<compile_context>
chip_gen: v5e
topology: v5e:2x2
jax: 0.10.0
libtpu: 0.0.40
codegen_flags: <defaults>
</compile_context>

<pallas_src>
import functools

import jax
import jax.numpy as jnp
from jax.experimental import pallas as pl
from jax.experimental.pallas import tpu as pltpu


def _round_up(x, m):
    return (x + m - 1) // m * m


@functools.lru_cache(maxsize=None)
def _num_tensorcores():
    """Best-effort TensorCores-per-device (v7x / megacore parts -> 2, else 1)."""
    try:
        info = pltpu.get_tpu_info()
        for attr in ("num_cores", "core_count", "num_tensorcores", "tensorcore_count"):
            v = getattr(info, attr, None)
            if isinstance(v, int) and v > 0:
                return max(1, min(int(v), 2))
    except Exception:
        pass
    try:
        kind = jax.devices()[0].device_kind.lower()
    except Exception:
        return 1
    if "7" in kind or "v4" in kind or "v5p" in kind:
        return 2
    return 1


# ----------------------------------------------------------------------------------
# Pallas kernel: single-pass (full-K) matmul with fused bias + skip + ReLU epilogue
# ----------------------------------------------------------------------------------
def _matmul_epilogue_kernel(*refs, relu, has_skip):
    if has_skip:
        a_ref, b_ref, bias_ref, skip_ref, o_ref = refs
    else:
        a_ref, b_ref, bias_ref, o_ref = refs
        skip_ref = None
    acc = jnp.dot(a_ref[...], b_ref[...], preferred_element_type=jnp.float32)
    acc = acc + bias_ref[...]                      # f32 epilogue (v5e-friendly)
    if skip_ref is not None:
        acc = acc + skip_ref[...].astype(jnp.float32)
    if relu:
        acc = jnp.maximum(acc, 0.0)
    o_ref[...] = acc.astype(o_ref.dtype)           # cast only at the store


def pallas_matmul(a, b, bias, *, relu=False, skip=None, out_dtype=jnp.bfloat16):
    """(M,K)@(K,N) + bias (+ skip) [+ ReLU] -> (M,N) out_dtype.
    bf16 MXU operands, f32 accumulate/epilogue."""
    M, K = a.shape
    K2, N = b.shape
    assert K == K2
    a = a.astype(jnp.bfloat16)
    b = b.astype(jnp.bfloat16)
    bias2d = bias.astype(jnp.float32).reshape(1, N)

    # Small matmuls: a pallas_call is pure launch/DMA-setup overhead; XLA fuses these.
    if M < 256:
        out = jnp.dot(a, b, preferred_element_type=jnp.float32) + bias2d
        if skip is not None:
            out = out + skip.astype(jnp.float32)
        if relu:
            out = jnp.maximum(out, 0.0)
        return out.astype(out_dtype)

    # --- M tiling: full-K, full-N single pass; one full-M block per TensorCore. ---
    n_tc = _num_tensorcores()
    if n_tc >= 2:
        n_blocks = max(2, pl.cdiv(M, 1024))        # v7x: even, minimal block count
        if n_blocks % 2:
            n_blocks += 1
    else:
        n_blocks = pl.cdiv(M, 2048)                # v5e/v6e: single full-M block
    TM = _round_up(pl.cdiv(M, n_blocks), 8)
    Mp = _round_up(M, TM)

    if Mp != M:
        a = jnp.pad(a, ((0, Mp - M), (0, 0)))      # fused pad, zero rows only

    has_skip = skip is not None
    operands = [a, b, bias2d]
    in_specs = [
        pl.BlockSpec((TM, K), lambda i: (i, 0)),
        pl.BlockSpec((K, N), lambda i: (0, 0)),    # weights resident across i
        pl.BlockSpec((1, N), lambda i: (0, 0)),    # bias resident across i
    ]
    if has_skip:
        skip = skip.astype(jnp.bfloat16)
        if Mp != M:
            skip = jnp.pad(skip, ((0, Mp - M), (0, 0)))
        operands.append(skip)
        in_specs.append(pl.BlockSpec((TM, N), lambda i: (i, 0)))

    out = pl.pallas_call(
        functools.partial(_matmul_epilogue_kernel, relu=relu, has_skip=has_skip),
        out_shape=jax.ShapeDtypeStruct((Mp, N), out_dtype),
        grid_spec=pltpu.PrefetchScalarGridSpec(
            num_scalar_prefetch=0,
            grid=(Mp // TM,),
            in_specs=in_specs,
            out_specs=pl.BlockSpec((TM, N), lambda i: (i, 0)),
        ),
        compiler_params=pltpu.CompilerParams(
            dimension_semantics=("parallel",)),
    )(*operands)
    if Mp != M:
        out = out[:M]
    return out


# ----------------------------------------------------------------------------------
# Pallas kernel: fused two-layer MLP (fc1 + ReLU + fc2), all weights resident in VMEM
# ----------------------------------------------------------------------------------
def _mlp_fused_kernel(x_ref, w1_ref, b1_ref, w2_ref, b2_ref, o_ref):
    h = jnp.dot(x_ref[...], w1_ref[...], preferred_element_type=jnp.float32)
    h = jnp.maximum(h + b1_ref[...], 0.0)
    o = jnp.dot(h.astype(jnp.bfloat16), w2_ref[...], preferred_element_type=jnp.float32)
    o_ref[...] = (o + b2_ref[...]).astype(o_ref.dtype)


def pallas_mlp(x, w1, b1, w2, b2):
    """x: (M, Cin) -> (M, Nout) f32.  Single kernel, single grid step."""
    M, Cin = x.shape
    Hd = w1.shape[1]
    N = w2.shape[1]
    Mp = _round_up(M, 8)
    x = x.astype(jnp.bfloat16)
    if Mp != M:
        x = jnp.pad(x, ((0, Mp - M), (0, 0)))
    out = pl.pallas_call(
        _mlp_fused_kernel,
        out_shape=jax.ShapeDtypeStruct((Mp, N), jnp.float32),
        grid_spec=pltpu.PrefetchScalarGridSpec(
            num_scalar_prefetch=0,
            grid=(1,),
            in_specs=[
                pl.BlockSpec((Mp, Cin), lambda i: (0, 0)),
                pl.BlockSpec((Cin, Hd), lambda i: (0, 0)),
                pl.BlockSpec((1, Hd), lambda i: (0, 0)),
                pl.BlockSpec((Hd, N), lambda i: (0, 0)),
                pl.BlockSpec((1, N), lambda i: (0, 0)),
            ],
            out_specs=pl.BlockSpec((Mp, N), lambda i: (0, 0)),
        ),
        compiler_params=pltpu.CompilerParams(
            dimension_semantics=("arbitrary",)),
    )(x, w1.astype(jnp.bfloat16), b1.astype(jnp.float32).reshape(1, -1),
      w2.astype(jnp.bfloat16), b2.astype(jnp.float32).reshape(1, -1))
    return out[:M]


# ----------------------------------------------------------------------------------
# JAX glue: im2col, conv wrapper, upsample, fused smooth conv, vertex sampler
# ----------------------------------------------------------------------------------
def _im2col(x, kh, kw, stride, pad):
    """x: (B,H,W,C) -> patches (B*Ho*Wo, kh*kw*C) ordered (i, j, c), bf16."""
    # TODO(synk): the stride-2 encoder tap loop stays in XLA: stride-2 shifted windows
    # are not expressible in a BlockSpec index_map; patches are emitted directly in
    # bf16 so the materialized bytes are halved and XLA fuses pad+slices+concat+cast.
    B, H, W, C = x.shape
    xp = jnp.pad(x, ((0, 0), (pad, pad), (pad, pad), (0, 0)))
    Ho = (H + 2 * pad - kh) // stride + 1
    Wo = (W + 2 * pad - kw) // stride + 1
    cols = [xp[:, i:i + stride * Ho:stride, j:j + stride * Wo:stride, :]
            for i in range(kh) for j in range(kw)]
    patches = jnp.concatenate(cols, axis=-1).astype(jnp.bfloat16)
    return patches.reshape(B * Ho * Wo, kh * kw * C), (B, Ho, Wo)


def conv2d(x, w, b, *, ksize, stride=1, pad=0, relu=False, skip=None,
           out_dtype=jnp.bfloat16):
    """x: (B,H,W,Cin); w: (kh*kw*Cin, Cout); b: (Cout,); optional fused residual skip."""
    B, H, W, C = x.shape
    if ksize == 1 and stride == 1 and pad == 0:
        skip2d = None if skip is None else skip.reshape(B * H * W, -1)
        out = pallas_matmul(x.reshape(B * H * W, C), w, b, relu=relu,
                            skip=skip2d, out_dtype=out_dtype)
        return out.reshape(B, H, W, -1)
    assert skip is None
    patches, (B, Ho, Wo) = _im2col(x, ksize, ksize, stride, pad)
    out = pallas_matmul(patches, w, b, relu=relu, out_dtype=out_dtype)
    return out.reshape(B, Ho, Wo, -1)


# --- fused 3x3 stride-1 smooth conv: per-batch rows resident in VMEM, 3 shifted taps ---
def _smooth3x3_kernel(x_ref, w_ref, b_ref, o_ref, *, H, W, relu):
    # x_ref: ((H+2)*W, 3*C)  column-precombined, H-padded rows for one batch element
    # w_ref: (3, 3*C, Cout) per-row-tap weight slabs (resident); b_ref: (1, Cout)
    HW = H * W
    acc = jnp.dot(x_ref[0:HW, :], w_ref[0], preferred_element_type=jnp.float32)
    acc = acc + jnp.dot(x_ref[W:W + HW, :], w_ref[1], preferred_element_type=jnp.float32)
    acc = acc + jnp.dot(x_ref[2 * W:2 * W + HW, :], w_ref[2],
                        preferred_element_type=jnp.float32)
    acc = acc + b_ref[...]
    if relu:
        acc = jnp.maximum(acc, 0.0)
    o_ref[...] = acc.astype(o_ref.dtype)


def smooth_conv3x3(x, w_taps, b, *, relu=True, out_dtype=jnp.bfloat16):
    """3x3, stride 1, pad 1 conv.  x: (B,H,W,C); w_taps: (3, 3*C, Cout); b: (Cout,)."""
    B, H, W, C = x.shape
    Cout = w_taps.shape[-1]
    if W % 8 != 0:
        # TODO(synk): odd widths fall back to the generic im2col path.
        w_flat = w_taps.reshape(3, 3, C, Cout).reshape(3 * 3 * C, Cout)
        return conv2d(x, w_flat, b, ksize=3, stride=1, pad=1, relu=relu,
                      out_dtype=out_dtype)
    xpad = jnp.pad(x, ((0, 0), (1, 1), (1, 1), (0, 0)))
    # Column (W) shifts pre-combined channel-wise -> (B, H+2, W, 3*C); row (H) shifts
    # become 8-aligned, static slices inside the kernel.
    xw = jnp.concatenate([xpad[:, :, j:j + W, :] for j in range(3)], axis=-1)
    xw = xw.reshape(B, (H + 2) * W, 3 * C).astype(jnp.bfloat16)
    out = pl.pallas_call(
        functools.partial(_smooth3x3_kernel, H=H, W=W, relu=relu),
        out_shape=jax.ShapeDtypeStruct((B, H * W, Cout), out_dtype),
        grid_spec=pltpu.PrefetchScalarGridSpec(
            num_scalar_prefetch=0,
            grid=(B,),
            in_specs=[
                pl.BlockSpec((None, (H + 2) * W, 3 * C), lambda bb: (bb, 0, 0)),
                pl.BlockSpec((3, 3 * C, Cout), lambda bb: (0, 0, 0)),   # resident
                pl.BlockSpec((1, Cout), lambda bb: (0, 0)),             # resident
            ],
            out_specs=pl.BlockSpec((None, H * W, Cout), lambda bb: (bb, 0, 0)),
        ),
        compiler_params=pltpu.CompilerParams(
            dimension_semantics=("parallel",)),
    )(xw, w_taps.astype(jnp.bfloat16), b.astype(jnp.float32).reshape(1, Cout))
    return out.reshape(B, H, W, Cout)


def upsample2_nearest(x):
    B, H, W, C = x.shape
    y = jnp.broadcast_to(x[:, :, None, :, None, :], (B, H, 2, W, 2, C))
    return y.reshape(B, 2 * H, 2 * W, C)


def sample_vertices_with_coords(feat, vertexs):
    """feat: (B,H,W,C); vertexs: (B,N,2) int (row, col) in decoder-feature coords.
    Returns (B, N, C+2): sampled features + [xx, yy] coordconv channels computed
    directly from the vertex indices (no full coord-map materialization)."""
    # TODO(synk): CoordConvTh / vertex_sampler sources unavailable; (row, col) nearest
    # sampling and linspace(-1, 1) coordinate normalization (xx, yy order) assumed.
    B, H, W, C = feat.shape
    r = jnp.clip(vertexs[..., 0], 0, H - 1)
    c = jnp.clip(vertexs[..., 1], 0, W - 1)
    flat = feat.reshape(B, H * W, C)
    idx = (r * W + c).astype(jnp.int32)
    sampled = jnp.take_along_axis(flat, idx[..., None], axis=1).astype(jnp.float32)
    xx = (-1.0 + 2.0 * c.astype(jnp.float32) / (W - 1))[..., None]
    yy = (-1.0 + 2.0 * r.astype(jnp.float32) / (H - 1))[..., None]
    return jnp.concatenate([sampled, xx, yy], axis=-1)


# ----------------------------------------------------------------------------------
# Parameters (deterministic synthetic init, scaled-down channels, bf16 weights)
# ----------------------------------------------------------------------------------
def init_params(key, in_channels=3, classes=2,
                enc_channels=(16, 16, 32, 64, 128), pyramid_channels=64):
    keys = list(jax.random.split(key, 32))
    kit = iter(keys)

    def dense(k, shape):
        return (jax.random.normal(k, shape, jnp.float32) * 0.05).astype(jnp.bfloat16)

    params = {}
    # TODO(synk): stands in for the ResNet34 encoder (5 stride-2 stages).
    enc = []
    cin = in_channels
    for c in enc_channels:
        enc.append((dense(next(kit), (3 * 3 * cin, c)), jnp.zeros((c,), jnp.float32)))
        cin = c
    params["encoder"] = enc

    # FPN decoder: lateral 1x1 convs (c5, c4, c3, c2) + 3x3 smoothing conv on P2.
    lats = []
    for c in enc_channels[1:][::-1]:
        lats.append((dense(next(kit), (c, pyramid_channels)),
                     jnp.zeros((pyramid_channels,), jnp.float32)))
    params["lateral"] = lats
    # smooth weights stored as per-row-tap slabs: (3, 3*C, Cout), (j, c) row-major.
    params["smooth"] = (dense(next(kit), (3, 3 * pyramid_channels, pyramid_channels)),
                        jnp.zeros((pyramid_channels,), jnp.float32))

    # TODO(synk): Mlp source unavailable; two-layer per-vertex MLP assumed.
    mlp_in = pyramid_channels + 2  # +2 coordconv channels (mirrors 258 = 256 + 2)
    params["mlp_fc1"] = (dense(next(kit), (mlp_in, mlp_in)),
                         jnp.zeros((mlp_in,), jnp.float32))
    params["mlp_fc2"] = (dense(next(kit), (mlp_in, classes - 1)),
                         jnp.zeros((classes - 1,), jnp.float32))
    return params


# ----------------------------------------------------------------------------------
# Forward pass
# ----------------------------------------------------------------------------------
def phcc_fpn_forward(params, x_nchw, vertexs):
    x = jnp.transpose(x_nchw, (0, 2, 3, 1)).astype(jnp.float32)  # NCHW -> NHWC

    # encoder (5 stride-2 stages); bf16 intermediates
    feats = []
    h = x
    for (w, b) in params["encoder"]:
        h = conv2d(h, w, b, ksize=3, stride=2, pad=1, relu=True)
        feats.append(h)
    c1, c2, c3, c4, c5 = feats

    # FPN decoder (top-down): lateral 1x1 convs with the residual add fused in; the
    # tiny levels (M < 256 rows) stay in fused XLA, P2 runs the skip-fused Pallas GEMM.
    lat5, lat4, lat3, lat2 = params["lateral"]
    p5 = conv2d(c5, lat5[0], lat5[1], ksize=1)
    p4 = conv2d(c4, lat4[0], lat4[1], ksize=1, skip=upsample2_nearest(p5))
    p3 = conv2d(c3, lat3[0], lat3[1], ksize=1, skip=upsample2_nearest(p4))
    p2 = conv2d(c2, lat2[0], lat2[1], ksize=1, skip=upsample2_nearest(p3))
    sw, sb = params["smooth"]
    feat_dec = smooth_conv3x3(p2, sw, sb, relu=True)              # fused 3-tap kernel

    # coordconv channels + vertex sampling fused at the vertex level, then fused MLP
    feat_seq = sample_vertices_with_coords(feat_dec, vertexs)     # (B, 90, C+2)
    B, N, C = feat_seq.shape
    w1, b1 = params["mlp_fc1"]
    w2, b2 = params["mlp_fc2"]
    out = pallas_mlp(feat_seq.reshape(B * N, C), w1, b1, w2, b2)
    return out.reshape(B, N, -1)                                  # (B, 90, classes - 1)

# TODO(synk): the is_testvertex branch (cv2 dilate/erode, cart2polar, degree2cart,
# post/_complete_flatten) is host-side numpy/OpenCV post-processing with data-dependent
# recursion; it has no Pallas equivalent and is not part of the default forward path.


if __name__ == "__main__":
    key = jax.random.PRNGKey(0)
    kx, kv, kp = jax.random.split(key, 3)

    x = jax.random.normal(kx, (2, 3, 64, 64), jnp.float32)            # NCHW input
    vertexs = jax.random.randint(kv, (2, 90, 2), 0, 16, dtype=jnp.int32)
    params = init_params(kp)

    out = jax.jit(phcc_fpn_forward)(params, x, vertexs)
    out = jax.block_until_ready(out)
    assert out.shape == (2, 90, 1), out.shape
    assert out.dtype == jnp.float32
    print("KERNEL_OK")
</pallas_src>

<mosaic_0001>
module attributes {stable_mosaic.version = 11 : i64} {
  func.func @_matmul_epilogue_kernel(%arg0: i32, %arg1: memref<2048x27xbf16, #tpu.memory_space<vmem>>, %arg2: memref<27x16xbf16, #tpu.memory_space<vmem>>, %arg3: memref<1x16xf32, #tpu.memory_space<vmem>>, %arg4: memref<2048x16xbf16, #tpu.memory_space<vmem>>) attributes {dimension_semantics = [#tpu.dimension_semantics<parallel>], iteration_bounds = array<i64: 1>, scalar_prefetch = 0 : i64, scratch_operands = 0 : i64, tpu.core_type = #tpu.core_type<tc>, window_params = [{transform_indices = @transform_0, window_bounds = array<i64: 2048, 27>}, {pipeline_mode = #tpu.pipeline_mode<synchronous>, transform_indices = @transform_1, window_bounds = array<i64: 27, 16>}, {pipeline_mode = #tpu.pipeline_mode<synchronous>, transform_indices = @transform_2, window_bounds = array<i64: 1, 16>}, {transform_indices = @transform_3, window_bounds = array<i64: 2048, 16>}]} {
    %c0 = arith.constant 0 : index
    %c0_0 = arith.constant 0 : index
    %0 = vector.load %arg1[%c0, %c0_0] : memref<2048x27xbf16, #tpu.memory_space<vmem>>, vector<2048x27xbf16>
    %c0_1 = arith.constant 0 : index
    %c0_2 = arith.constant 0 : index
    %1 = vector.load %arg2[%c0_1, %c0_2] : memref<27x16xbf16, #tpu.memory_space<vmem>>, vector<27x16xbf16>
    %cst = arith.constant dense<0.000000e+00> : vector<2048x16xf32>
    %2 = tpu.matmul %0, %1, %cst {dimension_numbers = #tpu.dot_dimension_numbers<[1], [0], [0], [1], [0, 0, 1, 1], [], []>} : vector<2048x27xbf16>, vector<27x16xbf16>, vector<2048x16xf32> -> vector<2048x16xf32>
    %c0_3 = arith.constant 0 : index
    %c0_4 = arith.constant 0 : index
    %3 = vector.load %arg3[%c0_3, %c0_4] : memref<1x16xf32, #tpu.memory_space<vmem>>, vector<1x16xf32>
    %4 = vector.broadcast %3 : vector<1x16xf32> to vector<2048x16xf32>
    %5 = arith.addf %2, %4 : vector<2048x16xf32>
    %cst_5 = arith.constant 0.000000e+00 : f32
    %6 = vector.broadcast %cst_5 : f32 to vector<2048x16xf32>
    %7 = arith.maximumf %5, %6 : vector<2048x16xf32>
    %8 = arith.truncf %7 : vector<2048x16xf32> to vector<2048x16xbf16>
    %c0_6 = arith.constant 0 : index
    %c0_7 = arith.constant 0 : index
    %9 = vector.load %arg4[%c0_6, %c0_7] : memref<2048x16xbf16, #tpu.memory_space<vmem>>, vector<2048x16xbf16>
    tpu.vector_store %arg4[%c0_6, %c0_7], %8 {strides = array<i32>} : memref<2048x16xbf16, #tpu.memory_space<vmem>>, vector<2048x16xbf16>,
    return
  }
  func.func @transform_0(%arg0: i32) -> (i32, i32) {
    %c0_i32 = arith.constant 0 : i32
    %c0_i32_0 = arith.constant 0 : i32
    return %arg0, %c0_i32 : i32, i32
  }
  func.func @transform_1(%arg0: i32) -> (i32, i32) {
    %c0_i32 = arith.constant 0 : i32
    %c0_i32_0 = arith.constant 0 : i32
    %c0_i32_1 = arith.constant 0 : i32
    return %c0_i32, %c0_i32_0 : i32, i32
  }
  func.func @transform_2(%arg0: i32) -> (i32, i32) {
    %c0_i32 = arith.constant 0 : i32
    %c0_i32_0 = arith.constant 0 : i32
    %c0_i32_1 = arith.constant 0 : i32
    return %c0_i32, %c0_i32_0 : i32, i32
  }
  func.func @transform_3(%arg0: i32) -> (i32, i32) {
    %c0_i32 = arith.constant 0 : i32
    %c0_i32_0 = arith.constant 0 : i32
    return %arg0, %c0_i32 : i32, i32
  }
}

module attributes {stable_mosaic.version = 11 : i64} {
  func.func @_matmul_epilogue_kernel(%arg0: i32, %arg1: memref<512x144xbf16, #tpu.memory_space<vmem>>, %arg2: memref<144x16xbf16, #tpu.memory_space<vmem>>, %arg3: memref<1x16xf32, #tpu.memory_space<vmem>>, %arg4: memref<512x16xbf16, #tpu.memory_space<vmem>>) attributes {dimension_semantics = [#tpu.dimension_semantics<parallel>], iteration_bounds = array<i64: 1>, scalar_prefetch = 0 : i64, scratch_operands = 0 : i64, tpu.core_type = #tpu.core_type<tc>, window_params = [{transform_indices = @transform_0, window_bounds = array<i64: 512, 144>}, {pipeline_mode = #tpu.pipeline_mode<synchronous>, transform_indices = @transform_1, window_bounds = array<i64: 144, 16>}, {pipeline_mode = #tpu.pipeline_mode<synchronous>, transform_indices = @transform_2, window_bounds = array<i64: 1, 16>}, {transform_indices = @transform_3, window_bounds = array<i64: 512, 16>}]} {
    %c0 = arith.constant 0 : index
    %c0_0 = arith.constant 0 : index
    %0 = vector.load %arg1[%c0, %c0_0] : memref<512x144xbf16, #tpu.memory_space<vmem>>, vector<512x144xbf16>
    %c0_1 = arith.constant 0 : index
    %c0_2 = arith.constant 0 : index
    %1 = vector.load %arg2[%c0_1, %c0_2] : memref<144x16xbf16, #tpu.memory_space<vmem>>, vector<144x16xbf16>
    %cst = arith.constant dense<0.000000e+00> : vector<512x16xf32>
    %2 = tpu.matmul %0, %1, %cst {dimension_numbers = #tpu.dot_dimension_numbers<[1], [0], [0], [1], [0, 0, 1, 1], [], []>} : vector<512x144xbf16>, vector<144x16xbf16>, vector<512x16xf32> -> vector<512x16xf32>
    %c0_3 = arith.constant 0 : index
    %c0_4 = arith.constant 0 : index
    %3 = vector.load %arg3[%c0_3, %c0_4] : memref<1x16xf32, #tpu.memory_space<vmem>>, vector<1x16xf32>
    %4 = vector.broadcast %3 : vector<1x16xf32> to vector<512x16xf32>
    %5 = arith.addf %2, %4 : vector<512x16xf32>
    %cst_5 = arith.constant 0.000000e+00 : f32
    %6 = vector.broadcast %cst_5 : f32 to vector<512x16xf32>
    %7 = arith.maximumf %5, %6 : vector<512x16xf32>
    %8 = arith.truncf %7 : vector<512x16xf32> to vector<512x16xbf16>
    %c0_6 = arith.constant 0 : index
    %c0_7 = arith.constant 0 : index
    %9 = vector.load %arg4[%c0_6, %c0_7] : memref<512x16xbf16, #tpu.memory_space<vmem>>, vector<512x16xbf16>
    tpu.vector_store %arg4[%c0_6, %c0_7], %8 {strides = array<i32>} : memref<512x16xbf16, #tpu.memory_space<vmem>>, vector<512x16xbf16>,
    return
  }
  func.func @transform_0(%arg0: i32) -> (i32, i32) {
    %c0_i32 = arith.constant 0 : i32
    %c0_i32_0 = arith.constant 0 : i32
    return %arg0, %c0_i32 : i32, i32
  }
  func.func @transform_1(%arg0: i32) -> (i32, i32) {
    %c0_i32 = arith.constant 0 : i32
    %c0_i32_0 = arith.constant 0 : i32
    %c0_i32_1 = arith.constant 0 : i32
    return %c0_i32, %c0_i32_0 : i32, i32
  }
  func.func @transform_2(%arg0: i32) -> (i32, i32) {
    %c0_i32 = arith.constant 0 : i32
    %c0_i32_0 = arith.constant 0 : i32
    %c0_i32_1 = arith.constant 0 : i32
    return %c0_i32, %c0_i32_0 : i32, i32
  }
  func.func @transform_3(%arg0: i32) -> (i32, i32) {
    %c0_i32 = arith.constant 0 : i32
    %c0_i32_0 = arith.constant 0 : i32
    return %arg0, %c0_i32 : i32, i32
  }
}

module attributes {stable_mosaic.version = 11 : i64} {
  func.func @_matmul_epilogue_kernel(%arg0: i32, %arg1: memref<512x16xbf16, #tpu.memory_space<vmem>>, %arg2: memref<16x64xbf16, #tpu.memory_space<vmem>>, %arg3: memref<1x64xf32, #tpu.memory_space<vmem>>, %arg4: memref<512x64xbf16, #tpu.memory_space<vmem>>, %arg5: memref<512x64xbf16, #tpu.memory_space<vmem>>) attributes {dimension_semantics = [#tpu.dimension_semantics<parallel>], iteration_bounds = array<i64: 1>, scalar_prefetch = 0 : i64, scratch_operands = 0 : i64, tpu.core_type = #tpu.core_type<tc>, window_params = [{transform_indices = @transform_0, window_bounds = array<i64: 512, 16>}, {pipeline_mode = #tpu.pipeline_mode<synchronous>, transform_indices = @transform_1, window_bounds = array<i64: 16, 64>}, {pipeline_mode = #tpu.pipeline_mode<synchronous>, transform_indices = @transform_2, window_bounds = array<i64: 1, 64>}, {transform_indices = @transform_3, window_bounds = array<i64: 512, 64>}, {transform_indices = @transform_4, window_bounds = array<i64: 512, 64>}]} {
    %c0 = arith.constant 0 : index
    %c0_0 = arith.constant 0 : index
    %0 = vector.load %arg1[%c0, %c0_0] : memref<512x16xbf16, #tpu.memory_space<vmem>>, vector<512x16xbf16>
    %c0_1 = arith.constant 0 : index
    %c0_2 = arith.constant 0 : index
    %1 = vector.load %arg2[%c0_1, %c0_2] : memref<16x64xbf16, #tpu.memory_space<vmem>>, vector<16x64xbf16>
    %cst = arith.constant dense<0.000000e+00> : vector<512x64xf32>
    %2 = tpu.matmul %0, %1, %cst {dimension_numbers = #tpu.dot_dimension_numbers<[1], [0], [0], [1], [0, 0, 1, 1], [], []>} : vector<512x16xbf16>, vector<16x64xbf16>, vector<512x64xf32> -> vector<512x64xf32>
    %c0_3 = arith.constant 0 : index
    %c0_4 = arith.constant 0 : index
    %3 = vector.load %arg3[%c0_3, %c0_4] : memref<1x64xf32, #tpu.memory_space<vmem>>, vector<1x64xf32>
    %4 = vector.broadcast %3 : vector<1x64xf32> to vector<512x64xf32>
    %5 = arith.addf %2, %4 : vector<512x64xf32>
    %c0_5 = arith.constant 0 : index
    %c0_6 = arith.constant 0 : index
    %6 = vector.load %arg4[%c0_5, %c0_6] : memref<512x64xbf16, #tpu.memory_space<vmem>>, vector<512x64xbf16>
    %7 = arith.extf %6 : vector<512x64xbf16> to vector<512x64xf32>
    %8 = arith.addf %5, %7 : vector<512x64xf32>
    %9 = arith.truncf %8 : vector<512x64xf32> to vector<512x64xbf16>
    %c0_7 = arith.constant 0 : index
    %c0_8 = arith.constant 0 : index
    %10 = vector.load %arg5[%c0_7, %c0_8] : memref<512x64xbf16, #tpu.memory_space<vmem>>, vector<512x64xbf16>
    tpu.vector_store %arg5[%c0_7, %c0_8], %9 {strides = array<i32>} : memref<512x64xbf16, #tpu.memory_space<vmem>>, vector<512x64xbf16>,
    return
  }
  func.func @transform_0(%arg0: i32) -> (i32, i32) {
    %c0_i32 = arith.constant 0 : i32
    %c0_i32_0 = arith.constant 0 : i32
    return %arg0, %c0_i32 : i32, i32
  }
  func.func @transform_1(%arg0: i32) -> (i32, i32) {
    %c0_i32 = arith.constant 0 : i32
    %c0_i32_0 = arith.constant 0 : i32
    %c0_i32_1 = arith.constant 0 : i32
    return %c0_i32, %c0_i32_0 : i32, i32
  }
  func.func @transform_2(%arg0: i32) -> (i32, i32) {
    %c0_i32 = arith.constant 0 : i32
    %c0_i32_0 = arith.constant 0 : i32
    %c0_i32_1 = arith.constant 0 : i32
    return %c0_i32, %c0_i32_0 : i32, i32
  }
  func.func @transform_3(%arg0: i32) -> (i32, i32) {
    %c0_i32 = arith.constant 0 : i32
    %c0_i32_0 = arith.constant 0 : i32
    return %arg0, %c0_i32 : i32, i32
  }
  func.func @transform_4(%arg0: i32) -> (i32, i32) {
    %c0_i32 = arith.constant 0 : i32
    %c0_i32_0 = arith.constant 0 : i32
    return %arg0, %c0_i32 : i32, i32
  }
}

module attributes {stable_mosaic.version = 11 : i64} {
  func.func @_smooth3x3_kernel(%arg0: i32, %arg1: memref<1x288x192xbf16, #tpu.memory_space<vmem>>, %arg2: memref<3x192x64xbf16, #tpu.memory_space<vmem>>, %arg3: memref<1x64xf32, #tpu.memory_space<vmem>>, %arg4: memref<1x256x64xbf16, #tpu.memory_space<vmem>>) attributes {dimension_semantics = [#tpu.dimension_semantics<parallel>], iteration_bounds = array<i64: 2>, scalar_prefetch = 0 : i64, scratch_operands = 0 : i64, tpu.core_type = #tpu.core_type<tc>, window_params = [{transform_indices = @transform_0, window_bounds = array<i64: 1, 288, 192>}, {pipeline_mode = #tpu.pipeline_mode<synchronous>, transform_indices = @transform_1, window_bounds = array<i64: 3, 192, 64>}, {pipeline_mode = #tpu.pipeline_mode<synchronous>, transform_indices = @transform_2, window_bounds = array<i64: 1, 64>}, {transform_indices = @transform_3, window_bounds = array<i64: 1, 256, 64>}]} {
    %c0 = arith.constant 0 : index
    %c0_0 = arith.constant 0 : index
    %c0_1 = arith.constant 0 : index
    %0 = vector.load %arg1[%c0, %c0_0, %c0_1] : memref<1x288x192xbf16, #tpu.memory_space<vmem>>, vector<1x256x192xbf16>
    %1 = vector.shape_cast %0 : vector<1x256x192xbf16> to vector<256x192xbf16>
    %c0_2 = arith.constant 0 : index
    %c0_3 = arith.constant 0 : index
    %c0_4 = arith.constant 0 : index
    %2 = vector.load %arg2[%c0_2, %c0_3, %c0_4] : memref<3x192x64xbf16, #tpu.memory_space<vmem>>, vector<1x192x64xbf16>
    %3 = vector.shape_cast %2 : vector<1x192x64xbf16> to vector<192x64xbf16>
    %cst = arith.constant dense<0.000000e+00> : vector<256x64xf32>
    %4 = tpu.matmul %1, %3, %cst {dimension_numbers = #tpu.dot_dimension_numbers<[1], [0], [0], [1], [0, 0, 1, 1], [], []>} : vector<256x192xbf16>, vector<192x64xbf16>, vector<256x64xf32> -> vector<256x64xf32>
    %c0_5 = arith.constant 0 : index
    %c16 = arith.constant 16 : index
    %c0_6 = arith.constant 0 : index
    %5 = vector.load %arg1[%c0_5, %c16, %c0_6] : memref<1x288x192xbf16, #tpu.memory_space<vmem>>, vector<1x256x192xbf16>
    %6 = vector.shape_cast %5 : vector<1x256x192xbf16> to vector<256x192xbf16>
    %c1 = arith.constant 1 : index
    %c0_7 = arith.constant 0 : index
    %c0_8 = arith.constant 0 : index
    %7 = vector.load %arg2[%c1, %c0_7, %c0_8] : memref<3x192x64xbf16, #tpu.memory_space<vmem>>, vector<1x192x64xbf16>
    %8 = vector.shape_cast %7 : vector<1x192x64xbf16> to vector<192x64xbf16>
    %cst_9 = arith.constant dense<0.000000e+00> : vector<256x64xf32>
    %9 = tpu.matmul %6, %8, %cst_9 {dimension_numbers = #tpu.dot_dimension_numbers<[1], [0], [0], [1], [0, 0, 1, 1], [], []>} : vector<256x192xbf16>, vector<192x64xbf16>, vector<256x64xf32> -> vector<256x64xf32>
    %10 = arith.addf %4, %9 : vector<256x64xf32>
    %c0_10 = arith.constant 0 : index
    %c32 = arith.constant 32 : index
    %c0_11 = arith.constant 0 : index
    %11 = vector.load %arg1[%c0_10, %c32, %c0_11] : memref<1x288x192xbf16, #tpu.memory_space<vmem>>, vector<1x256x192xbf16>
    %12 = vector.shape_cast %11 : vector<1x256x192xbf16> to vector<256x192xbf16>
    %c2 = arith.constant 2 : index
    %c0_12 = arith.constant 0 : index
    %c0_13 = arith.constant 0 : index
    %13 = vector.load %arg2[%c2, %c0_12, %c0_13] : memref<3x192x64xbf16, #tpu.memory_space<vmem>>, vector<1x192x64xbf16>
    %14 = vector.shape_cast %13 : vector<1x192x64xbf16> to vector<192x64xbf16>
    %cst_14 = arith.constant dense<0.000000e+00> : vector<256x64xf32>
    %15 = tpu.matmul %12, %14, %cst_14 {dimension_numbers = #tpu.dot_dimension_numbers<[1], [0], [0], [1], [0, 0, 1, 1], [], []>} : vector<256x192xbf16>, vector<192x64xbf16>, vector<256x64xf32> -> vector<256x64xf32>
    %16 = arith.addf %10, %15 : vector<256x64xf32>
    %c0_15 = arith.constant 0 : index
    %c0_16 = arith.constant 0 : index
    %17 = vector.load %arg3[%c0_15, %c0_16] : memref<1x64xf32, #tpu.memory_space<vmem>>, vector<1x64xf32>
    %18 = vector.broadcast %17 : vector<1x64xf32> to vector<256x64xf32>
    %19 = arith.addf %16, %18 : vector<256x64xf32>
    %cst_17 = arith.constant 0.000000e+00 : f32
    %20 = vector.broadcast %cst_17 : f32 to vector<256x64xf32>
    %21 = arith.maximumf %19, %20 : vector<256x64xf32>
    %22 = arith.truncf %21 : vector<256x64xf32> to vector<256x64xbf16>
    %c0_18 = arith.constant 0 : index
    %c0_19 = arith.constant 0 : index
    %c0_20 = arith.constant 0 : index
    %23 = vector.load %arg4[%c0_18, %c0_19, %c0_20] : memref<1x256x64xbf16, #tpu.memory_space<vmem>>, vector<1x256x64xbf16>
    %24 = vector.shape_cast %23 : vector<1x256x64xbf16> to vector<256x64xbf16>
    %25 = vector.shape_cast %22 : vector<256x64xbf16> to vector<1x256x64xbf16>
    tpu.vector_store %arg4[%c0_18, %c0_19, %c0_20], %25 {strides = array<i32>} : memref<1x256x64xbf16, #tpu.memory_space<vmem>>, vector<1x256x64xbf16>,
    return
  }
  func.func @transform_0(%arg0: i32) -> (i32, i32, i32) {
    %c0_i32 = arith.constant 0 : i32
    %c0_i32_0 = arith.constant 0 : i32
    %c0_i32_1 = arith.constant 0 : i32
    return %arg0, %c0_i32, %c0_i32_0 : i32, i32, i32
  }
  func.func @transform_1(%arg0: i32) -> (i32, i32, i32) {
    %c0_i32 = arith.constant 0 : i32
    %c0_i32_0 = arith.constant 0 : i32
    %c0_i32_1 = arith.constant 0 : i32
    %c0_i32_2 = arith.constant 0 : i32
    return %c0_i32, %c0_i32_0, %c0_i32_1 : i32, i32, i32
  }
  func.func @transform_2(%arg0: i32) -> (i32, i32) {
    %c0_i32 = arith.constant 0 : i32
    %c0_i32_0 = arith.constant 0 : i32
    %c0_i32_1 = arith.constant 0 : i32
    return %c0_i32, %c0_i32_0 : i32, i32
  }
  func.func @transform_3(%arg0: i32) -> (i32, i32, i32) {
    %c0_i32 = arith.constant 0 : i32
    %c0_i32_0 = arith.constant 0 : i32
    %c0_i32_1 = arith.constant 0 : i32
    return %arg0, %c0_i32, %c0_i32_0 : i32, i32, i32
  }
}

module attributes {stable_mosaic.version = 11 : i64} {
  func.func @_mlp_fused_kernel(%arg0: i32, %arg1: memref<184x66xbf16, #tpu.memory_space<vmem>>, %arg2: memref<66x66xbf16, #tpu.memory_space<vmem>>, %arg3: memref<1x66xf32, #tpu.memory_space<vmem>>, %arg4: memref<66x1xbf16, #tpu.memory_space<vmem>>, %arg5: memref<1x1xf32, #tpu.memory_space<vmem>>, %arg6: memref<184x1xf32, #tpu.memory_space<vmem>>) attributes {dimension_semantics = [#tpu.dimension_semantics<arbitrary>], iteration_bounds = array<i64: 1>, scalar_prefetch = 0 : i64, scratch_operands = 0 : i64, tpu.core_type = #tpu.core_type<tc>, window_params = [{pipeline_mode = #tpu.pipeline_mode<synchronous>, transform_indices = @transform_0, window_bounds = array<i64: 184, 66>}, {pipeline_mode = #tpu.pipeline_mode<synchronous>, transform_indices = @transform_1, window_bounds = array<i64: 66, 66>}, {pipeline_mode = #tpu.pipeline_mode<synchronous>, transform_indices = @transform_2, window_bounds = array<i64: 1, 66>}, {pipeline_mode = #tpu.pipeline_mode<synchronous>, transform_indices = @transform_3, window_bounds = array<i64: 66, 1>}, {pipeline_mode = #tpu.pipeline_mode<synchronous>, transform_indices = @transform_4, window_bounds = array<i64: 1, 1>}, {pipeline_mode = #tpu.pipeline_mode<synchronous>, transform_indices = @transform_5, window_bounds = array<i64: 184, 1>}]} {
    %c0 = arith.constant 0 : index
    %c0_0 = arith.constant 0 : index
    %0 = vector.load %arg1[%c0, %c0_0] : memref<184x66xbf16, #tpu.memory_space<vmem>>, vector<184x66xbf16>
    %c0_1 = arith.constant 0 : index
    %c0_2 = arith.constant 0 : index
    %1 = vector.load %arg2[%c0_1, %c0_2] : memref<66x66xbf16, #tpu.memory_space<vmem>>, vector<66x66xbf16>
    %cst = arith.constant dense<0.000000e+00> : vector<184x66xf32>
    %2 = tpu.matmul %0, %1, %cst {dimension_numbers = #tpu.dot_dimension_numbers<[1], [0], [0], [1], [0, 0, 1, 1], [], []>} : vector<184x66xbf16>, vector<66x66xbf16>, vector<184x66xf32> -> vector<184x66xf32>
    %c0_3 = arith.constant 0 : index
    %c0_4 = arith.constant 0 : index
    %3 = vector.load %arg3[%c0_3, %c0_4] : memref<1x66xf32, #tpu.memory_space<vmem>>, vector<1x66xf32>
    %4 = vector.broadcast %3 : vector<1x66xf32> to vector<184x66xf32>
    %5 = arith.addf %2, %4 : vector<184x66xf32>
    %cst_5 = arith.constant 0.000000e+00 : f32
    %6 = vector.broadcast %cst_5 : f32 to vector<184x66xf32>
    %7 = arith.maximumf %5, %6 : vector<184x66xf32>
    %8 = arith.truncf %7 : vector<184x66xf32> to vector<184x66xbf16>
    %c0_6 = arith.constant 0 : index
    %c0_7 = arith.constant 0 : index
    %9 = vector.load %arg4[%c0_6, %c0_7] : memref<66x1xbf16, #tpu.memory_space<vmem>>, vector<66x1xbf16>
    %cst_8 = arith.constant dense<0.000000e+00> : vector<184x1xf32>
    %10 = tpu.matmul %8, %9, %cst_8 {dimension_numbers = #tpu.dot_dimension_numbers<[1], [0], [0], [1], [0, 0, 1, 1], [], []>} : vector<184x66xbf16>, vector<66x1xbf16>, vector<184x1xf32> -> vector<184x1xf32>
    %c0_9 = arith.constant 0 : index
    %c0_10 = arith.constant 0 : index
    %11 = vector.load %arg5[%c0_9, %c0_10] : memref<1x1xf32, #tpu.memory_space<vmem>>, vector<1x1xf32>
    %12 = vector.broadcast %11 : vector<1x1xf32> to vector<184x1xf32>
    %13 = arith.addf %10, %12 : vector<184x1xf32>
    %c0_11 = arith.constant 0 : index
    %c0_12 = arith.constant 0 : index
    %14 = vector.load %arg6[%c0_11, %c0_12] : memref<184x1xf32, #tpu.memory_space<vmem>>, vector<184x1xf32>
    tpu.vector_store %arg6[%c0_11, %c0_12], %13 {strides = array<i32>} : memref<184x1xf32, #tpu.memory_space<vmem>>, vector<184x1xf32>,
    return
  }
  func.func @transform_0(%arg0: i32) -> (i32, i32) {
    %c0_i32 = arith.constant 0 : i32
    %c0_i32_0 = arith.constant 0 : i32
    %c0_i32_1 = arith.constant 0 : i32
    return %c0_i32, %c0_i32_0 : i32, i32
  }
  func.func @transform_1(%arg0: i32) -> (i32, i32) {
    %c0_i32 = arith.constant 0 : i32
    %c0_i32_0 = arith.constant 0 : i32
    %c0_i32_1 = arith.constant 0 : i32
    return %c0_i32, %c0_i32_0 : i32, i32
  }
  func.func @transform_2(%arg0: i32) -> (i32, i32) {
    %c0_i32 = arith.constant 0 : i32
    %c0_i32_0 = arith.constant 0 : i32
    %c0_i32_1 = arith.constant 0 : i32
    return %c0_i32, %c0_i32_0 : i32, i32
  }
  func.func @transform_3(%arg0: i32) -> (i32, i32) {
    %c0_i32 = arith.constant 0 : i32
    %c0_i32_0 = arith.constant 0 : i32
    %c0_i32_1 = arith.constant 0 : i32
    return %c0_i32, %c0_i32_0 : i32, i32
  }
  func.func @transform_4(%arg0: i32) -> (i32, i32) {
    %c0_i32 = arith.constant 0 : i32
    %c0_i32_0 = arith.constant 0 : i32
    %c0_i32_1 = arith.constant 0 : i32
    return %c0_i32, %c0_i32_0 : i32, i32
  }
  func.func @transform_5(%arg0: i32) -> (i32, i32) {
    %c0_i32 = arith.constant 0 : i32
    %c0_i32_0 = arith.constant 0 : i32
    %c0_i32_1 = arith.constant 0 : i32
    return %c0_i32, %c0_i32_0 : i32, i32
  }
}

</mosaic_0001>

<llo_original>
// kernel: phcc_fpn_forward.5
$region0: #{phcc_fpn_forward.5}
  #allocation0 [shape = 'u32[]', space=smem, size = 0x4, offset = 0x4, fixed_abs, tag = 'smem constant byte address 0x4 - core index']
  #allocation1 [shape = 'u32[72,128]{1,0:T(1,128)}', space=vmem, size = 0x9000, scoped, tag = 'internal scratch']
  %s0 = inlined_call_operand.vmem [shape: bf16[2048,27], index: 0, kind: input, shape index: {}]
  %s1 = inlined_call_operand.vmem [shape: bf16[27,16], index: 1, kind: input, shape index: {}]
  %s2 = inlined_call_operand.vmem [shape: f32[1,16], index: 2, kind: input, shape index: {}]
  %s3 = inlined_call_operand.vmem [shape: bf16[2048,16], index: 3, kind: output, shape index: {}]
  %s4 = sld [smem:[#allocation0]]
  $region22: #{phcc_fpn_forward.5} parent=0
    _
  %s6 = ssub.s32 1, %s4
  %s7 = scalar_select 0, %s6, %s4
  // Predicated region
  $region2: #{phcc_fpn_forward.5} parent=0 // pred_check
    _
  $region3: #{phcc_fpn_forward.5} parent=0 // pred_check_branch
    %9 = sbr.rel (0) target = $region5
  $region4: #{phcc_fpn_forward.5} parent=0 // pred_region
    _
  $region5: #{phcc_fpn_forward.5} parent=0 // pred_fallthru
    _
  // Predicated region
  $region6: #{phcc_fpn_forward.5} parent=0 // pred_check
    _
  $region7: #{phcc_fpn_forward.5} parent=0 // pred_check_branch
    %11 = sbr.rel (0) target = $region9
  $region8: #{phcc_fpn_forward.5} parent=0 // pred_region
    _
  $region9: #{phcc_fpn_forward.5} parent=0 // pred_fallthru
    _
  // Predicated region
  $region10: #{phcc_fpn_forward.5} parent=0 // pred_check
    _
  $region11: #{phcc_fpn_forward.5} parent=0 // pred_check_branch
    %13 = sbr.rel (0) target = $region13
  $region12: #{phcc_fpn_forward.5} parent=0 // pred_region
    _
  $region13: #{phcc_fpn_forward.5} parent=0 // pred_fallthru
    _
  %v15 = vld [vmem:[%s0] sm:$0xf]
  %v16 = vld [vmem:[%s0 + $0x4] sm:$0xf]
  %v17 = vld [vmem:[%s0 + $0x8] sm:$0xf]
  %v18 = vld [vmem:[%s0 + $0xc] sm:$0xf]
  %v19 = vld [vmem:[%s0 + $0x10] sm:$0xf]
  %v20 = vld [vmem:[%s0 + $0x14] sm:$0xf]
  %v21 = vld [vmem:[%s0 + $0x18] sm:$0xf]
  %v22 = vld [vmem:[%s0 + $0x1c] sm:$0xf]
  %v23 = vld [vmem:[%s0 + $0x20] sm:$0xf]
  %v24 = vld [vmem:[%s0 + $0x24] sm:$0xf]
  %v25 = vld [vmem:[%s0 + $0x28] sm:$0xf]
  %v26 = vld [vmem:[%s0 + $0x2c] sm:$0xf]
  %v27 = vld [vmem:[%s0 + $0x30] sm:$0xf]
  %v28 = vld [vmem:[%s0 + $0x34] sm:$0xf]
  %v29 = vld [vmem:[%s0 + $0x38] sm:$0xf]
  %v30 = vld [vmem:[%s0 + $0x3c] sm:$0xf]
  %v31 = vld [vmem:[%s0 + $0x40] sm:$0xf]
  %v32 = vld [vmem:[%s0 + $0x44] sm:$0xf]
  %v33 = vld [vmem:[%s0 + $0x48] sm:$0xf]
  %v34 = vld [vmem:[%s0 + $0x4c] sm:$0xf]
  %v35 = vld [vmem:[%s0 + $0x50] sm:$0xf]
  %v36 = vld [vmem:[%s0 + $0x54] sm:$0xf]
  %v37 = vld [vmem:[%s0 + $0x58] sm:$0xf]
  %v38 = vld [vmem:[%s0 + $0x5c] sm:$0xf]
  %v39 = vld [vmem:[%s0 + $0x60] sm:$0xf]
  %v40 = vld [vmem:[%s0 + $0x64] sm:$0xf]
  %v41 = vld [vmem:[%s0 + $0x68] sm:$0xf]
  %v42 = vld [vmem:[%s0 + $0x6c] sm:$0xf]
  %v43 = vld [vmem:[%s0 + $0x70] sm:$0xf]
  %v44 = vld [vmem:[%s0 + $0x74] sm:$0xf]
  %v45 = vld [vmem:[%s0 + $0x78] sm:$0xf]
  %v46 = vld [vmem:[%s0 + $0x7c] sm:$0xf]
  %v47 = vld [vmem:[%s0 + $0x80] sm:$0xf]
  %v48 = vld [vmem:[%s0 + $0x84] sm:$0xf]
  %v49 = vld [vmem:[%s0 + $0x88] sm:$0xf]
  %v50 = vld [vmem:[%s0 + $0x8c] sm:$0xf]
  %v51 = vld [vmem:[%s0 + $0x90] sm:$0xf]
  %v52 = vld [vmem:[%s0 + $0x94] sm:$0xf]
  %v53 = vld [vmem:[%s0 + $0x98] sm:$0xf]
  %v54 = vld [vmem:[%s0 + $0x9c] sm:$0xf]
  %v55 = vld [vmem:[%s0 + $0xa0] sm:$0xf]
  %v56 = vld [vmem:[%s0 + $0xa4] sm:$0xf]
  %v57 = vld [vmem:[%s0 + $0xa8] sm:$0xf]
  %v58 = vld [vmem:[%s0 + $0xac] sm:$0xf]
  %v59 = vld [vmem:[%s0 + $0xb0] sm:$0xf]
  %v60 = vld [vmem:[%s0 + $0xb4] sm:$0xf]
  %v61 = vld [vmem:[%s0 + $0xb8] sm:$0xf]
  %v62 = vld [vmem:[%s0 + $0xbc] sm:$0xf]
  %v63 = vld [vmem:[%s0 + $0xc0] sm:$0xf]
  %v64 = vld [vmem:[%s0 + $0xc4] sm:$0xf]
  %v65 = vld [vmem:[%s0 + $0xc8] sm:$0xf]
  %v66 = vld [vmem:[%s0 + $0xcc] sm:$0xf]
  %v67 = vld [vmem:[%s0 + $0xd0] sm:$0xf]
  %v68 = vld [vmem:[%s0 + $0xd4] sm:$0xf]
  %v69 = vld [vmem:[%s0 + $0xd8] sm:$0xf]
  %v70 = vld [vmem:[%s0 + $0xdc] sm:$0xf]
  %v71 = vld [vmem:[%s0 + $0xe0] sm:$0xf]
  %v72 = vld [vmem:[%s0 + $0xe4] sm:$0xf]
  %v73 = vld [vmem:[%s0 + $0xe8] sm:$0xf]
  %v74 = vld [vmem:[%s0 + $0xec] sm:$0xf]
  %v75 = vld [vmem:[%s0 + $0xf0] sm:$0xf]
  %v76 = vld [vmem:[%s0 + $0xf4] sm:$0xf]
  %v77 = vld [vmem:[%s0 + $0xf8] sm:$0xf]
  %v78 = vld [vmem:[%s0 + $0xfc] sm:$0xf]
  %v79 = vld [vmem:[%s0 + $0x100] sm:$0xf]
  %v80 = vld [vmem:[%s0 + $0x104] sm:$0xf]
  %v81 = vld [vmem:[%s0 + $0x108] sm:$0xf]
  %v82 = vld [vmem:[%s0 + $0x10c] sm:$0xf]
  %v83 = vld [vmem:[%s0 + $0x110] sm:$0xf]
  %v84 = vld [vmem:[%s0 + $0x114] sm:$0xf]
  %v85 = vld [vmem:[%s0 + $0x118] sm:$0xf]
  %v86 = vld [vmem:[%s0 + $0x11c] sm:$0xf]
  %v87 = vld [vmem:[%s0 + $0x120] sm:$0xf]
  %v88 = vld [vmem:[%s0 + $0x124] sm:$0xf]
  %v89 = vld [vmem:[%s0 + $0x128] sm:$0xf]
  %v90 = vld [vmem:[%s0 + $0x12c] sm:$0xf]
  %v91 = vld [vmem:[%s0 + $0x130] sm:$0xf]
  %v92 = vld [vmem:[%s0 + $0x134] sm:$0xf]
  %v93 = vld [vmem:[%s0 + $0x138] sm:$0xf]
  %v94 = vld [vmem:[%s0 + $0x13c] sm:$0xf]
  %v95 = vld [vmem:[%s0 + $0x140] sm:$0xf]
  %v96 = vld [vmem:[%s0 + $0x144] sm:$0xf]
  %v97 = vld [vmem:[%s0 + $0x148] sm:$0xf]
  %v98 = vld [vmem:[%s0 + $0x14c] sm:$0xf]
  %v99 = vld [vmem:[%s0 + $0x150] sm:$0xf]
  %v100 = vld [vmem:[%s0 + $0x154] sm:$0xf]
  %v101 = vld [vmem:[%s0 + $0x158] sm:$0xf]
  %v102 = vld [vmem:[%s0 + $0x15c] sm:$0xf]
  %v103 = vld [vmem:[%s0 + $0x160] sm:$0xf]
  %v104 = vld [vmem:[%s0 + $0x164] sm:$0xf]
  %v105 = vld [vmem:[%s0 + $0x168] sm:$0xf]
  %v106 = vld [vmem:[%s0 + $0x16c] sm:$0xf]
  %v107 = vld [vmem:[%s0 + $0x170] sm:$0xf]
  %v108 = vld [vmem:[%s0 + $0x174] sm:$0xf]
  %v109 = vld [vmem:[%s0 + $0x178] sm:$0xf]
  %v110 = vld [vmem:[%s0 + $0x17c] sm:$0xf]
  %v111 = vld [vmem:[%s0 + $0x180] sm:$0xf]
  %v112 = vld [vmem:[%s0 + $0x184] sm:$0xf]
  %v113 = vld [vmem:[%s0 + $0x188] sm:$0xf]
  %v114 = vld [vmem:[%s0 + $0x18c] sm:$0xf]
  %v115 = vld [vmem:[%s0 + $0x190] sm:$0xf]
  %v116 = vld [vmem:[%s0 + $0x194] sm:$0xf]
  %v117 = vld [vmem:[%s0 + $0x198] sm:$0xf]
  %v118 = vld [vmem:[%s0 + $0x19c] sm:$0xf]
  %v119 = vld [vmem:[%s0 + $0x1a0] sm:$0xf]
  %v120 = vld [vmem:[%s0 + $0x1a4] sm:$0xf]
  %v121 = vld [vmem:[%s0 + $0x1a8] sm:$0xf]
  %v122 = vld [vmem:[%s0 + $0x1ac] sm:$0xf]
  %v123 = vld [vmem:[%s0 + $0x1b0] sm:$0xf]
  %v124 = vld [vmem:[%s0 + $0x1b4] sm:$0xf]
  %v125 = vld [vmem:[%s0 + $0x1b8] sm:$0xf]
  %v126 = vld [vmem:[%s0 + $0x1bc] sm:$0xf]
  %v127 = vld [vmem:[%s0 + $0x1c0] sm:$0xf]
  %v128 = vld [vmem:[%s0 + $0x1c4] sm:$0xf]
  %v129 = vld [vmem:[%s0 + $0x1c8] sm:$0xf]
  %v130 = vld [vmem:[%s0 + $0x1cc] sm:$0xf]
  %v131 = vld [vmem:[%s0 + $0x1d0] sm:$0xf]
  %v132 = vld [vmem:[%s0 + $0x1d4] sm:$0xf]
  %v133 = vld [vmem:[%s0 + $0x1d8] sm:$0xf]
  %v134 = vld [vmem:[%s0 + $0x1dc] sm:$0xf]
  %v135 = vld [vmem:[%s0 + $0x1e0] sm:$0xf]
  %v136 = vld [vmem:[%s0 + $0x1e4] sm:$0xf]
  %v137 = vld [vmem:[%s0 + $0x1e8] sm:$0xf]
  %v138 = vld [vmem:[%s0 + $0x1ec] sm:$0xf]
  %v139 = vld [vmem:[%s0 + $0x1f0] sm:$0xf]
  %v140 = vld [vmem:[%s0 + $0x1f4] sm:$0xf]
  %v141 = vld [vmem:[%s0 + $0x1f8] sm:$0xf]
  %v142 = vld [vmem:[%s0 + $0x1fc] sm:$0xf]
  %v143 = vld [vmem:[%s0 + $0x200] sm:$0xf]
  %v144 = vld [vmem:[%s0 + $0x204] sm:$0xf]
  %v145 = vld [vmem:[%s0 + $0x208] sm:$0xf]
  %v146 = vld [vmem:[%s0 + $0x20c] sm:$0xf]
  %v147 = vld [vmem:[%s0 + $0x210] sm:$0xf]
  %v148 = vld [vmem:[%s0 + $0x214] sm:$0xf]
  %v149 = vld [vmem:[%s0 + $0x218] sm:$0xf]
  %v150 = vld [vmem:[%s0 + $0x21c] sm:$0xf]
  %v151 = vld [vmem:[%s0 + $0x220] sm:$0xf]
  %v152 = vld [vmem:[%s0 + $0x224] sm:$0xf]
  %v153 = vld [vmem:[%s0 + $0x228] sm:$0xf]
  %v154 = vld [vmem:[%s0 + $0x22c] sm:$0xf]
  %v155 = vld [vmem:[%s0 + $0x230] sm:$0xf]
  %v156 = vld [vmem:[%s0 + $0x234] sm:$0xf]
  %v157 = vld [vmem:[%s0 + $0x238] sm:$0xf]
  %v158 = vld [vmem:[%s0 + $0x23c] sm:$0xf]
  %v159 = vld [vmem:[%s0 + $0x240] sm:$0xf]
  %v160 = vld [vmem:[%s0 + $0x244] sm:$0xf]
  %v161 = vld [vmem:[%s0 + $0x248] sm:$0xf]
  %v162 = vld [vmem:[%s0 + $0x24c] sm:$0xf]
  %v163 = vld [vmem:[%s0 + $0x250] sm:$0xf]
  %v164 = vld [vmem:[%s0 + $0x254] sm:$0xf]
  %v165 = vld [vmem:[%s0 + $0x258] sm:$0xf]
  %v166 = vld [vmem:[%s0 + $0x25c] sm:$0xf]
  %v167 = vld [vmem:[%s0 + $0x260] sm:$0xf]
  %v168 = vld [vmem:[%s0 + $0x264] sm:$0xf]
  %v169 = vld [vmem:[%s0 + $0x268] sm:$0xf]
  %v170 = vld [vmem:[%s0 + $0x26c] sm:$0xf]
  %v171 = vld [vmem:[%s0 + $0x270] sm:$0xf]
  %v172 = vld [vmem:[%s0 + $0x274] sm:$0xf]
  %v173 = vld [vmem:[%s0 + $0x278] sm:$0xf]
  %v174 = vld [vmem:[%s0 + $0x27c] sm:$0xf]
  %v175 = vld [vmem:[%s0 + $0x280] sm:$0xf]
  %v176 = vld [vmem:[%s0 + $0x284] sm:$0xf]
  %v177 = vld [vmem:[%s0 + $0x288] sm:$0xf]
  %v178 = vld [vmem:[%s0 + $0x28c] sm:$0xf]
  %v179 = vld [vmem:[%s0 + $0x290] sm:$0xf]
  %v180 = vld [vmem:[%s0 + $0x294] sm:$0xf]
  %v181 = vld [vmem:[%s0 + $0x298] sm:$0xf]
  %v182 = vld [vmem:[%s0 + $0x29c] sm:$0xf]
  %v183 = vld [vmem:[%s0 + $0x2a0] sm:$0xf]
  %v184 = vld [vmem:[%s0 + $0x2a4] sm:$0xf]
  %v185 = vld [vmem:[%s0 + $0x2a8] sm:$0xf]
  %v186 = vld [vmem:[%s0 + $0x2ac] sm:$0xf]
  %v187 = vld [vmem:[%s0 + $0x2b0] sm:$0xf]
  %v188 = vld [vmem:[%s0 + $0x2b4] sm:$0xf]
  %v189 = vld [vmem:[%s0 + $0x2b8] sm:$0xf]
  %v190 = vld [vmem:[%s0 + $0x2bc] sm:$0xf]
  %v191 = vld [vmem:[%s0 + $0x2c0] sm:$0xf]
  %v192 = vld [vmem:[%s0 + $0x2c4] sm:$0xf]
  %v193 = vld [vmem:[%s0 + $0x2c8] sm:$0xf]
  %v194 = vld [vmem:[%s0 + $0x2cc] sm:$0xf]
  %v195 = vld [vmem:[%s0 + $0x2d0] sm:$0xf]
  %v196 = vld [vmem:[%s0 + $0x2d4] sm:$0xf]
  %v197 = vld [vmem:[%s0 + $0x2d8] sm:$0xf]
  %v198 = vld [vmem:[%s0 + $0x2dc] sm:$0xf]
  %v199 = vld [vmem:[%s0 + $0x2e0] sm:$0xf]
  %v200 = vld [vmem:[%s0 + $0x2e4] sm:$0xf]
  %v201 = vld [vmem:[%s0 + $0x2e8] sm:$0xf]
  %v202 = vld [vmem:[%s0 + $0x2ec] sm:$0xf]
  %v203 = vld [vmem:[%s0 + $0x2f0] sm:$0xf]
  %v204 = vld [vmem:[%s0 + $0x2f4] sm:$0xf]
  %v205 = vld [vmem:[%s0 + $0x2f8] sm:$0xf]
  %v206 = vld [vmem:[%s0 + $0x2fc] sm:$0xf]
  %v207 = vld [vmem:[%s0 + $0x300] sm:$0xf]
  %v208 = vld [vmem:[%s0 + $0x304] sm:$0xf]
  %v209 = vld [vmem:[%s0 + $0x308] sm:$0xf]
  %v210 = vld [vmem:[%s0 + $0x30c] sm:$0xf]
  %v211 = vld [vmem:[%s0 + $0x310] sm:$0xf]
  %v212 = vld [vmem:[%s0 + $0x314] sm:$0xf]
  %v213 = vld [vmem:[%s0 + $0x318] sm:$0xf]
  %v214 = vld [vmem:[%s0 + $0x31c] sm:$0xf]
  %v215 = vld [vmem:[%s0 + $0x320] sm:$0xf]
  %v216 = vld [vmem:[%s0 + $0x324] sm:$0xf]
  %v217 = vld [vmem:[%s0 + $0x328] sm:$0xf]
  %v218 = vld [vmem:[%s0 + $0x32c] sm:$0xf]
  %v219 = vld [vmem:[%s0 + $0x330] sm:$0xf]
  %v220 = vld [vmem:[%s0 + $0x334] sm:$0xf]
  %v221 = vld [vmem:[%s0 + $0x338] sm:$0xf]
  %v222 = vld [vmem:[%s0 + $0x33c] sm:$0xf]
  %v223 = vld [vmem:[%s0 + $0x340] sm:$0xf]
  %v224 = vld [vmem:[%s0 + $0x344] sm:$0xf]
  %v225 = vld [vmem:[%s0 + $0x348] sm:$0xf]
  %v226 = vld [vmem:[%s0 + $0x34c] sm:$0xf]
  %v227 = vld [vmem:[%s0 + $0x350] sm:$0xf]
  %v228 = vld [vmem:[%s0 + $0x354] sm:$0xf]
  %v229 = vld [vmem:[%s0 + $0x358] sm:$0xf]
  %v230 = vld [vmem:[%s0 + $0x35c] sm:$0xf]
  %v231 = vld [vmem:[%s0 + $0x360] sm:$0xf]
  %v232 = vld [vmem:[%s0 + $0x364] sm:$0xf]
  %v233 = vld [vmem:[%s0 + $0x368] sm:$0xf]
  %v234 = vld [vmem:[%s0 + $0x36c] sm:$0xf]
  %v235 = vld [vmem:[%s0 + $0x370] sm:$0xf]
  %v236 = vld [vmem:[%s0 + $0x374] sm:$0xf]
  %v237 = vld [vmem:[%s0 + $0x378] sm:$0xf]
  %v238 = vld [vmem:[%s0 + $0x37c] sm:$0xf]
  %v239 = vld [vmem:[%s0 + $0x380] sm:$0xf]
  %v240 = vld [vmem:[%s0 + $0x384] sm:$0xf]
  %v241 = vld [vmem:[%s0 + $0x388] sm:$0xf]
  %v242 = vld [vmem:[%s0 + $0x38c] sm:$0xf]
  %v243 = vld [vmem:[%s0 + $0x390] sm:$0xf]
  %v244 = vld [vmem:[%s0 + $0x394] sm:$0xf]
  %v245 = vld [vmem:[%s0 + $0x398] sm:$0xf]
  %v246 = vld [vmem:[%s0 + $0x39c] sm:$0xf]
  %v247 = vld [vmem:[%s0 + $0x3a0] sm:$0xf]
  %v248 = vld [vmem:[%s0 + $0x3a4] sm:$0xf]
  %v249 = vld [vmem:[%s0 + $0x3a8] sm:$0xf]
  %v250 = vld [vmem:[%s0 + $0x3ac] sm:$0xf]
  %v251 = vld [vmem:[%s0 + $0x3b0] sm:$0xf]
  %v252 = vld [vmem:[%s0 + $0x3b4] sm:$0xf]
  %v253 = vld [vmem:[%s0 + $0x3b8] sm:$0xf]
  %v254 = vld [vmem:[%s0 + $0x3bc] sm:$0xf]
  %v255 = vld [vmem:[%s0 + $0x3c0] sm:$0xf]
  %v256 = vld [vmem:[%s0 + $0x3c4] sm:$0xf]
  %v257 = vld [vmem:[%s0 + $0x3c8] sm:$0xf]
  %v258 = vld [vmem:[%s0 + $0x3cc] sm:$0xf]
  %v259 = vld [vmem:[%s0 + $0x3d0] sm:$0xf]
  %v260 = vld [vmem:[%s0 + $0x3d4] sm:$0xf]
  %v261 = vld [vmem:[%s0 + $0x3d8] sm:$0xf]
  %v262 = vld [vmem:[%s0 + $0x3dc] sm:$0xf]
  %v263 = vld [vmem:[%s0 + $0x3e0] sm:$0xf]
  %v264 = vld [vmem:[%s0 + $0x3e4] sm:$0xf]
  %v265 = vld [vmem:[%s0 + $0x3e8] sm:$0xf]
  %v266 = vld [vmem:[%s0 + $0x3ec] sm:$0xf]
  %v267 = vld [vmem:[%s0 + $0x3f0] sm:$0xf]
  %v268 = vld [vmem:[%s0 + $0x3f4] sm:$0xf]
  %v269 = vld [vmem:[%s0 + $0x3f8] sm:$0xf]
  %v270 = vld [vmem:[%s0 + $0x3fc] sm:$0xf]
  %v271 = vld [vmem:[%s1] sm:$0xf]
  %v272 = vld [vmem:[%s1 + $0x4] sm:$0xf]
  %v273 = vld [vmem:[%s1 + $0x8] sm:$0xf]
  %v274 = vld [vmem:[%s1 + $0xc] sm:$0x3]
  %v275 = vld [vmem:[%s2] sm:$0x1]
  %v277 = vperm.slane %v275, 0
  %v535 = vunpack.c.l.b16 %v15
  %v536 = vunpack.c.l.b16 %v16
  %v537 = vunpack.c.l.b16 %v17
  %v538 = vunpack.c.l.b16 %v18
  %v539 = vunpack.c.l.b16 %v19
  %v540 = vunpack.c.l.b16 %v20
  %v541 = vunpack.c.l.b16 %v21
  %v542 = vunpack.c.l.b16 %v22
  %v543 = vunpack.c.l.b16 %v23
  %v544 = vunpack.c.l.b16 %v24
  %v545 = vunpack.c.l.b16 %v25
  %v546 = vunpack.c.l.b16 %v26
  %v547 = vunpack.c.l.b16 %v27
  %v548 = vunpack.c.l.b16 %v28
  %v549 = vunpack.c.l.b16 %v29
  %v550 = vunpack.c.l.b16 %v30
  %v551 = vunpack.c.l.b16 %v31
  %v552 = vunpack.c.l.b16 %v32
  %v553 = vunpack.c.l.b16 %v33
  %v554 = vunpack.c.l.b16 %v34
  %v555 = vunpack.c.l.b16 %v35
  %v556 = vunpack.c.l.b16 %v36
  %v557 = vunpack.c.l.b16 %v37
  %v558 = vunpack.c.l.b16 %v38
  %v559 = vunpack.c.l.b16 %v39
  %v560 = vunpack.c.l.b16 %v40
  %v561 = vunpack.c.l.b16 %v41
  %v562 = vunpack.c.l.b16 %v42
  %v563 = vunpack.c.l.b16 %v43
  %v564 = vunpack.c.l.b16 %v44
  %v565 = vunpack.c.l.b16 %v45
  %v566 = vunpack.c.l.b16 %v46
  %v567 = vunpack.c.l.b16 %v47
  %v568 = vunpack.c.l.b16 %v48
  %v569 = vunpack.c.l.b16 %v49
  %v570 = vunpack.c.l.b16 %v50
  %v571 = vunpack.c.l.b16 %v51
  %v572 = vunpack.c.l.b16 %v52
  %v573 = vunpack.c.l.b16 %v53
  %v574 = vunpack.c.l.b16 %v54
  %v575 = vunpack.c.l.b16 %v55
  %v576 = vunpack.c.l.b16 %v56
  %v577 = vunpack.c.l.b16 %v57
  %v578 = vunpack.c.l.b16 %v58
  %v579 = vunpack.c.l.b16 %v59
  %v580 = vunpack.c.l.b16 %v60
  %v581 = vunpack.c.l.b16 %v61
  %v582 = vunpack.c.l.b16 %v62
  %v583 = vunpack.c.l.b16 %v63
  %v584 = vunpack.c.l.b16 %v64
  %v585 = vunpack.c.l.b16 %v65
  %v586 = vunpack.c.l.b16 %v66
  %v587 = vunpack.c.l.b16 %v67
  %v588 = vunpack.c.l.b16 %v68
  %v589 = vunpack.c.l.b16 %v69
  %v590 = vunpack.c.l.b16 %v70
  %v591 = vunpack.c.l.b16 %v71
  %v592 = vunpack.c.l.b16 %v72
  %v593 = vunpack.c.l.b16 %v73
  %v594 = vunpack.c.l.b16 %v74
  %v595 = vunpack.c.l.b16 %v75
  %v596 = vunpack.c.l.b16 %v76
  %v597 = vunpack.c.l.b16 %v77
  %v598 = vunpack.c.l.b16 %v78
  %v599 = vunpack.c.l.b16 %v79
  %v600 = vunpack.c.l.b16 %v80
  %v601 = vunpack.c.l.b16 %v81
  %v602 = vunpack.c.l.b16 %v82
  %v603 = vunpack.c.l.b16 %v83
  %v604 = vunpack.c.l.b16 %v84
  %v605 = vunpack.c.l.b16 %v85
  %v606 = vunpack.c.l.b16 %v86
  %v607 = vunpack.c.l.b16 %v87
  %v608 = vunpack.c.l.b16 %v88
  %v609 = vunpack.c.l.b16 %v89
  %v610 = vunpack.c.l.b16 %v90
  %v611 = vunpack.c.l.b16 %v91
  %v612 = vunpack.c.l.b16 %v92
  %v613 = vunpack.c.l.b16 %v93
  %v614 = vunpack.c.l.b16 %v94
  %v615 = vunpack.c.l.b16 %v95
  %v616 = vunpack.c.l.b16 %v96
  %v617 = vunpack.c.l.b16 %v97
  %v618 = vunpack.c.l.b16 %v98
  %v619 = vunpack.c.l.b16 %v99
  %v620 = vunpack.c.l.b16 %v100
  %v621 = vunpack.c.l.b16 %v101
  %v622 = vunpack.c.l.b16 %v102
  %v623 = vunpack.c.l.b16 %v103
  %v624 = vunpack.c.l.b16 %v104
  %v625 = vunpack.c.l.b16 %v105
  %v626 = vunpack.c.l.b16 %v106
  %v627 = vunpack.c.l.b16 %v107
  %v628 = vunpack.c.l.b16 %v108
  %v629 = vunpack.c.l.b16 %v109
  %v630 = vunpack.c.l.b16 %v110
  %v631 = vunpack.c.l.b16 %v111
  %v632 = vunpack.c.l.b16 %v112
  %v633 = vunpack.c.l.b16 %v113
  %v634 = vunpack.c.l.b16 %v114
  %v635 = vunpack.c.l.b16 %v115
  %v636 = vunpack.c.l.b16 %v116
  %v637 = vunpack.c.l.b16 %v117
  %v638 = vunpack.c.l.b16 %v118
  %v639 = vunpack.c.l.b16 %v119
  %v640 = vunpack.c.l.b16 %v120
  %v641 = vunpack.c.l.b16 %v121
  %v642 = vunpack.c.l.b16 %v122
  %v643 = vunpack.c.l.b16 %v123
  %v644 = vunpack.c.l.b16 %v124
  %v645 = vunpack.c.l.b16 %v125
  %v646 = vunpack.c.l.b16 %v126
  %v647 = vunpack.c.l.b16 %v127
  %v648 = vunpack.c.l.b16 %v128
  %v649 = vunpack.c.l.b16 %v129
  %v650 = vunpack.c.l.b16 %v130
  %v651 = vunpack.c.l.b16 %v131
  %v652 = vunpack.c.l.b16 %v132
  %v653 = vunpack.c.l.b16 %v133
  %v654 = vunpack.c.l.b16 %v134
  %v655 = vunpack.c.l.b16 %v135
  %v656 = vunpack.c.l.b16 %v136
  %v657 = vunpack.c.l.b16 %v137
  %v658 = vunpack.c.l.b16 %v138
  %v659 = vunpack.c.l.b16 %v139
  %v660 = vunpack.c.l.b16 %v140
  %v661 = vunpack.c.l.b16 %v141
  %v662 = vunpack.c.l.b16 %v142
  %v663 = vunpack.c.l.b16 %v143
  %v664 = vunpack.c.l.b16 %v144
  %v665 = vunpack.c.l.b16 %v145
  %v666 = vunpack.c.l.b16 %v146
  %v667 = vunpack.c.l.b16 %v147
  %v668 = vunpack.c.l.b16 %v148
  %v669 = vunpack.c.l.b16 %v149
  %v670 = vunpack.c.l.b16 %v150
  %v671 = vunpack.c.l.b16 %v151
  %v672 = vunpack.c.l.b16 %v152
  %v673 = vunpack.c.l.b16 %v153
  %v674 = vunpack.c.l.b16 %v154
  %v675 = vunpack.c.l.b16 %v155
  %v676 = vunpack.c.l.b16 %v156
  %v677 = vunpack.c.l.b16 %v157
  %v678 = vunpack.c.l.b16 %v158
  %v679 = vunpack.c.l.b16 %v159
  %v680 = vunpack.c.l.b16 %v160
  %v681 = vunpack.c.l.b16 %v161
  %v682 = vunpack.c.l.b16 %v162
  %v683 = vunpack.c.l.b16 %v163
  %v684 = vunpack.c.l.b16 %v164
  %v685 = vunpack.c.l.b16 %v165
  %v686 = vunpack.c.l.b16 %v166
  %v687 = vunpack.c.l.b16 %v167
  %v688 = vunpack.c.l.b16 %v168
  %v689 = vunpack.c.l.b16 %v169
  %v690 = vunpack.c.l.b16 %v170
  %v691 = vunpack.c.l.b16 %v171
  %v692 = vunpack.c.l.b16 %v172
  %v693 = vunpack.c.l.b16 %v173
  %v694 = vunpack.c.l.b16 %v174
  %v695 = vunpack.c.l.b16 %v175
  %v696 = vunpack.c.l.b16 %v176
  %v697 = vunpack.c.l.b16 %v177
  %v698 = vunpack.c.l.b16 %v178
  %v699 = vunpack.c.l.b16 %v179
  %v700 = vunpack.c.l.b16 %v180
  %v701 = vunpack.c.l.b16 %v181
  %v702 = vunpack.c.l.b16 %v182
  %v703 = vunpack.c.l.b16 %v183
  %v704 = vunpack.c.l.b16 %v184
  %v705 = vunpack.c.l.b16 %v185
  %v706 = vunpack.c.l.b16 %v186
  %v707 = vunpack.c.l.b16 %v187
  %v708 = vunpack.c.l.b16 %v188
  %v709 = vunpack.c.l.b16 %v189
  %v710 = vunpack.c.l.b16 %v190
  %v711 = vunpack.c.l.b16 %v191
  %v712 = vunpack.c.l.b16 %v192
  %v713 = vunpack.c.l.b16 %v193
  %v714 = vunpack.c.l.b16 %v194
  %v715 = vunpack.c.l.b16 %v195
  %v716 = vunpack.c.l.b16 %v196
  %v717 = vunpack.c.l.b16 %v197
  %v718 = vunpack.c.l.b16 %v198
  %v719 = vunpack.c.l.b16 %v199
  %v720 = vunpack.c.l.b16 %v200
  %v721 = vunpack.c.l.b16 %v201
  %v722 = vunpack.c.l.b16 %v202
  %v723 = vunpack.c.l.b16 %v203
  %v724 = vunpack.c.l.b16 %v204
  %v725 = vunpack.c.l.b16 %v205
  %v726 = vunpack.c.l.b16 %v206
  %v727 = vunpack.c.l.b16 %v207
  %v728 = vunpack.c.l.b16 %v208
  %v729 = vunpack.c.l.b16 %v209
  %v730 = vunpack.c.l.b16 %v210
  %v731 = vunpack.c.l.b16 %v211
  %v732 = vunpack.c.l.b16 %v212
  %v733 = vunpack.c.l.b16 %v213
  %v734 = vunpack.c.l.b16 %v214
  %v735 = vunpack.c.l.b16 %v215
  %v736 = vunpack.c.l.b16 %v216
  %v737 = vunpack.c.l.b16 %v217
  %v738 = vunpack.c.l.b16 %v218
  %v739 = vunpack.c.l.b16 %v219
  %v740 = vunpack.c.l.b16 %v220
  %v741 = vunpack.c.l.b16 %v221
  %v742 = vunpack.c.l.b16 %v222
  %v743 = vunpack.c.l.b16 %v223
  %v744 = vunpack.c.l.b16 %v224
  %v745 = vunpack.c.l.b16 %v225
  %v746 = vunpack.c.l.b16 %v226
  %v747 = vunpack.c.l.b16 %v227
  %v748 = vunpack.c.l.b16 %v228
  %v749 = vunpack.c.l.b16 %v229
  %v750 = vunpack.c.l.b16 %v230
  %v751 = vunpack.c.l.b16 %v231
  %v752 = vunpack.c.l.b16 %v232
  %v753 = vunpack.c.l.b16 %v233
  %v754 = vunpack.c.l.b16 %v234
  %v755 = vunpack.c.l.b16 %v235
  %v756 = vunpack.c.l.b16 %v236
  %v757 = vunpack.c.l.b16 %v237
  %v758 = vunpack.c.l.b16 %v238
  %v759 = vunpack.c.l.b16 %v239
  %v760 = vunpack.c.l.b16 %v240
  %v761 = vunpack.c.l.b16 %v241
  %v762 = vunpack.c.l.b16 %v242
  %v763 = vunpack.c.l.b16 %v243
  %v764 = vunpack.c.l.b16 %v244
  %v765 = vunpack.c.l.b16 %v245
  %v766 = vunpack.c.l.b16 %v246
  %v767 = vunpack.c.l.b16 %v247
  %v768 = vunpack.c.l.b16 %v248
  %v769 = vunpack.c.l.b16 %v249
  %v770 = vunpack.c.l.b16 %v250
  %v771 = vunpack.c.l.b16 %v251
  %v772 = vunpack.c.l.b16 %v252
  %v773 = vunpack.c.l.b16 %v253
  %v774 = vunpack.c.l.b16 %v254
  %v775 = vunpack.c.l.b16 %v255
  %v776 = vunpack.c.l.b16 %v256
  %v777 = vunpack.c.l.b16 %v257
  %v778 = vunpack.c.l.b16 %v258
  %v779 = vunpack.c.l.b16 %v259
  %v780 = vunpack.c.l.b16 %v260
  %v781 = vunpack.c.l.b16 %v261
  %v782 = vunpack.c.l.b16 %v262
  %v783 = vunpack.c.l.b16 %v263
  %v784 = vunpack.c.l.b16 %v264
  %v785 = vunpack.c.l.b16 %v265
  %v786 = vunpack.c.l.b16 %v266
  %v787 = vunpack.c.l.b16 %v267
  %v788 = vunpack.c.l.b16 %v268
  %v789 = vunpack.c.l.b16 %v269
  %v790 = vunpack.c.l.b16 %v270
  %v791 = vpack.c.b16 %v536, %v535
  %v792 = vpack.c.b16 %v538, %v537
  %v793 = vpack.c.b16 %v540, %v539
  %v794 = vpack.c.b16 %v542, %v541
  %v795 = vpack.c.b16 %v544, %v543
  %v796 = vpack.c.b16 %v546, %v545
  %v797 = vpack.c.b16 %v548, %v547
  %v798 = vpack.c.b16 %v550, %v549
  %v799 = vpack.c.b16 %v552, %v551
  %v800 = vpack.c.b16 %v554, %v553
  %v801 = vpack.c.b16 %v556, %v555
  %v802 = vpack.c.b16 %v558, %v557
  %v803 = vpack.c.b16 %v560, %v559
  %v804 = vpack.c.b16 %v562, %v561
  %v805 = vpack.c.b16 %v564, %v563
  %v806 = vpack.c.b16 %v566, %v565
  %v807 = vpack.c.b16 %v568, %v567
  %v808 = vpack.c.b16 %v570, %v569
  %v809 = vpack.c.b16 %v572, %v571
  %v810 = vpack.c.b16 %v574, %v573
  %v811 = vpack.c.b16 %v576, %v575
  %v812 = vpack.c.b16 %v578, %v577
  %v813 = vpack.c.b16 %v580, %v579
  %v814 = vpack.c.b16 %v582, %v581
  %v815 = vpack.c.b16 %v584, %v583
  %v816 = vpack.c.b16 %v586, %v585
  %v817 = vpack.c.b16 %v588, %v587
  %v818 = vpack.c.b16 %v590, %v589
  %v819 = vpack.c.b16 %v592, %v591
  %v820 = vpack.c.b16 %v594, %v593
  %v821 = vpack.c.b16 %v596, %v595
  %v822 = vpack.c.b16 %v598, %v597
  %v823 = vpack.c.b16 %v600, %v599
  %v824 = vpack.c.b16 %v602, %v601
  %v825 = vpack.c.b16 %v604, %v603
  %v826 = vpack.c.b16 %v606, %v605
  %v827 = vpack.c.b16 %v608, %v607
  %v828 = vpack.c.b16 %v610, %v609
  %v829 = vpack.c.b16 %v612, %v611
  %v830 = vpack.c.b16 %v614, %v613
  %v831 = vpack.c.b16 %v616, %v615
  %v832 = vpack.c.b16 %v618, %v617
  %v833 = vpack.c.b16 %v620, %v619
  %v834 = vpack.c.b16 %v622, %v621
  %v835 = vpack.c.b16 %v624, %v623
  %v836 = vpack.c.b16 %v626, %v625
  %v837 = vpack.c.b16 %v628, %v627
  %v838 = vpack.c.b16 %v630, %v629
  %v839 = vpack.c.b16 %v632, %v631
  %v840 = vpack.c.b16 %v634, %v633
  %v841 = vpack.c.b16 %v636, %v635
  %v842 = vpack.c.b16 %v638, %v637
  %v843 = vpack.c.b16 %v640, %v639
  %v844 = vpack.c.b16 %v642, %v641
  %v845 = vpack.c.b16 %v644, %v643
  %v846 = vpack.c.b16 %v646, %v645
  %v847 = vpack.c.b16 %v648, %v647
  %v848 = vpack.c.b16 %v650, %v649
  %v849 = vpack.c.b16 %v652, %v651
  %v850 = vpack.c.b16 %v654, %v653
  %v851 = vpack.c.b16 %v656, %v655
  %v852 = vpack.c.b16 %v658, %v657
  %v853 = vpack.c.b16 %v660, %v659
  %v854 = vpack.c.b16 %v662, %v661
  %v855 = vpack.c.b16 %v664, %v663
  %v856 = vpack.c.b16 %v666, %v665
  %v857 = vpack.c.b16 %v668, %v667
  %v858 = vpack.c.b16 %v670, %v669
  %v859 = vpack.c.b16 %v672, %v671
  %v860 = vpack.c.b16 %v674, %v673
  %v861 = vpack.c.b16 %v676, %v675
  %v862 = vpack.c.b16 %v678, %v677
  %v863 = vpack.c.b16 %v680, %v679
  %v864 = vpack.c.b16 %v682, %v681
  %v865 = vpack.c.b16 %v684, %v683
  %v866 = vpack.c.b16 %v686, %v685
  %v867 = vpack.c.b16 %v688, %v687
  %v868 = vpack.c.b16 %v690, %v689
  %v869 = vpack.c.b16 %v692, %v691
  %v870 = vpack.c.b16 %v694, %v693
  %v871 = vpack.c.b16 %v696, %v695
  %v872 = vpack.c.b16 %v698, %v697
  %v873 = vpack.c.b16 %v700, %v699
  %v874 = vpack.c.b16 %v702, %v701
  %v875 = vpack.c.b16 %v704, %v703
  %v876 = vpack.c.b16 %v706, %v705
  %v877 = vpack.c.b16 %v708, %v707
  %v878 = vpack.c.b16 %v710, %v709
  %v879 = vpack.c.b16 %v712, %v711
  %v880 = vpack.c.b16 %v714, %v713
  %v881 = vpack.c.b16 %v716, %v715
  %v882 = vpack.c.b16 %v718, %v717
  %v883 = vpack.c.b16 %v720, %v719
  %v884 = vpack.c.b16 %v722, %v721
  %v885 = vpack.c.b16 %v724, %v723
  %v886 = vpack.c.b16 %v726, %v725
  %v887 = vpack.c.b16 %v728, %v727
  %v888 = vpack.c.b16 %v730, %v729
  %v889 = vpack.c.b16 %v732, %v731
  %v890 = vpack.c.b16 %v734, %v733
  %v891 = vpack.c.b16 %v736, %v735
  %v892 = vpack.c.b16 %v738, %v737
  %v893 = vpack.c.b16 %v740, %v739
  %v894 = vpack.c.b16 %v742, %v741
  %v895 = vpack.c.b16 %v744, %v743
  %v896 = vpack.c.b16 %v746, %v745
  %v897 = vpack.c.b16 %v748, %v747
  %v898 = vpack.c.b16 %v750, %v749
  %v899 = vpack.c.b16 %v752, %v751
  %v900 = vpack.c.b16 %v754, %v753
  %v901 = vpack.c.b16 %v756, %v755
  %v902 = vpack.c.b16 %v758, %v757
  %v903 = vpack.c.b16 %v760, %v759
  %v904 = vpack.c.b16 %v762, %v761
  %v905 = vpack.c.b16 %v764, %v763
  %v906 = vpack.c.b16 %v766, %v765
  %v907 = vpack.c.b16 %v768, %v767
  %v908 = vpack.c.b16 %v770, %v769
  %v909 = vpack.c.b16 %v772, %v771
  %v910 = vpack.c.b16 %v774, %v773
  %v911 = vpack.c.b16 %v776, %v775
  %v912 = vpack.c.b16 %v778, %v777
  %v913 = vpack.c.b16 %v780, %v779
  %v914 = vpack.c.b16 %v782, %v781
  %v915 = vpack.c.b16 %v784, %v783
  %v916 = vpack.c.b16 %v786, %v785
  %v917 = vpack.c.b16 %v788, %v787
  %v918 = vpack.c.b16 %v790, %v789
  %v923 = vunpack.c.l.b16 %v271
  %v924 = vunpack.c.l.b16 %v272
  %v925 = vunpack.c.l.b16 %v273
  %v926 = vunpack.c.l.b16 %v274
  %v927 = vpack.c.b16 %v924, %v923
  %v928 = vpack.c.b16 %v926, %v925
  %vm930 = vcmask 220160
  %v932 = vsel %vm930, %v791, 0
  %v935 = vsel %vm930, %v792, 0
  %v938 = vsel %vm930, %v793, 0
  %v941 = vsel %vm930, %v794, 0
  %v944 = vsel %vm930, %v795, 0
  %v947 = vsel %vm930, %v796, 0
  %v950 = vsel %vm930, %v797, 0
  %v953 = vsel %vm930, %v798, 0
  %v956 = vsel %vm930, %v799, 0
  %v959 = vsel %vm930, %v800, 0
  %v962 = vsel %vm930, %v801, 0
  %v965 = vsel %vm930, %v802, 0
  %v968 = vsel %vm930, %v803, 0
  %v971 = vsel %vm930, %v804, 0
  %v974 = vsel %vm930, %v805, 0
  %v977 = vsel %vm930, %v806, 0
  %v980 = vsel %vm930, %v807, 0
  %v983 = vsel %vm930, %v808, 0
  %v986 = vsel %vm930, %v809, 0
  %v989 = vsel %vm930, %v810, 0
  %v992 = vsel %vm930, %v811, 0
  %v995 = vsel %vm930, %v812, 0
  %v998 = vsel %vm930, %v813, 0
  %v1001 = vsel %vm930, %v814, 0
  %v1004 = vsel %vm930, %v815, 0
  %v1007 = vsel %vm930, %v816, 0
  %v1010 = vsel %vm930, %v817, 0
  %v1013 = vsel %vm930, %v818, 0
  %v1016 = vsel %vm930, %v819, 0
  %v1019 = vsel %vm930, %v820, 0
  %v1022 = vsel %vm930, %v821, 0
  %v1025 = vsel %vm930, %v822, 0
  %v1028 = vsel %vm930, %v823, 0
  %v1031 = vsel %vm930, %v824, 0
  %v1034 = vsel %vm930, %v825, 0
  %v1037 = vsel %vm930, %v826, 0
  %v1040 = vsel %vm930, %v827, 0
  %v1043 = vsel %vm930, %v828, 0
  %v1046 = vsel %vm930, %v829, 0
  %v1049 = vsel %vm930, %v830, 0
  %v1052 = vsel %vm930, %v831, 0
  %v1055 = vsel %vm930, %v832, 0
  %v1058 = vsel %vm930, %v833, 0
  %v1061 = vsel %vm930, %v834, 0
  %v1064 = vsel %vm930, %v835, 0
  %v1067 = vsel %vm930, %v836, 0
  %v1070 = vsel %vm930, %v837, 0
  %v1073 = vsel %vm930, %v838, 0
  %v1076 = vsel %vm930, %v839, 0
  %v1079 = vsel %vm930, %v840, 0
  %v1082 = vsel %vm930, %v841, 0
  %v1085 = vsel %vm930, %v842, 0
  %v1088 = vsel %vm930, %v843, 0
  %v1091 = vsel %vm930, %v844, 0
  %v1094 = vsel %vm930, %v845, 0
  %v1097 = vsel %vm930, %v846, 0
  %v1100 = vsel %vm930, %v847, 0
  %v1103 = vsel %vm930, %v848, 0
  %v1106 = vsel %vm930, %v849, 0
  %v1109 = vsel %vm930, %v850, 0
  %v1112 = vsel %vm930, %v851, 0
  %v1115 = vsel %vm930, %v852, 0
  %v1118 = vsel %vm930, %v853, 0
  %v1121 = vsel %vm930, %v854, 0
  %v1124 = vsel %vm930, %v855, 0
  %v1127 = vsel %vm930, %v856, 0
  %v1130 = vsel %vm930, %v857, 0
  %v1133 = vsel %vm930, %v858, 0
  %v1136 = vsel %vm930, %v859, 0
  %v1139 = vsel %vm930, %v860, 0
  %v1142 = vsel %vm930, %v861, 0
  %v1145 = vsel %vm930, %v862, 0
  %v1148 = vsel %vm930, %v863, 0
  %v1151 = vsel %vm930, %v864, 0
  %v1154 = vsel %vm930, %v865, 0
  %v1157 = vsel %vm930, %v866, 0
  %v1160 = vsel %vm930, %v867, 0
  %v1163 = vsel %vm930, %v868, 0
  %v1166 = vsel %vm930, %v869, 0
  %v1169 = vsel %vm930, %v870, 0
  %v1172 = vsel %vm930, %v871, 0
  %v1175 = vsel %vm930, %v872, 0
  %v1178 = vsel %vm930, %v873, 0
  %v1181 = vsel %vm930, %v874, 0
  %v1184 = vsel %vm930, %v875, 0
  %v1187 = vsel %vm930, %v876, 0
  %v1190 = vsel %vm930, %v877, 0
  %v1193 = vsel %vm930, %v878, 0
  %v1196 = vsel %vm930, %v879, 0
  %v1199 = vsel %vm930, %v880, 0
  %v1202 = vsel %vm930, %v881, 0
  %v1205 = vsel %vm930, %v882, 0
  %v1208 = vsel %vm930, %v883, 0
  %v1211 = vsel %vm930, %v884, 0
  %v1214 = vsel %vm930, %v885, 0
  %v1217 = vsel %vm930, %v886, 0
  %v1220 = vsel %vm930, %v887, 0
  %v1223 = vsel %vm930, %v888, 0
  %v1226 = vsel %vm930, %v889, 0
  %v1229 = vsel %vm930, %v890, 0
  %v1232 = vsel %vm930, %v891, 0
  %v1235 = vsel %vm930, %v892, 0
  %v1238 = vsel %vm930, %v893, 0
  %v1241 = vsel %vm930, %v894, 0
  %v1244 = vsel %vm930, %v895, 0
  %v1247 = vsel %vm930, %v896, 0
  %v1250 = vsel %vm930, %v897, 0
  %v1253 = vsel %vm930, %v898, 0
  %v1256 = vsel %vm930, %v899, 0
  %v1259 = vsel %vm930, %v900, 0
  %v1262 = vsel %vm930, %v901, 0
  %v1265 = vsel %vm930, %v902, 0
  %v1268 = vsel %vm930, %v903, 0
  %v1271 = vsel %vm930, %v904, 0
  %v1274 = vsel %vm930, %v905, 0
  %v1277 = vsel %vm930, %v906, 0
  %v1280 = vsel %vm930, %v907, 0
  %v1283 = vsel %vm930, %v908, 0
  %v1286 = vsel %vm930, %v909, 0
  %v1289 = vsel %vm930, %v910, 0
  %v1292 = vsel %vm930, %v911, 0
  %v1295 = vsel %vm930, %v912, 0
  %v1298 = vsel %vm930, %v913, 0
  %v1301 = vsel %vm930, %v914, 0
  %v1304 = vsel %vm930, %v915, 0
  %v1307 = vsel %vm930, %v916, 0
  %v1310 = vsel %vm930, %v917, 0
  %v1313 = vsel %vm930, %v918, 0
  %vm1315 = vcmask 1044480
  %vm1316 = vcmask 1045504
  %v1317 = vsel %vm1315, 4294967295, 65535
  %v1318 = vsel %vm1316, %v1317, 0
  %v1320 = vand.u32 %v928, %v1318
  %1322 = vmatpush.bf16.msra.mxu0 0
  %1323 = vmatpush.bf16.msra.mxu0 0
  %1324 = vmatpush.bf16.msra.mxu0 0
  %1325 = vmatpush.bf16.msra.mxu0 0
  %1326 = vmatpush.bf16.msra.mxu0 0
  %1327 = vmatpush.bf16.msra.mxu0 0
  %1328 = vmatpush.bf16.msra.mxu0 %v1320
  %1329 = vmatpush.bf16.msra.mxu0 %v927
  %1330 = vmatmul.bf16.gmra.mxu0 %v932
  %v1331 = vpop.f32.mrf.mxu0
  %v1332 = vadd.f32 %v277, %v1331
  %v1333 = vpop.f32.mrf.mxu0
  %v1334 = vadd.f32 %v277, %v1333
  %1335 = vmatmul.bf16.gmra.mxu0 %v935
  %v1336 = vpop.f32.mrf.mxu0
  %v1337 = vadd.f32 %v277, %v1336
  %v1338 = vpop.f32.mrf.mxu0
  %v1339 = vadd.f32 %v277, %v1338
  %1340 = vmatmul.bf16.gmra.mxu0 %v938
  %v1341 = vpop.f32.mrf.mxu0
  %v1342 = vadd.f32 %v277, %v1341
  %v1343 = vpop.f32.mrf.mxu0
  %v1344 = vadd.f32 %v277, %v1343
  %1345 = vmatmul.bf16.gmra.mxu0 %v941
  %v1346 = vpop.f32.mrf.mxu0
  %v1347 = vadd.f32 %v277, %v1346
  %v1348 = vpop.f32.mrf.mxu0
  %v1349 = vadd.f32 %v277, %v1348
  %1350 = vmatmul.bf16.gmra.mxu0 %v944
  %v1351 = vpop.f32.mrf.mxu0
  %v1352 = vadd.f32 %v277, %v1351
  %v1353 = vpop.f32.mrf.mxu0
  %v1354 = vadd.f32 %v277, %v1353
  %1355 = vmatmul.bf16.gmra.mxu0 %v947
  %v1356 = vpop.f32.mrf.mxu0
  %v1357 = vadd.f32 %v277, %v1356
  %v1358 = vpop.f32.mrf.mxu0
  %v1359 = vadd.f32 %v277, %v1358
  %1360 = vmatmul.bf16.gmra.mxu0 %v950
  %v1361 = vpop.f32.mrf.mxu0
  %v1362 = vadd.f32 %v277, %v1361
  %v1363 = vpop.f32.mrf.mxu0
  %v1364 = vadd.f32 %v277, %v1363
  %1365 = vmatmul.bf16.gmra.mxu0 %v953
  %v1366 = vpop.f32.mrf.mxu0
  %v1367 = vadd.f32 %v277, %v1366
  %v1368 = vpop.f32.mrf.mxu0
  %v1369 = vadd.f32 %v277, %v1368
  %1370 = vmatmul.bf16.gmra.mxu0 %v956
  %v1371 = vpop.f32.mrf.mxu0
  %v1372 = vadd.f32 %v277, %v1371
  %v1373 = vpop.f32.mrf.mxu0
  %v1374 = vadd.f32 %v277, %v1373
  %1375 = vmatmul.bf16.gmra.mxu0 %v959
  %v1376 = vpop.f32.mrf.mxu0
  %v1377 = vadd.f32 %v277, %v1376
  %v1378 = vpop.f32.mrf.mxu0
  %v1379 = vadd.f32 %v277, %v1378
  %1380 = vmatmul.bf16.gmra.mxu0 %v962
  %v1381 = vpop.f32.mrf.mxu0
  %v1382 = vadd.f32 %v277, %v1381
  %v1383 = vpop.f32.mrf.mxu0
  %v1384 = vadd.f32 %v277, %v1383
  %1385 = vmatmul.bf16.gmra.mxu0 %v965
  %v1386 = vpop.f32.mrf.mxu0
  %v1387 = vadd.f32 %v277, %v1386
  %v1388 = vpop.f32.mrf.mxu0
  %v1389 = vadd.f32 %v277, %v1388
  %1390 = vmatmul.bf16.gmra.mxu0 %v968
  %v1391 = vpop.f32.mrf.mxu0
  %v1392 = vadd.f32 %v277, %v1391
  %v1393 = vpop.f32.mrf.mxu0
  %v1394 = vadd.f32 %v277, %v1393
  %1395 = vmatmul.bf16.gmra.mxu0 %v971
  %v1396 = vpop.f32.mrf.mxu0
  %v1397 = vadd.f32 %v277, %v1396
  %v1398 = vpop.f32.mrf.mxu0
  %v1399 = vadd.f32 %v277, %v1398
  %1400 = vmatmul.bf16.gmra.mxu0 %v974
  %v1401 = vpop.f32.mrf.mxu0
  %v1402 = vadd.f32 %v277, %v1401
  %v1403 = vpop.f32.mrf.mxu0
  %v1404 = vadd.f32 %v277, %v1403
  %1405 = vmatmul.bf16.gmra.mxu0 %v977
  %v1406 = vpop.f32.mrf.mxu0
  %v1407 = vadd.f32 %v277, %v1406
  %v1408 = vpop.f32.mrf.mxu0
  %v1409 = vadd.f32 %v277, %v1408
  %1410 = vmatmul.bf16.gmra.mxu0 %v980
  %v1411 = vpop.f32.mrf.mxu0
  %v1412 = vadd.f32 %v277, %v1411
  %v1413 = vpop.f32.mrf.mxu0
  %v1414 = vadd.f32 %v277, %v1413
  %1415 = vmatmul.bf16.gmra.mxu0 %v983
  %v1416 = vpop.f32.mrf.mxu0
  %v1417 = vadd.f32 %v277, %v1416
  %v1418 = vpop.f32.mrf.mxu0
  %v1419 = vadd.f32 %v277, %v1418
  %1420 = vmatmul.bf16.gmra.mxu0 %v986
  %v1421 = vpop.f32.mrf.mxu0
  %v1422 = vadd.f32 %v277, %v1421
  %v1423 = vpop.f32.mrf.mxu0
  %v1424 = vadd.f32 %v277, %v1423
  %1425 = vmatmul.bf16.gmra.mxu0 %v989
  %v1426 = vpop.f32.mrf.mxu0
  %v1427 = vadd.f32 %v277, %v1426
  %v1428 = vpop.f32.mrf.mxu0
  %v1429 = vadd.f32 %v277, %v1428
  %1430 = vmatmul.bf16.gmra.mxu0 %v992
  %v1431 = vpop.f32.mrf.mxu0
  %v1432 = vadd.f32 %v277, %v1431
  %v1433 = vpop.f32.mrf.mxu0
  %v1434 = vadd.f32 %v277, %v1433
  %1435 = vmatmul.bf16.gmra.mxu0 %v995
  %v1436 = vpop.f32.mrf.mxu0
  %v1437 = vadd.f32 %v277, %v1436
  %v1438 = vpop.f32.mrf.mxu0
  %v1439 = vadd.f32 %v277, %v1438
  %1440 = vmatmul.bf16.gmra.mxu0 %v998
  %v1441 = vpop.f32.mrf.mxu0
  %v1442 = vadd.f32 %v277, %v1441
  %v1443 = vpop.f32.mrf.mxu0
  %v1444 = vadd.f32 %v277, %v1443
  %1445 = vmatmul.bf16.gmra.mxu0 %v1001
  %v1446 = vpop.f32.mrf.mxu0
  %v1447 = vadd.f32 %v277, %v1446
  %v1448 = vpop.f32.mrf.mxu0
  %v1449 = vadd.f32 %v277, %v1448
  %1450 = vmatmul.bf16.gmra.mxu0 %v1004
  %v1451 = vpop.f32.mrf.mxu0
  %v1452 = vadd.f32 %v277, %v1451
  %v1453 = vpop.f32.mrf.mxu0
  %v1454 = vadd.f32 %v277, %v1453
  %1455 = vmatmul.bf16.gmra.mxu0 %v1007
  %v1456 = vpop.f32.mrf.mxu0
  %v1457 = vadd.f32 %v277, %v1456
  %v1458 = vpop.f32.mrf.mxu0
  %v1459 = vadd.f32 %v277, %v1458
  %1460 = vmatmul.bf16.gmra.mxu0 %v1010
  %v1461 = vpop.f32.mrf.mxu0
  %v1462 = vadd.f32 %v277, %v1461
  %v1463 = vpop.f32.mrf.mxu0
  %v1464 = vadd.f32 %v277, %v1463
  %1465 = vmatmul.bf16.gmra.mxu0 %v1013
  %v1466 = vpop.f32.mrf.mxu0
  %v1467 = vadd.f32 %v277, %v1466
  %v1468 = vpop.f32.mrf.mxu0
  %v1469 = vadd.f32 %v277, %v1468
  %1470 = vmatmul.bf16.gmra.mxu0 %v1016
  %v1471 = vpop.f32.mrf.mxu0
  %v1472 = vadd.f32 %v277, %v1471
  %v1473 = vpop.f32.mrf.mxu0
  %v1474 = vadd.f32 %v277, %v1473
  %1475 = vmatmul.bf16.gmra.mxu0 %v1019
  %v1476 = vpop.f32.mrf.mxu0
  %v1477 = vadd.f32 %v277, %v1476
  %v1478 = vpop.f32.mrf.mxu0
  %v1479 = vadd.f32 %v277, %v1478
  %1480 = vmatmul.bf16.gmra.mxu0 %v1022
  %v1481 = vpop.f32.mrf.mxu0
  %v1482 = vadd.f32 %v277, %v1481
  %v1483 = vpop.f32.mrf.mxu0
  %v1484 = vadd.f32 %v277, %v1483
  %1485 = vmatmul.bf16.gmra.mxu0 %v1025
  %v1486 = vpop.f32.mrf.mxu0
  %v1487 = vadd.f32 %v277, %v1486
  %v1488 = vpop.f32.mrf.mxu0
  %v1489 = vadd.f32 %v277, %v1488
  %1490 = vmatmul.bf16.gmra.mxu0 %v1028
  %v1491 = vpop.f32.mrf.mxu0
  %v1492 = vadd.f32 %v277, %v1491
  %v1493 = vpop.f32.mrf.mxu0
  %v1494 = vadd.f32 %v277, %v1493
  %1495 = vmatmul.bf16.gmra.mxu0 %v1031
  %v1496 = vpop.f32.mrf.mxu0
  %v1497 = vadd.f32 %v277, %v1496
  %v1498 = vpop.f32.mrf.mxu0
  %v1499 = vadd.f32 %v277, %v1498
  %1500 = vmatmul.bf16.gmra.mxu0 %v1034
  %v1501 = vpop.f32.mrf.mxu0
  %v1502 = vadd.f32 %v277, %v1501
  %v1503 = vpop.f32.mrf.mxu0
  %v1504 = vadd.f32 %v277, %v1503
  %1505 = vmatmul.bf16.gmra.mxu0 %v1037
  %v1506 = vpop.f32.mrf.mxu0
  %v1507 = vadd.f32 %v277, %v1506
  %v1508 = vpop.f32.mrf.mxu0
  %v1509 = vadd.f32 %v277, %v1508
  %1510 = vmatmul.bf16.gmra.mxu0 %v1040
  %v1511 = vpop.f32.mrf.mxu0
  %v1512 = vadd.f32 %v277, %v1511
  %v1513 = vpop.f32.mrf.mxu0
  %v1514 = vadd.f32 %v277, %v1513
  %1515 = vmatmul.bf16.gmra.mxu0 %v1043
  %v1516 = vpop.f32.mrf.mxu0
  %v1517 = vadd.f32 %v277, %v1516
  %v1518 = vpop.f32.mrf.mxu0
  %v1519 = vadd.f32 %v277, %v1518
  %1520 = vmatmul.bf16.gmra.mxu0 %v1046
  %v1521 = vpop.f32.mrf.mxu0
  %v1522 = vadd.f32 %v277, %v1521
  %v1523 = vpop.f32.mrf.mxu0
  %v1524 = vadd.f32 %v277, %v1523
  %1525 = vmatmul.bf16.gmra.mxu0 %v1049
  %v1526 = vpop.f32.mrf.mxu0
  %v1527 = vadd.f32 %v277, %v1526
  %v1528 = vpop.f32.mrf.mxu0
  %v1529 = vadd.f32 %v277, %v1528
  %1530 = vmatmul.bf16.gmra.mxu0 %v1052
  %v1531 = vpop.f32.mrf.mxu0
  %v1532 = vadd.f32 %v277, %v1531
  %v1533 = vpop.f32.mrf.mxu0
  %v1534 = vadd.f32 %v277, %v1533
  %1535 = vmatmul.bf16.gmra.mxu0 %v1055
  %v1536 = vpop.f32.mrf.mxu0
  %v1537 = vadd.f32 %v277, %v1536
  %v1538 = vpop.f32.mrf.mxu0
  %v1539 = vadd.f32 %v277, %v1538
  %1540 = vmatmul.bf16.gmra.mxu0 %v1058
  %v1541 = vpop.f32.mrf.mxu0
  %v1542 = vadd.f32 %v277, %v1541
  %v1543 = vpop.f32.mrf.mxu0
  %v1544 = vadd.f32 %v277, %v1543
  %1545 = vmatmul.bf16.gmra.mxu0 %v1061
  %v1546 = vpop.f32.mrf.mxu0
  %v1547 = vadd.f32 %v277, %v1546
  %v1548 = vpop.f32.mrf.mxu0
  %v1549 = vadd.f32 %v277, %v1548
  %1550 = vmatmul.bf16.gmra.mxu0 %v1064
  %v1551 = vpop.f32.mrf.mxu0
  %v1552 = vadd.f32 %v277, %v1551
  %v1553 = vpop.f32.mrf.mxu0
  %v1554 = vadd.f32 %v277, %v1553
  %1555 = vmatmul.bf16.gmra.mxu0 %v1067
  %v1556 = vpop.f32.mrf.mxu0
  %v1557 = vadd.f32 %v277, %v1556
  %v1558 = vpop.f32.mrf.mxu0
  %v1559 = vadd.f32 %v277, %v1558
  %1560 = vmatmul.bf16.gmra.mxu0 %v1070
  %v1561 = vpop.f32.mrf.mxu0
  %v1562 = vadd.f32 %v277, %v1561
  %v1563 = vpop.f32.mrf.mxu0
  %v1564 = vadd.f32 %v277, %v1563
  %1565 = vmatmul.bf16.gmra.mxu0 %v1073
  %v1566 = vpop.f32.mrf.mxu0
  %v1567 = vadd.f32 %v277, %v1566
  %v1568 = vpop.f32.mrf.mxu0
  %v1569 = vadd.f32 %v277, %v1568
  %1570 = vmatmul.bf16.gmra.mxu0 %v1076
  %v1571 = vpop.f32.mrf.mxu0
  %v1572 = vadd.f32 %v277, %v1571
  %v1573 = vpop.f32.mrf.mxu0
  %v1574 = vadd.f32 %v277, %v1573
  %1575 = vmatmul.bf16.gmra.mxu0 %v1079
  %v1576 = vpop.f32.mrf.mxu0
  %v1577 = vadd.f32 %v277, %v1576
  %v1578 = vpop.f32.mrf.mxu0
  %v1579 = vadd.f32 %v277, %v1578
  %1580 = vmatmul.bf16.gmra.mxu0 %v1082
  %v1581 = vpop.f32.mrf.mxu0
  %v1582 = vadd.f32 %v277, %v1581
  %v1583 = vpop.f32.mrf.mxu0
  %v1584 = vadd.f32 %v277, %v1583
  %1585 = vmatmul.bf16.gmra.mxu0 %v1085
  %v1586 = vpop.f32.mrf.mxu0
  %v1587 = vadd.f32 %v277, %v1586
  %v1588 = vpop.f32.mrf.mxu0
  %v1589 = vadd.f32 %v277, %v1588
  %1590 = vmatmul.bf16.gmra.mxu0 %v1088
  %v1591 = vpop.f32.mrf.mxu0
  %v1592 = vadd.f32 %v277, %v1591
  %v1593 = vpop.f32.mrf.mxu0
  %v1594 = vadd.f32 %v277, %v1593
  %1595 = vmatmul.bf16.gmra.mxu0 %v1091
  %v1596 = vpop.f32.mrf.mxu0
  %v1597 = vadd.f32 %v277, %v1596
  %v1598 = vpop.f32.mrf.mxu0
  %v1599 = vadd.f32 %v277, %v1598
  %1600 = vmatmul.bf16.gmra.mxu0 %v1094
  %v1601 = vpop.f32.mrf.mxu0
  %v1602 = vadd.f32 %v277, %v1601
  %v1603 = vpop.f32.mrf.mxu0
  %v1604 = vadd.f32 %v277, %v1603
  %1605 = vmatmul.bf16.gmra.mxu0 %v1097
  %v1606 = vpop.f32.mrf.mxu0
  %v1607 = vadd.f32 %v277, %v1606
  %v1608 = vpop.f32.mrf.mxu0
  %v1609 = vadd.f32 %v277, %v1608
  %1610 = vmatmul.bf16.gmra.mxu0 %v1100
  %v1611 = vpop.f32.mrf.mxu0
  %v1612 = vadd.f32 %v277, %v1611
  %v1613 = vpop.f32.mrf.mxu0
  %v1614 = vadd.f32 %v277, %v1613
  %1615 = vmatmul.bf16.gmra.mxu0 %v1103
  %v1616 = vpop.f32.mrf.mxu0
  %v1617 = vadd.f32 %v277, %v1616
  %v1618 = vpop.f32.mrf.mxu0
  %v1619 = vadd.f32 %v277, %v1618
  %1620 = vmatmul.bf16.gmra.mxu0 %v1106
  %v1621 = vpop.f32.mrf.mxu0
  %v1622 = vadd.f32 %v277, %v1621
  %v1623 = vpop.f32.mrf.mxu0
  %v1624 = vadd.f32 %v277, %v1623
  %1625 = vmatmul.bf16.gmra.mxu0 %v1109
  %v1626 = vpop.f32.mrf.mxu0
  %v1627 = vadd.f32 %v277, %v1626
  %v1628 = vpop.f32.mrf.mxu0
  %v1629 = vadd.f32 %v277, %v1628
  %1630 = vmatmul.bf16.gmra.mxu0 %v1112
  %v1631 = vpop.f32.mrf.mxu0
  %v1632 = vadd.f32 %v277, %v1631
  %v1633 = vpop.f32.mrf.mxu0
  %v1634 = vadd.f32 %v277, %v1633
  %1635 = vmatmul.bf16.gmra.mxu0 %v1115
  %v1636 = vpop.f32.mrf.mxu0
  %v1637 = vadd.f32 %v277, %v1636
  %v1638 = vpop.f32.mrf.mxu0
  %v1639 = vadd.f32 %v277, %v1638
  %1640 = vmatmul.bf16.gmra.mxu0 %v1118
  %v1641 = vpop.f32.mrf.mxu0
  %v1642 = vadd.f32 %v277, %v1641
  %v1643 = vpop.f32.mrf.mxu0
  %v1644 = vadd.f32 %v277, %v1643
  %1645 = vmatmul.bf16.gmra.mxu0 %v1121
  %v1646 = vpop.f32.mrf.mxu0
  %v1647 = vadd.f32 %v277, %v1646
  %v1648 = vpop.f32.mrf.mxu0
  %v1649 = vadd.f32 %v277, %v1648
  %1650 = vmatmul.bf16.gmra.mxu0 %v1124
  %v1651 = vpop.f32.mrf.mxu0
  %v1652 = vadd.f32 %v277, %v1651
  %v1653 = vpop.f32.mrf.mxu0
  %v1654 = vadd.f32 %v277, %v1653
  %1655 = vmatmul.bf16.gmra.mxu0 %v1127
  %v1656 = vpop.f32.mrf.mxu0
  %v1657 = vadd.f32 %v277, %v1656
  %v1658 = vpop.f32.mrf.mxu0
  %v1659 = vadd.f32 %v277, %v1658
  %1660 = vmatmul.bf16.gmra.mxu0 %v1130
  %v1661 = vpop.f32.mrf.mxu0
  %v1662 = vadd.f32 %v277, %v1661
  %v1663 = vpop.f32.mrf.mxu0
  %v1664 = vadd.f32 %v277, %v1663
  %1665 = vmatmul.bf16.gmra.mxu0 %v1133
  %v1666 = vpop.f32.mrf.mxu0
  %v1667 = vadd.f32 %v277, %v1666
  %v1668 = vpop.f32.mrf.mxu0
  %v1669 = vadd.f32 %v277, %v1668
  %1670 = vmatmul.bf16.gmra.mxu0 %v1136
  %v1671 = vpop.f32.mrf.mxu0
  %v1672 = vadd.f32 %v277, %v1671
  %v1673 = vpop.f32.mrf.mxu0
  %v1674 = vadd.f32 %v277, %v1673
  %1675 = vmatmul.bf16.gmra.mxu0 %v1139
  %v1676 = vpop.f32.mrf.mxu0
  %v1677 = vadd.f32 %v277, %v1676
  %v1678 = vpop.f32.mrf.mxu0
  %v1679 = vadd.f32 %v277, %v1678
  %1680 = vmatmul.bf16.gmra.mxu0 %v1142
  %v1681 = vpop.f32.mrf.mxu0
  %v1682 = vadd.f32 %v277, %v1681
  %v1683 = vpop.f32.mrf.mxu0
  %v1684 = vadd.f32 %v277, %v1683
  %1685 = vmatmul.bf16.gmra.mxu0 %v1145
  %v1686 = vpop.f32.mrf.mxu0
  %v1687 = vadd.f32 %v277, %v1686
  %v1688 = vpop.f32.mrf.mxu0
  %v1689 = vadd.f32 %v277, %v1688
  %1690 = vmatmul.bf16.gmra.mxu0 %v1148
  %v1691 = vpop.f32.mrf.mxu0
  %v1692 = vadd.f32 %v277, %v1691
  %v1693 = vpop.f32.mrf.mxu0
  %v1694 = vadd.f32 %v277, %v1693
  %1695 = vmatmul.bf16.gmra.mxu0 %v1151
  %v1696 = vpop.f32.mrf.mxu0
  %v1697 = vadd.f32 %v277, %v1696
  %v1698 = vpop.f32.mrf.mxu0
  %v1699 = vadd.f32 %v277, %v1698
  %1700 = vmatmul.bf16.gmra.mxu0 %v1154
  %v1701 = vpop.f32.mrf.mxu0
  %v1702 = vadd.f32 %v277, %v1701
  %v1703 = vpop.f32.mrf.mxu0
  %v1704 = vadd.f32 %v277, %v1703
  %1705 = vmatmul.bf16.gmra.mxu0 %v1157
  %v1706 = vpop.f32.mrf.mxu0
  %v1707 = vadd.f32 %v277, %v1706
  %v1708 = vpop.f32.mrf.mxu0
  %v1709 = vadd.f32 %v277, %v1708
  %1710 = vmatmul.bf16.gmra.mxu0 %v1160
  %v1711 = vpop.f32.mrf.mxu0
  %v1712 = vadd.f32 %v277, %v1711
  %v1713 = vpop.f32.mrf.mxu0
  %v1714 = vadd.f32 %v277, %v1713
  %1715 = vmatmul.bf16.gmra.mxu0 %v1163
  %v1716 = vpop.f32.mrf.mxu0
  %v1717 = vadd.f32 %v277, %v1716
  %v1718 = vpop.f32.mrf.mxu0
  %v1719 = vadd.f32 %v277, %v1718
  %1720 = vmatmul.bf16.gmra.mxu0 %v1166
  %v1721 = vpop.f32.mrf.mxu0
  %v1722 = vadd.f32 %v277, %v1721
  %v1723 = vpop.f32.mrf.mxu0
  %v1724 = vadd.f32 %v277, %v1723
  %1725 = vmatmul.bf16.gmra.mxu0 %v1169
  %v1726 = vpop.f32.mrf.mxu0
  %v1727 = vadd.f32 %v277, %v1726
  %v1728 = vpop.f32.mrf.mxu0
  %v1729 = vadd.f32 %v277, %v1728
  %1730 = vmatmul.bf16.gmra.mxu0 %v1172
  %v1731 = vpop.f32.mrf.mxu0
  %v1732 = vadd.f32 %v277, %v1731
  %v1733 = vpop.f32.mrf.mxu0
  %v1734 = vadd.f32 %v277, %v1733
  %1735 = vmatmul.bf16.gmra.mxu0 %v1175
  %v1736 = vpop.f32.mrf.mxu0
  %v1737 = vadd.f32 %v277, %v1736
  %v1738 = vpop.f32.mrf.mxu0
  %v1739 = vadd.f32 %v277, %v1738
  %1740 = vmatmul.bf16.gmra.mxu0 %v1178
  %v1741 = vpop.f32.mrf.mxu0
  %v1742 = vadd.f32 %v277, %v1741
  %v1743 = vpop.f32.mrf.mxu0
  %v1744 = vadd.f32 %v277, %v1743
  %1745 = vmatmul.bf16.gmra.mxu0 %v1181
  %v1746 = vpop.f32.mrf.mxu0
  %v1747 = vadd.f32 %v277, %v1746
  %v1748 = vpop.f32.mrf.mxu0
  %v1749 = vadd.f32 %v277, %v1748
  %1750 = vmatmul.bf16.gmra.mxu0 %v1184
  %v1751 = vpop.f32.mrf.mxu0
  %v1752 = vadd.f32 %v277, %v1751
  %v1753 = vpop.f32.mrf.mxu0
  %v1754 = vadd.f32 %v277, %v1753
  %1755 = vmatmul.bf16.gmra.mxu0 %v1187
  %v1756 = vpop.f32.mrf.mxu0
  %v1757 = vadd.f32 %v277, %v1756
  %v1758 = vpop.f32.mrf.mxu0
  %v1759 = vadd.f32 %v277, %v1758
  %1760 = vmatmul.bf16.gmra.mxu0 %v1190
  %v1761 = vpop.f32.mrf.mxu0
  %v1762 = vadd.f32 %v277, %v1761
  %v1763 = vpop.f32.mrf.mxu0
  %v1764 = vadd.f32 %v277, %v1763
  %1765 = vmatmul.bf16.gmra.mxu0 %v1193
  %v1766 = vpop.f32.mrf.mxu0
  %v1767 = vadd.f32 %v277, %v1766
  %v1768 = vpop.f32.mrf.mxu0
  %v1769 = vadd.f32 %v277, %v1768
  %1770 = vmatmul.bf16.gmra.mxu0 %v1196
  %v1771 = vpop.f32.mrf.mxu0
  %v1772 = vadd.f32 %v277, %v1771
  %v1773 = vpop.f32.mrf.mxu0
  %v1774 = vadd.f32 %v277, %v1773
  %1775 = vmatmul.bf16.gmra.mxu0 %v1199
  %v1776 = vpop.f32.mrf.mxu0
  %v1777 = vadd.f32 %v277, %v1776
  %v1778 = vpop.f32.mrf.mxu0
  %v1779 = vadd.f32 %v277, %v1778
  %1780 = vmatmul.bf16.gmra.mxu0 %v1202
  %v1781 = vpop.f32.mrf.mxu0
  %v1782 = vadd.f32 %v277, %v1781
  %v1783 = vpop.f32.mrf.mxu0
  %v1784 = vadd.f32 %v277, %v1783
  %1785 = vmatmul.bf16.gmra.mxu0 %v1205
  %v1786 = vpop.f32.mrf.mxu0
  %v1787 = vadd.f32 %v277, %v1786
  %v1788 = vpop.f32.mrf.mxu0
  %v1789 = vadd.f32 %v277, %v1788
  %1790 = vmatmul.bf16.gmra.mxu0 %v1208
  %v1791 = vpop.f32.mrf.mxu0
  %v1792 = vadd.f32 %v277, %v1791
  %v1793 = vpop.f32.mrf.mxu0
  %v1794 = vadd.f32 %v277, %v1793
  %1795 = vmatmul.bf16.gmra.mxu0 %v1211
  %v1796 = vpop.f32.mrf.mxu0
  %v1797 = vadd.f32 %v277, %v1796
  %v1798 = vpop.f32.mrf.mxu0
  %v1799 = vadd.f32 %v277, %v1798
  %1800 = vmatmul.bf16.gmra.mxu0 %v1214
  %v1801 = vpop.f32.mrf.mxu0
  %v1802 = vadd.f32 %v277, %v1801
  %v1803 = vpop.f32.mrf.mxu0
  %v1804 = vadd.f32 %v277, %v1803
  %1805 = vmatmul.bf16.gmra.mxu0 %v1217
  %v1806 = vpop.f32.mrf.mxu0
  %v1807 = vadd.f32 %v277, %v1806
  %v1808 = vpop.f32.mrf.mxu0
  %v1809 = vadd.f32 %v277, %v1808
  %1810 = vmatmul.bf16.gmra.mxu0 %v1220
  %v1811 = vpop.f32.mrf.mxu0
  %v1812 = vadd.f32 %v277, %v1811
  %v1813 = vpop.f32.mrf.mxu0
  %v1814 = vadd.f32 %v277, %v1813
  %1815 = vmatmul.bf16.gmra.mxu0 %v1223
  %v1816 = vpop.f32.mrf.mxu0
  %v1817 = vadd.f32 %v277, %v1816
  %v1818 = vpop.f32.mrf.mxu0
  %v1819 = vadd.f32 %v277, %v1818
  %1820 = vmatmul.bf16.gmra.mxu0 %v1226
  %v1821 = vpop.f32.mrf.mxu0
  %v1822 = vadd.f32 %v277, %v1821
  %v1823 = vpop.f32.mrf.mxu0
  %v1824 = vadd.f32 %v277, %v1823
  %1825 = vmatmul.bf16.gmra.mxu0 %v1229
  %v1826 = vpop.f32.mrf.mxu0
  %v1827 = vadd.f32 %v277, %v1826
  %v1828 = vpop.f32.mrf.mxu0
  %v1829 = vadd.f32 %v277, %v1828
  %1830 = vmatmul.bf16.gmra.mxu0 %v1232
  %v1831 = vpop.f32.mrf.mxu0
  %v1832 = vadd.f32 %v277, %v1831
  %v1833 = vpop.f32.mrf.mxu0
  %v1834 = vadd.f32 %v277, %v1833
  %1835 = vmatmul.bf16.gmra.mxu0 %v1235
  %v1836 = vpop.f32.mrf.mxu0
  %v1837 = vadd.f32 %v277, %v1836
  %v1838 = vpop.f32.mrf.mxu0
  %v1839 = vadd.f32 %v277, %v1838
  %1840 = vmatmul.bf16.gmra.mxu0 %v1238
  %v1841 = vpop.f32.mrf.mxu0
  %v1842 = vadd.f32 %v277, %v1841
  %v1843 = vpop.f32.mrf.mxu0
  %v1844 = vadd.f32 %v277, %v1843
  %1845 = vmatmul.bf16.gmra.mxu0 %v1241
  %v1846 = vpop.f32.mrf.mxu0
  %v1847 = vadd.f32 %v277, %v1846
  %v1848 = vpop.f32.mrf.mxu0
  %v1849 = vadd.f32 %v277, %v1848
  %1850 = vmatmul.bf16.gmra.mxu0 %v1244
  %v1851 = vpop.f32.mrf.mxu0
  %v1852 = vadd.f32 %v277, %v1851
  %v1853 = vpop.f32.mrf.mxu0
  %v1854 = vadd.f32 %v277, %v1853
  %1855 = vmatmul.bf16.gmra.mxu0 %v1247
  %v1856 = vpop.f32.mrf.mxu0
  %v1857 = vadd.f32 %v277, %v1856
  %v1858 = vpop.f32.mrf.mxu0
  %v1859 = vadd.f32 %v277, %v1858
  %1860 = vmatmul.bf16.gmra.mxu0 %v1250
  %v1861 = vpop.f32.mrf.mxu0
  %v1862 = vadd.f32 %v277, %v1861
  %v1863 = vpop.f32.mrf.mxu0
  %v1864 = vadd.f32 %v277, %v1863
  %1865 = vmatmul.bf16.gmra.mxu0 %v1253
  %v1866 = vpop.f32.mrf.mxu0
  %v1867 = vadd.f32 %v277, %v1866
  %v1868 = vpop.f32.mrf.mxu0
  %v1869 = vadd.f32 %v277, %v1868
  %1870 = vmatmul.bf16.gmra.mxu0 %v1256
  %v1871 = vpop.f32.mrf.mxu0
  %v1872 = vadd.f32 %v277, %v1871
  %v1873 = vpop.f32.mrf.mxu0
  %v1874 = vadd.f32 %v277, %v1873
  %1875 = vmatmul.bf16.gmra.mxu0 %v1259
  %v1876 = vpop.f32.mrf.mxu0
  %v1877 = vadd.f32 %v277, %v1876
  %v1878 = vpop.f32.mrf.mxu0
  %v1879 = vadd.f32 %v277, %v1878
  %1880 = vmatmul.bf16.gmra.mxu0 %v1262
  %v1881 = vpop.f32.mrf.mxu0
  %v1882 = vadd.f32 %v277, %v1881
  %v1883 = vpop.f32.mrf.mxu0
  %v1884 = vadd.f32 %v277, %v1883
  %1885 = vmatmul.bf16.gmra.mxu0 %v1265
  %v1886 = vpop.f32.mrf.mxu0
  %v1887 = vadd.f32 %v277, %v1886
  %v1888 = vpop.f32.mrf.mxu0
  %v1889 = vadd.f32 %v277, %v1888
  %1890 = vmatmul.bf16.gmra.mxu0 %v1268
  %v1891 = vpop.f32.mrf.mxu0
  %v1892 = vadd.f32 %v277, %v1891
  %v1893 = vpop.f32.mrf.mxu0
  %v1894 = vadd.f32 %v277, %v1893
  %1895 = vmatmul.bf16.gmra.mxu0 %v1271
  %v1896 = vpop.f32.mrf.mxu0
  %v1897 = vadd.f32 %v277, %v1896
  %v1898 = vpop.f32.mrf.mxu0
  %v1899 = vadd.f32 %v277, %v1898
  %1900 = vmatmul.bf16.gmra.mxu0 %v1274
  %v1901 = vpop.f32.mrf.mxu0
  %v1902 = vadd.f32 %v277, %v1901
  %v1903 = vpop.f32.mrf.mxu0
  %v1904 = vadd.f32 %v277, %v1903
  %1905 = vmatmul.bf16.gmra.mxu0 %v1277
  %v1906 = vpop.f32.mrf.mxu0
  %v1907 = vadd.f32 %v277, %v1906
  %v1908 = vpop.f32.mrf.mxu0
  %v1909 = vadd.f32 %v277, %v1908
  %1910 = vmatmul.bf16.gmra.mxu0 %v1280
  %v1911 = vpop.f32.mrf.mxu0
  %v1912 = vadd.f32 %v277, %v1911
  %v1913 = vpop.f32.mrf.mxu0
  %v1914 = vadd.f32 %v277, %v1913
  %1915 = vmatmul.bf16.gmra.mxu0 %v1283
  %v1916 = vpop.f32.mrf.mxu0
  %v1917 = vadd.f32 %v277, %v1916
  %v1918 = vpop.f32.mrf.mxu0
  %v1919 = vadd.f32 %v277, %v1918
  %1920 = vmatmul.bf16.gmra.mxu0 %v1286
  %v1921 = vpop.f32.mrf.mxu0
  %v1922 = vadd.f32 %v277, %v1921
  %v1923 = vpop.f32.mrf.mxu0
  %v1924 = vadd.f32 %v277, %v1923
  %1925 = vmatmul.bf16.gmra.mxu0 %v1289
  %v1926 = vpop.f32.mrf.mxu0
  %v1927 = vadd.f32 %v277, %v1926
  %v1928 = vpop.f32.mrf.mxu0
  %v1929 = vadd.f32 %v277, %v1928
  %1930 = vmatmul.bf16.gmra.mxu0 %v1292
  %v1931 = vpop.f32.mrf.mxu0
  %v1932 = vadd.f32 %v277, %v1931
  %v1933 = vpop.f32.mrf.mxu0
  %v1934 = vadd.f32 %v277, %v1933
  %1935 = vmatmul.bf16.gmra.mxu0 %v1295
  %v1936 = vpop.f32.mrf.mxu0
  %v1937 = vadd.f32 %v277, %v1936
  %v1938 = vpop.f32.mrf.mxu0
  %v1939 = vadd.f32 %v277, %v1938
  %1940 = vmatmul.bf16.gmra.mxu0 %v1298
  %v1941 = vpop.f32.mrf.mxu0
  %v1942 = vadd.f32 %v277, %v1941
  %v1943 = vpop.f32.mrf.mxu0
  %v1944 = vadd.f32 %v277, %v1943
  %1945 = vmatmul.bf16.gmra.mxu0 %v1301
  %v1946 = vpop.f32.mrf.mxu0
  %v1947 = vadd.f32 %v277, %v1946
  %v1948 = vpop.f32.mrf.mxu0
  %v1949 = vadd.f32 %v277, %v1948
  %1950 = vmatmul.bf16.gmra.mxu0 %v1304
  %v1951 = vpop.f32.mrf.mxu0
  %v1952 = vadd.f32 %v277, %v1951
  %v1953 = vpop.f32.mrf.mxu0
  %v1954 = vadd.f32 %v277, %v1953
  %1955 = vmatmul.bf16.gmra.mxu0 %v1307
  %v1956 = vpop.f32.mrf.mxu0
  %v1957 = vadd.f32 %v277, %v1956
  %v1958 = vpop.f32.mrf.mxu0
  %v1959 = vadd.f32 %v277, %v1958
  %1960 = vmatmul.bf16.gmra.mxu0 %v1310
  %v1961 = vpop.f32.mrf.mxu0
  %v1962 = vadd.f32 %v277, %v1961
  %v1963 = vpop.f32.mrf.mxu0
  %v1964 = vadd.f32 %v277, %v1963
  %1965 = vmatmul.bf16.gmra.mxu0 %v1313
  %v1966 = vpop.f32.mrf.mxu0
  %v1967 = vadd.f32 %v277, %v1966
  %v1968 = vpop.f32.mrf.mxu0
  %v1969 = vadd.f32 %v277, %v1968
  %1970 = vdwg.mxu0
  %v1971 = vmax.f32 %v1332, 0.0
  %v1972 = vmax.f32 %v1334, 0.0
  %v1973 = vmax.f32 %v1337, 0.0
  %v1974 = vmax.f32 %v1339, 0.0
  %v1975 = vmax.f32 %v1342, 0.0
  %v1976 = vmax.f32 %v1344, 0.0
  %v1977 = vmax.f32 %v1347, 0.0
  %v1978 = vmax.f32 %v1349, 0.0
  %v1979 = vmax.f32 %v1352, 0.0
  %v1980 = vmax.f32 %v1354, 0.0
  %v1981 = vmax.f32 %v1357, 0.0
  %v1982 = vmax.f32 %v1359, 0.0
  %v1983 = vmax.f32 %v1362, 0.0
  %v1984 = vmax.f32 %v1364, 0.0
  %v1985 = vmax.f32 %v1367, 0.0
  %v1986 = vmax.f32 %v1369, 0.0
  %v1987 = vmax.f32 %v1372, 0.0
  %v1988 = vmax.f32 %v1374, 0.0
  %v1989 = vmax.f32 %v1377, 0.0
  %v1990 = vmax.f32 %v1379, 0.0
  %v1991 = vmax.f32 %v1382, 0.0
  %v1992 = vmax.f32 %v1384, 0.0
  %v1993 = vmax.f32 %v1387, 0.0
  %v1994 = vmax.f32 %v1389, 0.0
  %v1995 = vmax.f32 %v1392, 0.0
  %v1996 = vmax.f32 %v1394, 0.0
  %v1997 = vmax.f32 %v1397, 0.0
  %v1998 = vmax.f32 %v1399, 0.0
  %v1999 = vmax.f32 %v1402, 0.0
  %v2000 = vmax.f32 %v1404, 0.0
  %v2001 = vmax.f32 %v1407, 0.0
  %v2002 = vmax.f32 %v1409, 0.0
  %v2003 = vmax.f32 %v1412, 0.0
  %v2004 = vmax.f32 %v1414, 0.0
  %v2005 = vmax.f32 %v1417, 0.0
  %v2006 = vmax.f32 %v1419, 0.0
  %v2007 = vmax.f32 %v1422, 0.0
  %v2008 = vmax.f32 %v1424, 0.0
  %v2009 = vmax.f32 %v1427, 0.0
  %v2010 = vmax.f32 %v1429, 0.0
  %v2011 = vmax.f32 %v1432, 0.0
  %v2012 = vmax.f32 %v1434, 0.0
  %v2013 = vmax.f32 %v1437, 0.0
  %v2014 = vmax.f32 %v1439, 0.0
  %v2015 = vmax.f32 %v1442, 0.0
  %v2016 = vmax.f32 %v1444, 0.0
  %v2017 = vmax.f32 %v1447, 0.0
  %v2018 = vmax.f32 %v1449, 0.0
  %v2019 = vmax.f32 %v1452, 0.0
  %v2020 = vmax.f32 %v1454, 0.0
  %v2021 = vmax.f32 %v1457, 0.0
  %v2022 = vmax.f32 %v1459, 0.0
  %v2023 = vmax.f32 %v1462, 0.0
  %v2024 = vmax.f32 %v1464, 0.0
  %v2025 = vmax.f32 %v1467, 0.0
  %v2026 = vmax.f32 %v1469, 0.0
  %v2027 = vmax.f32 %v1472, 0.0
  %v2028 = vmax.f32 %v1474, 0.0
  %v2029 = vmax.f32 %v1477, 0.0
  %v2030 = vmax.f32 %v1479, 0.0
  %v2031 = vmax.f32 %v1482, 0.0
  %v2032 = vmax.f32 %v1484, 0.0
  %v2033 = vmax.f32 %v1487, 0.0
  %v2034 = vmax.f32 %v1489, 0.0
  %v2035 = vmax.f32 %v1492, 0.0
  %v2036 = vmax.f32 %v1494, 0.0
  %v2037 = vmax.f32 %v1497, 0.0
  %v2038 = vmax.f32 %v1499, 0.0
  %v2039 = vmax.f32 %v1502, 0.0
  %v2040 = vmax.f32 %v1504, 0.0
  %v2041 = vmax.f32 %v1507, 0.0
  %v2042 = vmax.f32 %v1509, 0.0
  %v2043 = vmax.f32 %v1512, 0.0
  %v2044 = vmax.f32 %v1514, 0.0
  %v2045 = vmax.f32 %v1517, 0.0
  %v2046 = vmax.f32 %v1519, 0.0
  %v2047 = vmax.f32 %v1522, 0.0
  %v2048 = vmax.f32 %v1524, 0.0
  %v2049 = vmax.f32 %v1527, 0.0
  %v2050 = vmax.f32 %v1529, 0.0
  %v2051 = vmax.f32 %v1532, 0.0
  %v2052 = vmax.f32 %v1534, 0.0
  %v2053 = vmax.f32 %v1537, 0.0
  %v2054 = vmax.f32 %v1539, 0.0
  %v2055 = vmax.f32 %v1542, 0.0
  %v2056 = vmax.f32 %v1544, 0.0
  %v2057 = vmax.f32 %v1547, 0.0
  %v2058 = vmax.f32 %v1549, 0.0
  %v2059 = vmax.f32 %v1552, 0.0
  %v2060 = vmax.f32 %v1554, 0.0
  %v2061 = vmax.f32 %v1557, 0.0
  %v2062 = vmax.f32 %v1559, 0.0
  %v2063 = vmax.f32 %v1562, 0.0
  %v2064 = vmax.f32 %v1564, 0.0
  %v2065 = vmax.f32 %v1567, 0.0
  %v2066 = vmax.f32 %v1569, 0.0
  %v2067 = vmax.f32 %v1572, 0.0
  %v2068 = vmax.f32 %v1574, 0.0
  %v2069 = vmax.f32 %v1577, 0.0
  %v2070 = vmax.f32 %v1579, 0.0
  %v2071 = vmax.f32 %v1582, 0.0
  %v2072 = vmax.f32 %v1584, 0.0
  %v2073 = vmax.f32 %v1587, 0.0
  %v2074 = vmax.f32 %v1589, 0.0
  %v2075 = vmax.f32 %v1592, 0.0
  %v2076 = vmax.f32 %v1594, 0.0
  %v2077 = vmax.f32 %v1597, 0.0
  %v2078 = vmax.f32 %v1599, 0.0
  %v2079 = vmax.f32 %v1602, 0.0
  %v2080 = vmax.f32 %v1604, 0.0
  %v2081 = vmax.f32 %v1607, 0.0
  %v2082 = vmax.f32 %v1609, 0.0
  %v2083 = vmax.f32 %v1612, 0.0
  %v2084 = vmax.f32 %v1614, 0.0
  %v2085 = vmax.f32 %v1617, 0.0
  %v2086 = vmax.f32 %v1619, 0.0
  %v2087 = vmax.f32 %v1622, 0.0
  %v2088 = vmax.f32 %v1624, 0.0
  %v2089 = vmax.f32 %v1627, 0.0
  %v2090 = vmax.f32 %v1629, 0.0
  %v2091 = vmax.f32 %v1632, 0.0
  %v2092 = vmax.f32 %v1634, 0.0
  %v2093 = vmax.f32 %v1637, 0.0
  %v2094 = vmax.f32 %v1639, 0.0
  %v2095 = vmax.f32 %v1642, 0.0
  %v2096 = vmax.f32 %v1644, 0.0
  %v2097 = vmax.f32 %v1647, 0.0
  %v2098 = vmax.f32 %v1649, 0.0
  %v2099 = vmax.f32 %v1652, 0.0
  %v2100 = vmax.f32 %v1654, 0.0
  %v2101 = vmax.f32 %v1657, 0.0
  %v2102 = vmax.f32 %v1659, 0.0
  %v2103 = vmax.f32 %v1662, 0.0
  %v2104 = vmax.f32 %v1664, 0.0
  %v2105 = vmax.f32 %v1667, 0.0
  %v2106 = vmax.f32 %v1669, 0.0
  %v2107 = vmax.f32 %v1672, 0.0
  %v2108 = vmax.f32 %v1674, 0.0
  %v2109 = vmax.f32 %v1677, 0.0
  %v2110 = vmax.f32 %v1679, 0.0
  %v2111 = vmax.f32 %v1682, 0.0
  %v2112 = vmax.f32 %v1684, 0.0
  %v2113 = vmax.f32 %v1687, 0.0
  %v2114 = vmax.f32 %v1689, 0.0
  %v2115 = vmax.f32 %v1692, 0.0
  %v2116 = vmax.f32 %v1694, 0.0
  %v2117 = vmax.f32 %v1697, 0.0
  %v2118 = vmax.f32 %v1699, 0.0
  %v2119 = vmax.f32 %v1702, 0.0
  %v2120 = vmax.f32 %v1704, 0.0
  %v2121 = vmax.f32 %v1707, 0.0
  %v2122 = vmax.f32 %v1709, 0.0
  %v2123 = vmax.f32 %v1712, 0.0
  %v2124 = vmax.f32 %v1714, 0.0
  %v2125 = vmax.f32 %v1717, 0.0
  %v2126 = vmax.f32 %v1719, 0.0
  %v2127 = vmax.f32 %v1722, 0.0
  %v2128 = vmax.f32 %v1724, 0.0
  %v2129 = vmax.f32 %v1727, 0.0
  %v2130 = vmax.f32 %v1729, 0.0
  %v2131 = vmax.f32 %v1732, 0.0
  %v2132 = vmax.f32 %v1734, 0.0
  %v2133 = vmax.f32 %v1737, 0.0
  %v2134 = vmax.f32 %v1739, 0.0
  %v2135 = vmax.f32 %v1742, 0.0
  %v2136 = vmax.f32 %v1744, 0.0
  %v2137 = vmax.f32 %v1747, 0.0
  %v2138 = vmax.f32 %v1749, 0.0
  %v2139 = vmax.f32 %v1752, 0.0
  %v2140 = vmax.f32 %v1754, 0.0
  %v2141 = vmax.f32 %v1757, 0.0
  %v2142 = vmax.f32 %v1759, 0.0
  %v2143 = vmax.f32 %v1762, 0.0
  %v2144 = vmax.f32 %v1764, 0.0
  %v2145 = vmax.f32 %v1767, 0.0
  %v2146 = vmax.f32 %v1769, 0.0
  %v2147 = vmax.f32 %v1772, 0.0
  %v2148 = vmax.f32 %v1774, 0.0
  %v2149 = vmax.f32 %v1777, 0.0
  %v2150 = vmax.f32 %v1779, 0.0
  %v2151 = vmax.f32 %v1782, 0.0
  %v2152 = vmax.f32 %v1784, 0.0
  %v2153 = vmax.f32 %v1787, 0.0
  %v2154 = vmax.f32 %v1789, 0.0
  %v2155 = vmax.f32 %v1792, 0.0
  %v2156 = vmax.f32 %v1794, 0.0
  %v2157 = vmax.f32 %v1797, 0.0
  %v2158 = vmax.f32 %v1799, 0.0
  %v2159 = vmax.f32 %v1802, 0.0
  %v2160 = vmax.f32 %v1804, 0.0
  %v2161 = vmax.f32 %v1807, 0.0
  %v2162 = vmax.f32 %v1809, 0.0
  %v2163 = vmax.f32 %v1812, 0.0
  %v2164 = vmax.f32 %v1814, 0.0
  %v2165 = vmax.f32 %v1817, 0.0
  %v2166 = vmax.f32 %v1819, 0.0
  %v2167 = vmax.f32 %v1822, 0.0
  %v2168 = vmax.f32 %v1824, 0.0
  %v2169 = vmax.f32 %v1827, 0.0
  %v2170 = vmax.f32 %v1829, 0.0
  %v2171 = vmax.f32 %v1832, 0.0
  %v2172 = vmax.f32 %v1834, 0.0
  %v2173 = vmax.f32 %v1837, 0.0
  %v2174 = vmax.f32 %v1839, 0.0
  %v2175 = vmax.f32 %v1842, 0.0
  %v2176 = vmax.f32 %v1844, 0.0
  %v2177 = vmax.f32 %v1847, 0.0
  %v2178 = vmax.f32 %v1849, 0.0
  %v2179 = vmax.f32 %v1852, 0.0
  %v2180 = vmax.f32 %v1854, 0.0
  %v2181 = vmax.f32 %v1857, 0.0
  %v2182 = vmax.f32 %v1859, 0.0
  %v2183 = vmax.f32 %v1862, 0.0
  %v2184 = vmax.f32 %v1864, 0.0
  %v2185 = vmax.f32 %v1867, 0.0
  %v2186 = vmax.f32 %v1869, 0.0
  %v2187 = vmax.f32 %v1872, 0.0
  %v2188 = vmax.f32 %v1874, 0.0
  %v2189 = vmax.f32 %v1877, 0.0
  %v2190 = vmax.f32 %v1879, 0.0
  %v2191 = vmax.f32 %v1882, 0.0
  %v2192 = vmax.f32 %v1884, 0.0
  %v2193 = vmax.f32 %v1887, 0.0
  %v2194 = vmax.f32 %v1889, 0.0
  %v2195 = vmax.f32 %v1892, 0.0
  %v2196 = vmax.f32 %v1894, 0.0
  %v2197 = vmax.f32 %v1897, 0.0
  %v2198 = vmax.f32 %v1899, 0.0
  %v2199 = vmax.f32 %v1902, 0.0
  %v2200 = vmax.f32 %v1904, 0.0
  %v2201 = vmax.f32 %v1907, 0.0
  %v2202 = vmax.f32 %v1909, 0.0
  %v2203 = vmax.f32 %v1912, 0.0
  %v2204 = vmax.f32 %v1914, 0.0
  %v2205 = vmax.f32 %v1917, 0.0
  %v2206 = vmax.f32 %v1919, 0.0
  %v2207 = vmax.f32 %v1922, 0.0
  %v2208 = vmax.f32 %v1924, 0.0
  %v2209 = vmax.f32 %v1927, 0.0
  %v2210 = vmax.f32 %v1929, 0.0
  %v2211 = vmax.f32 %v1932, 0.0
  %v2212 = vmax.f32 %v1934, 0.0
  %v2213 = vmax.f32 %v1937, 0.0
  %v2214 = vmax.f32 %v1939, 0.0
  %v2215 = vmax.f32 %v1942, 0.0
  %v2216 = vmax.f32 %v1944, 0.0
  %v2217 = vmax.f32 %v1947, 0.0
  %v2218 = vmax.f32 %v1949, 0.0
  %v2219 = vmax.f32 %v1952, 0.0
  %v2220 = vmax.f32 %v1954, 0.0
  %v2221 = vmax.f32 %v1957, 0.0
  %v2222 = vmax.f32 %v1959, 0.0
  %v2223 = vmax.f32 %v1962, 0.0
  %v2224 = vmax.f32 %v1964, 0.0
  %v2225 = vmax.f32 %v1967, 0.0
  %v2226 = vmax.f32 %v1969, 0.0
  %v2227 = vpack.c.bf16 %v1971, %v1971
  %v2228 = vpack.c.bf16 %v1972, %v1972
  %v2229 = vpack.c.bf16 %v1973, %v1973
  %v2230 = vpack.c.bf16 %v1974, %v1974
  %v2231 = vpack.c.bf16 %v1975, %v1975
  %v2232 = vpack.c.bf16 %v1976, %v1976
  %v2233 = vpack.c.bf16 %v1977, %v1977
  %v2234 = vpack.c.bf16 %v1978, %v1978
  %v2235 = vpack.c.bf16 %v1979, %v1979
  %v2236 = vpack.c.bf16 %v1980, %v1980
  %v2237 = vpack.c.bf16 %v1981, %v1981
  %v2238 = vpack.c.bf16 %v1982, %v1982
  %v2239 = vpack.c.bf16 %v1983, %v1983
  %v2240 = vpack.c.bf16 %v1984, %v1984
  %v2241 = vpack.c.bf16 %v1985, %v1985
  %v2242 = vpack.c.bf16 %v1986, %v1986
  %v2243 = vpack.c.bf16 %v1987, %v1987
  %v2244 = vpack.c.bf16 %v1988, %v1988
  %v2245 = vpack.c.bf16 %v1989, %v1989
  %v2246 = vpack.c.bf16 %v1990, %v1990
  %v2247 = vpack.c.bf16 %v1991, %v1991
  %v2248 = vpack.c.bf16 %v1992, %v1992
  %v2249 = vpack.c.bf16 %v1993, %v1993
  %v2250 = vpack.c.bf16 %v1994, %v1994
  %v2251 = vpack.c.bf16 %v1995, %v1995
  %v2252 = vpack.c.bf16 %v1996, %v1996
  %v2253 = vpack.c.bf16 %v1997, %v1997
  %v2254 = vpack.c.bf16 %v1998, %v1998
  %v2255 = vpack.c.bf16 %v1999, %v1999
  %v2256 = vpack.c.bf16 %v2000, %v2000
  %v2257 = vpack.c.bf16 %v2001, %v2001
  %v2258 = vpack.c.bf16 %v2002, %v2002
  %v2259 = vpack.c.bf16 %v2003, %v2003
  %v2260 = vpack.c.bf16 %v2004, %v2004
  %v2261 = vpack.c.bf16 %v2005, %v2005
  %v2262 = vpack.c.bf16 %v2006, %v2006
  %v2263 = vpack.c.bf16 %v2007, %v2007
  %v2264 = vpack.c.bf16 %v2008, %v2008
  %v2265 = vpack.c.bf16 %v2009, %v2009
  %v2266 = vpack.c.bf16 %v2010, %v2010
  %v2267 = vpack.c.bf16 %v2011, %v2011
  %v2268 = vpack.c.bf16 %v2012, %v2012
  %v2269 = vpack.c.bf16 %v2013, %v2013
  %v2270 = vpack.c.bf16 %v2014, %v2014
  %v2271 = vpack.c.bf16 %v2015, %v2015
  %v2272 = vpack.c.bf16 %v2016, %v2016
  %v2273 = vpack.c.bf16 %v2017, %v2017
  %v2274 = vpack.c.bf16 %v2018, %v2018
  %v2275 = vpack.c.bf16 %v2019, %v2019
  %v2276 = vpack.c.bf16 %v2020, %v2020
  %v2277 = vpack.c.bf16 %v2021, %v2021
  %v2278 = vpack.c.bf16 %v2022, %v2022
  %v2279 = vpack.c.bf16 %v2023, %v2023
  %v2280 = vpack.c.bf16 %v2024, %v2024
  %v2281 = vpack.c.bf16 %v2025, %v2025
  %v2282 = vpack.c.bf16 %v2026, %v2026
  %v2283 = vpack.c.bf16 %v2027, %v2027
  %v2284 = vpack.c.bf16 %v2028, %v2028
  %v2285 = vpack.c.bf16 %v2029, %v2029
  %v2286 = vpack.c.bf16 %v2030, %v2030
  %v2287 = vpack.c.bf16 %v2031, %v2031
  %v2288 = vpack.c.bf16 %v2032, %v2032
  %v2289 = vpack.c.bf16 %v2033, %v2033
  %v2290 = vpack.c.bf16 %v2034, %v2034
  %v2291 = vpack.c.bf16 %v2035, %v2035
  %v2292 = vpack.c.bf16 %v2036, %v2036
  %v2293 = vpack.c.bf16 %v2037, %v2037
  %v2294 = vpack.c.bf16 %v2038, %v2038
  %v2295 = vpack.c.bf16 %v2039, %v2039
  %v2296 = vpack.c.bf16 %v2040, %v2040
  %v2297 = vpack.c.bf16 %v2041, %v2041
  %v2298 = vpack.c.bf16 %v2042, %v2042
  %v2299 = vpack.c.bf16 %v2043, %v2043
  %v2300 = vpack.c.bf16 %v2044, %v2044
  %v2301 = vpack.c.bf16 %v2045, %v2045
  %v2302 = vpack.c.bf16 %v2046, %v2046
  %v2303 = vpack.c.bf16 %v2047, %v2047
  %v2304 = vpack.c.bf16 %v2048, %v2048
  %v2305 = vpack.c.bf16 %v2049, %v2049
  %v2306 = vpack.c.bf16 %v2050, %v2050
  %v2307 = vpack.c.bf16 %v2051, %v2051
  %v2308 = vpack.c.bf16 %v2052, %v2052
  %v2309 = vpack.c.bf16 %v2053, %v2053
  %v2310 = vpack.c.bf16 %v2054, %v2054
  %v2311 = vpack.c.bf16 %v2055, %v2055
  %v2312 = vpack.c.bf16 %v2056, %v2056
  %v2313 = vpack.c.bf16 %v2057, %v2057
  %v2314 = vpack.c.bf16 %v2058, %v2058
  %v2315 = vpack.c.bf16 %v2059, %v2059
  %v2316 = vpack.c.bf16 %v2060, %v2060
  %v2317 = vpack.c.bf16 %v2061, %v2061
  %v2318 = vpack.c.bf16 %v2062, %v2062
  %v2319 = vpack.c.bf16 %v2063, %v2063
  %v2320 = vpack.c.bf16 %v2064, %v2064
  %v2321 = vpack.c.bf16 %v2065, %v2065
  %v2322 = vpack.c.bf16 %v2066, %v2066
  %v2323 = vpack.c.bf16 %v2067, %v2067
  %v2324 = vpack.c.bf16 %v2068, %v2068
  %v2325 = vpack.c.bf16 %v2069, %v2069
  %v2326 = vpack.c.bf16 %v2070, %v2070
  %v2327 = vpack.c.bf16 %v2071, %v2071
  %v2328 = vpack.c.bf16 %v2072, %v2072
  %v2329 = vpack.c.bf16 %v2073, %v2073
  %v2330 = vpack.c.bf16 %v2074, %v2074
  %v2331 = vpack.c.bf16 %v2075, %v2075
  %v2332 = vpack.c.bf16 %v2076, %v2076
  %v2333 = vpack.c.bf16 %v2077, %v2077
  %v2334 = vpack.c.bf16 %v2078, %v2078
  %v2335 = vpack.c.bf16 %v2079, %v2079
  %v2336 = vpack.c.bf16 %v2080, %v2080
  %v2337 = vpack.c.bf16 %v2081, %v2081
  %v2338 = vpack.c.bf16 %v2082, %v2082
  %v2339 = vpack.c.bf16 %v2083, %v2083
  %v2340 = vpack.c.bf16 %v2084, %v2084
  %v2341 = vpack.c.bf16 %v2085, %v2085
  %v2342 = vpack.c.bf16 %v2086, %v2086
  %v2343 = vpack.c.bf16 %v2087, %v2087
  %v2344 = vpack.c.bf16 %v2088, %v2088
  %v2345 = vpack.c.bf16 %v2089, %v2089
  %v2346 = vpack.c.bf16 %v2090, %v2090
  %v2347 = vpack.c.bf16 %v2091, %v2091
  %v2348 = vpack.c.bf16 %v2092, %v2092
  %v2349 = vpack.c.bf16 %v2093, %v2093
  %v2350 = vpack.c.bf16 %v2094, %v2094
  %v2351 = vpack.c.bf16 %v2095, %v2095
  %v2352 = vpack.c.bf16 %v2096, %v2096
  %v2353 = vpack.c.bf16 %v2097, %v2097
  %v2354 = vpack.c.bf16 %v2098, %v2098
  %v2355 = vpack.c.bf16 %v2099, %v2099
  %v2356 = vpack.c.bf16 %v2100, %v2100
  %v2357 = vpack.c.bf16 %v2101, %v2101
  %v2358 = vpack.c.bf16 %v2102, %v2102
  %v2359 = vpack.c.bf16 %v2103, %v2103
  %v2360 = vpack.c.bf16 %v2104, %v2104
  %v2361 = vpack.c.bf16 %v2105, %v2105
  %v2362 = vpack.c.bf16 %v2106, %v2106
  %v2363 = vpack.c.bf16 %v2107, %v2107
  %v2364 = vpack.c.bf16 %v2108, %v2108
  %v2365 = vpack.c.bf16 %v2109, %v2109
  %v2366 = vpack.c.bf16 %v2110, %v2110
  %v2367 = vpack.c.bf16 %v2111, %v2111
  %v2368 = vpack.c.bf16 %v2112, %v2112
  %v2369 = vpack.c.bf16 %v2113, %v2113
  %v2370 = vpack.c.bf16 %v2114, %v2114
  %v2371 = vpack.c.bf16 %v2115, %v2115
  %v2372 = vpack.c.bf16 %v2116, %v2116
  %v2373 = vpack.c.bf16 %v2117, %v2117
  %v2374 = vpack.c.bf16 %v2118, %v2118
  %v2375 = vpack.c.bf16 %v2119, %v2119
  %v2376 = vpack.c.bf16 %v2120, %v2120
  %v2377 = vpack.c.bf16 %v2121, %v2121
  %v2378 = vpack.c.bf16 %v2122, %v2122
  %v2379 = vpack.c.bf16 %v2123, %v2123
  %v2380 = vpack.c.bf16 %v2124, %v2124
  %v2381 = vpack.c.bf16 %v2125, %v2125
  %v2382 = vpack.c.bf16 %v2126, %v2126
  %v2383 = vpack.c.bf16 %v2127, %v2127
  %v2384 = vpack.c.bf16 %v2128, %v2128
  %v2385 = vpack.c.bf16 %v2129, %v2129
  %v2386 = vpack.c.bf16 %v2130, %v2130
  %v2387 = vpack.c.bf16 %v2131, %v2131
  %v2388 = vpack.c.bf16 %v2132, %v2132
  %v2389 = vpack.c.bf16 %v2133, %v2133
  %v2390 = vpack.c.bf16 %v2134, %v2134
  %v2391 = vpack.c.bf16 %v2135, %v2135
  %v2392 = vpack.c.bf16 %v2136, %v2136
  %v2393 = vpack.c.bf16 %v2137, %v2137
  %v2394 = vpack.c.bf16 %v2138, %v2138
  %v2395 = vpack.c.bf16 %v2139, %v2139
  %v2396 = vpack.c.bf16 %v2140, %v2140
  %v2397 = vpack.c.bf16 %v2141, %v2141
  %v2398 = vpack.c.bf16 %v2142, %v2142
  %v2399 = vpack.c.bf16 %v2143, %v2143
  %v2400 = vpack.c.bf16 %v2144, %v2144
  %v2401 = vpack.c.bf16 %v2145, %v2145
  %v2402 = vpack.c.bf16 %v2146, %v2146
  %v2403 = vpack.c.bf16 %v2147, %v2147
  %v2404 = vpack.c.bf16 %v2148, %v2148
  %v2405 = vpack.c.bf16 %v2149, %v2149
  %v2406 = vpack.c.bf16 %v2150, %v2150
  %v2407 = vpack.c.bf16 %v2151, %v2151
  %v2408 = vpack.c.bf16 %v2152, %v2152
  %v2409 = vpack.c.bf16 %v2153, %v2153
  %v2410 = vpack.c.bf16 %v2154, %v2154
  %v2411 = vpack.c.bf16 %v2155, %v2155
  %v2412 = vpack.c.bf16 %v2156, %v2156
  %v2413 = vpack.c.bf16 %v2157, %v2157
  %v2414 = vpack.c.bf16 %v2158, %v2158
  %v2415 = vpack.c.bf16 %v2159, %v2159
  %v2416 = vpack.c.bf16 %v2160, %v2160
  %v2417 = vpack.c.bf16 %v2161, %v2161
  %v2418 = vpack.c.bf16 %v2162, %v2162
  %v2419 = vpack.c.bf16 %v2163, %v2163
  %v2420 = vpack.c.bf16 %v2164, %v2164
  %v2421 = vpack.c.bf16 %v2165, %v2165
  %v2422 = vpack.c.bf16 %v2166, %v2166
  %v2423 = vpack.c.bf16 %v2167, %v2167
  %v2424 = vpack.c.bf16 %v2168, %v2168
  %v2425 = vpack.c.bf16 %v2169, %v2169
  %v2426 = vpack.c.bf16 %v2170, %v2170
  %v2427 = vpack.c.bf16 %v2171, %v2171
  %v2428 = vpack.c.bf16 %v2172, %v2172
  %v2429 = vpack.c.bf16 %v2173, %v2173
  %v2430 = vpack.c.bf16 %v2174, %v2174
  %v2431 = vpack.c.bf16 %v2175, %v2175
  %v2432 = vpack.c.bf16 %v2176, %v2176
  %v2433 = vpack.c.bf16 %v2177, %v2177
  %v2434 = vpack.c.bf16 %v2178, %v2178
  %v2435 = vpack.c.bf16 %v2179, %v2179
  %v2436 = vpack.c.bf16 %v2180, %v2180
  %v2437 = vpack.c.bf16 %v2181, %v2181
  %v2438 = vpack.c.bf16 %v2182, %v2182
  %v2439 = vpack.c.bf16 %v2183, %v2183
  %v2440 = vpack.c.bf16 %v2184, %v2184
  %v2441 = vpack.c.bf16 %v2185, %v2185
  %v2442 = vpack.c.bf16 %v2186, %v2186
  %v2443 = vpack.c.bf16 %v2187, %v2187
  %v2444 = vpack.c.bf16 %v2188, %v2188
  %v2445 = vpack.c.bf16 %v2189, %v2189
  %v2446 = vpack.c.bf16 %v2190, %v2190
  %v2447 = vpack.c.bf16 %v2191, %v2191
  %v2448 = vpack.c.bf16 %v2192, %v2192
  %v2449 = vpack.c.bf16 %v2193, %v2193
  %v2450 = vpack.c.bf16 %v2194, %v2194
  %v2451 = vpack.c.bf16 %v2195, %v2195
  %v2452 = vpack.c.bf16 %v2196, %v2196
  %v2453 = vpack.c.bf16 %v2197, %v2197
  %v2454 = vpack.c.bf16 %v2198, %v2198
  %v2455 = vpack.c.bf16 %v2199, %v2199
  %v2456 = vpack.c.bf16 %v2200, %v2200
  %v2457 = vpack.c.bf16 %v2201, %v2201
  %v2458 = vpack.c.bf16 %v2202, %v2202
  %v2459 = vpack.c.bf16 %v2203, %v2203
  %v2460 = vpack.c.bf16 %v2204, %v2204
  %v2461 = vpack.c.bf16 %v2205, %v2205
  %v2462 = vpack.c.bf16 %v2206, %v2206
  %v2463 = vpack.c.bf16 %v2207, %v2207
  %v2464 = vpack.c.bf16 %v2208, %v2208
  %v2465 = vpack.c.bf16 %v2209, %v2209
  %v2466 = vpack.c.bf16 %v2210, %v2210
  %v2467 = vpack.c.bf16 %v2211, %v2211
  %v2468 = vpack.c.bf16 %v2212, %v2212
  %v2469 = vpack.c.bf16 %v2213, %v2213
  %v2470 = vpack.c.bf16 %v2214, %v2214
  %v2471 = vpack.c.bf16 %v2215, %v2215
  %v2472 = vpack.c.bf16 %v2216, %v2216
  %v2473 = vpack.c.bf16 %v2217, %v2217
  %v2474 = vpack.c.bf16 %v2218, %v2218
  %v2475 = vpack.c.bf16 %v2219, %v2219
  %v2476 = vpack.c.bf16 %v2220, %v2220
  %v2477 = vpack.c.bf16 %v2221, %v2221
  %v2478 = vpack.c.bf16 %v2222, %v2222
  %v2479 = vpack.c.bf16 %v2223, %v2223
  %v2480 = vpack.c.bf16 %v2224, %v2224
  %v2481 = vpack.c.bf16 %v2225, %v2225
  %v2482 = vpack.c.bf16 %v2226, %v2226
  %vm2483 = vcmask 125952
  %2484 = vst.msk [vmem:[%s3] sm:$0xf] %vm2483, %v2227
  %2485 = vst.msk [vmem:[%s3 + $0x4] sm:$0xf] %vm2483, %v2228
  %2486 = vst.msk [vmem:[%s3 + $0x8] sm:$0xf] %vm2483, %v2229
  %2487 = vst.msk [vmem:[%s3 + $0xc] sm:$0xf] %vm2483, %v2230
  %2488 = vst.msk [vmem:[%s3 + $0x10] sm:$0xf] %vm2483, %v2231
  %2489 = vst.msk [vmem:[%s3 + $0x14] sm:$0xf] %vm2483, %v2232
  %2490 = vst.msk [vmem:[%s3 + $0x18] sm:$0xf] %vm2483, %v2233
  %2491 = vst.msk [vmem:[%s3 + $0x1c] sm:$0xf] %vm2483, %v2234
  %2492 = vst.msk [vmem:[%s3 + $0x20] sm:$0xf] %vm2483, %v2235
  %2493 = vst.msk [vmem:[%s3 + $0x24] sm:$0xf] %vm2483, %v2236
  %2494 = vst.msk [vmem:[%s3 + $0x28] sm:$0xf] %vm2483, %v2237
  %2495 = vst.msk [vmem:[%s3 + $0x2c] sm:$0xf] %vm2483, %v2238
  %2496 = vst.msk [vmem:[%s3 + $0x30] sm:$0xf] %vm2483, %v2239
  %2497 = vst.msk [vmem:[%s3 + $0x34] sm:$0xf] %vm2483, %v2240
  %2498 = vst.msk [vmem:[%s3 + $0x38] sm:$0xf] %vm2483, %v2241
  %2499 = vst.msk [vmem:[%s3 + $0x3c] sm:$0xf] %vm2483, %v2242
  %2500 = vst.msk [vmem:[%s3 + $0x40] sm:$0xf] %vm2483, %v2243
  %2501 = vst.msk [vmem:[%s3 + $0x44] sm:$0xf] %vm2483, %v2244
  %2502 = vst.msk [vmem:[%s3 + $0x48] sm:$0xf] %vm2483, %v2245
  %2503 = vst.msk [vmem:[%s3 + $0x4c] sm:$0xf] %vm2483, %v2246
  %2504 = vst.msk [vmem:[%s3 + $0x50] sm:$0xf] %vm2483, %v2247
  %2505 = vst.msk [vmem:[%s3 + $0x54] sm:$0xf] %vm2483, %v2248
  %2506 = vst.msk [vmem:[%s3 + $0x58] sm:$0xf] %vm2483, %v2249
  %2507 = vst.msk [vmem:[%s3 + $0x5c] sm:$0xf] %vm2483, %v2250
  %2508 = vst.msk [vmem:[%s3 + $0x60] sm:$0xf] %vm2483, %v2251
  %2509 = vst.msk [vmem:[%s3 + $0x64] sm:$0xf] %vm2483, %v2252
  %2510 = vst.msk [vmem:[%s3 + $0x68] sm:$0xf] %vm2483, %v2253
  %2511 = vst.msk [vmem:[%s3 + $0x6c] sm:$0xf] %vm2483, %v2254
  %2512 = vst.msk [vmem:[%s3 + $0x70] sm:$0xf] %vm2483, %v2255
  %2513 = vst.msk [vmem:[%s3 + $0x74] sm:$0xf] %vm2483, %v2256
  %2514 = vst.msk [vmem:[%s3 + $0x78] sm:$0xf] %vm2483, %v2257
  %2515 = vst.msk [vmem:[%s3 + $0x7c] sm:$0xf] %vm2483, %v2258
  %2516 = vst.msk [vmem:[%s3 + $0x80] sm:$0xf] %vm2483, %v2259
  %2517 = vst.msk [vmem:[%s3 + $0x84] sm:$0xf] %vm2483, %v2260
  %2518 = vst.msk [vmem:[%s3 + $0x88] sm:$0xf] %vm2483, %v2261
  %2519 = vst.msk [vmem:[%s3 + $0x8c] sm:$0xf] %vm2483, %v2262
  %2520 = vst.msk [vmem:[%s3 + $0x90] sm:$0xf] %vm2483, %v2263
  %2521 = vst.msk [vmem:[%s3 + $0x94] sm:$0xf] %vm2483, %v2264
  %2522 = vst.msk [vmem:[%s3 + $0x98] sm:$0xf] %vm2483, %v2265
  %2523 = vst.msk [vmem:[%s3 + $0x9c] sm:$0xf] %vm2483, %v2266
  %2524 = vst.msk [vmem:[%s3 + $0xa0] sm:$0xf] %vm2483, %v2267
  %2525 = vst.msk [vmem:[%s3 + $0xa4] sm:$0xf] %vm2483, %v2268
  %2526 = vst.msk [vmem:[%s3 + $0xa8] sm:$0xf] %vm2483, %v2269
  %2527 = vst.msk [vmem:[%s3 + $0xac] sm:$0xf] %vm2483, %v2270
  %2528 = vst.msk [vmem:[%s3 + $0xb0] sm:$0xf] %vm2483, %v2271
  %2529 = vst.msk [vmem:[%s3 + $0xb4] sm:$0xf] %vm2483, %v2272
  %2530 = vst.msk [vmem:[%s3 + $0xb8] sm:$0xf] %vm2483, %v2273
  %2531 = vst.msk [vmem:[%s3 + $0xbc] sm:$0xf] %vm2483, %v2274
  %2532 = vst.msk [vmem:[%s3 + $0xc0] sm:$0xf] %vm2483, %v2275
  %2533 = vst.msk [vmem:[%s3 + $0xc4] sm:$0xf] %vm2483, %v2276
  %2534 = vst.msk [vmem:[%s3 + $0xc8] sm:$0xf] %vm2483, %v2277
  %2535 = vst.msk [vmem:[%s3 + $0xcc] sm:$0xf] %vm2483, %v2278
  %2536 = vst.msk [vmem:[%s3 + $0xd0] sm:$0xf] %vm2483, %v2279
  %2537 = vst.msk [vmem:[%s3 + $0xd4] sm:$0xf] %vm2483, %v2280
  %2538 = vst.msk [vmem:[%s3 + $0xd8] sm:$0xf] %vm2483, %v2281
  %2539 = vst.msk [vmem:[%s3 + $0xdc] sm:$0xf] %vm2483, %v2282
  %2540 = vst.msk [vmem:[%s3 + $0xe0] sm:$0xf] %vm2483, %v2283
  %2541 = vst.msk [vmem:[%s3 + $0xe4] sm:$0xf] %vm2483, %v2284
  %2542 = vst.msk [vmem:[%s3 + $0xe8] sm:$0xf] %vm2483, %v2285
  %2543 = vst.msk [vmem:[%s3 + $0xec] sm:$0xf] %vm2483, %v2286
  %2544 = vst.msk [vmem:[%s3 + $0xf0] sm:$0xf] %vm2483, %v2287
  %2545 = vst.msk [vmem:[%s3 + $0xf4] sm:$0xf] %vm2483, %v2288
  %2546 = vst.msk [vmem:[%s3 + $0xf8] sm:$0xf] %vm2483, %v2289
  %2547 = vst.msk [vmem:[%s3 + $0xfc] sm:$0xf] %vm2483, %v2290
  %2548 = vst.msk [vmem:[%s3 + $0x100] sm:$0xf] %vm2483, %v2291
  %2549 = vst.msk [vmem:[%s3 + $0x104] sm:$0xf] %vm2483, %v2292
  %2550 = vst.msk [vmem:[%s3 + $0x108] sm:$0xf] %vm2483, %v2293
  %2551 = vst.msk [vmem:[%s3 + $0x10c] sm:$0xf] %vm2483, %v2294
  %2552 = vst.msk [vmem:[%s3 + $0x110] sm:$0xf] %vm2483, %v2295
  %2553 = vst.msk [vmem:[%s3 + $0x114] sm:$0xf] %vm2483, %v2296
  %2554 = vst.msk [vmem:[%s3 + $0x118] sm:$0xf] %vm2483, %v2297
  %2555 = vst.msk [vmem:[%s3 + $0x11c] sm:$0xf] %vm2483, %v2298
  %2556 = vst.msk [vmem:[%s3 + $0x120] sm:$0xf] %vm2483, %v2299
  %2557 = vst.msk [vmem:[%s3 + $0x124] sm:$0xf] %vm2483, %v2300
  %2558 = vst.msk [vmem:[%s3 + $0x128] sm:$0xf] %vm2483, %v2301
  %2559 = vst.msk [vmem:[%s3 + $0x12c] sm:$0xf] %vm2483, %v2302
  %2560 = vst.msk [vmem:[%s3 + $0x130] sm:$0xf] %vm2483, %v2303
  %2561 = vst.msk [vmem:[%s3 + $0x134] sm:$0xf] %vm2483, %v2304
  %2562 = vst.msk [vmem:[%s3 + $0x138] sm:$0xf] %vm2483, %v2305
  %2563 = vst.msk [vmem:[%s3 + $0x13c] sm:$0xf] %vm2483, %v2306
  %2564 = vst.msk [vmem:[%s3 + $0x140] sm:$0xf] %vm2483, %v2307
  %2565 = vst.msk [vmem:[%s3 + $0x144] sm:$0xf] %vm2483, %v2308
  %2566 = vst.msk [vmem:[%s3 + $0x148] sm:$0xf] %vm2483, %v2309
  %2567 = vst.msk [vmem:[%s3 + $0x14c] sm:$0xf] %vm2483, %v2310
  %2568 = vst.msk [vmem:[%s3 + $0x150] sm:$0xf] %vm2483, %v2311
  %2569 = vst.msk [vmem:[%s3 + $0x154] sm:$0xf] %vm2483, %v2312
  %2570 = vst.msk [vmem:[%s3 + $0x158] sm:$0xf] %vm2483, %v2313
  %2571 = vst.msk [vmem:[%s3 + $0x15c] sm:$0xf] %vm2483, %v2314
  %2572 = vst.msk [vmem:[%s3 + $0x160] sm:$0xf] %vm2483, %v2315
  %2573 = vst.msk [vmem:[%s3 + $0x164] sm:$0xf] %vm2483, %v2316
  %2574 = vst.msk [vmem:[%s3 + $0x168] sm:$0xf] %vm2483, %v2317
  %2575 = vst.msk [vmem:[%s3 + $0x16c] sm:$0xf] %vm2483, %v2318
  %2576 = vst.msk [vmem:[%s3 + $0x170] sm:$0xf] %vm2483, %v2319
  %2577 = vst.msk [vmem:[%s3 + $0x174] sm:$0xf] %vm2483, %v2320
  %2578 = vst.msk [vmem:[%s3 + $0x178] sm:$0xf] %vm2483, %v2321
  %2579 = vst.msk [vmem:[%s3 + $0x17c] sm:$0xf] %vm2483, %v2322
  %2580 = vst.msk [vmem:[%s3 + $0x180] sm:$0xf] %vm2483, %v2323
  %2581 = vst.msk [vmem:[%s3 + $0x184] sm:$0xf] %vm2483, %v2324
  %2582 = vst.msk [vmem:[%s3 + $0x188] sm:$0xf] %vm2483, %v2325
  %2583 = vst.msk [vmem:[%s3 + $0x18c] sm:$0xf] %vm2483, %v2326
  %2584 = vst.msk [vmem:[%s3 + $0x190] sm:$0xf] %vm2483, %v2327
  %2585 = vst.msk [vmem:[%s3 + $0x194] sm:$0xf] %vm2483, %v2328
  %2586 = vst.msk [vmem:[%s3 + $0x198] sm:$0xf] %vm2483, %v2329
  %2587 = vst.msk [vmem:[%s3 + $0x19c] sm:$0xf] %vm2483, %v2330
  %2588 = vst.msk [vmem:[%s3 + $0x1a0] sm:$0xf] %vm2483, %v2331
  %2589 = vst.msk [vmem:[%s3 + $0x1a4] sm:$0xf] %vm2483, %v2332
  %2590 = vst.msk [vmem:[%s3 + $0x1a8] sm:$0xf] %vm2483, %v2333
  %2591 = vst.msk [vmem:[%s3 + $0x1ac] sm:$0xf] %vm2483, %v2334
  %2592 = vst.msk [vmem:[%s3 + $0x1b0] sm:$0xf] %vm2483, %v2335
  %2593 = vst.msk [vmem:[%s3 + $0x1b4] sm:$0xf] %vm2483, %v2336
  %2594 = vst.msk [vmem:[%s3 + $0x1b8] sm:$0xf] %vm2483, %v2337
  %2595 = vst.msk [vmem:[%s3 + $0x1bc] sm:$0xf] %vm2483, %v2338
  %2596 = vst.msk [vmem:[%s3 + $0x1c0] sm:$0xf] %vm2483, %v2339
  %2597 = vst.msk [vmem:[%s3 + $0x1c4] sm:$0xf] %vm2483, %v2340
  %2598 = vst.msk [vmem:[%s3 + $0x1c8] sm:$0xf] %vm2483, %v2341
  %2599 = vst.msk [vmem:[%s3 + $0x1cc] sm:$0xf] %vm2483, %v2342
  %2600 = vst.msk [vmem:[%s3 + $0x1d0] sm:$0xf] %vm2483, %v2343
  %2601 = vst.msk [vmem:[%s3 + $0x1d4] sm:$0xf] %vm2483, %v2344
  %2602 = vst.msk [vmem:[%s3 + $0x1d8] sm:$0xf] %vm2483, %v2345
  %2603 = vst.msk [vmem:[%s3 + $0x1dc] sm:$0xf] %vm2483, %v2346
  %2604 = vst.msk [vmem:[%s3 + $0x1e0] sm:$0xf] %vm2483, %v2347
  %2605 = vst.msk [vmem:[%s3 + $0x1e4] sm:$0xf] %vm2483, %v2348
  %2606 = vst.msk [vmem:[%s3 + $0x1e8] sm:$0xf] %vm2483, %v2349
  %2607 = vst.msk [vmem:[%s3 + $0x1ec] sm:$0xf] %vm2483, %v2350
  %2608 = vst.msk [vmem:[%s3 + $0x1f0] sm:$0xf] %vm2483, %v2351
  %2609 = vst.msk [vmem:[%s3 + $0x1f4] sm:$0xf] %vm2483, %v2352
  %2610 = vst.msk [vmem:[%s3 + $0x1f8] sm:$0xf] %vm2483, %v2353
  %2611 = vst.msk [vmem:[%s3 + $0x1fc] sm:$0xf] %vm2483, %v2354
  %2612 = vst.msk [vmem:[%s3 + $0x200] sm:$0xf] %vm2483, %v2355
  %2613 = vst.msk [vmem:[%s3 + $0x204] sm:$0xf] %vm2483, %v2356
  %2614 = vst.msk [vmem:[%s3 + $0x208] sm:$0xf] %vm2483, %v2357
  %2615 = vst.msk [vmem:[%s3 + $0x20c] sm:$0xf] %vm2483, %v2358
  %2616 = vst.msk [vmem:[%s3 + $0x210] sm:$0xf] %vm2483, %v2359
  %2617 = vst.msk [vmem:[%s3 + $0x214] sm:$0xf] %vm2483, %v2360
  %2618 = vst.msk [vmem:[%s3 + $0x218] sm:$0xf] %vm2483, %v2361
  %2619 = vst.msk [vmem:[%s3 + $0x21c] sm:$0xf] %vm2483, %v2362
  %2620 = vst.msk [vmem:[%s3 + $0x220] sm:$0xf] %vm2483, %v2363
  %2621 = vst.msk [vmem:[%s3 + $0x224] sm:$0xf] %vm2483, %v2364
  %2622 = vst.msk [vmem:[%s3 + $0x228] sm:$0xf] %vm2483, %v2365
  %2623 = vst.msk [vmem:[%s3 + $0x22c] sm:$0xf] %vm2483, %v2366
  %2624 = vst.msk [vmem:[%s3 + $0x230] sm:$0xf] %vm2483, %v2367
  %2625 = vst.msk [vmem:[%s3 + $0x234] sm:$0xf] %vm2483, %v2368
  %2626 = vst.msk [vmem:[%s3 + $0x238] sm:$0xf] %vm2483, %v2369
  %2627 = vst.msk [vmem:[%s3 + $0x23c] sm:$0xf] %vm2483, %v2370
  %2628 = vst.msk [vmem:[%s3 + $0x240] sm:$0xf] %vm2483, %v2371
  %2629 = vst.msk [vmem:[%s3 + $0x244] sm:$0xf] %vm2483, %v2372
  %2630 = vst.msk [vmem:[%s3 + $0x248] sm:$0xf] %vm2483, %v2373
  %2631 = vst.msk [vmem:[%s3 + $0x24c] sm:$0xf] %vm2483, %v2374
  %2632 = vst.msk [vmem:[%s3 + $0x250] sm:$0xf] %vm2483, %v2375
  %2633 = vst.msk [vmem:[%s3 + $0x254] sm:$0xf] %vm2483, %v2376
  %2634 = vst.msk [vmem:[%s3 + $0x258] sm:$0xf] %vm2483, %v2377
  %2635 = vst.msk [vmem:[%s3 + $0x25c] sm:$0xf] %vm2483, %v2378
  %2636 = vst.msk [vmem:[%s3 + $0x260] sm:$0xf] %vm2483, %v2379
  %2637 = vst.msk [vmem:[%s3 + $0x264] sm:$0xf] %vm2483, %v2380
  %2638 = vst.msk [vmem:[%s3 + $0x268] sm:$0xf] %vm2483, %v2381
  %2639 = vst.msk [vmem:[%s3 + $0x26c] sm:$0xf] %vm2483, %v2382
  %2640 = vst.msk [vmem:[%s3 + $0x270] sm:$0xf] %vm2483, %v2383
  %2641 = vst.msk [vmem:[%s3 + $0x274] sm:$0xf] %vm2483, %v2384
  %2642 = vst.msk [vmem:[%s3 + $0x278] sm:$0xf] %vm2483, %v2385
  %2643 = vst.msk [vmem:[%s3 + $0x27c] sm:$0xf] %vm2483, %v2386
  %2644 = vst.msk [vmem:[%s3 + $0x280] sm:$0xf] %vm2483, %v2387
  %2645 = vst.msk [vmem:[%s3 + $0x284] sm:$0xf] %vm2483, %v2388
  %2646 = vst.msk [vmem:[%s3 + $0x288] sm:$0xf] %vm2483, %v2389
  %2647 = vst.msk [vmem:[%s3 + $0x28c] sm:$0xf] %vm2483, %v2390
  %2648 = vst.msk [vmem:[%s3 + $0x290] sm:$0xf] %vm2483, %v2391
  %2649 = vst.msk [vmem:[%s3 + $0x294] sm:$0xf] %vm2483, %v2392
  %2650 = vst.msk [vmem:[%s3 + $0x298] sm:$0xf] %vm2483, %v2393
  %2651 = vst.msk [vmem:[%s3 + $0x29c] sm:$0xf] %vm2483, %v2394
  %2652 = vst.msk [vmem:[%s3 + $0x2a0] sm:$0xf] %vm2483, %v2395
  %2653 = vst.msk [vmem:[%s3 + $0x2a4] sm:$0xf] %vm2483, %v2396
  %2654 = vst.msk [vmem:[%s3 + $0x2a8] sm:$0xf] %vm2483, %v2397
  %2655 = vst.msk [vmem:[%s3 + $0x2ac] sm:$0xf] %vm2483, %v2398
  %2656 = vst.msk [vmem:[%s3 + $0x2b0] sm:$0xf] %vm2483, %v2399
  %2657 = vst.msk [vmem:[%s3 + $0x2b4] sm:$0xf] %vm2483, %v2400
  %2658 = vst.msk [vmem:[%s3 + $0x2b8] sm:$0xf] %vm2483, %v2401
  %2659 = vst.msk [vmem:[%s3 + $0x2bc] sm:$0xf] %vm2483, %v2402
  %2660 = vst.msk [vmem:[%s3 + $0x2c0] sm:$0xf] %vm2483, %v2403
  %2661 = vst.msk [vmem:[%s3 + $0x2c4] sm:$0xf] %vm2483, %v2404
  %2662 = vst.msk [vmem:[%s3 + $0x2c8] sm:$0xf] %vm2483, %v2405
  %2663 = vst.msk [vmem:[%s3 + $0x2cc] sm:$0xf] %vm2483, %v2406
  %2664 = vst.msk [vmem:[%s3 + $0x2d0] sm:$0xf] %vm2483, %v2407
  %2665 = vst.msk [vmem:[%s3 + $0x2d4] sm:$0xf] %vm2483, %v2408
  %2666 = vst.msk [vmem:[%s3 + $0x2d8] sm:$0xf] %vm2483, %v2409
  %2667 = vst.msk [vmem:[%s3 + $0x2dc] sm:$0xf] %vm2483, %v2410
  %2668 = vst.msk [vmem:[%s3 + $0x2e0] sm:$0xf] %vm2483, %v2411
  %2669 = vst.msk [vmem:[%s3 + $0x2e4] sm:$0xf] %vm2483, %v2412
  %2670 = vst.msk [vmem:[%s3 + $0x2e8] sm:$0xf] %vm2483, %v2413
  %2671 = vst.msk [vmem:[%s3 + $0x2ec] sm:$0xf] %vm2483, %v2414
  %2672 = vst.msk [vmem:[%s3 + $0x2f0] sm:$0xf] %vm2483, %v2415
  %2673 = vst.msk [vmem:[%s3 + $0x2f4] sm:$0xf] %vm2483, %v2416
  %2674 = vst.msk [vmem:[%s3 + $0x2f8] sm:$0xf] %vm2483, %v2417
  %2675 = vst.msk [vmem:[%s3 + $0x2fc] sm:$0xf] %vm2483, %v2418
  %2676 = vst.msk [vmem:[%s3 + $0x300] sm:$0xf] %vm2483, %v2419
  %2677 = vst.msk [vmem:[%s3 + $0x304] sm:$0xf] %vm2483, %v2420
  %2678 = vst.msk [vmem:[%s3 + $0x308] sm:$0xf] %vm2483, %v2421
  %2679 = vst.msk [vmem:[%s3 + $0x30c] sm:$0xf] %vm2483, %v2422
  %2680 = vst.msk [vmem:[%s3 + $0x310] sm:$0xf] %vm2483, %v2423
  %2681 = vst.msk [vmem:[%s3 + $0x314] sm:$0xf] %vm2483, %v2424
  %2682 = vst.msk [vmem:[%s3 + $0x318] sm:$0xf] %vm2483, %v2425
  %2683 = vst.msk [vmem:[%s3 + $0x31c] sm:$0xf] %vm2483, %v2426
  %2684 = vst.msk [vmem:[%s3 + $0x320] sm:$0xf] %vm2483, %v2427
  %2685 = vst.msk [vmem:[%s3 + $0x324] sm:$0xf] %vm2483, %v2428
  %2686 = vst.msk [vmem:[%s3 + $0x328] sm:$0xf] %vm2483, %v2429
  %2687 = vst.msk [vmem:[%s3 + $0x32c] sm:$0xf] %vm2483, %v2430
  %2688 = vst.msk [vmem:[%s3 + $0x330] sm:$0xf] %vm2483, %v2431
  %2689 = vst.msk [vmem:[%s3 + $0x334] sm:$0xf] %vm2483, %v2432
  %2690 = vst.msk [vmem:[%s3 + $0x338] sm:$0xf] %vm2483, %v2433
  %2691 = vst.msk [vmem:[%s3 + $0x33c] sm:$0xf] %vm2483, %v2434
  %2692 = vst.msk [vmem:[%s3 + $0x340] sm:$0xf] %vm2483, %v2435
  %2693 = vst.msk [vmem:[%s3 + $0x344] sm:$0xf] %vm2483, %v2436
  %2694 = vst.msk [vmem:[%s3 + $0x348] sm:$0xf] %vm2483, %v2437
  %2695 = vst.msk [vmem:[%s3 + $0x34c] sm:$0xf] %vm2483, %v2438
  %2696 = vst.msk [vmem:[%s3 + $0x350] sm:$0xf] %vm2483, %v2439
  %2697 = vst.msk [vmem:[%s3 + $0x354] sm:$0xf] %vm2483, %v2440
  %2698 = vst.msk [vmem:[%s3 + $0x358] sm:$0xf] %vm2483, %v2441
  %2699 = vst.msk [vmem:[%s3 + $0x35c] sm:$0xf] %vm2483, %v2442
  %2700 = vst.msk [vmem:[%s3 + $0x360] sm:$0xf] %vm2483, %v2443
  %2701 = vst.msk [vmem:[%s3 + $0x364] sm:$0xf] %vm2483, %v2444
  %2702 = vst.msk [vmem:[%s3 + $0x368] sm:$0xf] %vm2483, %v2445
  %2703 = vst.msk [vmem:[%s3 + $0x36c] sm:$0xf] %vm2483, %v2446
  %2704 = vst.msk [vmem:[%s3 + $0x370] sm:$0xf] %vm2483, %v2447
  %2705 = vst.msk [vmem:[%s3 + $0x374] sm:$0xf] %vm2483, %v2448
  %2706 = vst.msk [vmem:[%s3 + $0x378] sm:$0xf] %vm2483, %v2449
  %2707 = vst.msk [vmem:[%s3 + $0x37c] sm:$0xf] %vm2483, %v2450
  %2708 = vst.msk [vmem:[%s3 + $0x380] sm:$0xf] %vm2483, %v2451
  %2709 = vst.msk [vmem:[%s3 + $0x384] sm:$0xf] %vm2483, %v2452
  %2710 = vst.msk [vmem:[%s3 + $0x388] sm:$0xf] %vm2483, %v2453
  %2711 = vst.msk [vmem:[%s3 + $0x38c] sm:$0xf] %vm2483, %v2454
  %2712 = vst.msk [vmem:[%s3 + $0x390] sm:$0xf] %vm2483, %v2455
  %2713 = vst.msk [vmem:[%s3 + $0x394] sm:$0xf] %vm2483, %v2456
  %2714 = vst.msk [vmem:[%s3 + $0x398] sm:$0xf] %vm2483, %v2457
  %2715 = vst.msk [vmem:[%s3 + $0x39c] sm:$0xf] %vm2483, %v2458
  %2716 = vst.msk [vmem:[%s3 + $0x3a0] sm:$0xf] %vm2483, %v2459
  %2717 = vst.msk [vmem:[%s3 + $0x3a4] sm:$0xf] %vm2483, %v2460
  %2718 = vst.msk [vmem:[%s3 + $0x3a8] sm:$0xf] %vm2483, %v2461
  %2719 = vst.msk [vmem:[%s3 + $0x3ac] sm:$0xf] %vm2483, %v2462
  %2720 = vst.msk [vmem:[%s3 + $0x3b0] sm:$0xf] %vm2483, %v2463
  %2721 = vst.msk [vmem:[%s3 + $0x3b4] sm:$0xf] %vm2483, %v2464
  %2722 = vst.msk [vmem:[%s3 + $0x3b8] sm:$0xf] %vm2483, %v2465
  %2723 = vst.msk [vmem:[%s3 + $0x3bc] sm:$0xf] %vm2483, %v2466
  %2724 = vst.msk [vmem:[%s3 + $0x3c0] sm:$0xf] %vm2483, %v2467
  %2725 = vst.msk [vmem:[%s3 + $0x3c4] sm:$0xf] %vm2483, %v2468
  %2726 = vst.msk [vmem:[%s3 + $0x3c8] sm:$0xf] %vm2483, %v2469
  %2727 = vst.msk [vmem:[%s3 + $0x3cc] sm:$0xf] %vm2483, %v2470
  %2728 = vst.msk [vmem:[%s3 + $0x3d0] sm:$0xf] %vm2483, %v2471
  %2729 = vst.msk [vmem:[%s3 + $0x3d4] sm:$0xf] %vm2483, %v2472
  %2730 = vst.msk [vmem:[%s3 + $0x3d8] sm:$0xf] %vm2483, %v2473
  %2731 = vst.msk [vmem:[%s3 + $0x3dc] sm:$0xf] %vm2483, %v2474
  %2732 = vst.msk [vmem:[%s3 + $0x3e0] sm:$0xf] %vm2483, %v2475
  %2733 = vst.msk [vmem:[%s3 + $0x3e4] sm:$0xf] %vm2483, %v2476
  %2734 = vst.msk [vmem:[%s3 + $0x3e8] sm:$0xf] %vm2483, %v2477
  %2735 = vst.msk [vmem:[%s3 + $0x3ec] sm:$0xf] %vm2483, %v2478
  %2736 = vst.msk [vmem:[%s3 + $0x3f0] sm:$0xf] %vm2483, %v2479
  %2737 = vst.msk [vmem:[%s3 + $0x3f4] sm:$0xf] %vm2483, %v2480
  %2738 = vst.msk [vmem:[%s3 + $0x3f8] sm:$0xf] %vm2483, %v2481
  %2739 = vst.msk [vmem:[%s3 + $0x3fc] sm:$0xf] %vm2483, %v2482
  // Predicated region
  $region14: #{phcc_fpn_forward.5} parent=0 // pred_check
    _
  $region15: #{phcc_fpn_forward.5} parent=0 // pred_check_branch
    %2741 = sbr.rel (0) target = $region17
  $region16: #{phcc_fpn_forward.5} parent=0 // pred_region
    _
  $region17: #{phcc_fpn_forward.5} parent=0 // pred_fallthru
    _
  // Predicated region
  $region18: #{phcc_fpn_forward.5} parent=0 // pred_check
    _
  $region19: #{phcc_fpn_forward.5} parent=0 // pred_check_branch
    %2743 = sbr.rel (0) target = $region21
  $region20: #{phcc_fpn_forward.5} parent=0 // pred_region
    _
  $region21: #{phcc_fpn_forward.5} parent=0 // pred_fallthru
    _

// kernel: phcc_fpn_forward.6
$region0: #{phcc_fpn_forward.6}
  #allocation0 [shape = 'u32[]', space=smem, size = 0x4, offset = 0x4, fixed_abs, tag = 'smem constant byte address 0x4 - core index']
  #allocation1 [shape = 'u32[72,128]{1,0:T(1,128)}', space=vmem, size = 0x9000, scoped, tag = 'internal scratch']
  %s0 = inlined_call_operand.vmem [shape: bf16[512,144], index: 0, kind: input, shape index: {}]
  %s1 = inlined_call_operand.vmem [shape: bf16[144,16], index: 1, kind: input, shape index: {}]
  %s2 = inlined_call_operand.vmem [shape: f32[1,16], index: 2, kind: input, shape index: {}]
  %s3 = inlined_call_operand.vmem [shape: bf16[512,16], index: 3, kind: output, shape index: {}]
  %s4 = sld [smem:[#allocation0]]
  $region22: #{phcc_fpn_forward.6} parent=0
    _
  %s6 = ssub.s32 1, %s4
  %s7 = scalar_select 0, %s6, %s4
  // Predicated region
  $region2: #{phcc_fpn_forward.6} parent=0 // pred_check
    _
  $region3: #{phcc_fpn_forward.6} parent=0 // pred_check_branch
    %9 = sbr.rel (0) target = $region5
  $region4: #{phcc_fpn_forward.6} parent=0 // pred_region
    _
  $region5: #{phcc_fpn_forward.6} parent=0 // pred_fallthru
    _
  // Predicated region
  $region6: #{phcc_fpn_forward.6} parent=0 // pred_check
    _
  $region7: #{phcc_fpn_forward.6} parent=0 // pred_check_branch
    %11 = sbr.rel (0) target = $region9
  $region8: #{phcc_fpn_forward.6} parent=0 // pred_region
    _
  $region9: #{phcc_fpn_forward.6} parent=0 // pred_fallthru
    _
  // Predicated region
  $region10: #{phcc_fpn_forward.6} parent=0 // pred_check
    _
  $region11: #{phcc_fpn_forward.6} parent=0 // pred_check_branch
    %13 = sbr.rel (0) target = $region13
  $region12: #{phcc_fpn_forward.6} parent=0 // pred_region
    _
  $region13: #{phcc_fpn_forward.6} parent=0 // pred_fallthru
    _
  %v15 = vld [vmem:[%s0] sm:$0xff]
  %v16 = vld [vmem:[%s0 + $0x8] sm:$0xff]
  %v17 = vld [vmem:[%s0 + $0x10] sm:$0xff]
  %v18 = vld [vmem:[%s0 + $0x18] sm:$0xff]
  %v19 = vld [vmem:[%s0 + $0x20] sm:$0xff]
  %v20 = vld [vmem:[%s0 + $0x28] sm:$0xff]
  %v21 = vld [vmem:[%s0 + $0x30] sm:$0xff]
  %v22 = vld [vmem:[%s0 + $0x38] sm:$0xff]
  %v23 = vld [vmem:[%s0 + $0x40] sm:$0xff]
  %v24 = vld [vmem:[%s0 + $0x48] sm:$0xff]
  %v25 = vld [vmem:[%s0 + $0x50] sm:$0xff]
  %v26 = vld [vmem:[%s0 + $0x58] sm:$0xff]
  %v27 = vld [vmem:[%s0 + $0x60] sm:$0xff]
  %v28 = vld [vmem:[%s0 + $0x68] sm:$0xff]
  %v29 = vld [vmem:[%s0 + $0x70] sm:$0xff]
  %v30 = vld [vmem:[%s0 + $0x78] sm:$0xff]
  %v31 = vld [vmem:[%s0 + $0x80] sm:$0xff]
  %v32 = vld [vmem:[%s0 + $0x88] sm:$0xff]
  %v33 = vld [vmem:[%s0 + $0x90] sm:$0xff]
  %v34 = vld [vmem:[%s0 + $0x98] sm:$0xff]
  %v35 = vld [vmem:[%s0 + $0xa0] sm:$0xff]
  %v36 = vld [vmem:[%s0 + $0xa8] sm:$0xff]
  %v37 = vld [vmem:[%s0 + $0xb0] sm:$0xff]
  %v38 = vld [vmem:[%s0 + $0xb8] sm:$0xff]
  %v39 = vld [vmem:[%s0 + $0xc0] sm:$0xff]
  %v40 = vld [vmem:[%s0 + $0xc8] sm:$0xff]
  %v41 = vld [vmem:[%s0 + $0xd0] sm:$0xff]
  %v42 = vld [vmem:[%s0 + $0xd8] sm:$0xff]
  %v43 = vld [vmem:[%s0 + $0xe0] sm:$0xff]
  %v44 = vld [vmem:[%s0 + $0xe8] sm:$0xff]
  %v45 = vld [vmem:[%s0 + $0xf0] sm:$0xff]
  %v46 = vld [vmem:[%s0 + $0xf8] sm:$0xff]
  %v47 = vld [vmem:[%s0 + $0x100] sm:$0xff]
  %v48 = vld [vmem:[%s0 + $0x108] sm:$0xff]
  %v49 = vld [vmem:[%s0 + $0x110] sm:$0xff]
  %v50 = vld [vmem:[%s0 + $0x118] sm:$0xff]
  %v51 = vld [vmem:[%s0 + $0x120] sm:$0xff]
  %v52 = vld [vmem:[%s0 + $0x128] sm:$0xff]
  %v53 = vld [vmem:[%s0 + $0x130] sm:$0xff]
  %v54 = vld [vmem:[%s0 + $0x138] sm:$0xff]
  %v55 = vld [vmem:[%s0 + $0x140] sm:$0xff]
  %v56 = vld [vmem:[%s0 + $0x148] sm:$0xff]
  %v57 = vld [vmem:[%s0 + $0x150] sm:$0xff]
  %v58 = vld [vmem:[%s0 + $0x158] sm:$0xff]
  %v59 = vld [vmem:[%s0 + $0x160] sm:$0xff]
  %v60 = vld [vmem:[%s0 + $0x168] sm:$0xff]
  %v61 = vld [vmem:[%s0 + $0x170] sm:$0xff]
  %v62 = vld [vmem:[%s0 + $0x178] sm:$0xff]
  %v63 = vld [vmem:[%s0 + $0x180] sm:$0xff]
  %v64 = vld [vmem:[%s0 + $0x188] sm:$0xff]
  %v65 = vld [vmem:[%s0 + $0x190] sm:$0xff]
  %v66 = vld [vmem:[%s0 + $0x198] sm:$0xff]
  %v67 = vld [vmem:[%s0 + $0x1a0] sm:$0xff]
  %v68 = vld [vmem:[%s0 + $0x1a8] sm:$0xff]
  %v69 = vld [vmem:[%s0 + $0x1b0] sm:$0xff]
  %v70 = vld [vmem:[%s0 + $0x1b8] sm:$0xff]
  %v71 = vld [vmem:[%s0 + $0x1c0] sm:$0xff]
  %v72 = vld [vmem:[%s0 + $0x1c8] sm:$0xff]
  %v73 = vld [vmem:[%s0 + $0x1d0] sm:$0xff]
  %v74 = vld [vmem:[%s0 + $0x1d8] sm:$0xff]
  %v75 = vld [vmem:[%s0 + $0x1e0] sm:$0xff]
  %v76 = vld [vmem:[%s0 + $0x1e8] sm:$0xff]
  %v77 = vld [vmem:[%s0 + $0x1f0] sm:$0xff]
  %v78 = vld [vmem:[%s0 + $0x1f8] sm:$0xff]
  %v79 = vld [vmem:[%s1] sm:$0xf]
  %v80 = vld [vmem:[%s1 + $0x4] sm:$0xf]
  %v81 = vld [vmem:[%s1 + $0x8] sm:$0xf]
  %v82 = vld [vmem:[%s1 + $0xc] sm:$0xf]
  %v83 = vld [vmem:[%s1 + $0x10] sm:$0xf]
  %v84 = vld [vmem:[%s1 + $0x14] sm:$0xf]
  %v85 = vld [vmem:[%s1 + $0x18] sm:$0xf]
  %v86 = vld [vmem:[%s1 + $0x1c] sm:$0xf]
  %v87 = vld [vmem:[%s1 + $0x20] sm:$0xf]
  %v88 = vld [vmem:[%s1 + $0x24] sm:$0xf]
  %v89 = vld [vmem:[%s1 + $0x28] sm:$0xf]
  %v90 = vld [vmem:[%s1 + $0x2c] sm:$0xf]
  %v91 = vld [vmem:[%s1 + $0x30] sm:$0xf]
  %v92 = vld [vmem:[%s1 + $0x34] sm:$0xf]
  %v93 = vld [vmem:[%s1 + $0x38] sm:$0xf]
  %v94 = vld [vmem:[%s1 + $0x3c] sm:$0xf]
  %v95 = vld [vmem:[%s1 + $0x40] sm:$0xf]
  %v96 = vld [vmem:[%s1 + $0x44] sm:$0xf]
  %v97 = vld [vmem:[%s2] sm:$0x1]
  %v99 = vperm.slane %v97, 0
  %v165 = vunpack.c.l.b16 %v15
  %v166 = vunpack.c.h.b16 %v15
  %v167 = vunpack.c.l.b16 %v16
  %v168 = vunpack.c.h.b16 %v16
  %v169 = vunpack.c.l.b16 %v17
  %v170 = vunpack.c.h.b16 %v17
  %v171 = vunpack.c.l.b16 %v18
  %v172 = vunpack.c.h.b16 %v18
  %v173 = vunpack.c.l.b16 %v19
  %v174 = vunpack.c.h.b16 %v19
  %v175 = vunpack.c.l.b16 %v20
  %v176 = vunpack.c.h.b16 %v20
  %v177 = vunpack.c.l.b16 %v21
  %v178 = vunpack.c.h.b16 %v21
  %v179 = vunpack.c.l.b16 %v22
  %v180 = vunpack.c.h.b16 %v22
  %v181 = vunpack.c.l.b16 %v23
  %v182 = vunpack.c.h.b16 %v23
  %v183 = vunpack.c.l.b16 %v24
  %v184 = vunpack.c.h.b16 %v24
  %v185 = vunpack.c.l.b16 %v25
  %v186 = vunpack.c.h.b16 %v25
  %v187 = vunpack.c.l.b16 %v26
  %v188 = vunpack.c.h.b16 %v26
  %v189 = vunpack.c.l.b16 %v27
  %v190 = vunpack.c.h.b16 %v27
  %v191 = vunpack.c.l.b16 %v28
  %v192 = vunpack.c.h.b16 %v28
  %v193 = vunpack.c.l.b16 %v29
  %v194 = vunpack.c.h.b16 %v29
  %v195 = vunpack.c.l.b16 %v30
  %v196 = vunpack.c.h.b16 %v30
  %v197 = vunpack.c.l.b16 %v31
  %v198 = vunpack.c.h.b16 %v31
  %v199 = vunpack.c.l.b16 %v32
  %v200 = vunpack.c.h.b16 %v32
  %v201 = vunpack.c.l.b16 %v33
  %v202 = vunpack.c.h.b16 %v33
  %v203 = vunpack.c.l.b16 %v34
  %v204 = vunpack.c.h.b16 %v34
  %v205 = vunpack.c.l.b16 %v35
  %v206 = vunpack.c.h.b16 %v35
  %v207 = vunpack.c.l.b16 %v36
  %v208 = vunpack.c.h.b16 %v36
  %v209 = vunpack.c.l.b16 %v37
  %v210 = vunpack.c.h.b16 %v37
  %v211 = vunpack.c.l.b16 %v38
  %v212 = vunpack.c.h.b16 %v38
  %v213 = vunpack.c.l.b16 %v39
  %v214 = vunpack.c.h.b16 %v39
  %v215 = vunpack.c.l.b16 %v40
  %v216 = vunpack.c.h.b16 %v40
  %v217 = vunpack.c.l.b16 %v41
  %v218 = vunpack.c.h.b16 %v41
  %v219 = vunpack.c.l.b16 %v42
  %v220 = vunpack.c.h.b16 %v42
  %v221 = vunpack.c.l.b16 %v43
  %v222 = vunpack.c.h.b16 %v43
  %v223 = vunpack.c.l.b16 %v44
  %v224 = vunpack.c.h.b16 %v44
  %v225 = vunpack.c.l.b16 %v45
  %v226 = vunpack.c.h.b16 %v45
  %v227 = vunpack.c.l.b16 %v46
  %v228 = vunpack.c.h.b16 %v46
  %v229 = vunpack.c.l.b16 %v47
  %v230 = vunpack.c.h.b16 %v47
  %v231 = vunpack.c.l.b16 %v48
  %v232 = vunpack.c.h.b16 %v48
  %v233 = vunpack.c.l.b16 %v49
  %v234 = vunpack.c.h.b16 %v49
  %v235 = vunpack.c.l.b16 %v50
  %v236 = vunpack.c.h.b16 %v50
  %v237 = vunpack.c.l.b16 %v51
  %v238 = vunpack.c.h.b16 %v51
  %v239 = vunpack.c.l.b16 %v52
  %v240 = vunpack.c.h.b16 %v52
  %v241 = vunpack.c.l.b16 %v53
  %v242 = vunpack.c.h.b16 %v53
  %v243 = vunpack.c.l.b16 %v54
  %v244 = vunpack.c.h.b16 %v54
  %v245 = vunpack.c.l.b16 %v55
  %v246 = vunpack.c.h.b16 %v55
  %v247 = vunpack.c.l.b16 %v56
  %v248 = vunpack.c.h.b16 %v56
  %v249 = vunpack.c.l.b16 %v57
  %v250 = vunpack.c.h.b16 %v57
  %v251 = vunpack.c.l.b16 %v58
  %v252 = vunpack.c.h.b16 %v58
  %v253 = vunpack.c.l.b16 %v59
  %v254 = vunpack.c.h.b16 %v59
  %v255 = vunpack.c.l.b16 %v60
  %v256 = vunpack.c.h.b16 %v60
  %v257 = vunpack.c.l.b16 %v61
  %v258 = vunpack.c.h.b16 %v61
  %v259 = vunpack.c.l.b16 %v62
  %v260 = vunpack.c.h.b16 %v62
  %v261 = vunpack.c.l.b16 %v63
  %v262 = vunpack.c.h.b16 %v63
  %v263 = vunpack.c.l.b16 %v64
  %v264 = vunpack.c.h.b16 %v64
  %v265 = vunpack.c.l.b16 %v65
  %v266 = vunpack.c.h.b16 %v65
  %v267 = vunpack.c.l.b16 %v66
  %v268 = vunpack.c.h.b16 %v66
  %v269 = vunpack.c.l.b16 %v67
  %v270 = vunpack.c.h.b16 %v67
  %v271 = vunpack.c.l.b16 %v68
  %v272 = vunpack.c.h.b16 %v68
  %v273 = vunpack.c.l.b16 %v69
  %v274 = vunpack.c.h.b16 %v69
  %v275 = vunpack.c.l.b16 %v70
  %v276 = vunpack.c.h.b16 %v70
  %v277 = vunpack.c.l.b16 %v71
  %v278 = vunpack.c.h.b16 %v71
  %v279 = vunpack.c.l.b16 %v72
  %v280 = vunpack.c.h.b16 %v72
  %v281 = vunpack.c.l.b16 %v73
  %v282 = vunpack.c.h.b16 %v73
  %v283 = vunpack.c.l.b16 %v74
  %v284 = vunpack.c.h.b16 %v74
  %v285 = vunpack.c.l.b16 %v75
  %v286 = vunpack.c.h.b16 %v75
  %v287 = vunpack.c.l.b16 %v76
  %v288 = vunpack.c.h.b16 %v76
  %v289 = vunpack.c.l.b16 %v77
  %v290 = vunpack.c.h.b16 %v77
  %v291 = vunpack.c.l.b16 %v78
  %v292 = vunpack.c.h.b16 %v78
  %v293 = vpack.c.b16 %v167, %v165
  %v294 = vpack.c.b16 %v168, %v166
  %v295 = vpack.c.b16 %v171, %v169
  %v296 = vpack.c.b16 %v172, %v170
  %v297 = vpack.c.b16 %v175, %v173
  %v298 = vpack.c.b16 %v176, %v174
  %v299 = vpack.c.b16 %v179, %v177
  %v300 = vpack.c.b16 %v180, %v178
  %v301 = vpack.c.b16 %v183, %v181
  %v302 = vpack.c.b16 %v184, %v182
  %v303 = vpack.c.b16 %v187, %v185
  %v304 = vpack.c.b16 %v188, %v186
  %v305 = vpack.c.b16 %v191, %v189
  %v306 = vpack.c.b16 %v192, %v190
  %v307 = vpack.c.b16 %v195, %v193
  %v308 = vpack.c.b16 %v196, %v194
  %v309 = vpack.c.b16 %v199, %v197
  %v310 = vpack.c.b16 %v200, %v198
  %v311 = vpack.c.b16 %v203, %v201
  %v312 = vpack.c.b16 %v204, %v202
  %v313 = vpack.c.b16 %v207, %v205
  %v314 = vpack.c.b16 %v208, %v206
  %v315 = vpack.c.b16 %v211, %v209
  %v316 = vpack.c.b16 %v212, %v210
  %v317 = vpack.c.b16 %v215, %v213
  %v318 = vpack.c.b16 %v216, %v214
  %v319 = vpack.c.b16 %v219, %v217
  %v320 = vpack.c.b16 %v220, %v218
  %v321 = vpack.c.b16 %v223, %v221
  %v322 = vpack.c.b16 %v224, %v222
  %v323 = vpack.c.b16 %v227, %v225
  %v324 = vpack.c.b16 %v228, %v226
  %v325 = vpack.c.b16 %v231, %v229
  %v326 = vpack.c.b16 %v232, %v230
  %v327 = vpack.c.b16 %v235, %v233
  %v328 = vpack.c.b16 %v236, %v234
  %v329 = vpack.c.b16 %v239, %v237
  %v330 = vpack.c.b16 %v240, %v238
  %v331 = vpack.c.b16 %v243, %v241
  %v332 = vpack.c.b16 %v244, %v242
  %v333 = vpack.c.b16 %v247, %v245
  %v334 = vpack.c.b16 %v248, %v246
  %v335 = vpack.c.b16 %v251, %v249
  %v336 = vpack.c.b16 %v252, %v250
  %v337 = vpack.c.b16 %v255, %v253
  %v338 = vpack.c.b16 %v256, %v254
  %v339 = vpack.c.b16 %v259, %v257
  %v340 = vpack.c.b16 %v260, %v258
  %v341 = vpack.c.b16 %v263, %v261
  %v342 = vpack.c.b16 %v264, %v262
  %v343 = vpack.c.b16 %v267, %v265
  %v344 = vpack.c.b16 %v268, %v266
  %v345 = vpack.c.b16 %v271, %v269
  %v346 = vpack.c.b16 %v272, %v270
  %v347 = vpack.c.b16 %v275, %v273
  %v348 = vpack.c.b16 %v276, %v274
  %v349 = vpack.c.b16 %v279, %v277
  %v350 = vpack.c.b16 %v280, %v278
  %v351 = vpack.c.b16 %v283, %v281
  %v352 = vpack.c.b16 %v284, %v282
  %v353 = vpack.c.b16 %v287, %v285
  %v354 = vpack.c.b16 %v288, %v286
  %v355 = vpack.c.b16 %v291, %v289
  %v356 = vpack.c.b16 %v292, %v290
  %v407 = vunpack.c.l.b16 %v79
  %v408 = vunpack.c.l.b16 %v80
  %v409 = vunpack.c.l.b16 %v81
  %v410 = vunpack.c.l.b16 %v82
  %v411 = vunpack.c.l.b16 %v83
  %v412 = vunpack.c.l.b16 %v84
  %v413 = vunpack.c.l.b16 %v85
  %v414 = vunpack.c.l.b16 %v86
  %v415 = vunpack.c.l.b16 %v87
  %v416 = vunpack.c.l.b16 %v88
  %v417 = vunpack.c.l.b16 %v89
  %v418 = vunpack.c.l.b16 %v90
  %v419 = vunpack.c.l.b16 %v91
  %v420 = vunpack.c.l.b16 %v92
  %v421 = vunpack.c.l.b16 %v93
  %v422 = vunpack.c.l.b16 %v94
  %v423 = vunpack.c.l.b16 %v95
  %v424 = vunpack.c.l.b16 %v96
  %v425 = vpack.c.b16 %v408, %v407
  %v426 = vpack.c.b16 %v410, %v409
  %v427 = vpack.c.b16 %v412, %v411
  %v428 = vpack.c.b16 %v414, %v413
  %v429 = vpack.c.b16 %v416, %v415
  %v430 = vpack.c.b16 %v418, %v417
  %v431 = vpack.c.b16 %v420, %v419
  %v432 = vpack.c.b16 %v422, %v421
  %v433 = vpack.c.b16 %v424, %v423
  %vm443 = vcmask 130048
  %v445 = vsel %vm443, %v294, 0
  %v448 = vsel %vm443, %v296, 0
  %v451 = vsel %vm443, %v298, 0
  %v454 = vsel %vm443, %v300, 0
  %v457 = vsel %vm443, %v302, 0
  %v460 = vsel %vm443, %v304, 0
  %v463 = vsel %vm443, %v306, 0
  %v466 = vsel %vm443, %v308, 0
  %v469 = vsel %vm443, %v310, 0
  %v472 = vsel %vm443, %v312, 0
  %v475 = vsel %vm443, %v314, 0
  %v478 = vsel %vm443, %v316, 0
  %v481 = vsel %vm443, %v318, 0
  %v484 = vsel %vm443, %v320, 0
  %v487 = vsel %vm443, %v322, 0
  %v490 = vsel %vm443, %v324, 0
  %v493 = vsel %vm443, %v326, 0
  %v496 = vsel %vm443, %v328, 0
  %v499 = vsel %vm443, %v330, 0
  %v502 = vsel %vm443, %v332, 0
  %v505 = vsel %vm443, %v334, 0
  %v508 = vsel %vm443, %v336, 0
  %v511 = vsel %vm443, %v338, 0
  %v514 = vsel %vm443, %v340, 0
  %v517 = vsel %vm443, %v342, 0
  %v520 = vsel %vm443, %v344, 0
  %v523 = vsel %vm443, %v346, 0
  %v526 = vsel %vm443, %v348, 0
  %v529 = vsel %vm443, %v350, 0
  %v532 = vsel %vm443, %v352, 0
  %v535 = vsel %vm443, %v354, 0
  %v538 = vsel %vm443, %v356, 0
  %540 = vmatpush.bf16.msra.mxu0 %v432
  %541 = vmatpush.bf16.msra.mxu0 %v431
  %542 = vmatpush.bf16.msra.mxu0 %v430
  %543 = vmatpush.bf16.msra.mxu0 %v429
  %544 = vmatpush.bf16.msra.mxu0 %v428
  %545 = vmatpush.bf16.msra.mxu0 %v427
  %546 = vmatpush.bf16.msra.mxu0 %v426
  %547 = vmatpush.bf16.msra.mxu0 %v425
  %548 = vmatmul.bf16.gmra.mxu0 %v293
  %v549 = vpop.f32.mrf.mxu0
  %v550 = vadd.f32 %v99, %v549
  %v551 = vpop.f32.mrf.mxu0
  %v552 = vadd.f32 %v99, %v551
  %553 = vmatmul.bf16.gmra.mxu0 %v295
  %v554 = vpop.f32.mrf.mxu0
  %v555 = vadd.f32 %v99, %v554
  %v556 = vpop.f32.mrf.mxu0
  %v557 = vadd.f32 %v99, %v556
  %558 = vmatmul.bf16.gmra.mxu0 %v297
  %v559 = vpop.f32.mrf.mxu0
  %v560 = vadd.f32 %v99, %v559
  %v561 = vpop.f32.mrf.mxu0
  %v562 = vadd.f32 %v99, %v561
  %563 = vmatmul.bf16.gmra.mxu0 %v299
  %v564 = vpop.f32.mrf.mxu0
  %v565 = vadd.f32 %v99, %v564
  %v566 = vpop.f32.mrf.mxu0
  %v567 = vadd.f32 %v99, %v566
  %568 = vmatmul.bf16.gmra.mxu0 %v301
  %v569 = vpop.f32.mrf.mxu0
  %v570 = vadd.f32 %v99, %v569
  %v571 = vpop.f32.mrf.mxu0
  %v572 = vadd.f32 %v99, %v571
  %573 = vmatmul.bf16.gmra.mxu0 %v303
  %v574 = vpop.f32.mrf.mxu0
  %v575 = vadd.f32 %v99, %v574
  %v576 = vpop.f32.mrf.mxu0
  %v577 = vadd.f32 %v99, %v576
  %578 = vmatmul.bf16.gmra.mxu0 %v305
  %v579 = vpop.f32.mrf.mxu0
  %v580 = vadd.f32 %v99, %v579
  %v581 = vpop.f32.mrf.mxu0
  %v582 = vadd.f32 %v99, %v581
  %583 = vmatmul.bf16.gmra.mxu0 %v307
  %v584 = vpop.f32.mrf.mxu0
  %v585 = vadd.f32 %v99, %v584
  %v586 = vpop.f32.mrf.mxu0
  %v587 = vadd.f32 %v99, %v586
  %588 = vmatmul.bf16.gmra.mxu0 %v309
  %v589 = vpop.f32.mrf.mxu0
  %v590 = vadd.f32 %v99, %v589
  %v591 = vpop.f32.mrf.mxu0
  %v592 = vadd.f32 %v99, %v591
  %593 = vmatmul.bf16.gmra.mxu0 %v311
  %v594 = vpop.f32.mrf.mxu0
  %v595 = vadd.f32 %v99, %v594
  %v596 = vpop.f32.mrf.mxu0
  %v597 = vadd.f32 %v99, %v596
  %598 = vmatmul.bf16.gmra.mxu0 %v313
  %v599 = vpop.f32.mrf.mxu0
  %v600 = vadd.f32 %v99, %v599
  %v601 = vpop.f32.mrf.mxu0
  %v602 = vadd.f32 %v99, %v601
  %603 = vmatmul.bf16.gmra.mxu0 %v315
  %v604 = vpop.f32.mrf.mxu0
  %v605 = vadd.f32 %v99, %v604
  %v606 = vpop.f32.mrf.mxu0
  %v607 = vadd.f32 %v99, %v606
  %608 = vmatmul.bf16.gmra.mxu0 %v317
  %v609 = vpop.f32.mrf.mxu0
  %v610 = vadd.f32 %v99, %v609
  %v611 = vpop.f32.mrf.mxu0
  %v612 = vadd.f32 %v99, %v611
  %613 = vmatmul.bf16.gmra.mxu0 %v319
  %v614 = vpop.f32.mrf.mxu0
  %v615 = vadd.f32 %v99, %v614
  %v616 = vpop.f32.mrf.mxu0
  %v617 = vadd.f32 %v99, %v616
  %618 = vmatmul.bf16.gmra.mxu0 %v321
  %v619 = vpop.f32.mrf.mxu0
  %v620 = vadd.f32 %v99, %v619
  %v621 = vpop.f32.mrf.mxu0
  %v622 = vadd.f32 %v99, %v621
  %623 = vmatmul.bf16.gmra.mxu0 %v323
  %v624 = vpop.f32.mrf.mxu0
  %v625 = vadd.f32 %v99, %v624
  %v626 = vpop.f32.mrf.mxu0
  %v627 = vadd.f32 %v99, %v626
  %628 = vmatmul.bf16.gmra.mxu0 %v325
  %v629 = vpop.f32.mrf.mxu0
  %v630 = vadd.f32 %v99, %v629
  %v631 = vpop.f32.mrf.mxu0
  %v632 = vadd.f32 %v99, %v631
  %633 = vmatmul.bf16.gmra.mxu0 %v327
  %v634 = vpop.f32.mrf.mxu0
  %v635 = vadd.f32 %v99, %v634
  %v636 = vpop.f32.mrf.mxu0
  %v637 = vadd.f32 %v99, %v636
  %638 = vmatmul.bf16.gmra.mxu0 %v329
  %v639 = vpop.f32.mrf.mxu0
  %v640 = vadd.f32 %v99, %v639
  %v641 = vpop.f32.mrf.mxu0
  %v642 = vadd.f32 %v99, %v641
  %643 = vmatmul.bf16.gmra.mxu0 %v331
  %v644 = vpop.f32.mrf.mxu0
  %v645 = vadd.f32 %v99, %v644
  %v646 = vpop.f32.mrf.mxu0
  %v647 = vadd.f32 %v99, %v646
  %648 = vmatmul.bf16.gmra.mxu0 %v333
  %v649 = vpop.f32.mrf.mxu0
  %v650 = vadd.f32 %v99, %v649
  %v651 = vpop.f32.mrf.mxu0
  %v652 = vadd.f32 %v99, %v651
  %653 = vmatmul.bf16.gmra.mxu0 %v335
  %v654 = vpop.f32.mrf.mxu0
  %v655 = vadd.f32 %v99, %v654
  %v656 = vpop.f32.mrf.mxu0
  %v657 = vadd.f32 %v99, %v656
  %658 = vmatmul.bf16.gmra.mxu0 %v337
  %v659 = vpop.f32.mrf.mxu0
  %v660 = vadd.f32 %v99, %v659
  %v661 = vpop.f32.mrf.mxu0
  %v662 = vadd.f32 %v99, %v661
  %663 = vmatmul.bf16.gmra.mxu0 %v339
  %v664 = vpop.f32.mrf.mxu0
  %v665 = vadd.f32 %v99, %v664
  %v666 = vpop.f32.mrf.mxu0
  %v667 = vadd.f32 %v99, %v666
  %668 = vmatmul.bf16.gmra.mxu0 %v341
  %v669 = vpop.f32.mrf.mxu0
  %v670 = vadd.f32 %v99, %v669
  %v671 = vpop.f32.mrf.mxu0
  %v672 = vadd.f32 %v99, %v671
  %673 = vmatmul.bf16.gmra.mxu0 %v343
  %v674 = vpop.f32.mrf.mxu0
  %v675 = vadd.f32 %v99, %v674
  %v676 = vpop.f32.mrf.mxu0
  %v677 = vadd.f32 %v99, %v676
  %678 = vmatmul.bf16.gmra.mxu0 %v345
  %v679 = vpop.f32.mrf.mxu0
  %v680 = vadd.f32 %v99, %v679
  %v681 = vpop.f32.mrf.mxu0
  %v682 = vadd.f32 %v99, %v681
  %683 = vmatmul.bf16.gmra.mxu0 %v347
  %v684 = vpop.f32.mrf.mxu0
  %v685 = vadd.f32 %v99, %v684
  %v686 = vpop.f32.mrf.mxu0
  %v687 = vadd.f32 %v99, %v686
  %688 = vmatmul.bf16.gmra.mxu0 %v349
  %v689 = vpop.f32.mrf.mxu0
  %v690 = vadd.f32 %v99, %v689
  %v691 = vpop.f32.mrf.mxu0
  %v692 = vadd.f32 %v99, %v691
  %693 = vmatmul.bf16.gmra.mxu0 %v351
  %v694 = vpop.f32.mrf.mxu0
  %v695 = vadd.f32 %v99, %v694
  %v696 = vpop.f32.mrf.mxu0
  %v697 = vadd.f32 %v99, %v696
  %698 = vmatmul.bf16.gmra.mxu0 %v353
  %v699 = vpop.f32.mrf.mxu0
  %v700 = vadd.f32 %v99, %v699
  %v701 = vpop.f32.mrf.mxu0
  %v702 = vadd.f32 %v99, %v701
  %703 = vmatmul.bf16.gmra.mxu0 %v355
  %v704 = vpop.f32.mrf.mxu0
  %v705 = vadd.f32 %v99, %v704
  %v706 = vpop.f32.mrf.mxu0
  %v707 = vadd.f32 %v99, %v706
  %708 = vdwg.mxu0
  %709 = vmatpush.bf16.msra.mxu0 0
  %710 = vmatpush.bf16.msra.mxu0 0
  %711 = vmatpush.bf16.msra.mxu0 0
  %712 = vmatpush.bf16.msra.mxu0 0
  %713 = vmatpush.bf16.msra.mxu0 0
  %714 = vmatpush.bf16.msra.mxu0 0
  %715 = vmatpush.bf16.msra.mxu0 0
  %716 = vmatpush.bf16.msra.mxu0 %v433
  %717 = vmatmul.bf16.gmra.mxu0 %v445
  %v718 = vpop.f32.mrf.mxu0
  %v719 = vadd.f32 %v550, %v718
  %v720 = vpop.f32.mrf.mxu0
  %v721 = vadd.f32 %v552, %v720
  %722 = vmatmul.bf16.gmra.mxu0 %v448
  %v723 = vpop.f32.mrf.mxu0
  %v724 = vadd.f32 %v555, %v723
  %v725 = vpop.f32.mrf.mxu0
  %v726 = vadd.f32 %v557, %v725
  %727 = vmatmul.bf16.gmra.mxu0 %v451
  %v728 = vpop.f32.mrf.mxu0
  %v729 = vadd.f32 %v560, %v728
  %v730 = vpop.f32.mrf.mxu0
  %v731 = vadd.f32 %v562, %v730
  %732 = vmatmul.bf16.gmra.mxu0 %v454
  %v733 = vpop.f32.mrf.mxu0
  %v734 = vadd.f32 %v565, %v733
  %v735 = vpop.f32.mrf.mxu0
  %v736 = vadd.f32 %v567, %v735
  %737 = vmatmul.bf16.gmra.mxu0 %v457
  %v738 = vpop.f32.mrf.mxu0
  %v739 = vadd.f32 %v570, %v738
  %v740 = vpop.f32.mrf.mxu0
  %v741 = vadd.f32 %v572, %v740
  %742 = vmatmul.bf16.gmra.mxu0 %v460
  %v743 = vpop.f32.mrf.mxu0
  %v744 = vadd.f32 %v575, %v743
  %v745 = vpop.f32.mrf.mxu0
  %v746 = vadd.f32 %v577, %v745
  %747 = vmatmul.bf16.gmra.mxu0 %v463
  %v748 = vpop.f32.mrf.mxu0
  %v749 = vadd.f32 %v580, %v748
  %v750 = vpop.f32.mrf.mxu0
  %v751 = vadd.f32 %v582, %v750
  %752 = vmatmul.bf16.gmra.mxu0 %v466
  %v753 = vpop.f32.mrf.mxu0
  %v754 = vadd.f32 %v585, %v753
  %v755 = vpop.f32.mrf.mxu0
  %v756 = vadd.f32 %v587, %v755
  %757 = vmatmul.bf16.gmra.mxu0 %v469
  %v758 = vpop.f32.mrf.mxu0
  %v759 = vadd.f32 %v590, %v758
  %v760 = vpop.f32.mrf.mxu0
  %v761 = vadd.f32 %v592, %v760
  %762 = vmatmul.bf16.gmra.mxu0 %v472
  %v763 = vpop.f32.mrf.mxu0
  %v764 = vadd.f32 %v595, %v763
  %v765 = vpop.f32.mrf.mxu0
  %v766 = vadd.f32 %v597, %v765
  %767 = vmatmul.bf16.gmra.mxu0 %v475
  %v768 = vpop.f32.mrf.mxu0
  %v769 = vadd.f32 %v600, %v768
  %v770 = vpop.f32.mrf.mxu0
  %v771 = vadd.f32 %v602, %v770
  %772 = vmatmul.bf16.gmra.mxu0 %v478
  %v773 = vpop.f32.mrf.mxu0
  %v774 = vadd.f32 %v605, %v773
  %v775 = vpop.f32.mrf.mxu0
  %v776 = vadd.f32 %v607, %v775
  %777 = vmatmul.bf16.gmra.mxu0 %v481
  %v778 = vpop.f32.mrf.mxu0
  %v779 = vadd.f32 %v610, %v778
  %v780 = vpop.f32.mrf.mxu0
  %v781 = vadd.f32 %v612, %v780
  %782 = vmatmul.bf16.gmra.mxu0 %v484
  %v783 = vpop.f32.mrf.mxu0
  %v784 = vadd.f32 %v615, %v783
  %v785 = vpop.f32.mrf.mxu0
  %v786 = vadd.f32 %v617, %v785
  %787 = vmatmul.bf16.gmra.mxu0 %v487
  %v788 = vpop.f32.mrf.mxu0
  %v789 = vadd.f32 %v620, %v788
  %v790 = vpop.f32.mrf.mxu0
  %v791 = vadd.f32 %v622, %v790
  %792 = vmatmul.bf16.gmra.mxu0 %v490
  %v793 = vpop.f32.mrf.mxu0
  %v794 = vadd.f32 %v625, %v793
  %v795 = vpop.f32.mrf.mxu0
  %v796 = vadd.f32 %v627, %v795
  %797 = vmatmul.bf16.gmra.mxu0 %v493
  %v798 = vpop.f32.mrf.mxu0
  %v799 = vadd.f32 %v630, %v798
  %v800 = vpop.f32.mrf.mxu0
  %v801 = vadd.f32 %v632, %v800
  %802 = vmatmul.bf16.gmra.mxu0 %v496
  %v803 = vpop.f32.mrf.mxu0
  %v804 = vadd.f32 %v635, %v803
  %v805 = vpop.f32.mrf.mxu0
  %v806 = vadd.f32 %v637, %v805
  %807 = vmatmul.bf16.gmra.mxu0 %v499
  %v808 = vpop.f32.mrf.mxu0
  %v809 = vadd.f32 %v640, %v808
  %v810 = vpop.f32.mrf.mxu0
  %v811 = vadd.f32 %v642, %v810
  %812 = vmatmul.bf16.gmra.mxu0 %v502
  %v813 = vpop.f32.mrf.mxu0
  %v814 = vadd.f32 %v645, %v813
  %v815 = vpop.f32.mrf.mxu0
  %v816 = vadd.f32 %v647, %v815
  %817 = vmatmul.bf16.gmra.mxu0 %v505
  %v818 = vpop.f32.mrf.mxu0
  %v819 = vadd.f32 %v650, %v818
  %v820 = vpop.f32.mrf.mxu0
  %v821 = vadd.f32 %v652, %v820
  %822 = vmatmul.bf16.gmra.mxu0 %v508
  %v823 = vpop.f32.mrf.mxu0
  %v824 = vadd.f32 %v655, %v823
  %v825 = vpop.f32.mrf.mxu0
  %v826 = vadd.f32 %v657, %v825
  %827 = vmatmul.bf16.gmra.mxu0 %v511
  %v828 = vpop.f32.mrf.mxu0
  %v829 = vadd.f32 %v660, %v828
  %v830 = vpop.f32.mrf.mxu0
  %v831 = vadd.f32 %v662, %v830
  %832 = vmatmul.bf16.gmra.mxu0 %v514
  %v833 = vpop.f32.mrf.mxu0
  %v834 = vadd.f32 %v665, %v833
  %v835 = vpop.f32.mrf.mxu0
  %v836 = vadd.f32 %v667, %v835
  %837 = vmatmul.bf16.gmra.mxu0 %v517
  %v838 = vpop.f32.mrf.mxu0
  %v839 = vadd.f32 %v670, %v838
  %v840 = vpop.f32.mrf.mxu0
  %v841 = vadd.f32 %v672, %v840
  %842 = vmatmul.bf16.gmra.mxu0 %v520
  %v843 = vpop.f32.mrf.mxu0
  %v844 = vadd.f32 %v675, %v843
  %v845 = vpop.f32.mrf.mxu0
  %v846 = vadd.f32 %v677, %v845
  %847 = vmatmul.bf16.gmra.mxu0 %v523
  %v848 = vpop.f32.mrf.mxu0
  %v849 = vadd.f32 %v680, %v848
  %v850 = vpop.f32.mrf.mxu0
  %v851 = vadd.f32 %v682, %v850
  %852 = vmatmul.bf16.gmra.mxu0 %v526
  %v853 = vpop.f32.mrf.mxu0
  %v854 = vadd.f32 %v685, %v853
  %v855 = vpop.f32.mrf.mxu0
  %v856 = vadd.f32 %v687, %v855
  %857 = vmatmul.bf16.gmra.mxu0 %v529
  %v858 = vpop.f32.mrf.mxu0
  %v859 = vadd.f32 %v690, %v858
  %v860 = vpop.f32.mrf.mxu0
  %v861 = vadd.f32 %v692, %v860
  %862 = vmatmul.bf16.gmra.mxu0 %v532
  %v863 = vpop.f32.mrf.mxu0
  %v864 = vadd.f32 %v695, %v863
  %v865 = vpop.f32.mrf.mxu0
  %v866 = vadd.f32 %v697, %v865
  %867 = vmatmul.bf16.gmra.mxu0 %v535
  %v868 = vpop.f32.mrf.mxu0
  %v869 = vadd.f32 %v700, %v868
  %v870 = vpop.f32.mrf.mxu0
  %v871 = vadd.f32 %v702, %v870
  %872 = vmatmul.bf16.gmra.mxu0 %v538
  %v873 = vpop.f32.mrf.mxu0
  %v874 = vadd.f32 %v705, %v873
  %v875 = vpop.f32.mrf.mxu0
  %v876 = vadd.f32 %v707, %v875
  %877 = vdwg.mxu0
  %v878 = vmax.f32 %v719, 0.0
  %v879 = vmax.f32 %v721, 0.0
  %v880 = vmax.f32 %v724, 0.0
  %v881 = vmax.f32 %v726, 0.0
  %v882 = vmax.f32 %v729, 0.0
  %v883 = vmax.f32 %v731, 0.0
  %v884 = vmax.f32 %v734, 0.0
  %v885 = vmax.f32 %v736, 0.0
  %v886 = vmax.f32 %v739, 0.0
  %v887 = vmax.f32 %v741, 0.0
  %v888 = vmax.f32 %v744, 0.0
  %v889 = vmax.f32 %v746, 0.0
  %v890 = vmax.f32 %v749, 0.0
  %v891 = vmax.f32 %v751, 0.0
  %v892 = vmax.f32 %v754, 0.0
  %v893 = vmax.f32 %v756, 0.0
  %v894 = vmax.f32 %v759, 0.0
  %v895 = vmax.f32 %v761, 0.0
  %v896 = vmax.f32 %v764, 0.0
  %v897 = vmax.f32 %v766, 0.0
  %v898 = vmax.f32 %v769, 0.0
  %v899 = vmax.f32 %v771, 0.0
  %v900 = vmax.f32 %v774, 0.0
  %v901 = vmax.f32 %v776, 0.0
  %v902 = vmax.f32 %v779, 0.0
  %v903 = vmax.f32 %v781, 0.0
  %v904 = vmax.f32 %v784, 0.0
  %v905 = vmax.f32 %v786, 0.0
  %v906 = vmax.f32 %v789, 0.0
  %v907 = vmax.f32 %v791, 0.0
  %v908 = vmax.f32 %v794, 0.0
  %v909 = vmax.f32 %v796, 0.0
  %v910 = vmax.f32 %v799, 0.0
  %v911 = vmax.f32 %v801, 0.0
  %v912 = vmax.f32 %v804, 0.0
  %v913 = vmax.f32 %v806, 0.0
  %v914 = vmax.f32 %v809, 0.0
  %v915 = vmax.f32 %v811, 0.0
  %v916 = vmax.f32 %v814, 0.0
  %v917 = vmax.f32 %v816, 0.0
  %v918 = vmax.f32 %v819, 0.0
  %v919 = vmax.f32 %v821, 0.0
  %v920 = vmax.f32 %v824, 0.0
  %v921 = vmax.f32 %v826, 0.0
  %v922 = vmax.f32 %v829, 0.0
  %v923 = vmax.f32 %v831, 0.0
  %v924 = vmax.f32 %v834, 0.0
  %v925 = vmax.f32 %v836, 0.0
  %v926 = vmax.f32 %v839, 0.0
  %v927 = vmax.f32 %v841, 0.0
  %v928 = vmax.f32 %v844, 0.0
  %v929 = vmax.f32 %v846, 0.0
  %v930 = vmax.f32 %v849, 0.0
  %v931 = vmax.f32 %v851, 0.0
  %v932 = vmax.f32 %v854, 0.0
  %v933 = vmax.f32 %v856, 0.0
  %v934 = vmax.f32 %v859, 0.0
  %v935 = vmax.f32 %v861, 0.0
  %v936 = vmax.f32 %v864, 0.0
  %v937 = vmax.f32 %v866, 0.0
  %v938 = vmax.f32 %v869, 0.0
  %v939 = vmax.f32 %v871, 0.0
  %v940 = vmax.f32 %v874, 0.0
  %v941 = vmax.f32 %v876, 0.0
  %v942 = vpack.c.bf16 %v878, %v878
  %v943 = vpack.c.bf16 %v879, %v879
  %v944 = vpack.c.bf16 %v880, %v880
  %v945 = vpack.c.bf16 %v881, %v881
  %v946 = vpack.c.bf16 %v882, %v882
  %v947 = vpack.c.bf16 %v883, %v883
  %v948 = vpack.c.bf16 %v884, %v884
  %v949 = vpack.c.bf16 %v885, %v885
  %v950 = vpack.c.bf16 %v886, %v886
  %v951 = vpack.c.bf16 %v887, %v887
  %v952 = vpack.c.bf16 %v888, %v888
  %v953 = vpack.c.bf16 %v889, %v889
  %v954 = vpack.c.bf16 %v890, %v890
  %v955 = vpack.c.bf16 %v891, %v891
  %v956 = vpack.c.bf16 %v892, %v892
  %v957 = vpack.c.bf16 %v893, %v893
  %v958 = vpack.c.bf16 %v894, %v894
  %v959 = vpack.c.bf16 %v895, %v895
  %v960 = vpack.c.bf16 %v896, %v896
  %v961 = vpack.c.bf16 %v897, %v897
  %v962 = vpack.c.bf16 %v898, %v898
  %v963 = vpack.c.bf16 %v899, %v899
  %v964 = vpack.c.bf16 %v900, %v900
  %v965 = vpack.c.bf16 %v901, %v901
  %v966 = vpack.c.bf16 %v902, %v902
  %v967 = vpack.c.bf16 %v903, %v903
  %v968 = vpack.c.bf16 %v904, %v904
  %v969 = vpack.c.bf16 %v905, %v905
  %v970 = vpack.c.bf16 %v906, %v906
  %v971 = vpack.c.bf16 %v907, %v907
  %v972 = vpack.c.bf16 %v908, %v908
  %v973 = vpack.c.bf16 %v909, %v909
  %v974 = vpack.c.bf16 %v910, %v910
  %v975 = vpack.c.bf16 %v911, %v911
  %v976 = vpack.c.bf16 %v912, %v912
  %v977 = vpack.c.bf16 %v913, %v913
  %v978 = vpack.c.bf16 %v914, %v914
  %v979 = vpack.c.bf16 %v915, %v915
  %v980 = vpack.c.bf16 %v916, %v916
  %v981 = vpack.c.bf16 %v917, %v917
  %v982 = vpack.c.bf16 %v918, %v918
  %v983 = vpack.c.bf16 %v919, %v919
  %v984 = vpack.c.bf16 %v920, %v920
  %v985 = vpack.c.bf16 %v921, %v921
  %v986 = vpack.c.bf16 %v922, %v922
  %v987 = vpack.c.bf16 %v923, %v923
  %v988 = vpack.c.bf16 %v924, %v924
  %v989 = vpack.c.bf16 %v925, %v925
  %v990 = vpack.c.bf16 %v926, %v926
  %v991 = vpack.c.bf16 %v927, %v927
  %v992 = vpack.c.bf16 %v928, %v928
  %v993 = vpack.c.bf16 %v929, %v929
  %v994 = vpack.c.bf16 %v930, %v930
  %v995 = vpack.c.bf16 %v931, %v931
  %v996 = vpack.c.bf16 %v932, %v932
  %v997 = vpack.c.bf16 %v933, %v933
  %v998 = vpack.c.bf16 %v934, %v934
  %v999 = vpack.c.bf16 %v935, %v935
  %v1000 = vpack.c.bf16 %v936, %v936
  %v1001 = vpack.c.bf16 %v937, %v937
  %v1002 = vpack.c.bf16 %v938, %v938
  %v1003 = vpack.c.bf16 %v939, %v939
  %v1004 = vpack.c.bf16 %v940, %v940
  %v1005 = vpack.c.bf16 %v941, %v941
  %vm1006 = vcmask 125952
  %1007 = vst.msk [vmem:[%s3] sm:$0xf] %vm1006, %v942
  %1008 = vst.msk [vmem:[%s3 + $0x4] sm:$0xf] %vm1006, %v943
  %1009 = vst.msk [vmem:[%s3 + $0x8] sm:$0xf] %vm1006, %v944
  %1010 = vst.msk [vmem:[%s3 + $0xc] sm:$0xf] %vm1006, %v945
  %1011 = vst.msk [vmem:[%s3 + $0x10] sm:$0xf] %vm1006, %v946
  %1012 = vst.msk [vmem:[%s3 + $0x14] sm:$0xf] %vm1006, %v947
  %1013 = vst.msk [vmem:[%s3 + $0x18] sm:$0xf] %vm1006, %v948
  %1014 = vst.msk [vmem:[%s3 + $0x1c] sm:$0xf] %vm1006, %v949
  %1015 = vst.msk [vmem:[%s3 + $0x20] sm:$0xf] %vm1006, %v950
  %1016 = vst.msk [vmem:[%s3 + $0x24] sm:$0xf] %vm1006, %v951
  %1017 = vst.msk [vmem:[%s3 + $0x28] sm:$0xf] %vm1006, %v952
  %1018 = vst.msk [vmem:[%s3 + $0x2c] sm:$0xf] %vm1006, %v953
  %1019 = vst.msk [vmem:[%s3 + $0x30] sm:$0xf] %vm1006, %v954
  %1020 = vst.msk [vmem:[%s3 + $0x34] sm:$0xf] %vm1006, %v955
  %1021 = vst.msk [vmem:[%s3 + $0x38] sm:$0xf] %vm1006, %v956
  %1022 = vst.msk [vmem:[%s3 + $0x3c] sm:$0xf] %vm1006, %v957
  %1023 = vst.msk [vmem:[%s3 + $0x40] sm:$0xf] %vm1006, %v958
  %1024 = vst.msk [vmem:[%s3 + $0x44] sm:$0xf] %vm1006, %v959
  %1025 = vst.msk [vmem:[%s3 + $0x48] sm:$0xf] %vm1006, %v960
  %1026 = vst.msk [vmem:[%s3 + $0x4c] sm:$0xf] %vm1006, %v961
  %1027 = vst.msk [vmem:[%s3 + $0x50] sm:$0xf] %vm1006, %v962
  %1028 = vst.msk [vmem:[%s3 + $0x54] sm:$0xf] %vm1006, %v963
  %1029 = vst.msk [vmem:[%s3 + $0x58] sm:$0xf] %vm1006, %v964
  %1030 = vst.msk [vmem:[%s3 + $0x5c] sm:$0xf] %vm1006, %v965
  %1031 = vst.msk [vmem:[%s3 + $0x60] sm:$0xf] %vm1006, %v966
  %1032 = vst.msk [vmem:[%s3 + $0x64] sm:$0xf] %vm1006, %v967
  %1033 = vst.msk [vmem:[%s3 + $0x68] sm:$0xf] %vm1006, %v968
  %1034 = vst.msk [vmem:[%s3 + $0x6c] sm:$0xf] %vm1006, %v969
  %1035 = vst.msk [vmem:[%s3 + $0x70] sm:$0xf] %vm1006, %v970
  %1036 = vst.msk [vmem:[%s3 + $0x74] sm:$0xf] %vm1006, %v971
  %1037 = vst.msk [vmem:[%s3 + $0x78] sm:$0xf] %vm1006, %v972
  %1038 = vst.msk [vmem:[%s3 + $0x7c] sm:$0xf] %vm1006, %v973
  %1039 = vst.msk [vmem:[%s3 + $0x80] sm:$0xf] %vm1006, %v974
  %1040 = vst.msk [vmem:[%s3 + $0x84] sm:$0xf] %vm1006, %v975
  %1041 = vst.msk [vmem:[%s3 + $0x88] sm:$0xf] %vm1006, %v976
  %1042 = vst.msk [vmem:[%s3 + $0x8c] sm:$0xf] %vm1006, %v977
  %1043 = vst.msk [vmem:[%s3 + $0x90] sm:$0xf] %vm1006, %v978
  %1044 = vst.msk [vmem:[%s3 + $0x94] sm:$0xf] %vm1006, %v979
  %1045 = vst.msk [vmem:[%s3 + $0x98] sm:$0xf] %vm1006, %v980
  %1046 = vst.msk [vmem:[%s3 + $0x9c] sm:$0xf] %vm1006, %v981
  %1047 = vst.msk [vmem:[%s3 + $0xa0] sm:$0xf] %vm1006, %v982
  %1048 = vst.msk [vmem:[%s3 + $0xa4] sm:$0xf] %vm1006, %v983
  %1049 = vst.msk [vmem:[%s3 + $0xa8] sm:$0xf] %vm1006, %v984
  %1050 = vst.msk [vmem:[%s3 + $0xac] sm:$0xf] %vm1006, %v985
  %1051 = vst.msk [vmem:[%s3 + $0xb0] sm:$0xf] %vm1006, %v986
  %1052 = vst.msk [vmem:[%s3 + $0xb4] sm:$0xf] %vm1006, %v987
  %1053 = vst.msk [vmem:[%s3 + $0xb8] sm:$0xf] %vm1006, %v988
  %1054 = vst.msk [vmem:[%s3 + $0xbc] sm:$0xf] %vm1006, %v989
  %1055 = vst.msk [vmem:[%s3 + $0xc0] sm:$0xf] %vm1006, %v990
  %1056 = vst.msk [vmem:[%s3 + $0xc4] sm:$0xf] %vm1006, %v991
  %1057 = vst.msk [vmem:[%s3 + $0xc8] sm:$0xf] %vm1006, %v992
  %1058 = vst.msk [vmem:[%s3 + $0xcc] sm:$0xf] %vm1006, %v993
  %1059 = vst.msk [vmem:[%s3 + $0xd0] sm:$0xf] %vm1006, %v994
  %1060 = vst.msk [vmem:[%s3 + $0xd4] sm:$0xf] %vm1006, %v995
  %1061 = vst.msk [vmem:[%s3 + $0xd8] sm:$0xf] %vm1006, %v996
  %1062 = vst.msk [vmem:[%s3 + $0xdc] sm:$0xf] %vm1006, %v997
  %1063 = vst.msk [vmem:[%s3 + $0xe0] sm:$0xf] %vm1006, %v998
  %1064 = vst.msk [vmem:[%s3 + $0xe4] sm:$0xf] %vm1006, %v999
  %1065 = vst.msk [vmem:[%s3 + $0xe8] sm:$0xf] %vm1006, %v1000
  %1066 = vst.msk [vmem:[%s3 + $0xec] sm:$0xf] %vm1006, %v1001
  %1067 = vst.msk [vmem:[%s3 + $0xf0] sm:$0xf] %vm1006, %v1002
  %1068 = vst.msk [vmem:[%s3 + $0xf4] sm:$0xf] %vm1006, %v1003
  %1069 = vst.msk [vmem:[%s3 + $0xf8] sm:$0xf] %vm1006, %v1004
  %1070 = vst.msk [vmem:[%s3 + $0xfc] sm:$0xf] %vm1006, %v1005
  // Predicated region
  $region14: #{phcc_fpn_forward.6} parent=0 // pred_check
    _
  $region15: #{phcc_fpn_forward.6} parent=0 // pred_check_branch
    %1072 = sbr.rel (0) target = $region17
  $region16: #{phcc_fpn_forward.6} parent=0 // pred_region
    _
  $region17: #{phcc_fpn_forward.6} parent=0 // pred_fallthru
    _
  // Predicated region
  $region18: #{phcc_fpn_forward.6} parent=0 // pred_check
    _
  $region19: #{phcc_fpn_forward.6} parent=0 // pred_check_branch
    %1074 = sbr.rel (0) target = $region21
  $region20: #{phcc_fpn_forward.6} parent=0 // pred_region
    _
  $region21: #{phcc_fpn_forward.6} parent=0 // pred_fallthru
    _

// kernel: phcc_fpn_forward.7
$region0: #{phcc_fpn_forward.7}
  #allocation0 [shape = 'u32[]', space=smem, size = 0x4, offset = 0x4, fixed_abs, tag = 'smem constant byte address 0x4 - core index']
  #allocation1 [shape = 'u32[72,128]{1,0:T(1,128)}', space=vmem, size = 0x9000, scoped, tag = 'internal scratch']
  %s0 = inlined_call_operand.vmem [shape: bf16[512,16], index: 0, kind: input, shape index: {}]
  %s1 = inlined_call_operand.vmem [shape: bf16[16,64], index: 1, kind: input, shape index: {}]
  %s2 = inlined_call_operand.vmem [shape: f32[1,64], index: 2, kind: input, shape index: {}]
  %s3 = inlined_call_operand.vmem [shape: bf16[512,64], index: 3, kind: input, shape index: {}]
  %s4 = inlined_call_operand.vmem [shape: bf16[512,64], index: 4, kind: output, shape index: {}]
  %s5 = sld [smem:[#allocation0]]
  $region26: #{phcc_fpn_forward.7} parent=0
    _
  %s7 = ssub.s32 1, %s5
  %s8 = scalar_select 0, %s7, %s5
  // Predicated region
  $region2: #{phcc_fpn_forward.7} parent=0 // pred_check
    _
  $region3: #{phcc_fpn_forward.7} parent=0 // pred_check_branch
    %10 = sbr.rel (0) target = $region5
  $region4: #{phcc_fpn_forward.7} parent=0 // pred_region
    _
  $region5: #{phcc_fpn_forward.7} parent=0 // pred_fallthru
    _
  // Predicated region
  $region6: #{phcc_fpn_forward.7} parent=0 // pred_check
    _
  $region7: #{phcc_fpn_forward.7} parent=0 // pred_check_branch
    %12 = sbr.rel (0) target = $region9
  $region8: #{phcc_fpn_forward.7} parent=0 // pred_region
    _
  $region9: #{phcc_fpn_forward.7} parent=0 // pred_fallthru
    _
  // Predicated region
  $region10: #{phcc_fpn_forward.7} parent=0 // pred_check
    _
  $region11: #{phcc_fpn_forward.7} parent=0 // pred_check_branch
    %14 = sbr.rel (0) target = $region13
  $region12: #{phcc_fpn_forward.7} parent=0 // pred_region
    _
  $region13: #{phcc_fpn_forward.7} parent=0 // pred_fallthru
    _
  // Predicated region
  $region14: #{phcc_fpn_forward.7} parent=0 // pred_check
    _
  $region15: #{phcc_fpn_forward.7} parent=0 // pred_check_branch
    %16 = sbr.rel (0) target = $region17
  $region16: #{phcc_fpn_forward.7} parent=0 // pred_region
    _
  $region17: #{phcc_fpn_forward.7} parent=0 // pred_fallthru
    _
  %v18 = vld [vmem:[%s0] sm:$0xf]
  %v19 = vld [vmem:[%s0 + $0x4] sm:$0xf]
  %v20 = vld [vmem:[%s0 + $0x8] sm:$0xf]
  %v21 = vld [vmem:[%s0 + $0xc] sm:$0xf]
  %v22 = vld [vmem:[%s0 + $0x10] sm:$0xf]
  %v23 = vld [vmem:[%s0 + $0x14] sm:$0xf]
  %v24 = vld [vmem:[%s0 + $0x18] sm:$0xf]
  %v25 = vld [vmem:[%s0 + $0x1c] sm:$0xf]
  %v26 = vld [vmem:[%s0 + $0x20] sm:$0xf]
  %v27 = vld [vmem:[%s0 + $0x24] sm:$0xf]
  %v28 = vld [vmem:[%s0 + $0x28] sm:$0xf]
  %v29 = vld [vmem:[%s0 + $0x2c] sm:$0xf]
  %v30 = vld [vmem:[%s0 + $0x30] sm:$0xf]
  %v31 = vld [vmem:[%s0 + $0x34] sm:$0xf]
  %v32 = vld [vmem:[%s0 + $0x38] sm:$0xf]
  %v33 = vld [vmem:[%s0 + $0x3c] sm:$0xf]
  %v34 = vld [vmem:[%s0 + $0x40] sm:$0xf]
  %v35 = vld [vmem:[%s0 + $0x44] sm:$0xf]
  %v36 = vld [vmem:[%s0 + $0x48] sm:$0xf]
  %v37 = vld [vmem:[%s0 + $0x4c] sm:$0xf]
  %v38 = vld [vmem:[%s0 + $0x50] sm:$0xf]
  %v39 = vld [vmem:[%s0 + $0x54] sm:$0xf]
  %v40 = vld [vmem:[%s0 + $0x58] sm:$0xf]
  %v41 = vld [vmem:[%s0 + $0x5c] sm:$0xf]
  %v42 = vld [vmem:[%s0 + $0x60] sm:$0xf]
  %v43 = vld [vmem:[%s0 + $0x64] sm:$0xf]
  %v44 = vld [vmem:[%s0 + $0x68] sm:$0xf]
  %v45 = vld [vmem:[%s0 + $0x6c] sm:$0xf]
  %v46 = vld [vmem:[%s0 + $0x70] sm:$0xf]
  %v47 = vld [vmem:[%s0 + $0x74] sm:$0xf]
  %v48 = vld [vmem:[%s0 + $0x78] sm:$0xf]
  %v49 = vld [vmem:[%s0 + $0x7c] sm:$0xf]
  %v50 = vld [vmem:[%s0 + $0x80] sm:$0xf]
  %v51 = vld [vmem:[%s0 + $0x84] sm:$0xf]
  %v52 = vld [vmem:[%s0 + $0x88] sm:$0xf]
  %v53 = vld [vmem:[%s0 + $0x8c] sm:$0xf]
  %v54 = vld [vmem:[%s0 + $0x90] sm:$0xf]
  %v55 = vld [vmem:[%s0 + $0x94] sm:$0xf]
  %v56 = vld [vmem:[%s0 + $0x98] sm:$0xf]
  %v57 = vld [vmem:[%s0 + $0x9c] sm:$0xf]
  %v58 = vld [vmem:[%s0 + $0xa0] sm:$0xf]
  %v59 = vld [vmem:[%s0 + $0xa4] sm:$0xf]
  %v60 = vld [vmem:[%s0 + $0xa8] sm:$0xf]
  %v61 = vld [vmem:[%s0 + $0xac] sm:$0xf]
  %v62 = vld [vmem:[%s0 + $0xb0] sm:$0xf]
  %v63 = vld [vmem:[%s0 + $0xb4] sm:$0xf]
  %v64 = vld [vmem:[%s0 + $0xb8] sm:$0xf]
  %v65 = vld [vmem:[%s0 + $0xbc] sm:$0xf]
  %v66 = vld [vmem:[%s0 + $0xc0] sm:$0xf]
  %v67 = vld [vmem:[%s0 + $0xc4] sm:$0xf]
  %v68 = vld [vmem:[%s0 + $0xc8] sm:$0xf]
  %v69 = vld [vmem:[%s0 + $0xcc] sm:$0xf]
  %v70 = vld [vmem:[%s0 + $0xd0] sm:$0xf]
  %v71 = vld [vmem:[%s0 + $0xd4] sm:$0xf]
  %v72 = vld [vmem:[%s0 + $0xd8] sm:$0xf]
  %v73 = vld [vmem:[%s0 + $0xdc] sm:$0xf]
  %v74 = vld [vmem:[%s0 + $0xe0] sm:$0xf]
  %v75 = vld [vmem:[%s0 + $0xe4] sm:$0xf]
  %v76 = vld [vmem:[%s0 + $0xe8] sm:$0xf]
  %v77 = vld [vmem:[%s0 + $0xec] sm:$0xf]
  %v78 = vld [vmem:[%s0 + $0xf0] sm:$0xf]
  %v79 = vld [vmem:[%s0 + $0xf4] sm:$0xf]
  %v80 = vld [vmem:[%s0 + $0xf8] sm:$0xf]
  %v81 = vld [vmem:[%s0 + $0xfc] sm:$0xf]
  %v82 = vld [vmem:[%s1] sm:$0xf]
  %v83 = vld [vmem:[%s1 + $0x4] sm:$0xf]
  %v84 = vld [vmem:[%s2] sm:$0x1]
  %v86 = vperm.slane %v84, 0
  %v152 = vunpack.c.l.b16 %v18
  %v153 = vunpack.c.l.b16 %v19
  %v154 = vunpack.c.l.b16 %v20
  %v155 = vunpack.c.l.b16 %v21
  %v156 = vunpack.c.l.b16 %v22
  %v157 = vunpack.c.l.b16 %v23
  %v158 = vunpack.c.l.b16 %v24
  %v159 = vunpack.c.l.b16 %v25
  %v160 = vunpack.c.l.b16 %v26
  %v161 = vunpack.c.l.b16 %v27
  %v162 = vunpack.c.l.b16 %v28
  %v163 = vunpack.c.l.b16 %v29
  %v164 = vunpack.c.l.b16 %v30
  %v165 = vunpack.c.l.b16 %v31
  %v166 = vunpack.c.l.b16 %v32
  %v167 = vunpack.c.l.b16 %v33
  %v168 = vunpack.c.l.b16 %v34
  %v169 = vunpack.c.l.b16 %v35
  %v170 = vunpack.c.l.b16 %v36
  %v171 = vunpack.c.l.b16 %v37
  %v172 = vunpack.c.l.b16 %v38
  %v173 = vunpack.c.l.b16 %v39
  %v174 = vunpack.c.l.b16 %v40
  %v175 = vunpack.c.l.b16 %v41
  %v176 = vunpack.c.l.b16 %v42
  %v177 = vunpack.c.l.b16 %v43
  %v178 = vunpack.c.l.b16 %v44
  %v179 = vunpack.c.l.b16 %v45
  %v180 = vunpack.c.l.b16 %v46
  %v181 = vunpack.c.l.b16 %v47
  %v182 = vunpack.c.l.b16 %v48
  %v183 = vunpack.c.l.b16 %v49
  %v184 = vunpack.c.l.b16 %v50
  %v185 = vunpack.c.l.b16 %v51
  %v186 = vunpack.c.l.b16 %v52
  %v187 = vunpack.c.l.b16 %v53
  %v188 = vunpack.c.l.b16 %v54
  %v189 = vunpack.c.l.b16 %v55
  %v190 = vunpack.c.l.b16 %v56
  %v191 = vunpack.c.l.b16 %v57
  %v192 = vunpack.c.l.b16 %v58
  %v193 = vunpack.c.l.b16 %v59
  %v194 = vunpack.c.l.b16 %v60
  %v195 = vunpack.c.l.b16 %v61
  %v196 = vunpack.c.l.b16 %v62
  %v197 = vunpack.c.l.b16 %v63
  %v198 = vunpack.c.l.b16 %v64
  %v199 = vunpack.c.l.b16 %v65
  %v200 = vunpack.c.l.b16 %v66
  %v201 = vunpack.c.l.b16 %v67
  %v202 = vunpack.c.l.b16 %v68
  %v203 = vunpack.c.l.b16 %v69
  %v204 = vunpack.c.l.b16 %v70
  %v205 = vunpack.c.l.b16 %v71
  %v206 = vunpack.c.l.b16 %v72
  %v207 = vunpack.c.l.b16 %v73
  %v208 = vunpack.c.l.b16 %v74
  %v209 = vunpack.c.l.b16 %v75
  %v210 = vunpack.c.l.b16 %v76
  %v211 = vunpack.c.l.b16 %v77
  %v212 = vunpack.c.l.b16 %v78
  %v213 = vunpack.c.l.b16 %v79
  %v214 = vunpack.c.l.b16 %v80
  %v215 = vunpack.c.l.b16 %v81
  %v216 = vpack.c.b16 %v153, %v152
  %v217 = vpack.c.b16 %v155, %v154
  %v218 = vpack.c.b16 %v157, %v156
  %v219 = vpack.c.b16 %v159, %v158
  %v220 = vpack.c.b16 %v161, %v160
  %v221 = vpack.c.b16 %v163, %v162
  %v222 = vpack.c.b16 %v165, %v164
  %v223 = vpack.c.b16 %v167, %v166
  %v224 = vpack.c.b16 %v169, %v168
  %v225 = vpack.c.b16 %v171, %v170
  %v226 = vpack.c.b16 %v173, %v172
  %v227 = vpack.c.b16 %v175, %v174
  %v228 = vpack.c.b16 %v177, %v176
  %v229 = vpack.c.b16 %v179, %v178
  %v230 = vpack.c.b16 %v181, %v180
  %v231 = vpack.c.b16 %v183, %v182
  %v232 = vpack.c.b16 %v185, %v184
  %v233 = vpack.c.b16 %v187, %v186
  %v234 = vpack.c.b16 %v189, %v188
  %v235 = vpack.c.b16 %v191, %v190
  %v236 = vpack.c.b16 %v193, %v192
  %v237 = vpack.c.b16 %v195, %v194
  %v238 = vpack.c.b16 %v197, %v196
  %v239 = vpack.c.b16 %v199, %v198
  %v240 = vpack.c.b16 %v201, %v200
  %v241 = vpack.c.b16 %v203, %v202
  %v242 = vpack.c.b16 %v205, %v204
  %v243 = vpack.c.b16 %v207, %v206
  %v244 = vpack.c.b16 %v209, %v208
  %v245 = vpack.c.b16 %v211, %v210
  %v246 = vpack.c.b16 %v213, %v212
  %v247 = vpack.c.b16 %v215, %v214
  %v250 = vunpack.c.l.b16 %v82
  %v251 = vunpack.c.l.b16 %v83
  %v252 = vpack.c.b16 %v251, %v250
  %vm254 = vcmask 130048
  %v256 = vsel %vm254, %v216, 0
  %v259 = vsel %vm254, %v217, 0
  %v262 = vsel %vm254, %v218, 0
  %v265 = vsel %vm254, %v219, 0
  %v268 = vsel %vm254, %v220, 0
  %v271 = vsel %vm254, %v221, 0
  %v274 = vsel %vm254, %v222, 0
  %v277 = vsel %vm254, %v223, 0
  %v280 = vsel %vm254, %v224, 0
  %v283 = vsel %vm254, %v225, 0
  %v286 = vsel %vm254, %v226, 0
  %v289 = vsel %vm254, %v227, 0
  %v292 = vsel %vm254, %v228, 0
  %v295 = vsel %vm254, %v229, 0
  %v298 = vsel %vm254, %v230, 0
  %v301 = vsel %vm254, %v231, 0
  %v304 = vsel %vm254, %v232, 0
  %v307 = vsel %vm254, %v233, 0
  %v310 = vsel %vm254, %v234, 0
  %v313 = vsel %vm254, %v235, 0
  %v316 = vsel %vm254, %v236, 0
  %v319 = vsel %vm254, %v237, 0
  %v322 = vsel %vm254, %v238, 0
  %v325 = vsel %vm254, %v239, 0
  %v328 = vsel %vm254, %v240, 0
  %v331 = vsel %vm254, %v241, 0
  %v334 = vsel %vm254, %v242, 0
  %v337 = vsel %vm254, %v243, 0
  %v340 = vsel %vm254, %v244, 0
  %v343 = vsel %vm254, %v245, 0
  %v346 = vsel %vm254, %v246, 0
  %v349 = vsel %vm254, %v247, 0
  %351 = vmatpush.bf16.msra.mxu0 0
  %352 = vmatpush.bf16.msra.mxu0 0
  %353 = vmatpush.bf16.msra.mxu0 0
  %354 = vmatpush.bf16.msra.mxu0 0
  %355 = vmatpush.bf16.msra.mxu0 0
  %356 = vmatpush.bf16.msra.mxu0 0
  %357 = vmatpush.bf16.msra.mxu0 0
  %358 = vmatpush.bf16.msra.mxu0 %v252
  %359 = vmatmul.bf16.gmra.mxu0 %v256
  %v360 = vpop.f32.mrf.mxu0
  %v361 = vadd.f32 %v86, %v360
  %v362 = vpop.f32.mrf.mxu0
  %v363 = vadd.f32 %v86, %v362
  %364 = vmatmul.bf16.gmra.mxu0 %v259
  %v365 = vpop.f32.mrf.mxu0
  %v366 = vadd.f32 %v86, %v365
  %v367 = vpop.f32.mrf.mxu0
  %v368 = vadd.f32 %v86, %v367
  %369 = vmatmul.bf16.gmra.mxu0 %v262
  %v370 = vpop.f32.mrf.mxu0
  %v371 = vadd.f32 %v86, %v370
  %v372 = vpop.f32.mrf.mxu0
  %v373 = vadd.f32 %v86, %v372
  %374 = vmatmul.bf16.gmra.mxu0 %v265
  %v375 = vpop.f32.mrf.mxu0
  %v376 = vadd.f32 %v86, %v375
  %v377 = vpop.f32.mrf.mxu0
  %v378 = vadd.f32 %v86, %v377
  %379 = vmatmul.bf16.gmra.mxu0 %v268
  %v380 = vpop.f32.mrf.mxu0
  %v381 = vadd.f32 %v86, %v380
  %v382 = vpop.f32.mrf.mxu0
  %v383 = vadd.f32 %v86, %v382
  %384 = vmatmul.bf16.gmra.mxu0 %v271
  %v385 = vpop.f32.mrf.mxu0
  %v386 = vadd.f32 %v86, %v385
  %v387 = vpop.f32.mrf.mxu0
  %v388 = vadd.f32 %v86, %v387
  %389 = vmatmul.bf16.gmra.mxu0 %v274
  %v390 = vpop.f32.mrf.mxu0
  %v391 = vadd.f32 %v86, %v390
  %v392 = vpop.f32.mrf.mxu0
  %v393 = vadd.f32 %v86, %v392
  %394 = vmatmul.bf16.gmra.mxu0 %v277
  %v395 = vpop.f32.mrf.mxu0
  %v396 = vadd.f32 %v86, %v395
  %v397 = vpop.f32.mrf.mxu0
  %v398 = vadd.f32 %v86, %v397
  %399 = vmatmul.bf16.gmra.mxu0 %v280
  %v400 = vpop.f32.mrf.mxu0
  %v401 = vadd.f32 %v86, %v400
  %v402 = vpop.f32.mrf.mxu0
  %v403 = vadd.f32 %v86, %v402
  %404 = vmatmul.bf16.gmra.mxu0 %v283
  %v405 = vpop.f32.mrf.mxu0
  %v406 = vadd.f32 %v86, %v405
  %v407 = vpop.f32.mrf.mxu0
  %v408 = vadd.f32 %v86, %v407
  %409 = vmatmul.bf16.gmra.mxu0 %v286
  %v410 = vpop.f32.mrf.mxu0
  %v411 = vadd.f32 %v86, %v410
  %v412 = vpop.f32.mrf.mxu0
  %v413 = vadd.f32 %v86, %v412
  %414 = vmatmul.bf16.gmra.mxu0 %v289
  %v415 = vpop.f32.mrf.mxu0
  %v416 = vadd.f32 %v86, %v415
  %v417 = vpop.f32.mrf.mxu0
  %v418 = vadd.f32 %v86, %v417
  %419 = vmatmul.bf16.gmra.mxu0 %v292
  %v420 = vpop.f32.mrf.mxu0
  %v421 = vadd.f32 %v86, %v420
  %v422 = vpop.f32.mrf.mxu0
  %v423 = vadd.f32 %v86, %v422
  %424 = vmatmul.bf16.gmra.mxu0 %v295
  %v425 = vpop.f32.mrf.mxu0
  %v426 = vadd.f32 %v86, %v425
  %v427 = vpop.f32.mrf.mxu0
  %v428 = vadd.f32 %v86, %v427
  %429 = vmatmul.bf16.gmra.mxu0 %v298
  %v430 = vpop.f32.mrf.mxu0
  %v431 = vadd.f32 %v86, %v430
  %v432 = vpop.f32.mrf.mxu0
  %v433 = vadd.f32 %v86, %v432
  %434 = vmatmul.bf16.gmra.mxu0 %v301
  %v435 = vpop.f32.mrf.mxu0
  %v436 = vadd.f32 %v86, %v435
  %v437 = vpop.f32.mrf.mxu0
  %v438 = vadd.f32 %v86, %v437
  %439 = vmatmul.bf16.gmra.mxu0 %v304
  %v440 = vpop.f32.mrf.mxu0
  %v441 = vadd.f32 %v86, %v440
  %v442 = vpop.f32.mrf.mxu0
  %v443 = vadd.f32 %v86, %v442
  %444 = vmatmul.bf16.gmra.mxu0 %v307
  %v445 = vpop.f32.mrf.mxu0
  %v446 = vadd.f32 %v86, %v445
  %v447 = vpop.f32.mrf.mxu0
  %v448 = vadd.f32 %v86, %v447
  %449 = vmatmul.bf16.gmra.mxu0 %v310
  %v450 = vpop.f32.mrf.mxu0
  %v451 = vadd.f32 %v86, %v450
  %v452 = vpop.f32.mrf.mxu0
  %v453 = vadd.f32 %v86, %v452
  %454 = vmatmul.bf16.gmra.mxu0 %v313
  %v455 = vpop.f32.mrf.mxu0
  %v456 = vadd.f32 %v86, %v455
  %v457 = vpop.f32.mrf.mxu0
  %v458 = vadd.f32 %v86, %v457
  %459 = vmatmul.bf16.gmra.mxu0 %v316
  %v460 = vpop.f32.mrf.mxu0
  %v461 = vadd.f32 %v86, %v460
  %v462 = vpop.f32.mrf.mxu0
  %v463 = vadd.f32 %v86, %v462
  %464 = vmatmul.bf16.gmra.mxu0 %v319
  %v465 = vpop.f32.mrf.mxu0
  %v466 = vadd.f32 %v86, %v465
  %v467 = vpop.f32.mrf.mxu0
  %v468 = vadd.f32 %v86, %v467
  %469 = vmatmul.bf16.gmra.mxu0 %v322
  %v470 = vpop.f32.mrf.mxu0
  %v471 = vadd.f32 %v86, %v470
  %v472 = vpop.f32.mrf.mxu0
  %v473 = vadd.f32 %v86, %v472
  %474 = vmatmul.bf16.gmra.mxu0 %v325
  %v475 = vpop.f32.mrf.mxu0
  %v476 = vadd.f32 %v86, %v475
  %v477 = vpop.f32.mrf.mxu0
  %v478 = vadd.f32 %v86, %v477
  %479 = vmatmul.bf16.gmra.mxu0 %v328
  %v480 = vpop.f32.mrf.mxu0
  %v481 = vadd.f32 %v86, %v480
  %v482 = vpop.f32.mrf.mxu0
  %v483 = vadd.f32 %v86, %v482
  %484 = vmatmul.bf16.gmra.mxu0 %v331
  %v485 = vpop.f32.mrf.mxu0
  %v486 = vadd.f32 %v86, %v485
  %v487 = vpop.f32.mrf.mxu0
  %v488 = vadd.f32 %v86, %v487
  %489 = vmatmul.bf16.gmra.mxu0 %v334
  %v490 = vpop.f32.mrf.mxu0
  %v491 = vadd.f32 %v86, %v490
  %v492 = vpop.f32.mrf.mxu0
  %v493 = vadd.f32 %v86, %v492
  %494 = vmatmul.bf16.gmra.mxu0 %v337
  %v495 = vpop.f32.mrf.mxu0
  %v496 = vadd.f32 %v86, %v495
  %v497 = vpop.f32.mrf.mxu0
  %v498 = vadd.f32 %v86, %v497
  %499 = vmatmul.bf16.gmra.mxu0 %v340
  %v500 = vpop.f32.mrf.mxu0
  %v501 = vadd.f32 %v86, %v500
  %v502 = vpop.f32.mrf.mxu0
  %v503 = vadd.f32 %v86, %v502
  %504 = vmatmul.bf16.gmra.mxu0 %v343
  %v505 = vpop.f32.mrf.mxu0
  %v506 = vadd.f32 %v86, %v505
  %v507 = vpop.f32.mrf.mxu0
  %v508 = vadd.f32 %v86, %v507
  %509 = vmatmul.bf16.gmra.mxu0 %v346
  %v510 = vpop.f32.mrf.mxu0
  %v511 = vadd.f32 %v86, %v510
  %v512 = vpop.f32.mrf.mxu0
  %v513 = vadd.f32 %v86, %v512
  %514 = vmatmul.bf16.gmra.mxu0 %v349
  %v515 = vpop.f32.mrf.mxu0
  %v516 = vadd.f32 %v86, %v515
  %v517 = vpop.f32.mrf.mxu0
  %v518 = vadd.f32 %v86, %v517
  %519 = vdwg.mxu0
  %v520 = vld [vmem:[%s3] sm:$0xf]
  %v521 = vld [vmem:[%s3 + $0x4] sm:$0xf]
  %v522 = vld [vmem:[%s3 + $0x8] sm:$0xf]
  %v523 = vld [vmem:[%s3 + $0xc] sm:$0xf]
  %v524 = vld [vmem:[%s3 + $0x10] sm:$0xf]
  %v525 = vld [vmem:[%s3 + $0x14] sm:$0xf]
  %v526 = vld [vmem:[%s3 + $0x18] sm:$0xf]
  %v527 = vld [vmem:[%s3 + $0x1c] sm:$0xf]
  %v528 = vld [vmem:[%s3 + $0x20] sm:$0xf]
  %v529 = vld [vmem:[%s3 + $0x24] sm:$0xf]
  %v530 = vld [vmem:[%s3 + $0x28] sm:$0xf]
  %v531 = vld [vmem:[%s3 + $0x2c] sm:$0xf]
  %v532 = vld [vmem:[%s3 + $0x30] sm:$0xf]
  %v533 = vld [vmem:[%s3 + $0x34] sm:$0xf]
  %v534 = vld [vmem:[%s3 + $0x38] sm:$0xf]
  %v535 = vld [vmem:[%s3 + $0x3c] sm:$0xf]
  %v536 = vld [vmem:[%s3 + $0x40] sm:$0xf]
  %v537 = vld [vmem:[%s3 + $0x44] sm:$0xf]
  %v538 = vld [vmem:[%s3 + $0x48] sm:$0xf]
  %v539 = vld [vmem:[%s3 + $0x4c] sm:$0xf]
  %v540 = vld [vmem:[%s3 + $0x50] sm:$0xf]
  %v541 = vld [vmem:[%s3 + $0x54] sm:$0xf]
  %v542 = vld [vmem:[%s3 + $0x58] sm:$0xf]
  %v543 = vld [vmem:[%s3 + $0x5c] sm:$0xf]
  %v544 = vld [vmem:[%s3 + $0x60] sm:$0xf]
  %v545 = vld [vmem:[%s3 + $0x64] sm:$0xf]
  %v546 = vld [vmem:[%s3 + $0x68] sm:$0xf]
  %v547 = vld [vmem:[%s3 + $0x6c] sm:$0xf]
  %v548 = vld [vmem:[%s3 + $0x70] sm:$0xf]
  %v549 = vld [vmem:[%s3 + $0x74] sm:$0xf]
  %v550 = vld [vmem:[%s3 + $0x78] sm:$0xf]
  %v551 = vld [vmem:[%s3 + $0x7c] sm:$0xf]
  %v552 = vld [vmem:[%s3 + $0x80] sm:$0xf]
  %v553 = vld [vmem:[%s3 + $0x84] sm:$0xf]
  %v554 = vld [vmem:[%s3 + $0x88] sm:$0xf]
  %v555 = vld [vmem:[%s3 + $0x8c] sm:$0xf]
  %v556 = vld [vmem:[%s3 + $0x90] sm:$0xf]
  %v557 = vld [vmem:[%s3 + $0x94] sm:$0xf]
  %v558 = vld [vmem:[%s3 + $0x98] sm:$0xf]
  %v559 = vld [vmem:[%s3 + $0x9c] sm:$0xf]
  %v560 = vld [vmem:[%s3 + $0xa0] sm:$0xf]
  %v561 = vld [vmem:[%s3 + $0xa4] sm:$0xf]
  %v562 = vld [vmem:[%s3 + $0xa8] sm:$0xf]
  %v563 = vld [vmem:[%s3 + $0xac] sm:$0xf]
  %v564 = vld [vmem:[%s3 + $0xb0] sm:$0xf]
  %v565 = vld [vmem:[%s3 + $0xb4] sm:$0xf]
  %v566 = vld [vmem:[%s3 + $0xb8] sm:$0xf]
  %v567 = vld [vmem:[%s3 + $0xbc] sm:$0xf]
  %v568 = vld [vmem:[%s3 + $0xc0] sm:$0xf]
  %v569 = vld [vmem:[%s3 + $0xc4] sm:$0xf]
  %v570 = vld [vmem:[%s3 + $0xc8] sm:$0xf]
  %v571 = vld [vmem:[%s3 + $0xcc] sm:$0xf]
  %v572 = vld [vmem:[%s3 + $0xd0] sm:$0xf]
  %v573 = vld [vmem:[%s3 + $0xd4] sm:$0xf]
  %v574 = vld [vmem:[%s3 + $0xd8] sm:$0xf]
  %v575 = vld [vmem:[%s3 + $0xdc] sm:$0xf]
  %v576 = vld [vmem:[%s3 + $0xe0] sm:$0xf]
  %v577 = vld [vmem:[%s3 + $0xe4] sm:$0xf]
  %v578 = vld [vmem:[%s3 + $0xe8] sm:$0xf]
  %v579 = vld [vmem:[%s3 + $0xec] sm:$0xf]
  %v580 = vld [vmem:[%s3 + $0xf0] sm:$0xf]
  %v581 = vld [vmem:[%s3 + $0xf4] sm:$0xf]
  %v582 = vld [vmem:[%s3 + $0xf8] sm:$0xf]
  %v583 = vld [vmem:[%s3 + $0xfc] sm:$0xf]
  %v584 = vunpack.c.l.bf16 %v520
  %v585 = vunpack.c.l.bf16 %v521
  %v586 = vunpack.c.l.bf16 %v522
  %v587 = vunpack.c.l.bf16 %v523
  %v588 = vunpack.c.l.bf16 %v524
  %v589 = vunpack.c.l.bf16 %v525
  %v590 = vunpack.c.l.bf16 %v526
  %v591 = vunpack.c.l.bf16 %v527
  %v592 = vunpack.c.l.bf16 %v528
  %v593 = vunpack.c.l.bf16 %v529
  %v594 = vunpack.c.l.bf16 %v530
  %v595 = vunpack.c.l.bf16 %v531
  %v596 = vunpack.c.l.bf16 %v532
  %v597 = vunpack.c.l.bf16 %v533
  %v598 = vunpack.c.l.bf16 %v534
  %v599 = vunpack.c.l.bf16 %v535
  %v600 = vunpack.c.l.bf16 %v536
  %v601 = vunpack.c.l.bf16 %v537
  %v602 = vunpack.c.l.bf16 %v538
  %v603 = vunpack.c.l.bf16 %v539
  %v604 = vunpack.c.l.bf16 %v540
  %v605 = vunpack.c.l.bf16 %v541
  %v606 = vunpack.c.l.bf16 %v542
  %v607 = vunpack.c.l.bf16 %v543
  %v608 = vunpack.c.l.bf16 %v544
  %v609 = vunpack.c.l.bf16 %v545
  %v610 = vunpack.c.l.bf16 %v546
  %v611 = vunpack.c.l.bf16 %v547
  %v612 = vunpack.c.l.bf16 %v548
  %v613 = vunpack.c.l.bf16 %v549
  %v614 = vunpack.c.l.bf16 %v550
  %v615 = vunpack.c.l.bf16 %v551
  %v616 = vunpack.c.l.bf16 %v552
  %v617 = vunpack.c.l.bf16 %v553
  %v618 = vunpack.c.l.bf16 %v554
  %v619 = vunpack.c.l.bf16 %v555
  %v620 = vunpack.c.l.bf16 %v556
  %v621 = vunpack.c.l.bf16 %v557
  %v622 = vunpack.c.l.bf16 %v558
  %v623 = vunpack.c.l.bf16 %v559
  %v624 = vunpack.c.l.bf16 %v560
  %v625 = vunpack.c.l.bf16 %v561
  %v626 = vunpack.c.l.bf16 %v562
  %v627 = vunpack.c.l.bf16 %v563
  %v628 = vunpack.c.l.bf16 %v564
  %v629 = vunpack.c.l.bf16 %v565
  %v630 = vunpack.c.l.bf16 %v566
  %v631 = vunpack.c.l.bf16 %v567
  %v632 = vunpack.c.l.bf16 %v568
  %v633 = vunpack.c.l.bf16 %v569
  %v634 = vunpack.c.l.bf16 %v570
  %v635 = vunpack.c.l.bf16 %v571
  %v636 = vunpack.c.l.bf16 %v572
  %v637 = vunpack.c.l.bf16 %v573
  %v638 = vunpack.c.l.bf16 %v574
  %v639 = vunpack.c.l.bf16 %v575
  %v640 = vunpack.c.l.bf16 %v576
  %v641 = vunpack.c.l.bf16 %v577
  %v642 = vunpack.c.l.bf16 %v578
  %v643 = vunpack.c.l.bf16 %v579
  %v644 = vunpack.c.l.bf16 %v580
  %v645 = vunpack.c.l.bf16 %v581
  %v646 = vunpack.c.l.bf16 %v582
  %v647 = vunpack.c.l.bf16 %v583
  %v648 = vadd.f32 %v361, %v584
  %v649 = vadd.f32 %v363, %v585
  %v650 = vadd.f32 %v366, %v586
  %v651 = vadd.f32 %v368, %v587
  %v652 = vadd.f32 %v371, %v588
  %v653 = vadd.f32 %v373, %v589
  %v654 = vadd.f32 %v376, %v590
  %v655 = vadd.f32 %v378, %v591
  %v656 = vadd.f32 %v381, %v592
  %v657 = vadd.f32 %v383, %v593
  %v658 = vadd.f32 %v386, %v594
  %v659 = vadd.f32 %v388, %v595
  %v660 = vadd.f32 %v391, %v596
  %v661 = vadd.f32 %v393, %v597
  %v662 = vadd.f32 %v396, %v598
  %v663 = vadd.f32 %v398, %v599
  %v664 = vadd.f32 %v401, %v600
  %v665 = vadd.f32 %v403, %v601
  %v666 = vadd.f32 %v406, %v602
  %v667 = vadd.f32 %v408, %v603
  %v668 = vadd.f32 %v411, %v604
  %v669 = vadd.f32 %v413, %v605
  %v670 = vadd.f32 %v416, %v606
  %v671 = vadd.f32 %v418, %v607
  %v672 = vadd.f32 %v421, %v608
  %v673 = vadd.f32 %v423, %v609
  %v674 = vadd.f32 %v426, %v610
  %v675 = vadd.f32 %v428, %v611
  %v676 = vadd.f32 %v431, %v612
  %v677 = vadd.f32 %v433, %v613
  %v678 = vadd.f32 %v436, %v614
  %v679 = vadd.f32 %v438, %v615
  %v680 = vadd.f32 %v441, %v616
  %v681 = vadd.f32 %v443, %v617
  %v682 = vadd.f32 %v446, %v618
  %v683 = vadd.f32 %v448, %v619
  %v684 = vadd.f32 %v451, %v620
  %v685 = vadd.f32 %v453, %v621
  %v686 = vadd.f32 %v456, %v622
  %v687 = vadd.f32 %v458, %v623
  %v688 = vadd.f32 %v461, %v624
  %v689 = vadd.f32 %v463, %v625
  %v690 = vadd.f32 %v466, %v626
  %v691 = vadd.f32 %v468, %v627
  %v692 = vadd.f32 %v471, %v628
  %v693 = vadd.f32 %v473, %v629
  %v694 = vadd.f32 %v476, %v630
  %v695 = vadd.f32 %v478, %v631
  %v696 = vadd.f32 %v481, %v632
  %v697 = vadd.f32 %v483, %v633
  %v698 = vadd.f32 %v486, %v634
  %v699 = vadd.f32 %v488, %v635
  %v700 = vadd.f32 %v491, %v636
  %v701 = vadd.f32 %v493, %v637
  %v702 = vadd.f32 %v496, %v638
  %v703 = vadd.f32 %v498, %v639
  %v704 = vadd.f32 %v501, %v640
  %v705 = vadd.f32 %v503, %v641
  %v706 = vadd.f32 %v506, %v642
  %v707 = vadd.f32 %v508, %v643
  %v708 = vadd.f32 %v511, %v644
  %v709 = vadd.f32 %v513, %v645
  %v710 = vadd.f32 %v516, %v646
  %v711 = vadd.f32 %v518, %v647
  %v712 = vpack.c.bf16 %v648, %v648
  %v713 = vpack.c.bf16 %v649, %v649
  %v714 = vpack.c.bf16 %v650, %v650
  %v715 = vpack.c.bf16 %v651, %v651
  %v716 = vpack.c.bf16 %v652, %v652
  %v717 = vpack.c.bf16 %v653, %v653
  %v718 = vpack.c.bf16 %v654, %v654
  %v719 = vpack.c.bf16 %v655, %v655
  %v720 = vpack.c.bf16 %v656, %v656
  %v721 = vpack.c.bf16 %v657, %v657
  %v722 = vpack.c.bf16 %v658, %v658
  %v723 = vpack.c.bf16 %v659, %v659
  %v724 = vpack.c.bf16 %v660, %v660
  %v725 = vpack.c.bf16 %v661, %v661
  %v726 = vpack.c.bf16 %v662, %v662
  %v727 = vpack.c.bf16 %v663, %v663
  %v728 = vpack.c.bf16 %v664, %v664
  %v729 = vpack.c.bf16 %v665, %v665
  %v730 = vpack.c.bf16 %v666, %v666
  %v731 = vpack.c.bf16 %v667, %v667
  %v732 = vpack.c.bf16 %v668, %v668
  %v733 = vpack.c.bf16 %v669, %v669
  %v734 = vpack.c.bf16 %v670, %v670
  %v735 = vpack.c.bf16 %v671, %v671
  %v736 = vpack.c.bf16 %v672, %v672
  %v737 = vpack.c.bf16 %v673, %v673
  %v738 = vpack.c.bf16 %v674, %v674
  %v739 = vpack.c.bf16 %v675, %v675
  %v740 = vpack.c.bf16 %v676, %v676
  %v741 = vpack.c.bf16 %v677, %v677
  %v742 = vpack.c.bf16 %v678, %v678
  %v743 = vpack.c.bf16 %v679, %v679
  %v744 = vpack.c.bf16 %v680, %v680
  %v745 = vpack.c.bf16 %v681, %v681
  %v746 = vpack.c.bf16 %v682, %v682
  %v747 = vpack.c.bf16 %v683, %v683
  %v748 = vpack.c.bf16 %v684, %v684
  %v749 = vpack.c.bf16 %v685, %v685
  %v750 = vpack.c.bf16 %v686, %v686
  %v751 = vpack.c.bf16 %v687, %v687
  %v752 = vpack.c.bf16 %v688, %v688
  %v753 = vpack.c.bf16 %v689, %v689
  %v754 = vpack.c.bf16 %v690, %v690
  %v755 = vpack.c.bf16 %v691, %v691
  %v756 = vpack.c.bf16 %v692, %v692
  %v757 = vpack.c.bf16 %v693, %v693
  %v758 = vpack.c.bf16 %v694, %v694
  %v759 = vpack.c.bf16 %v695, %v695
  %v760 = vpack.c.bf16 %v696, %v696
  %v761 = vpack.c.bf16 %v697, %v697
  %v762 = vpack.c.bf16 %v698, %v698
  %v763 = vpack.c.bf16 %v699, %v699
  %v764 = vpack.c.bf16 %v700, %v700
  %v765 = vpack.c.bf16 %v701, %v701
  %v766 = vpack.c.bf16 %v702, %v702
  %v767 = vpack.c.bf16 %v703, %v703
  %v768 = vpack.c.bf16 %v704, %v704
  %v769 = vpack.c.bf16 %v705, %v705
  %v770 = vpack.c.bf16 %v706, %v706
  %v771 = vpack.c.bf16 %v707, %v707
  %v772 = vpack.c.bf16 %v708, %v708
  %v773 = vpack.c.bf16 %v709, %v709
  %v774 = vpack.c.bf16 %v710, %v710
  %v775 = vpack.c.bf16 %v711, %v711
  %vm776 = vcmask 519168
  %777 = vst.msk [vmem:[%s4] sm:$0xf] %vm776, %v712
  %778 = vst.msk [vmem:[%s4 + $0x4] sm:$0xf] %vm776, %v713
  %779 = vst.msk [vmem:[%s4 + $0x8] sm:$0xf] %vm776, %v714
  %780 = vst.msk [vmem:[%s4 + $0xc] sm:$0xf] %vm776, %v715
  %781 = vst.msk [vmem:[%s4 + $0x10] sm:$0xf] %vm776, %v716
  %782 = vst.msk [vmem:[%s4 + $0x14] sm:$0xf] %vm776, %v717
  %783 = vst.msk [vmem:[%s4 + $0x18] sm:$0xf] %vm776, %v718
  %784 = vst.msk [vmem:[%s4 + $0x1c] sm:$0xf] %vm776, %v719
  %785 = vst.msk [vmem:[%s4 + $0x20] sm:$0xf] %vm776, %v720
  %786 = vst.msk [vmem:[%s4 + $0x24] sm:$0xf] %vm776, %v721
  %787 = vst.msk [vmem:[%s4 + $0x28] sm:$0xf] %vm776, %v722
  %788 = vst.msk [vmem:[%s4 + $0x2c] sm:$0xf] %vm776, %v723
  %789 = vst.msk [vmem:[%s4 + $0x30] sm:$0xf] %vm776, %v724
  %790 = vst.msk [vmem:[%s4 + $0x34] sm:$0xf] %vm776, %v725
  %791 = vst.msk [vmem:[%s4 + $0x38] sm:$0xf] %vm776, %v726
  %792 = vst.msk [vmem:[%s4 + $0x3c] sm:$0xf] %vm776, %v727
  %793 = vst.msk [vmem:[%s4 + $0x40] sm:$0xf] %vm776, %v728
  %794 = vst.msk [vmem:[%s4 + $0x44] sm:$0xf] %vm776, %v729
  %795 = vst.msk [vmem:[%s4 + $0x48] sm:$0xf] %vm776, %v730
  %796 = vst.msk [vmem:[%s4 + $0x4c] sm:$0xf] %vm776, %v731
  %797 = vst.msk [vmem:[%s4 + $0x50] sm:$0xf] %vm776, %v732
  %798 = vst.msk [vmem:[%s4 + $0x54] sm:$0xf] %vm776, %v733
  %799 = vst.msk [vmem:[%s4 + $0x58] sm:$0xf] %vm776, %v734
  %800 = vst.msk [vmem:[%s4 + $0x5c] sm:$0xf] %vm776, %v735
  %801 = vst.msk [vmem:[%s4 + $0x60] sm:$0xf] %vm776, %v736
  %802 = vst.msk [vmem:[%s4 + $0x64] sm:$0xf] %vm776, %v737
  %803 = vst.msk [vmem:[%s4 + $0x68] sm:$0xf] %vm776, %v738
  %804 = vst.msk [vmem:[%s4 + $0x6c] sm:$0xf] %vm776, %v739
  %805 = vst.msk [vmem:[%s4 + $0x70] sm:$0xf] %vm776, %v740
  %806 = vst.msk [vmem:[%s4 + $0x74] sm:$0xf] %vm776, %v741
  %807 = vst.msk [vmem:[%s4 + $0x78] sm:$0xf] %vm776, %v742
  %808 = vst.msk [vmem:[%s4 + $0x7c] sm:$0xf] %vm776, %v743
  %809 = vst.msk [vmem:[%s4 + $0x80] sm:$0xf] %vm776, %v744
  %810 = vst.msk [vmem:[%s4 + $0x84] sm:$0xf] %vm776, %v745
  %811 = vst.msk [vmem:[%s4 + $0x88] sm:$0xf] %vm776, %v746
  %812 = vst.msk [vmem:[%s4 + $0x8c] sm:$0xf] %vm776, %v747
  %813 = vst.msk [vmem:[%s4 + $0x90] sm:$0xf] %vm776, %v748
  %814 = vst.msk [vmem:[%s4 + $0x94] sm:$0xf] %vm776, %v749
  %815 = vst.msk [vmem:[%s4 + $0x98] sm:$0xf] %vm776, %v750
  %816 = vst.msk [vmem:[%s4 + $0x9c] sm:$0xf] %vm776, %v751
  %817 = vst.msk [vmem:[%s4 + $0xa0] sm:$0xf] %vm776, %v752
  %818 = vst.msk [vmem:[%s4 + $0xa4] sm:$0xf] %vm776, %v753
  %819 = vst.msk [vmem:[%s4 + $0xa8] sm:$0xf] %vm776, %v754
  %820 = vst.msk [vmem:[%s4 + $0xac] sm:$0xf] %vm776, %v755
  %821 = vst.msk [vmem:[%s4 + $0xb0] sm:$0xf] %vm776, %v756
  %822 = vst.msk [vmem:[%s4 + $0xb4] sm:$0xf] %vm776, %v757
  %823 = vst.msk [vmem:[%s4 + $0xb8] sm:$0xf] %vm776, %v758
  %824 = vst.msk [vmem:[%s4 + $0xbc] sm:$0xf] %vm776, %v759
  %825 = vst.msk [vmem:[%s4 + $0xc0] sm:$0xf] %vm776, %v760
  %826 = vst.msk [vmem:[%s4 + $0xc4] sm:$0xf] %vm776, %v761
  %827 = vst.msk [vmem:[%s4 + $0xc8] sm:$0xf] %vm776, %v762
  %828 = vst.msk [vmem:[%s4 + $0xcc] sm:$0xf] %vm776, %v763
  %829 = vst.msk [vmem:[%s4 + $0xd0] sm:$0xf] %vm776, %v764
  %830 = vst.msk [vmem:[%s4 + $0xd4] sm:$0xf] %vm776, %v765
  %831 = vst.msk [vmem:[%s4 + $0xd8] sm:$0xf] %vm776, %v766
  %832 = vst.msk [vmem:[%s4 + $0xdc] sm:$0xf] %vm776, %v767
  %833 = vst.msk [vmem:[%s4 + $0xe0] sm:$0xf] %vm776, %v768
  %834 = vst.msk [vmem:[%s4 + $0xe4] sm:$0xf] %vm776, %v769
  %835 = vst.msk [vmem:[%s4 + $0xe8] sm:$0xf] %vm776, %v770
  %836 = vst.msk [vmem:[%s4 + $0xec] sm:$0xf] %vm776, %v771
  %837 = vst.msk [vmem:[%s4 + $0xf0] sm:$0xf] %vm776, %v772
  %838 = vst.msk [vmem:[%s4 + $0xf4] sm:$0xf] %vm776, %v773
  %839 = vst.msk [vmem:[%s4 + $0xf8] sm:$0xf] %vm776, %v774
  %840 = vst.msk [vmem:[%s4 + $0xfc] sm:$0xf] %vm776, %v775
  // Predicated region
  $region18: #{phcc_fpn_forward.7} parent=0 // pred_check
    _
  $region19: #{phcc_fpn_forward.7} parent=0 // pred_check_branch
    %842 = sbr.rel (0) target = $region21
  $region20: #{phcc_fpn_forward.7} parent=0 // pred_region
    _
  $region21: #{phcc_fpn_forward.7} parent=0 // pred_fallthru
    _
  // Predicated region
  $region22: #{phcc_fpn_forward.7} parent=0 // pred_check
    _
  $region23: #{phcc_fpn_forward.7} parent=0 // pred_check_branch
    %844 = sbr.rel (0) target = $region25
  $region24: #{phcc_fpn_forward.7} parent=0 // pred_region
    _
  $region25: #{phcc_fpn_forward.7} parent=0 // pred_fallthru
    _

// kernel: phcc_fpn_forward.8
$region0: #{phcc_fpn_forward.8}
  #allocation0 [shape = 'u32[]', space=smem, size = 0x4, offset = 0x4, fixed_abs, tag = 'smem constant byte address 0x4 - core index']
  #allocation1 [shape = 'u32[72,128]{1,0:T(1,128)}', space=vmem, size = 0x9000, scoped, tag = 'internal scratch']
  %s0 = inlined_call_operand.vmem [shape: bf16[2,288,192], index: 0, kind: input, shape index: {}]
  %s1 = inlined_call_operand.vmem [shape: bf16[3,192,64], index: 1, kind: input, shape index: {}]
  %s2 = inlined_call_operand.vmem [shape: f32[1,64], index: 2, kind: input, shape index: {}]
  %s3 = inlined_call_operand.vmem [shape: bf16[2,256,64], index: 3, kind: output, shape index: {}]
  %s4 = sld [smem:[#allocation0]]
  $region45: #{phcc_fpn_forward.8} parent=0
    _
  %s6 = ssub.s32 1, %s4
  %s7 = scalar_select 0, %s6, %s4
  loop: start=0, step=1, limit=4
  $region2: #{phcc_fpn_forward.8} parent=0 // loop_pre_header
    _
  $region3: #{phcc_fpn_forward.8} parent=0 // loop_header
    %s9 = sphi 0, %s13
    %p10 = scmp.ge.s32.totalorder %s9, 4
    %s19 = sphi 0, %s21
    %s22 = sphi 0, %s19
    %s23 = sphi 0, %s22
    %s39 = sphi 0, %s23
    %s43 = sphi 0, %s43
    %s45 = sphi 0, %s43
    %s46 = sphi 0, %s45
    %s60 = sphi 0, %s46
    %s64 = sphi 0, %s64
    %s66 = sphi 0, %s64
    %s67 = sphi 0, %s66
    %s81 = sphi 0, %s67
    %s87 = sphi 0, %s89
    %s90 = sphi 0, %s87
    %s91 = sphi 0, %s90
    %s107 = sphi 0, %s91
  $region4: #{phcc_fpn_forward.8} parent=0 // loop_header_branch
    %12 = sbr.rel (%p10) target = $region8
  $region5: #{phcc_fpn_forward.8} parent=0 // loop_body
    %s14 = ssub.s32 %s9, 1
    %s15 = ssub.s32 %s9, 2
    %s16 = sadd.s32 %s9, 1
    %s17 = ssub.s32 %s9, %s16
    %p18 = scmp.eq.s32.totalorder %s17, 0
    %s20 = sadd.s32 %s19, 1
    %s21 = scalar_select %p18, %s19, %s20
    %p24 = pneg %p18
    %p25 = scmp.eq.s32.totalorder %s9, 1
    %p26 = por %p24, %p25
    %p27 = scmp.ne.s32.totalorder %s19, %s22
    %p28 = scmp.eq.s32.totalorder %s9, 0
    %p29 = por %p27, %p28
    %p30 = scmp.ne.s32.totalorder %s19, %s22
    %p31 = scmp.eq.s32.totalorder %s14, 1
    %p32 = por %p30, %p31
    %p33 = scmp.ne.s32.totalorder %s22, %s23
    %p34 = scmp.eq.s32.totalorder %s14, 0
    %p35 = por %p33, %p34
    %p36 = scmp.ne.s32.totalorder %s22, %s23
    %p37 = scmp.eq.s32.totalorder %s15, 1
    %p38 = por %p36, %p37
    %p40 = scmp.ne.s32.totalorder %s23, %s39
    %p41 = scmp.eq.s32.totalorder %s15, 0
    %p42 = por %p40, %p41
    %s44 = sadd.s32 %s43, 1
    %p47 = scmp.eq.s32.totalorder %s9, 1
    %p48 = scmp.ne.s32.totalorder %s43, %s45
    %p49 = scmp.eq.s32.totalorder %s9, 0
    %p50 = por %p48, %p49
    %p51 = scmp.ne.s32.totalorder %s43, %s45
    %p52 = scmp.eq.s32.totalorder %s14, 1
    %p53 = por %p51, %p52
    %p54 = scmp.ne.s32.totalorder %s45, %s46
    %p55 = scmp.eq.s32.totalorder %s14, 0
    %p56 = por %p54, %p55
    %p57 = scmp.ne.s32.totalorder %s45, %s46
    %p58 = scmp.eq.s32.totalorder %s15, 1
    %p59 = por %p57, %p58
    %p61 = scmp.ne.s32.totalorder %s46, %s60
    %p62 = scmp.eq.s32.totalorder %s15, 0
    %p63 = por %p61, %p62
    %s65 = sadd.s32 %s64, 1
    %p68 = scmp.eq.s32.totalorder %s9, 1
    %p69 = scmp.ne.s32.totalorder %s64, %s66
    %p70 = scmp.eq.s32.totalorder %s9, 0
    %p71 = por %p69, %p70
    %p72 = scmp.ne.s32.totalorder %s64, %s66
    %p73 = scmp.eq.s32.totalorder %s14, 1
    %p74 = por %p72, %p73
    %p75 = scmp.ne.s32.totalorder %s66, %s67
    %p76 = scmp.eq.s32.totalorder %s14, 0
    %p77 = por %p75, %p76
    %p78 = scmp.ne.s32.totalorder %s66, %s67
    %p79 = scmp.eq.s32.totalorder %s15, 1
    %p80 = por %p78, %p79
    %p82 = scmp.ne.s32.totalorder %s67, %s81
    %p83 = scmp.eq.s32.totalorder %s15, 0
    %p84 = por %p82, %p83
    %s85 = ssub.s32 %s9, %s16
    %p86 = scmp.eq.s32.totalorder %s85, 0
    %s88 = sadd.s32 %s87, 1
    %s89 = scalar_select %p86, %s87, %s88
    %p92 = pneg %p86
    %p93 = scmp.eq.s32.totalorder %s9, 1
    %p94 = por %p92, %p93
    %p95 = scmp.ne.s32.totalorder %s87, %s90
    %p96 = scmp.eq.s32.totalorder %s9, 0
    %p97 = por %p95, %p96
    %p98 = scmp.ne.s32.totalorder %s87, %s90
    %p99 = scmp.eq.s32.totalorder %s14, 1
    %p100 = por %p98, %p99
    %p101 = scmp.ne.s32.totalorder %s90, %s91
    %p102 = scmp.eq.s32.totalorder %s14, 0
    %p103 = por %p101, %p102
    %p104 = scmp.ne.s32.totalorder %s90, %s91
    %p105 = scmp.eq.s32.totalorder %s15, 1
    %p106 = por %p104, %p105
    %p108 = scmp.ne.s32.totalorder %s91, %s107
    %p109 = scmp.eq.s32.totalorder %s15, 0
    %p110 = por %p108, %p109
    %p111 = scmp.le.s32.totalorder 1, %s9
    %p112 = scmp.lt.s32.totalorder %s9, 3
    %p113 = pnand %p111, %p112
    %p114 = pneg %p113
    // Predicated region
    $region9: #{phcc_fpn_forward.8} parent=5 // pred_check
      _
    $region10: #{phcc_fpn_forward.8} parent=5 // pred_check_branch
      %116 = sbr.rel (%p113) target = $region12
    $region11: #{phcc_fpn_forward.8} parent=5 // pred_region
      %s117 = ssub.s32 %s9, 1
      // Predicated region
      $region13: #{phcc_fpn_forward.8} parent=11 // pred_check
        %p118 = pneg %p56
      $region14: #{phcc_fpn_forward.8} parent=11 // pred_check_branch
        %120 = sbr.rel (%p118) target = $region16
      $region15: #{phcc_fpn_forward.8} parent=11 // pred_region
        _
      $region16: #{phcc_fpn_forward.8} parent=11 // pred_fallthru
        _
      // Predicated region
      $region17: #{phcc_fpn_forward.8} parent=11 // pred_check
        %p121 = pneg %p77
      $region18: #{phcc_fpn_forward.8} parent=11 // pred_check_branch
        %123 = sbr.rel (%p121) target = $region20
      $region19: #{phcc_fpn_forward.8} parent=11 // pred_region
        _
      $region20: #{phcc_fpn_forward.8} parent=11 // pred_fallthru
        _
    $region12: #{phcc_fpn_forward.8} parent=5 // pred_fallthru
      _
    %p124 = scmp.lt.s32.totalorder %s9, 2
    // Predicated region
    $region21: #{phcc_fpn_forward.8} parent=5 // pred_check
      %p125 = pneg %p124
    $region22: #{phcc_fpn_forward.8} parent=5 // pred_check_branch
      %127 = sbr.rel (%p125) target = $region24
    $region23: #{phcc_fpn_forward.8} parent=5 // pred_region
      // Predicated region
      $region25: #{phcc_fpn_forward.8} parent=23 // pred_check
        %p128 = pneg %p29
      $region26: #{phcc_fpn_forward.8} parent=23 // pred_check_branch
        %130 = sbr.rel (%p128) target = $region28
      $region27: #{phcc_fpn_forward.8} parent=23 // pred_region
        %p131 = scmp.lt.s32.totalorder %s9, 1
        %s132 = scalar_select %p131, %s9, 1
        %s133 = smul.addr %s132, 72
        %s134 = smul.addr %s133, 4
        %s135 = scalar_lea.vmem %s0, %s134
      $region28: #{phcc_fpn_forward.8} parent=23 // pred_fallthru
        _
    $region24: #{phcc_fpn_forward.8} parent=5 // pred_fallthru
      _
    %p136 = scmp.le.s32.totalorder 1, %s9
    %p137 = scmp.lt.s32.totalorder %s9, 3
    %p138 = pnand %p136, %p137
    %p139 = pneg %p138
    // Predicated region
    $region29: #{phcc_fpn_forward.8} parent=5 // pred_check
      _
    $region30: #{phcc_fpn_forward.8} parent=5 // pred_check_branch
      %141 = sbr.rel (%p138) target = $region32
    $region31: #{phcc_fpn_forward.8} parent=5 // pred_region
      %s142 = ssub.s32 %s9, 1
      %p143 = scmp.lt.s32.totalorder %s14, 1
      %s144 = scalar_select %p143, %s14, 1
      %s145 = smul.addr %s144, 72
      %s146 = smul.addr %s145, 4
      %s147 = scalar_lea.vmem %s0, %s146
      %p148 = pneg %p35
      %p149 = pneg %p32
      %p150 = pneg %p56
      %p151 = pneg %p53
      %p152 = pneg %p77
      %p153 = pneg %p74
      %p154 = pneg %p103
      %p155 = pneg %p100
      %p156 = scmp.lt.s32.totalorder %s14, 1
      %s157 = scalar_select %p156, %s14, 1
      %s158 = smul.addr %s157, 32
      %s159 = smul.addr %s158, 4
      %s160 = scalar_lea.vmem %s3, %s159
      %p161 = scmp.lt.s32.totalorder %s14, 1
      %s162 = scalar_select %p161, %s14, 1
      %s163 = smul.addr %s162, 72
      %s164 = smul.addr %s163, 4
      %s165 = scalar_lea.vmem %s0, %s164
      %p166 = scmp.lt.s32.totalorder %s14, 1
      %s167 = scalar_select %p166, %s14, 1
      %s168 = smul.addr %s167, 32
      %s169 = smul.addr %s168, 4
      %s170 = scalar_lea.vmem %s3, %s169
      %v172 = vld [vmem:[%s165] sm:$0xff]
      %v173 = vld [vmem:[%s165 + $0x8] sm:$0xff]
      %v174 = vld [vmem:[%s165 + $0x10] sm:$0xff]
      %v175 = vld [vmem:[%s165 + $0x18] sm:$0xff]
      %v176 = vld [vmem:[%s165 + $0x20] sm:$0xff]
      %v177 = vld [vmem:[%s165 + $0x28] sm:$0xff]
      %v178 = vld [vmem:[%s165 + $0x30] sm:$0xff]
      %v179 = vld [vmem:[%s165 + $0x38] sm:$0xff]
      %v180 = vld [vmem:[%s165 + $0x40] sm:$0xff]
      %v181 = vld [vmem:[%s165 + $0x48] sm:$0xff]
      %v182 = vld [vmem:[%s165 + $0x50] sm:$0xff]
      %v183 = vld [vmem:[%s165 + $0x58] sm:$0xff]
      %v184 = vld [vmem:[%s165 + $0x60] sm:$0xff]
      %v185 = vld [vmem:[%s165 + $0x68] sm:$0xff]
      %v186 = vld [vmem:[%s165 + $0x70] sm:$0xff]
      %v187 = vld [vmem:[%s165 + $0x78] sm:$0xff]
      %v188 = vld [vmem:[%s165 + $0x80] sm:$0xff]
      %v189 = vld [vmem:[%s165 + $0x88] sm:$0xff]
      %v190 = vld [vmem:[%s165 + $0x90] sm:$0xff]
      %v191 = vld [vmem:[%s165 + $0x98] sm:$0xff]
      %v192 = vld [vmem:[%s165 + $0xa0] sm:$0xff]
      %v193 = vld [vmem:[%s165 + $0xa8] sm:$0xff]
      %v194 = vld [vmem:[%s165 + $0xb0] sm:$0xff]
      %v195 = vld [vmem:[%s165 + $0xb8] sm:$0xff]
      %v196 = vld [vmem:[%s165 + $0xc0] sm:$0xff]
      %v197 = vld [vmem:[%s165 + $0xc8] sm:$0xff]
      %v198 = vld [vmem:[%s165 + $0xd0] sm:$0xff]
      %v199 = vld [vmem:[%s165 + $0xd8] sm:$0xff]
      %v200 = vld [vmem:[%s165 + $0xe0] sm:$0xff]
      %v201 = vld [vmem:[%s165 + $0xe8] sm:$0xff]
      %v202 = vld [vmem:[%s165 + $0xf0] sm:$0xff]
      %v203 = vld [vmem:[%s165 + $0xf8] sm:$0xff]
      %v204 = vld [vmem:[%s1] sm:$0xf]
      %v205 = vld [vmem:[%s1 + $0x4] sm:$0xf]
      %v206 = vld [vmem:[%s1 + $0x8] sm:$0xf]
      %v207 = vld [vmem:[%s1 + $0xc] sm:$0xf]
      %v208 = vld [vmem:[%s1 + $0x10] sm:$0xf]
      %v209 = vld [vmem:[%s1 + $0x14] sm:$0xf]
      %v210 = vld [vmem:[%s1 + $0x18] sm:$0xf]
      %v211 = vld [vmem:[%s1 + $0x1c] sm:$0xf]
      %v212 = vld [vmem:[%s1 + $0x20] sm:$0xf]
      %v213 = vld [vmem:[%s1 + $0x24] sm:$0xf]
      %v214 = vld [vmem:[%s1 + $0x28] sm:$0xf]
      %v215 = vld [vmem:[%s1 + $0x2c] sm:$0xf]
      %v216 = vld [vmem:[%s1 + $0x30] sm:$0xf]
      %v217 = vld [vmem:[%s1 + $0x34] sm:$0xf]
      %v218 = vld [vmem:[%s1 + $0x38] sm:$0xf]
      %v219 = vld [vmem:[%s1 + $0x3c] sm:$0xf]
      %v220 = vld [vmem:[%s1 + $0x40] sm:$0xf]
      %v221 = vld [vmem:[%s1 + $0x44] sm:$0xf]
      %v222 = vld [vmem:[%s1 + $0x48] sm:$0xf]
      %v223 = vld [vmem:[%s1 + $0x4c] sm:$0xf]
      %v224 = vld [vmem:[%s1 + $0x50] sm:$0xf]
      %v225 = vld [vmem:[%s1 + $0x54] sm:$0xf]
      %v226 = vld [vmem:[%s1 + $0x58] sm:$0xf]
      %v227 = vld [vmem:[%s1 + $0x5c] sm:$0xf]
      %v228 = vld [vmem:[%s165 + $0x100] sm:$0xff]
      %v229 = vld [vmem:[%s165 + $0x108] sm:$0xff]
      %s230 = scalar_lea.vmem %s1, 96
      %v231 = vld [vmem:[%s230] sm:$0xf]
      %v232 = vld [vmem:[%s230 + $0x4] sm:$0xf]
      %v233 = vld [vmem:[%s230 + $0x8] sm:$0xf]
      %v234 = vld [vmem:[%s230 + $0xc] sm:$0xf]
      %v235 = vld [vmem:[%s230 + $0x10] sm:$0xf]
      %v236 = vld [vmem:[%s230 + $0x14] sm:$0xf]
      %v237 = vld [vmem:[%s230 + $0x18] sm:$0xf]
      %v238 = vld [vmem:[%s230 + $0x1c] sm:$0xf]
      %v239 = vld [vmem:[%s230 + $0x20] sm:$0xf]
      %v240 = vld [vmem:[%s230 + $0x24] sm:$0xf]
      %v241 = vld [vmem:[%s230 + $0x28] sm:$0xf]
      %v242 = vld [vmem:[%s230 + $0x2c] sm:$0xf]
      %v243 = vld [vmem:[%s230 + $0x30] sm:$0xf]
      %v244 = vld [vmem:[%s230 + $0x34] sm:$0xf]
      %v245 = vld [vmem:[%s230 + $0x38] sm:$0xf]
      %v246 = vld [vmem:[%s230 + $0x3c] sm:$0xf]
      %v247 = vld [vmem:[%s230 + $0x40] sm:$0xf]
      %v248 = vld [vmem:[%s230 + $0x44] sm:$0xf]
      %v249 = vld [vmem:[%s230 + $0x48] sm:$0xf]
      %v250 = vld [vmem:[%s230 + $0x4c] sm:$0xf]
      %v251 = vld [vmem:[%s230 + $0x50] sm:$0xf]
      %v252 = vld [vmem:[%s230 + $0x54] sm:$0xf]
      %v253 = vld [vmem:[%s230 + $0x58] sm:$0xf]
      %v254 = vld [vmem:[%s230 + $0x5c] sm:$0xf]
      %v287 = vunpack.c.l.b16 %v174
      %v288 = vunpack.c.h.b16 %v174
      %v289 = vunpack.c.l.b16 %v175
      %v290 = vunpack.c.h.b16 %v175
      %v291 = vunpack.c.l.b16 %v176
      %v292 = vunpack.c.h.b16 %v176
      %v293 = vunpack.c.l.b16 %v177
      %v294 = vunpack.c.h.b16 %v177
      %v295 = vunpack.c.l.b16 %v178
      %v296 = vunpack.c.h.b16 %v178
      %v297 = vunpack.c.l.b16 %v179
      %v298 = vunpack.c.h.b16 %v179
      %v299 = vunpack.c.l.b16 %v180
      %v300 = vunpack.c.h.b16 %v180
      %v301 = vunpack.c.l.b16 %v181
      %v302 = vunpack.c.h.b16 %v181
      %v303 = vunpack.c.l.b16 %v182
      %v304 = vunpack.c.h.b16 %v182
      %v305 = vunpack.c.l.b16 %v183
      %v306 = vunpack.c.h.b16 %v183
      %v307 = vunpack.c.l.b16 %v184
      %v308 = vunpack.c.h.b16 %v184
      %v309 = vunpack.c.l.b16 %v185
      %v310 = vunpack.c.h.b16 %v185
      %v311 = vunpack.c.l.b16 %v186
      %v312 = vunpack.c.h.b16 %v186
      %v313 = vunpack.c.l.b16 %v187
      %v314 = vunpack.c.h.b16 %v187
      %v315 = vunpack.c.l.b16 %v188
      %v316 = vunpack.c.h.b16 %v188
      %v317 = vunpack.c.l.b16 %v189
      %v318 = vunpack.c.h.b16 %v189
      %v319 = vunpack.c.l.b16 %v190
      %v320 = vunpack.c.h.b16 %v190
      %v321 = vunpack.c.l.b16 %v191
      %v322 = vunpack.c.h.b16 %v191
      %v323 = vunpack.c.l.b16 %v192
      %v324 = vunpack.c.h.b16 %v192
      %v325 = vunpack.c.l.b16 %v193
      %v326 = vunpack.c.h.b16 %v193
      %v327 = vunpack.c.l.b16 %v194
      %v328 = vunpack.c.h.b16 %v194
      %v329 = vunpack.c.l.b16 %v195
      %v330 = vunpack.c.h.b16 %v195
      %v331 = vunpack.c.l.b16 %v196
      %v332 = vunpack.c.h.b16 %v196
      %v333 = vunpack.c.l.b16 %v197
      %v334 = vunpack.c.h.b16 %v197
      %v335 = vunpack.c.l.b16 %v198
      %v336 = vunpack.c.h.b16 %v198
      %v337 = vunpack.c.l.b16 %v199
      %v338 = vunpack.c.h.b16 %v199
      %v339 = vunpack.c.l.b16 %v200
      %v340 = vunpack.c.h.b16 %v200
      %v341 = vunpack.c.l.b16 %v201
      %v342 = vunpack.c.h.b16 %v201
      %v343 = vunpack.c.l.b16 %v202
      %v344 = vunpack.c.h.b16 %v202
      %v345 = vunpack.c.l.b16 %v203
      %v346 = vunpack.c.h.b16 %v203
      %v347 = vunpack.c.l.b16 %v228
      %v348 = vunpack.c.h.b16 %v228
      %v349 = vunpack.c.l.b16 %v229
      %v350 = vunpack.c.h.b16 %v229
      %v351 = vpack.c.b16 %v289, %v287
      %v352 = vpack.c.b16 %v290, %v288
      %v353 = vpack.c.b16 %v293, %v291
      %v354 = vpack.c.b16 %v294, %v292
      %v355 = vpack.c.b16 %v297, %v295
      %v356 = vpack.c.b16 %v298, %v296
      %v357 = vpack.c.b16 %v301, %v299
      %v358 = vpack.c.b16 %v302, %v300
      %v359 = vpack.c.b16 %v305, %v303
      %v360 = vpack.c.b16 %v306, %v304
      %v361 = vpack.c.b16 %v309, %v307
      %v362 = vpack.c.b16 %v310, %v308
      %v363 = vpack.c.b16 %v313, %v311
      %v364 = vpack.c.b16 %v314, %v312
      %v365 = vpack.c.b16 %v317, %v315
      %v366 = vpack.c.b16 %v318, %v316
      %v367 = vpack.c.b16 %v321, %v319
      %v368 = vpack.c.b16 %v322, %v320
      %v369 = vpack.c.b16 %v325, %v323
      %v370 = vpack.c.b16 %v326, %v324
      %v371 = vpack.c.b16 %v329, %v327
      %v372 = vpack.c.b16 %v330, %v328
      %v373 = vpack.c.b16 %v333, %v331
      %v374 = vpack.c.b16 %v334, %v332
      %v375 = vpack.c.b16 %v337, %v335
      %v376 = vpack.c.b16 %v338, %v336
      %v377 = vpack.c.b16 %v341, %v339
      %v378 = vpack.c.b16 %v342, %v340
      %v379 = vpack.c.b16 %v345, %v343
      %v380 = vpack.c.b16 %v346, %v344
      %v381 = vpack.c.b16 %v349, %v347
      %v382 = vpack.c.b16 %v350, %v348
      %v423 = vunpack.c.l.b16 %v231
      %v424 = vunpack.c.l.b16 %v232
      %v425 = vunpack.c.l.b16 %v233
      %v426 = vunpack.c.l.b16 %v234
      %v427 = vunpack.c.l.b16 %v235
      %v428 = vunpack.c.l.b16 %v236
      %v429 = vunpack.c.l.b16 %v237
      %v430 = vunpack.c.l.b16 %v238
      %v431 = vunpack.c.l.b16 %v239
      %v432 = vunpack.c.l.b16 %v240
      %v433 = vunpack.c.l.b16 %v241
      %v434 = vunpack.c.l.b16 %v242
      %v435 = vunpack.c.l.b16 %v243
      %v436 = vunpack.c.l.b16 %v244
      %v437 = vunpack.c.l.b16 %v245
      %v438 = vunpack.c.l.b16 %v246
      %v439 = vunpack.c.l.b16 %v247
      %v440 = vunpack.c.l.b16 %v248
      %v441 = vunpack.c.l.b16 %v249
      %v442 = vunpack.c.l.b16 %v250
      %v443 = vunpack.c.l.b16 %v251
      %v444 = vunpack.c.l.b16 %v252
      %v445 = vunpack.c.l.b16 %v253
      %v446 = vunpack.c.l.b16 %v254
      %v447 = vpack.c.b16 %v424, %v423
      %v448 = vpack.c.b16 %v426, %v425
      %v449 = vpack.c.b16 %v428, %v427
      %v450 = vpack.c.b16 %v430, %v429
      %v451 = vpack.c.b16 %v432, %v431
      %v452 = vpack.c.b16 %v434, %v433
      %v453 = vpack.c.b16 %v436, %v435
      %v454 = vpack.c.b16 %v438, %v437
      %v455 = vpack.c.b16 %v440, %v439
      %v456 = vpack.c.b16 %v442, %v441
      %v457 = vpack.c.b16 %v444, %v443
      %v458 = vpack.c.b16 %v446, %v445
      %vm471 = vcmask 523264
      %v473 = vsel %vm471, %v352, 0
      %v476 = vsel %vm471, %v354, 0
      %v479 = vsel %vm471, %v356, 0
      %v482 = vsel %vm471, %v358, 0
      %v485 = vsel %vm471, %v360, 0
      %v488 = vsel %vm471, %v362, 0
      %v491 = vsel %vm471, %v364, 0
      %v494 = vsel %vm471, %v366, 0
      %v497 = vsel %vm471, %v368, 0
      %v500 = vsel %vm471, %v370, 0
      %v503 = vsel %vm471, %v372, 0
      %v506 = vsel %vm471, %v374, 0
      %v509 = vsel %vm471, %v376, 0
      %v512 = vsel %vm471, %v378, 0
      %v515 = vsel %vm471, %v380, 0
      %v518 = vsel %vm471, %v382, 0
      %520 = vmatpush.bf16.msra.mxu0 %v454
      %521 = vmatpush.bf16.msra.mxu0 %v453
      %522 = vmatpush.bf16.msra.mxu0 %v452
      %523 = vmatpush.bf16.msra.mxu0 %v451
      %524 = vmatpush.bf16.msra.mxu0 %v450
      %525 = vmatpush.bf16.msra.mxu0 %v449
      %526 = vmatpush.bf16.msra.mxu0 %v448
      %527 = vmatpush.bf16.msra.mxu0 %v447
      %528 = vmatmul.bf16.gmra.mxu0 %v351
      %v529 = vpop.f32.mrf.mxu0
      %v530 = vadd.f32 0.0, %v529
      %v531 = vpop.f32.mrf.mxu0
      %v532 = vadd.f32 0.0, %v531
      %533 = vmatmul.bf16.gmra.mxu0 %v353
      %v534 = vpop.f32.mrf.mxu0
      %v535 = vadd.f32 0.0, %v534
      %v536 = vpop.f32.mrf.mxu0
      %v537 = vadd.f32 0.0, %v536
      %538 = vmatmul.bf16.gmra.mxu0 %v355
      %v539 = vpop.f32.mrf.mxu0
      %v540 = vadd.f32 0.0, %v539
      %v541 = vpop.f32.mrf.mxu0
      %v542 = vadd.f32 0.0, %v541
      %543 = vmatmul.bf16.gmra.mxu0 %v357
      %v544 = vpop.f32.mrf.mxu0
      %v545 = vadd.f32 0.0, %v544
      %v546 = vpop.f32.mrf.mxu0
      %v547 = vadd.f32 0.0, %v546
      %548 = vmatmul.bf16.gmra.mxu0 %v359
      %v549 = vpop.f32.mrf.mxu0
      %v550 = vadd.f32 0.0, %v549
      %v551 = vpop.f32.mrf.mxu0
      %v552 = vadd.f32 0.0, %v551
      %553 = vmatmul.bf16.gmra.mxu0 %v361
      %v554 = vpop.f32.mrf.mxu0
      %v555 = vadd.f32 0.0, %v554
      %v556 = vpop.f32.mrf.mxu0
      %v557 = vadd.f32 0.0, %v556
      %558 = vmatmul.bf16.gmra.mxu0 %v363
      %v559 = vpop.f32.mrf.mxu0
      %v560 = vadd.f32 0.0, %v559
      %v561 = vpop.f32.mrf.mxu0
      %v562 = vadd.f32 0.0, %v561
      %563 = vmatmul.bf16.gmra.mxu0 %v365
      %v564 = vpop.f32.mrf.mxu0
      %v565 = vadd.f32 0.0, %v564
      %v566 = vpop.f32.mrf.mxu0
      %v567 = vadd.f32 0.0, %v566
      %568 = vmatmul.bf16.gmra.mxu0 %v367
      %v569 = vpop.f32.mrf.mxu0
      %v570 = vadd.f32 0.0, %v569
      %v571 = vpop.f32.mrf.mxu0
      %v572 = vadd.f32 0.0, %v571
      %573 = vmatmul.bf16.gmra.mxu0 %v369
      %v574 = vpop.f32.mrf.mxu0
      %v575 = vadd.f32 0.0, %v574
      %v576 = vpop.f32.mrf.mxu0
      %v577 = vadd.f32 0.0, %v576
      %578 = vmatmul.bf16.gmra.mxu0 %v371
      %v579 = vpop.f32.mrf.mxu0
      %v580 = vadd.f32 0.0, %v579
      %v581 = vpop.f32.mrf.mxu0
      %v582 = vadd.f32 0.0, %v581
      %583 = vmatmul.bf16.gmra.mxu0 %v373
      %v584 = vpop.f32.mrf.mxu0
      %v585 = vadd.f32 0.0, %v584
      %v586 = vpop.f32.mrf.mxu0
      %v587 = vadd.f32 0.0, %v586
      %588 = vmatmul.bf16.gmra.mxu0 %v375
      %v589 = vpop.f32.mrf.mxu0
      %v590 = vadd.f32 0.0, %v589
      %v591 = vpop.f32.mrf.mxu0
      %v592 = vadd.f32 0.0, %v591
      %593 = vmatmul.bf16.gmra.mxu0 %v377
      %v594 = vpop.f32.mrf.mxu0
      %v595 = vadd.f32 0.0, %v594
      %v596 = vpop.f32.mrf.mxu0
      %v597 = vadd.f32 0.0, %v596
      %598 = vmatmul.bf16.gmra.mxu0 %v379
      %v599 = vpop.f32.mrf.mxu0
      %v600 = vadd.f32 0.0, %v599
      %v601 = vpop.f32.mrf.mxu0
      %v602 = vadd.f32 0.0, %v601
      %603 = vmatmul.bf16.gmra.mxu0 %v381
      %v604 = vpop.f32.mrf.mxu0
      %v605 = vadd.f32 0.0, %v604
      %v606 = vpop.f32.mrf.mxu0
      %v607 = vadd.f32 0.0, %v606
      %608 = vdwg.mxu0
      %609 = vmatpush.bf16.msra.mxu0 0
      %610 = vmatpush.bf16.msra.mxu0 0
      %611 = vmatpush.bf16.msra.mxu0 0
      %612 = vmatpush.bf16.msra.mxu0 0
      %613 = vmatpush.bf16.msra.mxu0 %v458
      %614 = vmatpush.bf16.msra.mxu0 %v457
      %615 = vmatpush.bf16.msra.mxu0 %v456
      %616 = vmatpush.bf16.msra.mxu0 %v455
      %617 = vmatmul.bf16.gmra.mxu0 %v473
      %v618 = vpop.f32.mrf.mxu0
      %v619 = vadd.f32 %v530, %v618
      %v620 = vpop.f32.mrf.mxu0
      %v621 = vadd.f32 %v532, %v620
      %622 = vmatmul.bf16.gmra.mxu0 %v476
      %v623 = vpop.f32.mrf.mxu0
      %v624 = vadd.f32 %v535, %v623
      %v625 = vpop.f32.mrf.mxu0
      %v626 = vadd.f32 %v537, %v625
      %627 = vmatmul.bf16.gmra.mxu0 %v479
      %v628 = vpop.f32.mrf.mxu0
      %v629 = vadd.f32 %v540, %v628
      %v630 = vpop.f32.mrf.mxu0
      %v631 = vadd.f32 %v542, %v630
      %632 = vmatmul.bf16.gmra.mxu0 %v482
      %v633 = vpop.f32.mrf.mxu0
      %v634 = vadd.f32 %v545, %v633
      %v635 = vpop.f32.mrf.mxu0
      %v636 = vadd.f32 %v547, %v635
      %637 = vmatmul.bf16.gmra.mxu0 %v485
      %v638 = vpop.f32.mrf.mxu0
      %v639 = vadd.f32 %v550, %v638
      %v640 = vpop.f32.mrf.mxu0
      %v641 = vadd.f32 %v552, %v640
      %642 = vmatmul.bf16.gmra.mxu0 %v488
      %v643 = vpop.f32.mrf.mxu0
      %v644 = vadd.f32 %v555, %v643
      %v645 = vpop.f32.mrf.mxu0
      %v646 = vadd.f32 %v557, %v645
      %647 = vmatmul.bf16.gmra.mxu0 %v491
      %v648 = vpop.f32.mrf.mxu0
      %v649 = vadd.f32 %v560, %v648
      %v650 = vpop.f32.mrf.mxu0
      %v651 = vadd.f32 %v562, %v650
      %652 = vmatmul.bf16.gmra.mxu0 %v494
      %v653 = vpop.f32.mrf.mxu0
      %v654 = vadd.f32 %v565, %v653
      %v655 = vpop.f32.mrf.mxu0
      %v656 = vadd.f32 %v567, %v655
      %657 = vmatmul.bf16.gmra.mxu0 %v497
      %v658 = vpop.f32.mrf.mxu0
      %v659 = vadd.f32 %v570, %v658
      %v660 = vpop.f32.mrf.mxu0
      %v661 = vadd.f32 %v572, %v660
      %662 = vmatmul.bf16.gmra.mxu0 %v500
      %v663 = vpop.f32.mrf.mxu0
      %v664 = vadd.f32 %v575, %v663
      %v665 = vpop.f32.mrf.mxu0
      %v666 = vadd.f32 %v577, %v665
      %667 = vmatmul.bf16.gmra.mxu0 %v503
      %v668 = vpop.f32.mrf.mxu0
      %v669 = vadd.f32 %v580, %v668
      %v670 = vpop.f32.mrf.mxu0
      %v671 = vadd.f32 %v582, %v670
      %672 = vmatmul.bf16.gmra.mxu0 %v506
      %v673 = vpop.f32.mrf.mxu0
      %v674 = vadd.f32 %v585, %v673
      %v675 = vpop.f32.mrf.mxu0
      %v676 = vadd.f32 %v587, %v675
      %677 = vmatmul.bf16.gmra.mxu0 %v509
      %v678 = vpop.f32.mrf.mxu0
      %v679 = vadd.f32 %v590, %v678
      %v680 = vpop.f32.mrf.mxu0
      %v681 = vadd.f32 %v592, %v680
      %682 = vmatmul.bf16.gmra.mxu0 %v512
      %v683 = vpop.f32.mrf.mxu0
      %v684 = vadd.f32 %v595, %v683
      %v685 = vpop.f32.mrf.mxu0
      %v686 = vadd.f32 %v597, %v685
      %687 = vmatmul.bf16.gmra.mxu0 %v515
      %v688 = vpop.f32.mrf.mxu0
      %v689 = vadd.f32 %v600, %v688
      %v690 = vpop.f32.mrf.mxu0
      %v691 = vadd.f32 %v602, %v690
      %692 = vmatmul.bf16.gmra.mxu0 %v518
      %v693 = vpop.f32.mrf.mxu0
      %v694 = vadd.f32 %v605, %v693
      %v695 = vpop.f32.mrf.mxu0
      %v696 = vadd.f32 %v607, %v695
      %697 = vdwg.mxu0
      %v700 = vunpack.c.l.b16 %v172
      %v701 = vunpack.c.h.b16 %v172
      %v702 = vunpack.c.l.b16 %v173
      %v703 = vunpack.c.h.b16 %v173
      %v704 = vpack.c.b16 %v702, %v700
      %v705 = vpack.c.b16 %v703, %v701
      %v731 = vunpack.c.l.b16 %v204
      %v732 = vunpack.c.l.b16 %v205
      %v733 = vunpack.c.l.b16 %v206
      %v734 = vunpack.c.l.b16 %v207
      %v735 = vunpack.c.l.b16 %v208
      %v736 = vunpack.c.l.b16 %v209
      %v737 = vunpack.c.l.b16 %v210
      %v738 = vunpack.c.l.b16 %v211
      %v739 = vunpack.c.l.b16 %v212
      %v740 = vunpack.c.l.b16 %v213
      %v741 = vunpack.c.l.b16 %v214
      %v742 = vunpack.c.l.b16 %v215
      %v743 = vunpack.c.l.b16 %v216
      %v744 = vunpack.c.l.b16 %v217
      %v745 = vunpack.c.l.b16 %v218
      %v746 = vunpack.c.l.b16 %v219
      %v747 = vunpack.c.l.b16 %v220
      %v748 = vunpack.c.l.b16 %v221
      %v749 = vunpack.c.l.b16 %v222
      %v750 = vunpack.c.l.b16 %v223
      %v751 = vunpack.c.l.b16 %v224
      %v752 = vunpack.c.l.b16 %v225
      %v753 = vunpack.c.l.b16 %v226
      %v754 = vunpack.c.l.b16 %v227
      %v755 = vpack.c.b16 %v732, %v731
      %v756 = vpack.c.b16 %v734, %v733
      %v757 = vpack.c.b16 %v736, %v735
      %v758 = vpack.c.b16 %v738, %v737
      %v759 = vpack.c.b16 %v740, %v739
      %v760 = vpack.c.b16 %v742, %v741
      %v761 = vpack.c.b16 %v744, %v743
      %v762 = vpack.c.b16 %v746, %v745
      %v763 = vpack.c.b16 %v748, %v747
      %v764 = vpack.c.b16 %v750, %v749
      %v765 = vpack.c.b16 %v752, %v751
      %v766 = vpack.c.b16 %v754, %v753
      %v780 = vsel %vm471, %v705, 0
      %782 = vmatpush.bf16.msra.mxu0 %v762
      %783 = vmatpush.bf16.msra.mxu0 %v761
      %784 = vmatpush.bf16.msra.mxu0 %v760
      %785 = vmatpush.bf16.msra.mxu0 %v759
      %786 = vmatpush.bf16.msra.mxu0 %v758
      %787 = vmatpush.bf16.msra.mxu0 %v757
      %788 = vmatpush.bf16.msra.mxu0 %v756
      %789 = vmatpush.bf16.msra.mxu0 %v755
      %790 = vmatmul.bf16.gmra.mxu0 %v704
      %v791 = vpop.f32.mrf.mxu0
      %v792 = vadd.f32 %v619, %v791
      %v793 = vpop.f32.mrf.mxu0
      %v794 = vadd.f32 %v621, %v793
      %795 = vmatmul.bf16.gmra.mxu0 %v351
      %v796 = vpop.f32.mrf.mxu0
      %v797 = vadd.f32 %v624, %v796
      %v798 = vpop.f32.mrf.mxu0
      %v799 = vadd.f32 %v626, %v798
      %800 = vmatmul.bf16.gmra.mxu0 %v353
      %v801 = vpop.f32.mrf.mxu0
      %v802 = vadd.f32 %v629, %v801
      %v803 = vpop.f32.mrf.mxu0
      %v804 = vadd.f32 %v631, %v803
      %805 = vmatmul.bf16.gmra.mxu0 %v355
      %v806 = vpop.f32.mrf.mxu0
      %v807 = vadd.f32 %v634, %v806
      %v808 = vpop.f32.mrf.mxu0
      %v809 = vadd.f32 %v636, %v808
      %810 = vmatmul.bf16.gmra.mxu0 %v357
      %v811 = vpop.f32.mrf.mxu0
      %v812 = vadd.f32 %v639, %v811
      %v813 = vpop.f32.mrf.mxu0
      %v814 = vadd.f32 %v641, %v813
      %815 = vmatmul.bf16.gmra.mxu0 %v359
      %v816 = vpop.f32.mrf.mxu0
      %v817 = vadd.f32 %v644, %v816
      %v818 = vpop.f32.mrf.mxu0
      %v819 = vadd.f32 %v646, %v818
      %820 = vmatmul.bf16.gmra.mxu0 %v361
      %v821 = vpop.f32.mrf.mxu0
      %v822 = vadd.f32 %v649, %v821
      %v823 = vpop.f32.mrf.mxu0
      %v824 = vadd.f32 %v651, %v823
      %825 = vmatmul.bf16.gmra.mxu0 %v363
      %v826 = vpop.f32.mrf.mxu0
      %v827 = vadd.f32 %v654, %v826
      %v828 = vpop.f32.mrf.mxu0
      %v829 = vadd.f32 %v656, %v828
      %830 = vmatmul.bf16.gmra.mxu0 %v365
      %v831 = vpop.f32.mrf.mxu0
      %v832 = vadd.f32 %v659, %v831
      %v833 = vpop.f32.mrf.mxu0
      %v834 = vadd.f32 %v661, %v833
      %835 = vmatmul.bf16.gmra.mxu0 %v367
      %v836 = vpop.f32.mrf.mxu0
      %v837 = vadd.f32 %v664, %v836
      %v838 = vpop.f32.mrf.mxu0
      %v839 = vadd.f32 %v666, %v838
      %840 = vmatmul.bf16.gmra.mxu0 %v369
      %v841 = vpop.f32.mrf.mxu0
      %v842 = vadd.f32 %v669, %v841
      %v843 = vpop.f32.mrf.mxu0
      %v844 = vadd.f32 %v671, %v843
      %845 = vmatmul.bf16.gmra.mxu0 %v371
      %v846 = vpop.f32.mrf.mxu0
      %v847 = vadd.f32 %v674, %v846
      %v848 = vpop.f32.mrf.mxu0
      %v849 = vadd.f32 %v676, %v848
      %850 = vmatmul.bf16.gmra.mxu0 %v373
      %v851 = vpop.f32.mrf.mxu0
      %v852 = vadd.f32 %v679, %v851
      %v853 = vpop.f32.mrf.mxu0
      %v854 = vadd.f32 %v681, %v853
      %855 = vmatmul.bf16.gmra.mxu0 %v375
      %v856 = vpop.f32.mrf.mxu0
      %v857 = vadd.f32 %v684, %v856
      %v858 = vpop.f32.mrf.mxu0
      %v859 = vadd.f32 %v686, %v858
      %860 = vmatmul.bf16.gmra.mxu0 %v377
      %v861 = vpop.f32.mrf.mxu0
      %v862 = vadd.f32 %v689, %v861
      %v863 = vpop.f32.mrf.mxu0
      %v864 = vadd.f32 %v691, %v863
      %865 = vmatmul.bf16.gmra.mxu0 %v379
      %v866 = vpop.f32.mrf.mxu0
      %v867 = vadd.f32 %v694, %v866
      %v868 = vpop.f32.mrf.mxu0
      %v869 = vadd.f32 %v696, %v868
      %870 = vdwg.mxu0
      %871 = vmatpush.bf16.msra.mxu0 0
      %872 = vmatpush.bf16.msra.mxu0 0
      %873 = vmatpush.bf16.msra.mxu0 0
      %874 = vmatpush.bf16.msra.mxu0 0
      %875 = vmatpush.bf16.msra.mxu0 %v766
      %876 = vmatpush.bf16.msra.mxu0 %v765
      %877 = vmatpush.bf16.msra.mxu0 %v764
      %878 = vmatpush.bf16.msra.mxu0 %v763
      %879 = vmatmul.bf16.gmra.mxu0 %v780
      %v880 = vpop.f32.mrf.mxu0
      %v881 = vadd.f32 %v792, %v880
      %v882 = vpop.f32.mrf.mxu0
      %v883 = vadd.f32 %v794, %v882
      %884 = vmatmul.bf16.gmra.mxu0 %v473
      %v885 = vpop.f32.mrf.mxu0
      %v886 = vadd.f32 %v797, %v885
      %v887 = vpop.f32.mrf.mxu0
      %v888 = vadd.f32 %v799, %v887
      %889 = vmatmul.bf16.gmra.mxu0 %v476
      %v890 = vpop.f32.mrf.mxu0
      %v891 = vadd.f32 %v802, %v890
      %v892 = vpop.f32.mrf.mxu0
      %v893 = vadd.f32 %v804, %v892
      %894 = vmatmul.bf16.gmra.mxu0 %v479
      %v895 = vpop.f32.mrf.mxu0
      %v896 = vadd.f32 %v807, %v895
      %v897 = vpop.f32.mrf.mxu0
      %v898 = vadd.f32 %v809, %v897
      %899 = vmatmul.bf16.gmra.mxu0 %v482
      %v900 = vpop.f32.mrf.mxu0
      %v901 = vadd.f32 %v812, %v900
      %v902 = vpop.f32.mrf.mxu0
      %v903 = vadd.f32 %v814, %v902
      %904 = vmatmul.bf16.gmra.mxu0 %v485
      %v905 = vpop.f32.mrf.mxu0
      %v906 = vadd.f32 %v817, %v905
      %v907 = vpop.f32.mrf.mxu0
      %v908 = vadd.f32 %v819, %v907
      %909 = vmatmul.bf16.gmra.mxu0 %v488
      %v910 = vpop.f32.mrf.mxu0
      %v911 = vadd.f32 %v822, %v910
      %v912 = vpop.f32.mrf.mxu0
      %v913 = vadd.f32 %v824, %v912
      %914 = vmatmul.bf16.gmra.mxu0 %v491
      %v915 = vpop.f32.mrf.mxu0
      %v916 = vadd.f32 %v827, %v915
      %v917 = vpop.f32.mrf.mxu0
      %v918 = vadd.f32 %v829, %v917
      %919 = vmatmul.bf16.gmra.mxu0 %v494
      %v920 = vpop.f32.mrf.mxu0
      %v921 = vadd.f32 %v832, %v920
      %v922 = vpop.f32.mrf.mxu0
      %v923 = vadd.f32 %v834, %v922
      %924 = vmatmul.bf16.gmra.mxu0 %v497
      %v925 = vpop.f32.mrf.mxu0
      %v926 = vadd.f32 %v837, %v925
      %v927 = vpop.f32.mrf.mxu0
      %v928 = vadd.f32 %v839, %v927
      %929 = vmatmul.bf16.gmra.mxu0 %v500
      %v930 = vpop.f32.mrf.mxu0
      %v931 = vadd.f32 %v842, %v930
      %v932 = vpop.f32.mrf.mxu0
      %v933 = vadd.f32 %v844, %v932
      %934 = vmatmul.bf16.gmra.mxu0 %v503
      %v935 = vpop.f32.mrf.mxu0
      %v936 = vadd.f32 %v847, %v935
      %v937 = vpop.f32.mrf.mxu0
      %v938 = vadd.f32 %v849, %v937
      %939 = vmatmul.bf16.gmra.mxu0 %v506
      %v940 = vpop.f32.mrf.mxu0
      %v941 = vadd.f32 %v852, %v940
      %v942 = vpop.f32.mrf.mxu0
      %v943 = vadd.f32 %v854, %v942
      %944 = vmatmul.bf16.gmra.mxu0 %v509
      %v945 = vpop.f32.mrf.mxu0
      %v946 = vadd.f32 %v857, %v945
      %v947 = vpop.f32.mrf.mxu0
      %v948 = vadd.f32 %v859, %v947
      %949 = vmatmul.bf16.gmra.mxu0 %v512
      %v950 = vpop.f32.mrf.mxu0
      %v951 = vadd.f32 %v862, %v950
      %v952 = vpop.f32.mrf.mxu0
      %v953 = vadd.f32 %v864, %v952
      %954 = vmatmul.bf16.gmra.mxu0 %v515
      %v955 = vpop.f32.mrf.mxu0
      %v956 = vadd.f32 %v867, %v955
      %v957 = vpop.f32.mrf.mxu0
      %v958 = vadd.f32 %v869, %v957
      %959 = vdwg.mxu0
      %v960 = vld [vmem:[%s165 + $0x20] sm:$0xff]
      %v961 = vld [vmem:[%s165 + $0x28] sm:$0xff]
      %v962 = vld [vmem:[%s165 + $0x30] sm:$0xff]
      %v963 = vld [vmem:[%s165 + $0x38] sm:$0xff]
      %v964 = vld [vmem:[%s165 + $0x40] sm:$0xff]
      %v965 = vld [vmem:[%s165 + $0x48] sm:$0xff]
      %v966 = vld [vmem:[%s165 + $0x50] sm:$0xff]
      %v967 = vld [vmem:[%s165 + $0x58] sm:$0xff]
      %v968 = vld [vmem:[%s165 + $0x60] sm:$0xff]
      %v969 = vld [vmem:[%s165 + $0x68] sm:$0xff]
      %v970 = vld [vmem:[%s165 + $0x70] sm:$0xff]
      %v971 = vld [vmem:[%s165 + $0x78] sm:$0xff]
      %v972 = vld [vmem:[%s165 + $0x80] sm:$0xff]
      %v973 = vld [vmem:[%s165 + $0x88] sm:$0xff]
      %v974 = vld [vmem:[%s165 + $0x90] sm:$0xff]
      %v975 = vld [vmem:[%s165 + $0x98] sm:$0xff]
      %v976 = vld [vmem:[%s165 + $0xa0] sm:$0xff]
      %v977 = vld [vmem:[%s165 + $0xa8] sm:$0xff]
      %v978 = vld [vmem:[%s165 + $0xb0] sm:$0xff]
      %v979 = vld [vmem:[%s165 + $0xb8] sm:$0xff]
      %v980 = vld [vmem:[%s165 + $0xc0] sm:$0xff]
      %v981 = vld [vmem:[%s165 + $0xc8] sm:$0xff]
      %v982 = vld [vmem:[%s165 + $0xd0] sm:$0xff]
      %v983 = vld [vmem:[%s165 + $0xd8] sm:$0xff]
      %v984 = vld [vmem:[%s165 + $0xe0] sm:$0xff]
      %v985 = vld [vmem:[%s165 + $0xe8] sm:$0xff]
      %v986 = vld [vmem:[%s165 + $0xf0] sm:$0xff]
      %v987 = vld [vmem:[%s165 + $0xf8] sm:$0xff]
      %v988 = vld [vmem:[%s165 + $0x100] sm:$0xff]
      %v989 = vld [vmem:[%s165 + $0x108] sm:$0xff]
      %v990 = vld [vmem:[%s165 + $0x110] sm:$0xff]
      %v991 = vld [vmem:[%s165 + $0x118] sm:$0xff]
      %s992 = scalar_lea.vmem %s1, 192
      %v993 = vld [vmem:[%s992] sm:$0xf]
      %v994 = vld [vmem:[%s992 + $0x4] sm:$0xf]
      %v995 = vld [vmem:[%s992 + $0x8] sm:$0xf]
      %v996 = vld [vmem:[%s992 + $0xc] sm:$0xf]
      %v997 = vld [vmem:[%s992 + $0x10] sm:$0xf]
      %v998 = vld [vmem:[%s992 + $0x14] sm:$0xf]
      %v999 = vld [vmem:[%s992 + $0x18] sm:$0xf]
      %v1000 = vld [vmem:[%s992 + $0x1c] sm:$0xf]
      %v1001 = vld [vmem:[%s992 + $0x20] sm:$0xf]
      %v1002 = vld [vmem:[%s992 + $0x24] sm:$0xf]
      %v1003 = vld [vmem:[%s992 + $0x28] sm:$0xf]
      %v1004 = vld [vmem:[%s992 + $0x2c] sm:$0xf]
      %v1005 = vld [vmem:[%s992 + $0x30] sm:$0xf]
      %v1006 = vld [vmem:[%s992 + $0x34] sm:$0xf]
      %v1007 = vld [vmem:[%s992 + $0x38] sm:$0xf]
      %v1008 = vld [vmem:[%s992 + $0x3c] sm:$0xf]
      %v1009 = vld [vmem:[%s992 + $0x40] sm:$0xf]
      %v1010 = vld [vmem:[%s992 + $0x44] sm:$0xf]
      %v1011 = vld [vmem:[%s992 + $0x48] sm:$0xf]
      %v1012 = vld [vmem:[%s992 + $0x4c] sm:$0xf]
      %v1013 = vld [vmem:[%s992 + $0x50] sm:$0xf]
      %v1014 = vld [vmem:[%s992 + $0x54] sm:$0xf]
      %v1015 = vld [vmem:[%s992 + $0x58] sm:$0xf]
      %v1016 = vld [vmem:[%s992 + $0x5c] sm:$0xf]
      %v1049 = vunpack.c.l.b16 %v960
      %v1050 = vunpack.c.h.b16 %v960
      %v1051 = vunpack.c.l.b16 %v961
      %v1052 = vunpack.c.h.b16 %v961
      %v1053 = vunpack.c.l.b16 %v962
      %v1054 = vunpack.c.h.b16 %v962
      %v1055 = vunpack.c.l.b16 %v963
      %v1056 = vunpack.c.h.b16 %v963
      %v1057 = vunpack.c.l.b16 %v964
      %v1058 = vunpack.c.h.b16 %v964
      %v1059 = vunpack.c.l.b16 %v965
      %v1060 = vunpack.c.h.b16 %v965
      %v1061 = vunpack.c.l.b16 %v966
      %v1062 = vunpack.c.h.b16 %v966
      %v1063 = vunpack.c.l.b16 %v967
      %v1064 = vunpack.c.h.b16 %v967
      %v1065 = vunpack.c.l.b16 %v968
      %v1066 = vunpack.c.h.b16 %v968
      %v1067 = vunpack.c.l.b16 %v969
      %v1068 = vunpack.c.h.b16 %v969
      %v1069 = vunpack.c.l.b16 %v970
      %v1070 = vunpack.c.h.b16 %v970
      %v1071 = vunpack.c.l.b16 %v971
      %v1072 = vunpack.c.h.b16 %v971
      %v1073 = vunpack.c.l.b16 %v972
      %v1074 = vunpack.c.h.b16 %v972
      %v1075 = vunpack.c.l.b16 %v973
      %v1076 = vunpack.c.h.b16 %v973
      %v1077 = vunpack.c.l.b16 %v974
      %v1078 = vunpack.c.h.b16 %v974
      %v1079 = vunpack.c.l.b16 %v975
      %v1080 = vunpack.c.h.b16 %v975
      %v1081 = vunpack.c.l.b16 %v976
      %v1082 = vunpack.c.h.b16 %v976
      %v1083 = vunpack.c.l.b16 %v977
      %v1084 = vunpack.c.h.b16 %v977
      %v1085 = vunpack.c.l.b16 %v978
      %v1086 = vunpack.c.h.b16 %v978
      %v1087 = vunpack.c.l.b16 %v979
      %v1088 = vunpack.c.h.b16 %v979
      %v1089 = vunpack.c.l.b16 %v980
      %v1090 = vunpack.c.h.b16 %v980
      %v1091 = vunpack.c.l.b16 %v981
      %v1092 = vunpack.c.h.b16 %v981
      %v1093 = vunpack.c.l.b16 %v982
      %v1094 = vunpack.c.h.b16 %v982
      %v1095 = vunpack.c.l.b16 %v983
      %v1096 = vunpack.c.h.b16 %v983
      %v1097 = vunpack.c.l.b16 %v984
      %v1098 = vunpack.c.h.b16 %v984
      %v1099 = vunpack.c.l.b16 %v985
      %v1100 = vunpack.c.h.b16 %v985
      %v1101 = vunpack.c.l.b16 %v986
      %v1102 = vunpack.c.h.b16 %v986
      %v1103 = vunpack.c.l.b16 %v987
      %v1104 = vunpack.c.h.b16 %v987
      %v1105 = vunpack.c.l.b16 %v988
      %v1106 = vunpack.c.h.b16 %v988
      %v1107 = vunpack.c.l.b16 %v989
      %v1108 = vunpack.c.h.b16 %v989
      %v1109 = vunpack.c.l.b16 %v990
      %v1110 = vunpack.c.h.b16 %v990
      %v1111 = vunpack.c.l.b16 %v991
      %v1112 = vunpack.c.h.b16 %v991
      %v1113 = vpack.c.b16 %v1051, %v1049
      %v1114 = vpack.c.b16 %v1052, %v1050
      %v1115 = vpack.c.b16 %v1055, %v1053
      %v1116 = vpack.c.b16 %v1056, %v1054
      %v1117 = vpack.c.b16 %v1059, %v1057
      %v1118 = vpack.c.b16 %v1060, %v1058
      %v1119 = vpack.c.b16 %v1063, %v1061
      %v1120 = vpack.c.b16 %v1064, %v1062
      %v1121 = vpack.c.b16 %v1067, %v1065
      %v1122 = vpack.c.b16 %v1068, %v1066
      %v1123 = vpack.c.b16 %v1071, %v1069
      %v1124 = vpack.c.b16 %v1072, %v1070
      %v1125 = vpack.c.b16 %v1075, %v1073
      %v1126 = vpack.c.b16 %v1076, %v1074
      %v1127 = vpack.c.b16 %v1079, %v1077
      %v1128 = vpack.c.b16 %v1080, %v1078
      %v1129 = vpack.c.b16 %v1083, %v1081
      %v1130 = vpack.c.b16 %v1084, %v1082
      %v1131 = vpack.c.b16 %v1087, %v1085
      %v1132 = vpack.c.b16 %v1088, %v1086
      %v1133 = vpack.c.b16 %v1091, %v1089
      %v1134 = vpack.c.b16 %v1092, %v1090
      %v1135 = vpack.c.b16 %v1095, %v1093
      %v1136 = vpack.c.b16 %v1096, %v1094
      %v1137 = vpack.c.b16 %v1099, %v1097
      %v1138 = vpack.c.b16 %v1100, %v1098
      %v1139 = vpack.c.b16 %v1103, %v1101
      %v1140 = vpack.c.b16 %v1104, %v1102
      %v1141 = vpack.c.b16 %v1107, %v1105
      %v1142 = vpack.c.b16 %v1108, %v1106
      %v1143 = vpack.c.b16 %v1111, %v1109
      %v1144 = vpack.c.b16 %v1112, %v1110
      %v1185 = vunpack.c.l.b16 %v993
      %v1186 = vunpack.c.l.b16 %v994
      %v1187 = vunpack.c.l.b16 %v995
      %v1188 = vunpack.c.l.b16 %v996
      %v1189 = vunpack.c.l.b16 %v997
      %v1190 = vunpack.c.l.b16 %v998
      %v1191 = vunpack.c.l.b16 %v999
      %v1192 = vunpack.c.l.b16 %v1000
      %v1193 = vunpack.c.l.b16 %v1001
      %v1194 = vunpack.c.l.b16 %v1002
      %v1195 = vunpack.c.l.b16 %v1003
      %v1196 = vunpack.c.l.b16 %v1004
      %v1197 = vunpack.c.l.b16 %v1005
      %v1198 = vunpack.c.l.b16 %v1006
      %v1199 = vunpack.c.l.b16 %v1007
      %v1200 = vunpack.c.l.b16 %v1008
      %v1201 = vunpack.c.l.b16 %v1009
      %v1202 = vunpack.c.l.b16 %v1010
      %v1203 = vunpack.c.l.b16 %v1011
      %v1204 = vunpack.c.l.b16 %v1012
      %v1205 = vunpack.c.l.b16 %v1013
      %v1206 = vunpack.c.l.b16 %v1014
      %v1207 = vunpack.c.l.b16 %v1015
      %v1208 = vunpack.c.l.b16 %v1016
      %v1209 = vpack.c.b16 %v1186, %v1185
      %v1210 = vpack.c.b16 %v1188, %v1187
      %v1211 = vpack.c.b16 %v1190, %v1189
      %v1212 = vpack.c.b16 %v1192, %v1191
      %v1213 = vpack.c.b16 %v1194, %v1193
      %v1214 = vpack.c.b16 %v1196, %v1195
      %v1215 = vpack.c.b16 %v1198, %v1197
      %v1216 = vpack.c.b16 %v1200, %v1199
      %v1217 = vpack.c.b16 %v1202, %v1201
      %v1218 = vpack.c.b16 %v1204, %v1203
      %v1219 = vpack.c.b16 %v1206, %v1205
      %v1220 = vpack.c.b16 %v1208, %v1207
      %v1234 = vsel %vm471, %v1114, 0
      %v1237 = vsel %vm471, %v1116, 0
      %v1240 = vsel %vm471, %v1118, 0
      %v1243 = vsel %vm471, %v1120, 0
      %v1246 = vsel %vm471, %v1122, 0
      %v1249 = vsel %vm471, %v1124, 0
      %v1252 = vsel %vm471, %v1126, 0
      %v1255 = vsel %vm471, %v1128, 0
      %v1258 = vsel %vm471, %v1130, 0
      %v1261 = vsel %vm471, %v1132, 0
      %v1264 = vsel %vm471, %v1134, 0
      %v1267 = vsel %vm471, %v1136, 0
      %v1270 = vsel %vm471, %v1138, 0
      %v1273 = vsel %vm471, %v1140, 0
      %v1276 = vsel %vm471, %v1142, 0
      %v1279 = vsel %vm471, %v1144, 0
      %1281 = vmatpush.bf16.msra.mxu0 %v1216
      %1282 = vmatpush.bf16.msra.mxu0 %v1215
      %1283 = vmatpush.bf16.msra.mxu0 %v1214
      %1284 = vmatpush.bf16.msra.mxu0 %v1213
      %1285 = vmatpush.bf16.msra.mxu0 %v1212
      %1286 = vmatpush.bf16.msra.mxu0 %v1211
      %1287 = vmatpush.bf16.msra.mxu0 %v1210
      %1288 = vmatpush.bf16.msra.mxu0 %v1209
      %1289 = vmatmul.bf16.gmra.mxu0 %v1113
      %v1290 = vpop.f32.mrf.mxu0
      %v1291 = vadd.f32 0.0, %v1290
      %v1292 = vpop.f32.mrf.mxu0
      %v1293 = vadd.f32 0.0, %v1292
      %1294 = vmatmul.bf16.gmra.mxu0 %v1115
      %v1295 = vpop.f32.mrf.mxu0
      %v1296 = vadd.f32 0.0, %v1295
      %v1297 = vpop.f32.mrf.mxu0
      %v1298 = vadd.f32 0.0, %v1297
      %1299 = vmatmul.bf16.gmra.mxu0 %v1117
      %v1300 = vpop.f32.mrf.mxu0
      %v1301 = vadd.f32 0.0, %v1300
      %v1302 = vpop.f32.mrf.mxu0
      %v1303 = vadd.f32 0.0, %v1302
      %1304 = vmatmul.bf16.gmra.mxu0 %v1119
      %v1305 = vpop.f32.mrf.mxu0
      %v1306 = vadd.f32 0.0, %v1305
      %v1307 = vpop.f32.mrf.mxu0
      %v1308 = vadd.f32 0.0, %v1307
      %1309 = vmatmul.bf16.gmra.mxu0 %v1121
      %v1310 = vpop.f32.mrf.mxu0
      %v1311 = vadd.f32 0.0, %v1310
      %v1312 = vpop.f32.mrf.mxu0
      %v1313 = vadd.f32 0.0, %v1312
      %1314 = vmatmul.bf16.gmra.mxu0 %v1123
      %v1315 = vpop.f32.mrf.mxu0
      %v1316 = vadd.f32 0.0, %v1315
      %v1317 = vpop.f32.mrf.mxu0
      %v1318 = vadd.f32 0.0, %v1317
      %1319 = vmatmul.bf16.gmra.mxu0 %v1125
      %v1320 = vpop.f32.mrf.mxu0
      %v1321 = vadd.f32 0.0, %v1320
      %v1322 = vpop.f32.mrf.mxu0
      %v1323 = vadd.f32 0.0, %v1322
      %1324 = vmatmul.bf16.gmra.mxu0 %v1127
      %v1325 = vpop.f32.mrf.mxu0
      %v1326 = vadd.f32 0.0, %v1325
      %v1327 = vpop.f32.mrf.mxu0
      %v1328 = vadd.f32 0.0, %v1327
      %1329 = vmatmul.bf16.gmra.mxu0 %v1129
      %v1330 = vpop.f32.mrf.mxu0
      %v1331 = vadd.f32 0.0, %v1330
      %v1332 = vpop.f32.mrf.mxu0
      %v1333 = vadd.f32 0.0, %v1332
      %1334 = vmatmul.bf16.gmra.mxu0 %v1131
      %v1335 = vpop.f32.mrf.mxu0
      %v1336 = vadd.f32 0.0, %v1335
      %v1337 = vpop.f32.mrf.mxu0
      %v1338 = vadd.f32 0.0, %v1337
      %1339 = vmatmul.bf16.gmra.mxu0 %v1133
      %v1340 = vpop.f32.mrf.mxu0
      %v1341 = vadd.f32 0.0, %v1340
      %v1342 = vpop.f32.mrf.mxu0
      %v1343 = vadd.f32 0.0, %v1342
      %1344 = vmatmul.bf16.gmra.mxu0 %v1135
      %v1345 = vpop.f32.mrf.mxu0
      %v1346 = vadd.f32 0.0, %v1345
      %v1347 = vpop.f32.mrf.mxu0
      %v1348 = vadd.f32 0.0, %v1347
      %1349 = vmatmul.bf16.gmra.mxu0 %v1137
      %v1350 = vpop.f32.mrf.mxu0
      %v1351 = vadd.f32 0.0, %v1350
      %v1352 = vpop.f32.mrf.mxu0
      %v1353 = vadd.f32 0.0, %v1352
      %1354 = vmatmul.bf16.gmra.mxu0 %v1139
      %v1355 = vpop.f32.mrf.mxu0
      %v1356 = vadd.f32 0.0, %v1355
      %v1357 = vpop.f32.mrf.mxu0
      %v1358 = vadd.f32 0.0, %v1357
      %1359 = vmatmul.bf16.gmra.mxu0 %v1141
      %v1360 = vpop.f32.mrf.mxu0
      %v1361 = vadd.f32 0.0, %v1360
      %v1362 = vpop.f32.mrf.mxu0
      %v1363 = vadd.f32 0.0, %v1362
      %1364 = vmatmul.bf16.gmra.mxu0 %v1143
      %v1365 = vpop.f32.mrf.mxu0
      %v1366 = vadd.f32 0.0, %v1365
      %v1367 = vpop.f32.mrf.mxu0
      %v1368 = vadd.f32 0.0, %v1367
      %1369 = vdwg.mxu0
      %1370 = vmatpush.bf16.msra.mxu0 0
      %1371 = vmatpush.bf16.msra.mxu0 0
      %1372 = vmatpush.bf16.msra.mxu0 0
      %1373 = vmatpush.bf16.msra.mxu0 0
      %1374 = vmatpush.bf16.msra.mxu0 %v1220
      %1375 = vmatpush.bf16.msra.mxu0 %v1219
      %1376 = vmatpush.bf16.msra.mxu0 %v1218
      %1377 = vmatpush.bf16.msra.mxu0 %v1217
      %1378 = vmatmul.bf16.gmra.mxu0 %v1234
      %v1379 = vpop.f32.mrf.mxu0
      %v1380 = vadd.f32 %v1291, %v1379
      %v1381 = vpop.f32.mrf.mxu0
      %v1382 = vadd.f32 %v1293, %v1381
      %1383 = vmatmul.bf16.gmra.mxu0 %v1237
      %v1384 = vpop.f32.mrf.mxu0
      %v1385 = vadd.f32 %v1296, %v1384
      %v1386 = vpop.f32.mrf.mxu0
      %v1387 = vadd.f32 %v1298, %v1386
      %1388 = vmatmul.bf16.gmra.mxu0 %v1240
      %v1389 = vpop.f32.mrf.mxu0
      %v1390 = vadd.f32 %v1301, %v1389
      %v1391 = vpop.f32.mrf.mxu0
      %v1392 = vadd.f32 %v1303, %v1391
      %1393 = vmatmul.bf16.gmra.mxu0 %v1243
      %v1394 = vpop.f32.mrf.mxu0
      %v1395 = vadd.f32 %v1306, %v1394
      %v1396 = vpop.f32.mrf.mxu0
      %v1397 = vadd.f32 %v1308, %v1396
      %1398 = vmatmul.bf16.gmra.mxu0 %v1246
      %v1399 = vpop.f32.mrf.mxu0
      %v1400 = vadd.f32 %v1311, %v1399
      %v1401 = vpop.f32.mrf.mxu0
      %v1402 = vadd.f32 %v1313, %v1401
      %1403 = vmatmul.bf16.gmra.mxu0 %v1249
      %v1404 = vpop.f32.mrf.mxu0
      %v1405 = vadd.f32 %v1316, %v1404
      %v1406 = vpop.f32.mrf.mxu0
      %v1407 = vadd.f32 %v1318, %v1406
      %1408 = vmatmul.bf16.gmra.mxu0 %v1252
      %v1409 = vpop.f32.mrf.mxu0
      %v1410 = vadd.f32 %v1321, %v1409
      %v1411 = vpop.f32.mrf.mxu0
      %v1412 = vadd.f32 %v1323, %v1411
      %1413 = vmatmul.bf16.gmra.mxu0 %v1255
      %v1414 = vpop.f32.mrf.mxu0
      %v1415 = vadd.f32 %v1326, %v1414
      %v1416 = vpop.f32.mrf.mxu0
      %v1417 = vadd.f32 %v1328, %v1416
      %1418 = vmatmul.bf16.gmra.mxu0 %v1258
      %v1419 = vpop.f32.mrf.mxu0
      %v1420 = vadd.f32 %v1331, %v1419
      %v1421 = vpop.f32.mrf.mxu0
      %v1422 = vadd.f32 %v1333, %v1421
      %1423 = vmatmul.bf16.gmra.mxu0 %v1261
      %v1424 = vpop.f32.mrf.mxu0
      %v1425 = vadd.f32 %v1336, %v1424
      %v1426 = vpop.f32.mrf.mxu0
      %v1427 = vadd.f32 %v1338, %v1426
      %1428 = vmatmul.bf16.gmra.mxu0 %v1264
      %v1429 = vpop.f32.mrf.mxu0
      %v1430 = vadd.f32 %v1341, %v1429
      %v1431 = vpop.f32.mrf.mxu0
      %v1432 = vadd.f32 %v1343, %v1431
      %1433 = vmatmul.bf16.gmra.mxu0 %v1267
      %v1434 = vpop.f32.mrf.mxu0
      %v1435 = vadd.f32 %v1346, %v1434
      %v1436 = vpop.f32.mrf.mxu0
      %v1437 = vadd.f32 %v1348, %v1436
      %1438 = vmatmul.bf16.gmra.mxu0 %v1270
      %v1439 = vpop.f32.mrf.mxu0
      %v1440 = vadd.f32 %v1351, %v1439
      %v1441 = vpop.f32.mrf.mxu0
      %v1442 = vadd.f32 %v1353, %v1441
      %1443 = vmatmul.bf16.gmra.mxu0 %v1273
      %v1444 = vpop.f32.mrf.mxu0
      %v1445 = vadd.f32 %v1356, %v1444
      %v1446 = vpop.f32.mrf.mxu0
      %v1447 = vadd.f32 %v1358, %v1446
      %1448 = vmatmul.bf16.gmra.mxu0 %v1276
      %v1449 = vpop.f32.mrf.mxu0
      %v1450 = vadd.f32 %v1361, %v1449
      %v1451 = vpop.f32.mrf.mxu0
      %v1452 = vadd.f32 %v1363, %v1451
      %1453 = vmatmul.bf16.gmra.mxu0 %v1279
      %v1454 = vpop.f32.mrf.mxu0
      %v1455 = vadd.f32 %v1366, %v1454
      %v1456 = vpop.f32.mrf.mxu0
      %v1457 = vadd.f32 %v1368, %v1456
      %1458 = vdwg.mxu0
      %v1459 = vadd.f32 %v881, %v1380
      %v1460 = vadd.f32 %v883, %v1382
      %v1461 = vadd.f32 %v886, %v1385
      %v1462 = vadd.f32 %v888, %v1387
      %v1463 = vadd.f32 %v891, %v1390
      %v1464 = vadd.f32 %v893, %v1392
      %v1465 = vadd.f32 %v896, %v1395
      %v1466 = vadd.f32 %v898, %v1397
      %v1467 = vadd.f32 %v901, %v1400
      %v1468 = vadd.f32 %v903, %v1402
      %v1469 = vadd.f32 %v906, %v1405
      %v1470 = vadd.f32 %v908, %v1407
      %v1471 = vadd.f32 %v911, %v1410
      %v1472 = vadd.f32 %v913, %v1412
      %v1473 = vadd.f32 %v916, %v1415
      %v1474 = vadd.f32 %v918, %v1417
      %v1475 = vadd.f32 %v921, %v1420
      %v1476 = vadd.f32 %v923, %v1422
      %v1477 = vadd.f32 %v926, %v1425
      %v1478 = vadd.f32 %v928, %v1427
      %v1479 = vadd.f32 %v931, %v1430
      %v1480 = vadd.f32 %v933, %v1432
      %v1481 = vadd.f32 %v936, %v1435
      %v1482 = vadd.f32 %v938, %v1437
      %v1483 = vadd.f32 %v941, %v1440
      %v1484 = vadd.f32 %v943, %v1442
      %v1485 = vadd.f32 %v946, %v1445
      %v1486 = vadd.f32 %v948, %v1447
      %v1487 = vadd.f32 %v951, %v1450
      %v1488 = vadd.f32 %v953, %v1452
      %v1489 = vadd.f32 %v956, %v1455
      %v1490 = vadd.f32 %v958, %v1457
      %v1491 = vld [vmem:[%s2] sm:$0x1]
      %v1493 = vperm.slane %v1491, 0
      %v1495 = vadd.f32 %v1459, %v1493
      %v1496 = vadd.f32 %v1460, %v1493
      %v1497 = vadd.f32 %v1461, %v1493
      %v1498 = vadd.f32 %v1462, %v1493
      %v1499 = vadd.f32 %v1463, %v1493
      %v1500 = vadd.f32 %v1464, %v1493
      %v1501 = vadd.f32 %v1465, %v1493
      %v1502 = vadd.f32 %v1466, %v1493
      %v1503 = vadd.f32 %v1467, %v1493
      %v1504 = vadd.f32 %v1468, %v1493
      %v1505 = vadd.f32 %v1469, %v1493
      %v1506 = vadd.f32 %v1470, %v1493
      %v1507 = vadd.f32 %v1471, %v1493
      %v1508 = vadd.f32 %v1472, %v1493
      %v1509 = vadd.f32 %v1473, %v1493
      %v1510 = vadd.f32 %v1474, %v1493
      %v1511 = vadd.f32 %v1475, %v1493
      %v1512 = vadd.f32 %v1476, %v1493
      %v1513 = vadd.f32 %v1477, %v1493
      %v1514 = vadd.f32 %v1478, %v1493
      %v1515 = vadd.f32 %v1479, %v1493
      %v1516 = vadd.f32 %v1480, %v1493
      %v1517 = vadd.f32 %v1481, %v1493
      %v1518 = vadd.f32 %v1482, %v1493
      %v1519 = vadd.f32 %v1483, %v1493
      %v1520 = vadd.f32 %v1484, %v1493
      %v1521 = vadd.f32 %v1485, %v1493
      %v1522 = vadd.f32 %v1486, %v1493
      %v1523 = vadd.f32 %v1487, %v1493
      %v1524 = vadd.f32 %v1488, %v1493
      %v1525 = vadd.f32 %v1489, %v1493
      %v1526 = vadd.f32 %v1490, %v1493
      %v1527 = vmax.f32 %v1495, 0.0
      %v1528 = vmax.f32 %v1496, 0.0
      %v1529 = vmax.f32 %v1497, 0.0
      %v1530 = vmax.f32 %v1498, 0.0
      %v1531 = vmax.f32 %v1499, 0.0
      %v1532 = vmax.f32 %v1500, 0.0
      %v1533 = vmax.f32 %v1501, 0.0
      %v1534 = vmax.f32 %v1502, 0.0
      %v1535 = vmax.f32 %v1503, 0.0
      %v1536 = vmax.f32 %v1504, 0.0
      %v1537 = vmax.f32 %v1505, 0.0
      %v1538 = vmax.f32 %v1506, 0.0
      %v1539 = vmax.f32 %v1507, 0.0
      %v1540 = vmax.f32 %v1508, 0.0
      %v1541 = vmax.f32 %v1509, 0.0
      %v1542 = vmax.f32 %v1510, 0.0
      %v1543 = vmax.f32 %v1511, 0.0
      %v1544 = vmax.f32 %v1512, 0.0
      %v1545 = vmax.f32 %v1513, 0.0
      %v1546 = vmax.f32 %v1514, 0.0
      %v1547 = vmax.f32 %v1515, 0.0
      %v1548 = vmax.f32 %v1516, 0.0
      %v1549 = vmax.f32 %v1517, 0.0
      %v1550 = vmax.f32 %v1518, 0.0
      %v1551 = vmax.f32 %v1519, 0.0
      %v1552 = vmax.f32 %v1520, 0.0
      %v1553 = vmax.f32 %v1521, 0.0
      %v1554 = vmax.f32 %v1522, 0.0
      %v1555 = vmax.f32 %v1523, 0.0
      %v1556 = vmax.f32 %v1524, 0.0
      %v1557 = vmax.f32 %v1525, 0.0
      %v1558 = vmax.f32 %v1526, 0.0
      %v1559 = vpack.c.bf16 %v1527, %v1527
      %v1560 = vpack.c.bf16 %v1528, %v1528
      %v1561 = vpack.c.bf16 %v1529, %v1529
      %v1562 = vpack.c.bf16 %v1530, %v1530
      %v1563 = vpack.c.bf16 %v1531, %v1531
      %v1564 = vpack.c.bf16 %v1532, %v1532
      %v1565 = vpack.c.bf16 %v1533, %v1533
      %v1566 = vpack.c.bf16 %v1534, %v1534
      %v1567 = vpack.c.bf16 %v1535, %v1535
      %v1568 = vpack.c.bf16 %v1536, %v1536
      %v1569 = vpack.c.bf16 %v1537, %v1537
      %v1570 = vpack.c.bf16 %v1538, %v1538
      %v1571 = vpack.c.bf16 %v1539, %v1539
      %v1572 = vpack.c.bf16 %v1540, %v1540
      %v1573 = vpack.c.bf16 %v1541, %v1541
      %v1574 = vpack.c.bf16 %v1542, %v1542
      %v1575 = vpack.c.bf16 %v1543, %v1543
      %v1576 = vpack.c.bf16 %v1544, %v1544
      %v1577 = vpack.c.bf16 %v1545, %v1545
      %v1578 = vpack.c.bf16 %v1546, %v1546
      %v1579 = vpack.c.bf16 %v1547, %v1547
      %v1580 = vpack.c.bf16 %v1548, %v1548
      %v1581 = vpack.c.bf16 %v1549, %v1549
      %v1582 = vpack.c.bf16 %v1550, %v1550
      %v1583 = vpack.c.bf16 %v1551, %v1551
      %v1584 = vpack.c.bf16 %v1552, %v1552
      %v1585 = vpack.c.bf16 %v1553, %v1553
      %v1586 = vpack.c.bf16 %v1554, %v1554
      %v1587 = vpack.c.bf16 %v1555, %v1555
      %v1588 = vpack.c.bf16 %v1556, %v1556
      %v1589 = vpack.c.bf16 %v1557, %v1557
      %v1590 = vpack.c.bf16 %v1558, %v1558
      %vm1591 = vcmask 519168
      %1592 = vst.msk [vmem:[%s170] sm:$0xf] %vm1591, %v1559
      %1593 = vst.msk [vmem:[%s170 + $0x4] sm:$0xf] %vm1591, %v1560
      %1594 = vst.msk [vmem:[%s170 + $0x8] sm:$0xf] %vm1591, %v1561
      %1595 = vst.msk [vmem:[%s170 + $0xc] sm:$0xf] %vm1591, %v1562
      %1596 = vst.msk [vmem:[%s170 + $0x10] sm:$0xf] %vm1591, %v1563
      %1597 = vst.msk [vmem:[%s170 + $0x14] sm:$0xf] %vm1591, %v1564
      %1598 = vst.msk [vmem:[%s170 + $0x18] sm:$0xf] %vm1591, %v1565
      %1599 = vst.msk [vmem:[%s170 + $0x1c] sm:$0xf] %vm1591, %v1566
      %1600 = vst.msk [vmem:[%s170 + $0x20] sm:$0xf] %vm1591, %v1567
      %1601 = vst.msk [vmem:[%s170 + $0x24] sm:$0xf] %vm1591, %v1568
      %1602 = vst.msk [vmem:[%s170 + $0x28] sm:$0xf] %vm1591, %v1569
      %1603 = vst.msk [vmem:[%s170 + $0x2c] sm:$0xf] %vm1591, %v1570
      %1604 = vst.msk [vmem:[%s170 + $0x30] sm:$0xf] %vm1591, %v1571
      %1605 = vst.msk [vmem:[%s170 + $0x34] sm:$0xf] %vm1591, %v1572
      %1606 = vst.msk [vmem:[%s170 + $0x38] sm:$0xf] %vm1591, %v1573
      %1607 = vst.msk [vmem:[%s170 + $0x3c] sm:$0xf] %vm1591, %v1574
      %1608 = vst.msk [vmem:[%s170 + $0x40] sm:$0xf] %vm1591, %v1575
      %1609 = vst.msk [vmem:[%s170 + $0x44] sm:$0xf] %vm1591, %v1576
      %1610 = vst.msk [vmem:[%s170 + $0x48] sm:$0xf] %vm1591, %v1577
      %1611 = vst.msk [vmem:[%s170 + $0x4c] sm:$0xf] %vm1591, %v1578
      %1612 = vst.msk [vmem:[%s170 + $0x50] sm:$0xf] %vm1591, %v1579
      %1613 = vst.msk [vmem:[%s170 + $0x54] sm:$0xf] %vm1591, %v1580
      %1614 = vst.msk [vmem:[%s170 + $0x58] sm:$0xf] %vm1591, %v1581
      %1615 = vst.msk [vmem:[%s170 + $0x5c] sm:$0xf] %vm1591, %v1582
      %1616 = vst.msk [vmem:[%s170 + $0x60] sm:$0xf] %vm1591, %v1583
      %1617 = vst.msk [vmem:[%s170 + $0x64] sm:$0xf] %vm1591, %v1584
      %1618 = vst.msk [vmem:[%s170 + $0x68] sm:$0xf] %vm1591, %v1585
      %1619 = vst.msk [vmem:[%s170 + $0x6c] sm:$0xf] %vm1591, %v1586
      %1620 = vst.msk [vmem:[%s170 + $0x70] sm:$0xf] %vm1591, %v1587
      %1621 = vst.msk [vmem:[%s170 + $0x74] sm:$0xf] %vm1591, %v1588
      %1622 = vst.msk [vmem:[%s170 + $0x78] sm:$0xf] %vm1591, %v1589
      %1623 = vst.msk [vmem:[%s170 + $0x7c] sm:$0xf] %vm1591, %v1590
      %p1624 = scmp.lt.s32.totalorder %s14, 1
      %s1625 = scalar_select %p1624, %s14, 1
      %s1626 = smul.addr %s1625, 32
      %s1627 = smul.addr %s1626, 4
      %s1628 = scalar_lea.vmem %s3, %s1627
      // Predicated region
      $region33: #{phcc_fpn_forward.8} parent=31 // pred_check
        %p1629 = pneg %p100
      $region34: #{phcc_fpn_forward.8} parent=31 // pred_check_branch
        %1631 = sbr.rel (%p1629) target = $region36
      $region35: #{phcc_fpn_forward.8} parent=31 // pred_region
        _
      $region36: #{phcc_fpn_forward.8} parent=31 // pred_fallthru
        _
    $region32: #{phcc_fpn_forward.8} parent=5 // pred_fallthru
      _
    %p1632 = scmp.le.s32.totalorder 2, %s9
    // Predicated region
    $region37: #{phcc_fpn_forward.8} parent=5 // pred_check
      %p1633 = pneg %p1632
    $region38: #{phcc_fpn_forward.8} parent=5 // pred_check_branch
      %1635 = sbr.rel (%p1633) target = $region40
    $region39: #{phcc_fpn_forward.8} parent=5 // pred_region
      %s1636 = ssub.s32 %s9, 2
      // Predicated region
      $region41: #{phcc_fpn_forward.8} parent=39 // pred_check
        %p1637 = pneg %p106
      $region42: #{phcc_fpn_forward.8} parent=39 // pred_check_branch
        %1639 = sbr.rel (%p1637) target = $region44
      $region43: #{phcc_fpn_forward.8} parent=39 // pred_region
        %p1640 = scmp.lt.s32.totalorder %s15, 1
        %s1641 = scalar_select %p1640, %s15, 1
        %s1642 = smul.addr %s1641, 32
        %s1643 = smul.addr %s1642, 4
        %s1644 = scalar_lea.vmem %s3, %s1643
      $region44: #{phcc_fpn_forward.8} parent=39 // pred_fallthru
        _
    $region40: #{phcc_fpn_forward.8} parent=5 // pred_fallthru
      _
  $region6: #{phcc_fpn_forward.8} parent=0 // loop_footer
    %s13 = sadd.s32 1, %s9
  $region7: #{phcc_fpn_forward.8} parent=0 // loop_footer_branch
    %8 = sbr.rel target = $region3
  $region8: #{phcc_fpn_forward.8} parent=0 // loop_exit
    _

// kernel: phcc_fpn_forward.9
$region0: #{phcc_fpn_forward.9}
  #allocation0 [shape = 'u32[]', space=smem, size = 0x4, offset = 0x4, fixed_abs, tag = 'smem constant byte address 0x4 - core index']
  #allocation1 [shape = 'u32[72,128]{1,0:T(1,128)}', space=vmem, size = 0x9000, scoped, tag = 'internal scratch']
  #allocation2 [shape = 'f32[1,1]{1,0:T(1,128)S(1)}', space=vmem, size = 0x200, scoped, tag = 'scoped memory for phcc_fpn_forward.9']
  %s0 = inlined_call_operand.vmem [shape: bf16[184,66], index: 0, kind: input, shape index: {}]
  %s1 = inlined_call_operand.vmem [shape: bf16[66,66], index: 1, kind: input, shape index: {}]
  %s2 = inlined_call_operand.vmem [shape: f32[1,66], index: 2, kind: input, shape index: {}]
  %s3 = inlined_call_operand.vmem [shape: bf16[66,1], index: 3, kind: input, shape index: {}]
  %s4 = inlined_call_operand.<no memory space> [shape: f32[1,1], index: 4, kind: input, shape index: {}]
  %s5 = inlined_call_operand.vmem [shape: f32[184,1], index: 5, kind: output, shape index: {}]
  %s6 = sld [smem:[#allocation0]]
  $region30: #{phcc_fpn_forward.9} parent=0
    _
  %s8 = ssub.s32 1, %s6
  %s9 = scalar_select 0, %s8, %s6
  %v10 = vstv %s4
  %11 = vst [vmem:[#allocation2] sm:$0x1] %v10
  // Predicated region
  $region2: #{phcc_fpn_forward.9} parent=0 // pred_check
    _
  $region3: #{phcc_fpn_forward.9} parent=0 // pred_check_branch
    %13 = sbr.rel (0) target = $region5
  $region4: #{phcc_fpn_forward.9} parent=0 // pred_region
    _
  $region5: #{phcc_fpn_forward.9} parent=0 // pred_fallthru
    _
  // Predicated region
  $region6: #{phcc_fpn_forward.9} parent=0 // pred_check
    _
  $region7: #{phcc_fpn_forward.9} parent=0 // pred_check_branch
    %15 = sbr.rel (0) target = $region9
  $region8: #{phcc_fpn_forward.9} parent=0 // pred_region
    _
  $region9: #{phcc_fpn_forward.9} parent=0 // pred_fallthru
    _
  // Predicated region
  $region10: #{phcc_fpn_forward.9} parent=0 // pred_check
    _
  $region11: #{phcc_fpn_forward.9} parent=0 // pred_check_branch
    %17 = sbr.rel (0) target = $region13
  $region12: #{phcc_fpn_forward.9} parent=0 // pred_region
    _
  $region13: #{phcc_fpn_forward.9} parent=0 // pred_fallthru
    _
  // Predicated region
  $region14: #{phcc_fpn_forward.9} parent=0 // pred_check
    _
  $region15: #{phcc_fpn_forward.9} parent=0 // pred_check_branch
    %19 = sbr.rel (0) target = $region17
  $region16: #{phcc_fpn_forward.9} parent=0 // pred_region
    _
  $region17: #{phcc_fpn_forward.9} parent=0 // pred_fallthru
    _
  // Predicated region
  $region18: #{phcc_fpn_forward.9} parent=0 // pred_check
    _
  $region19: #{phcc_fpn_forward.9} parent=0 // pred_check_branch
    %21 = sbr.rel (0) target = $region21
  $region20: #{phcc_fpn_forward.9} parent=0 // pred_region
    _
  $region21: #{phcc_fpn_forward.9} parent=0 // pred_fallthru
    _
  %v23 = vld [vmem:[%s0] sm:$0xf]
  %v24 = vld [vmem:[%s0 + $0x4] sm:$0xf]
  %v25 = vld [vmem:[%s0 + $0x8] sm:$0xf]
  %v26 = vld [vmem:[%s0 + $0xc] sm:$0xf]
  %v27 = vld [vmem:[%s0 + $0x10] sm:$0xf]
  %v28 = vld [vmem:[%s0 + $0x14] sm:$0xf]
  %v29 = vld [vmem:[%s0 + $0x18] sm:$0xf]
  %v30 = vld [vmem:[%s0 + $0x1c] sm:$0xf]
  %v31 = vld [vmem:[%s0 + $0x20] sm:$0xf]
  %v32 = vld [vmem:[%s0 + $0x24] sm:$0xf]
  %v33 = vld [vmem:[%s0 + $0x28] sm:$0xf]
  %v34 = vld [vmem:[%s0 + $0x2c] sm:$0xf]
  %v35 = vld [vmem:[%s0 + $0x30] sm:$0xf]
  %v36 = vld [vmem:[%s0 + $0x34] sm:$0xf]
  %v37 = vld [vmem:[%s0 + $0x38] sm:$0xf]
  %v38 = vld [vmem:[%s0 + $0x3c] sm:$0xf]
  %v39 = vld [vmem:[%s0 + $0x40] sm:$0xf]
  %v40 = vld [vmem:[%s0 + $0x44] sm:$0xf]
  %v41 = vld [vmem:[%s0 + $0x48] sm:$0xf]
  %v42 = vld [vmem:[%s0 + $0x4c] sm:$0xf]
  %v43 = vld [vmem:[%s0 + $0x50] sm:$0xf]
  %v44 = vld [vmem:[%s0 + $0x54] sm:$0xf]
  %v45 = vld [vmem:[%s0 + $0x58] sm:$0xf]
  %v46 = vld [vmem:[%s1] sm:$0xf]
  %v47 = vld [vmem:[%s1 + $0x4] sm:$0xf]
  %v48 = vld [vmem:[%s1 + $0x8] sm:$0xf]
  %v49 = vld [vmem:[%s1 + $0xc] sm:$0xf]
  %v50 = vld [vmem:[%s1 + $0x10] sm:$0xf]
  %v51 = vld [vmem:[%s1 + $0x14] sm:$0xf]
  %v52 = vld [vmem:[%s1 + $0x18] sm:$0xf]
  %v53 = vld [vmem:[%s1 + $0x1c] sm:$0xf]
  %v54 = vld [vmem:[%s1 + $0x20] sm:$0x1]
  %v55 = vld [vmem:[%s2] sm:$0x1]
  %v57 = vperm.slane %v55, 0
  %v82 = vunpack.c.l.b16 %v23
  %v83 = vunpack.c.l.b16 %v24
  %v84 = vunpack.c.l.b16 %v25
  %v85 = vunpack.c.l.b16 %v26
  %v86 = vunpack.c.l.b16 %v27
  %v87 = vunpack.c.l.b16 %v28
  %v88 = vunpack.c.l.b16 %v29
  %v89 = vunpack.c.l.b16 %v30
  %v90 = vunpack.c.l.b16 %v31
  %v91 = vunpack.c.l.b16 %v32
  %v92 = vunpack.c.l.b16 %v33
  %v93 = vunpack.c.l.b16 %v34
  %v94 = vunpack.c.l.b16 %v35
  %v95 = vunpack.c.l.b16 %v36
  %v96 = vunpack.c.l.b16 %v37
  %v97 = vunpack.c.l.b16 %v38
  %v98 = vunpack.c.l.b16 %v39
  %v99 = vunpack.c.l.b16 %v40
  %v100 = vunpack.c.l.b16 %v41
  %v101 = vunpack.c.l.b16 %v42
  %v102 = vunpack.c.l.b16 %v43
  %v103 = vunpack.c.l.b16 %v44
  %v104 = vunpack.c.l.b16 %v45
  %v105 = vpack.c.b16 %v83, %v82
  %v106 = vpack.c.b16 %v85, %v84
  %v107 = vpack.c.b16 %v87, %v86
  %v108 = vpack.c.b16 %v89, %v88
  %v109 = vpack.c.b16 %v91, %v90
  %v110 = vpack.c.b16 %v93, %v92
  %v111 = vpack.c.b16 %v95, %v94
  %v112 = vpack.c.b16 %v97, %v96
  %v113 = vpack.c.b16 %v99, %v98
  %v114 = vpack.c.b16 %v101, %v100
  %v115 = vpack.c.b16 %v103, %v102
  %v116 = vpack.c.b16 %v104, %v104
  %v126 = vunpack.c.l.b16 %v46
  %v127 = vunpack.c.l.b16 %v47
  %v128 = vunpack.c.l.b16 %v48
  %v129 = vunpack.c.l.b16 %v49
  %v130 = vunpack.c.l.b16 %v50
  %v131 = vunpack.c.l.b16 %v51
  %v132 = vunpack.c.l.b16 %v52
  %v133 = vunpack.c.l.b16 %v53
  %v134 = vunpack.c.l.b16 %v54
  %v135 = vpack.c.b16 %v127, %v126
  %v136 = vpack.c.b16 %v129, %v128
  %v137 = vpack.c.b16 %v131, %v130
  %v138 = vpack.c.b16 %v133, %v132
  %v139 = vpack.c.b16 %v134, %v134
  %vm144 = vcmask 539648
  %v146 = vsel %vm144, %v105, 0
  %v149 = vsel %vm144, %v106, 0
  %v152 = vsel %vm144, %v107, 0
  %v155 = vsel %vm144, %v108, 0
  %v158 = vsel %vm144, %v109, 0
  %v161 = vsel %vm144, %v110, 0
  %v164 = vsel %vm144, %v111, 0
  %v167 = vsel %vm144, %v112, 0
  %v170 = vsel %vm144, %v113, 0
  %v173 = vsel %vm144, %v114, 0
  %v176 = vsel %vm144, %v115, 0
  %v179 = vsel %vm144, %v116, 0
  %vm181 = vcmask 1040384
  %v183 = vsel %vm181, %v139, 0
  %185 = vmatpush.bf16.msra.mxu0 0
  %186 = vmatpush.bf16.msra.mxu0 0
  %187 = vmatpush.bf16.msra.mxu0 0
  %188 = vmatpush.bf16.msra.mxu0 %v183
  %189 = vmatpush.bf16.msra.mxu0 %v138
  %190 = vmatpush.bf16.msra.mxu0 %v137
  %191 = vmatpush.bf16.msra.mxu0 %v136
  %192 = vmatpush.bf16.msra.mxu0 %v135
  %193 = vmatmul.bf16.gmra.mxu0 %v146
  %v194 = vpop.f32.mrf.mxu0
  %v195 = vadd.f32 %v57, %v194
  %v196 = vpop.f32.mrf.mxu0
  %v197 = vadd.f32 %v57, %v196
  %198 = vmatmul.bf16.gmra.mxu0 %v149
  %v199 = vpop.f32.mrf.mxu0
  %v200 = vadd.f32 %v57, %v199
  %v201 = vpop.f32.mrf.mxu0
  %v202 = vadd.f32 %v57, %v201
  %203 = vmatmul.bf16.gmra.mxu0 %v152
  %v204 = vpop.f32.mrf.mxu0
  %v205 = vadd.f32 %v57, %v204
  %v206 = vpop.f32.mrf.mxu0
  %v207 = vadd.f32 %v57, %v206
  %208 = vmatmul.bf16.gmra.mxu0 %v155
  %v209 = vpop.f32.mrf.mxu0
  %v210 = vadd.f32 %v57, %v209
  %v211 = vpop.f32.mrf.mxu0
  %v212 = vadd.f32 %v57, %v211
  %213 = vmatmul.bf16.gmra.mxu0 %v158
  %v214 = vpop.f32.mrf.mxu0
  %v215 = vadd.f32 %v57, %v214
  %v216 = vpop.f32.mrf.mxu0
  %v217 = vadd.f32 %v57, %v216
  %218 = vmatmul.bf16.gmra.mxu0 %v161
  %v219 = vpop.f32.mrf.mxu0
  %v220 = vadd.f32 %v57, %v219
  %v221 = vpop.f32.mrf.mxu0
  %v222 = vadd.f32 %v57, %v221
  %223 = vmatmul.bf16.gmra.mxu0 %v164
  %v224 = vpop.f32.mrf.mxu0
  %v225 = vadd.f32 %v57, %v224
  %v226 = vpop.f32.mrf.mxu0
  %v227 = vadd.f32 %v57, %v226
  %228 = vmatmul.bf16.gmra.mxu0 %v167
  %v229 = vpop.f32.mrf.mxu0
  %v230 = vadd.f32 %v57, %v229
  %v231 = vpop.f32.mrf.mxu0
  %v232 = vadd.f32 %v57, %v231
  %233 = vmatmul.bf16.gmra.mxu0 %v170
  %v234 = vpop.f32.mrf.mxu0
  %v235 = vadd.f32 %v57, %v234
  %v236 = vpop.f32.mrf.mxu0
  %v237 = vadd.f32 %v57, %v236
  %238 = vmatmul.bf16.gmra.mxu0 %v173
  %v239 = vpop.f32.mrf.mxu0
  %v240 = vadd.f32 %v57, %v239
  %v241 = vpop.f32.mrf.mxu0
  %v242 = vadd.f32 %v57, %v241
  %243 = vmatmul.bf16.gmra.mxu0 %v176
  %v244 = vpop.f32.mrf.mxu0
  %v245 = vadd.f32 %v57, %v244
  %v246 = vpop.f32.mrf.mxu0
  %v247 = vadd.f32 %v57, %v246
  %248 = vmatmul.bf16.gmra.mxu0 %v179
  %v249 = vpop.f32.mrf.mxu0
  %v250 = vadd.f32 %v57, %v249
  %v251 = vpop.f32.mrf.mxu0
  %252 = vdwg.mxu0
  %v253 = vmax.f32 %v195, 0.0
  %v254 = vmax.f32 %v197, 0.0
  %v255 = vmax.f32 %v200, 0.0
  %v256 = vmax.f32 %v202, 0.0
  %v257 = vmax.f32 %v205, 0.0
  %v258 = vmax.f32 %v207, 0.0
  %v259 = vmax.f32 %v210, 0.0
  %v260 = vmax.f32 %v212, 0.0
  %v261 = vmax.f32 %v215, 0.0
  %v262 = vmax.f32 %v217, 0.0
  %v263 = vmax.f32 %v220, 0.0
  %v264 = vmax.f32 %v222, 0.0
  %v265 = vmax.f32 %v225, 0.0
  %v266 = vmax.f32 %v227, 0.0
  %v267 = vmax.f32 %v230, 0.0
  %v268 = vmax.f32 %v232, 0.0
  %v269 = vmax.f32 %v235, 0.0
  %v270 = vmax.f32 %v237, 0.0
  %v271 = vmax.f32 %v240, 0.0
  %v272 = vmax.f32 %v242, 0.0
  %v273 = vmax.f32 %v245, 0.0
  %v274 = vmax.f32 %v247, 0.0
  %v275 = vmax.f32 %v250, 0.0
  %v276 = vpack.c.bf16 %v254, %v253
  %v277 = vpack.c.bf16 %v256, %v255
  %v278 = vpack.c.bf16 %v258, %v257
  %v279 = vpack.c.bf16 %v260, %v259
  %v280 = vpack.c.bf16 %v262, %v261
  %v281 = vpack.c.bf16 %v264, %v263
  %v282 = vpack.c.bf16 %v266, %v265
  %v283 = vpack.c.bf16 %v268, %v267
  %v284 = vpack.c.bf16 %v270, %v269
  %v285 = vpack.c.bf16 %v272, %v271
  %v286 = vpack.c.bf16 %v274, %v273
  %v287 = vpack.c.bf16 %v275, %v275
  %v288 = vld [vmem:[%s3] sm:$0xf]
  %v289 = vld [vmem:[%s3 + $0x4] sm:$0xf]
  %v290 = vld [vmem:[%s3 + $0x8] sm:$0xf]
  %v291 = vld [vmem:[%s3 + $0xc] sm:$0xf]
  %v292 = vld [vmem:[%s3 + $0x10] sm:$0xf]
  %v293 = vld [vmem:[%s3 + $0x14] sm:$0xf]
  %v294 = vld [vmem:[%s3 + $0x18] sm:$0xf]
  %v295 = vld [vmem:[%s3 + $0x1c] sm:$0xf]
  %v296 = vld [vmem:[%s3 + $0x20] sm:$0x1]
  %v297 = vld [vmem:[#allocation2] sm:$0x1]
  %v299 = vperm.slane %v297, 0
  %v310 = vunpack.c.l.b16 %v288
  %v311 = vunpack.c.l.b16 %v289
  %v312 = vunpack.c.l.b16 %v290
  %v313 = vunpack.c.l.b16 %v291
  %v314 = vunpack.c.l.b16 %v292
  %v315 = vunpack.c.l.b16 %v293
  %v316 = vunpack.c.l.b16 %v294
  %v317 = vunpack.c.l.b16 %v295
  %v318 = vunpack.c.l.b16 %v296
  %v319 = vpack.c.b16 %v311, %v310
  %v320 = vpack.c.b16 %v313, %v312
  %v321 = vpack.c.b16 %v315, %v314
  %v322 = vpack.c.b16 %v317, %v316
  %v323 = vpack.c.b16 %v318, %v318
  %v329 = vsel %vm144, %v276, 0
  %v332 = vsel %vm144, %v277, 0
  %v335 = vsel %vm144, %v278, 0
  %v338 = vsel %vm144, %v279, 0
  %v341 = vsel %vm144, %v280, 0
  %v344 = vsel %vm144, %v281, 0
  %v347 = vsel %vm144, %v282, 0
  %v350 = vsel %vm144, %v283, 0
  %v353 = vsel %vm144, %v284, 0
  %v356 = vsel %vm144, %v285, 0
  %v359 = vsel %vm144, %v286, 0
  %v362 = vsel %vm144, %v287, 0
  %v365 = vsel %vm181, %v323, 0
  %367 = vmatpush.bf16.msra.mxu0 0
  %368 = vmatpush.bf16.msra.mxu0 0
  %369 = vmatpush.bf16.msra.mxu0 0
  %370 = vmatpush.bf16.msra.mxu0 %v365
  %371 = vmatpush.bf16.msra.mxu0 %v322
  %372 = vmatpush.bf16.msra.mxu0 %v321
  %373 = vmatpush.bf16.msra.mxu0 %v320
  %374 = vmatpush.bf16.msra.mxu0 %v319
  %375 = vmatmul.bf16.gmra.mxu0 %v329
  %v376 = vpop.f32.mrf.mxu0
  %v377 = vadd.f32 %v299, %v376
  %v378 = vpop.f32.mrf.mxu0
  %v379 = vadd.f32 %v299, %v378
  %380 = vmatmul.bf16.gmra.mxu0 %v332
  %v381 = vpop.f32.mrf.mxu0
  %v382 = vadd.f32 %v299, %v381
  %v383 = vpop.f32.mrf.mxu0
  %v384 = vadd.f32 %v299, %v383
  %385 = vmatmul.bf16.gmra.mxu0 %v335
  %v386 = vpop.f32.mrf.mxu0
  %v387 = vadd.f32 %v299, %v386
  %v388 = vpop.f32.mrf.mxu0
  %v389 = vadd.f32 %v299, %v388
  %390 = vmatmul.bf16.gmra.mxu0 %v338
  %v391 = vpop.f32.mrf.mxu0
  %v392 = vadd.f32 %v299, %v391
  %v393 = vpop.f32.mrf.mxu0
  %v394 = vadd.f32 %v299, %v393
  %395 = vmatmul.bf16.gmra.mxu0 %v341
  %v396 = vpop.f32.mrf.mxu0
  %v397 = vadd.f32 %v299, %v396
  %v398 = vpop.f32.mrf.mxu0
  %v399 = vadd.f32 %v299, %v398
  %400 = vmatmul.bf16.gmra.mxu0 %v344
  %v401 = vpop.f32.mrf.mxu0
  %v402 = vadd.f32 %v299, %v401
  %v403 = vpop.f32.mrf.mxu0
  %v404 = vadd.f32 %v299, %v403
  %405 = vmatmul.bf16.gmra.mxu0 %v347
  %v406 = vpop.f32.mrf.mxu0
  %v407 = vadd.f32 %v299, %v406
  %v408 = vpop.f32.mrf.mxu0
  %v409 = vadd.f32 %v299, %v408
  %410 = vmatmul.bf16.gmra.mxu0 %v350
  %v411 = vpop.f32.mrf.mxu0
  %v412 = vadd.f32 %v299, %v411
  %v413 = vpop.f32.mrf.mxu0
  %v414 = vadd.f32 %v299, %v413
  %415 = vmatmul.bf16.gmra.mxu0 %v353
  %v416 = vpop.f32.mrf.mxu0
  %v417 = vadd.f32 %v299, %v416
  %v418 = vpop.f32.mrf.mxu0
  %v419 = vadd.f32 %v299, %v418
  %420 = vmatmul.bf16.gmra.mxu0 %v356
  %v421 = vpop.f32.mrf.mxu0
  %v422 = vadd.f32 %v299, %v421
  %v423 = vpop.f32.mrf.mxu0
  %v424 = vadd.f32 %v299, %v423
  %425 = vmatmul.bf16.gmra.mxu0 %v359
  %v426 = vpop.f32.mrf.mxu0
  %v427 = vadd.f32 %v299, %v426
  %v428 = vpop.f32.mrf.mxu0
  %v429 = vadd.f32 %v299, %v428
  %430 = vmatmul.bf16.gmra.mxu0 %v362
  %v431 = vpop.f32.mrf.mxu0
  %v432 = vadd.f32 %v299, %v431
  %v433 = vpop.f32.mrf.mxu0
  %434 = vdwg.mxu0
  %vm435 = vcmask 7168
  %436 = vst.msk [vmem:[%s5] sm:$0xff] %vm435, %v377
  %437 = vst.msk [vmem:[%s5 + $0x8] sm:$0xff] %vm435, %v379
  %438 = vst.msk [vmem:[%s5 + $0x10] sm:$0xff] %vm435, %v382
  %439 = vst.msk [vmem:[%s5 + $0x18] sm:$0xff] %vm435, %v384
  %440 = vst.msk [vmem:[%s5 + $0x20] sm:$0xff] %vm435, %v387
  %441 = vst.msk [vmem:[%s5 + $0x28] sm:$0xff] %vm435, %v389
  %442 = vst.msk [vmem:[%s5 + $0x30] sm:$0xff] %vm435, %v392
  %443 = vst.msk [vmem:[%s5 + $0x38] sm:$0xff] %vm435, %v394
  %444 = vst.msk [vmem:[%s5 + $0x40] sm:$0xff] %vm435, %v397
  %445 = vst.msk [vmem:[%s5 + $0x48] sm:$0xff] %vm435, %v399
  %446 = vst.msk [vmem:[%s5 + $0x50] sm:$0xff] %vm435, %v402
  %447 = vst.msk [vmem:[%s5 + $0x58] sm:$0xff] %vm435, %v404
  %448 = vst.msk [vmem:[%s5 + $0x60] sm:$0xff] %vm435, %v407
  %449 = vst.msk [vmem:[%s5 + $0x68] sm:$0xff] %vm435, %v409
  %450 = vst.msk [vmem:[%s5 + $0x70] sm:$0xff] %vm435, %v412
  %451 = vst.msk [vmem:[%s5 + $0x78] sm:$0xff] %vm435, %v414
  %452 = vst.msk [vmem:[%s5 + $0x80] sm:$0xff] %vm435, %v417
  %453 = vst.msk [vmem:[%s5 + $0x88] sm:$0xff] %vm435, %v419
  %454 = vst.msk [vmem:[%s5 + $0x90] sm:$0xff] %vm435, %v422
  %455 = vst.msk [vmem:[%s5 + $0x98] sm:$0xff] %vm435, %v424
  %456 = vst.msk [vmem:[%s5 + $0xa0] sm:$0xff] %vm435, %v427
  %457 = vst.msk [vmem:[%s5 + $0xa8] sm:$0xff] %vm435, %v429
  %458 = vst.msk [vmem:[%s5 + $0xb0] sm:$0xff] %vm435, %v432
  // Predicated region
  $region22: #{phcc_fpn_forward.9} parent=0 // pred_check
    _
  $region23: #{phcc_fpn_forward.9} parent=0 // pred_check_branch
    %460 = sbr.rel (0) target = $region25
  $region24: #{phcc_fpn_forward.9} parent=0 // pred_region
    _
  $region25: #{phcc_fpn_forward.9} parent=0 // pred_fallthru
    _
  // Predicated region
  $region26: #{phcc_fpn_forward.9} parent=0 // pred_check
    _
  $region27: #{phcc_fpn_forward.9} parent=0 // pred_check_branch
    %462 = sbr.rel (0) target = $region29
  $region28: #{phcc_fpn_forward.9} parent=0 // pred_region
    _
  $region29: #{phcc_fpn_forward.9} parent=0 // pred_fallthru
    _

</llo_original>
